<compile_context>
chip_gen: v7x
topology: tpu7x:2x2x1
jax: 0.10.0
libtpu: 0.0.40
codegen_flags: <defaults>
</compile_context>

<pallas_src>
import functools

import jax
import jax.numpy as jnp
from jax import lax
from jax.experimental import pallas as pl
from jax.experimental.pallas import tpu as pltpu

NEG_SLOPE = 0.2
BN_EPS = 1e-5


# ----------------------------------------------------------------------------
# Fused Pallas kernel: all GAT layers + pool + MLP, single invocation
# ----------------------------------------------------------------------------
def fused_gat_stack_kernel(x_ref, mask_ref, w_ref, vec_ref, pool_ref,
                           w1_ref, b1_ref, w2_ref, b2_ref, w3_ref, b3_ref,
                           o_ref, *, num_layers, negative_slope):
    # Loop-invariant loads (single invocation -> each input DMA'd exactly once).
    mask = mask_ref[...]                       # (N, N) additive mask: 0 / -1e30
    x = x_ref[...]                             # (N, H) zero-padded input feats

    def layer_step(l, x):
        w = w_ref[l]                           # (H, H)   static layer index
        vec = vec_ref[l]                       # (4, H): asrc, adst, gamma, beta
        a_src = vec[0:1, :]
        a_dst = vec[1:2, :]
        gamma = vec[2:3, :]
        beta = vec[3:4, :]

        xp = jnp.dot(x, w, preferred_element_type=jnp.float32)        # (N, H)

        # e[j, i] = LeakyReLU(a_dst . xp[j] + a_src . xp[i])
        # s_dst: VPU multiply + lane reduce (off the MXU).
        s_dst = jnp.sum(xp * a_dst, axis=1, keepdims=True)            # (N, 1)
        # s_src must be lane-major (1, N); a (N,1)->(1,N) sublane->lane relayout
        # (XLU transpose) is not guaranteed to lower at this shape, so keep the
        # single skinny MXU contraction (known-good).
        # TODO(synk): switch to VPU reduce + XLU transpose once (N,1)->(1,N)
        # transpose lowering is confirmed on all target generations.
        dn = (((1,), (1,)), ((), ()))
        s_src = lax.dot_general(a_src, xp, dn,
                                preferred_element_type=jnp.float32)   # (1, N)

        e = s_dst + s_src                      # (N, N) broadcast outer sum
        e = jnp.where(e > 0, e, negative_slope * e)                   # LeakyReLU
        e = e + mask                           # additive -1e30 on non-edges

        # Row softmax over sources (self-loops guarantee a finite max per row).
        e_max = jnp.max(e, axis=1, keepdims=True)
        p = jnp.exp(e - e_max)                 # masked entries underflow to 0
        denom = jnp.sum(p, axis=1, keepdims=True)
        alpha = p * pl.reciprocal(denom, approx=True)

        out = jnp.dot(alpha, xp, preferred_element_type=jnp.float32)  # (N, H)
        # (GATConv bias omitted: cancelled exactly by BN mean subtraction.)

        # BatchNorm1d (batch stats, biased variance) + ReLU, affine fused.
        mean = jnp.mean(out, axis=0, keepdims=True)
        var = jnp.mean((out - mean) ** 2, axis=0, keepdims=True)
        scale = gamma * lax.rsqrt(var + BN_EPS)
        shift = beta - mean * scale
        return jnp.maximum(out * scale + shift, 0.0)

    # Fully unrolled at trace time (equivalent to
    # lax.fori_loop(0, num_layers, layer_step, x, unroll=True) with a static
    # trip count): straight-line code, no grid-step / loop overhead.
    for l in range(num_layers):
        x = layer_step(l, x)

    # Epilogue: global mean pool (as a matmul) + Linear-ReLU x2 + Linear.
    pooled = jnp.dot(pool_ref[...], x, preferred_element_type=jnp.float32)  # (B, H)
    h1 = jnp.maximum(
        jnp.dot(pooled, w1_ref[...], preferred_element_type=jnp.float32)
        + b1_ref[...], 0.0)
    h2 = jnp.maximum(
        jnp.dot(h1, w2_ref[...], preferred_element_type=jnp.float32)
        + b2_ref[...], 0.0)
    o_ref[...] = (jnp.dot(h2, w3_ref[...], preferred_element_type=jnp.float32)
                  + b3_ref[...])


# ----------------------------------------------------------------------------
# Wrapper
# ----------------------------------------------------------------------------
def gat_stack_forward(x, adj, pool_mat, w_stack, vec_stack, mlp_params,
                      negative_slope=NEG_SLOPE):
    num_layers, fpad, h = w_stack.shape
    assert fpad == h, "kernel carries node features at width H (input is padded)"
    b = pool_mat.shape[0]
    w1, b1, w2, b2, w3, b3 = mlp_params
    dout = w3.shape[1]

    # Pad node features to the uniform weight input width (zero columns).
    x_pad = jnp.pad(x.astype(jnp.float32), ((0, 0), (0, fpad - x.shape[1])))
    # Additive attention mask, computed once: 0 on edges, -1e30 on non-edges.
    mask_add = (adj.astype(jnp.float32) - 1.0) * 1e30

    kernel = functools.partial(fused_gat_stack_kernel,
                               num_layers=num_layers,
                               negative_slope=negative_slope)

    vmem = pl.BlockSpec(memory_space=pltpu.MemorySpace.VMEM)

    return pl.pallas_call(
        kernel,
        out_shape=jax.ShapeDtypeStruct((b, dout), jnp.float32),
        in_specs=[vmem] * 11,      # whole arrays resident in VMEM, one DMA each
        out_specs=vmem,
    )(x_pad, mask_add, w_stack, vec_stack, pool_mat, w1, b1, w2, b2, w3, b3)


# ----------------------------------------------------------------------------
# Parameter construction
# ----------------------------------------------------------------------------
def init_params(key, input_dim, hidden_dim, output_dim, num_conv_layers):
    assert input_dim <= hidden_dim, "fused kernel pads input features to hidden_dim"

    def normal(k, shape, scale=0.3):
        return scale * jax.random.normal(k, shape, dtype=jnp.float32)

    w_list, vec_list = [], []
    # forward() uses zip(convs, batch_norms) -> first `num_conv_layers` convs.
    for li in range(num_conv_layers):
        fin = input_dim if li == 0 else hidden_dim
        k = jax.random.fold_in(key, li)
        ks = jax.random.split(k, 6)
        w = normal(ks[0], (fin, hidden_dim))                 # GATConv lin weight
        if fin < hidden_dim:
            w = jnp.pad(w, ((0, hidden_dim - fin), (0, 0)))  # zero rows for pad cols
        w_list.append(w)
        a_src = normal(ks[1], (hidden_dim,))                 # att_src
        a_dst = normal(ks[2], (hidden_dim,))                 # att_dst
        # ks[3] would be the GATConv bias -> mathematically cancelled by BN, dropped.
        gamma = 1.0 + normal(ks[4], (hidden_dim,), 0.05)     # BN gamma
        beta = normal(ks[5], (hidden_dim,), 0.05)            # BN beta
        vec_list.append(jnp.stack([a_src, a_dst, gamma, beta], axis=0))

    w_stack = jnp.stack(w_list, axis=0)                      # (L, H, H)
    vec_stack = jnp.stack(vec_list, axis=0)                  # (L, 4, H)

    km = jax.random.fold_in(key, 10_000)
    kms = jax.random.split(km, 6)
    mlp = (
        normal(kms[0], (hidden_dim, 50)), normal(kms[1], (1, 50), 0.05),
        normal(kms[2], (50, 25)),         normal(kms[3], (1, 25), 0.05),
        normal(kms[4], (25, output_dim)), normal(kms[5], (1, output_dim), 0.05),
    )
    return w_stack, vec_stack, mlp


# ----------------------------------------------------------------------------
# Main
# ----------------------------------------------------------------------------
if __name__ == "__main__":
    INPUT_DIM = 8
    HIDDEN_DIM = 16
    OUTPUT_DIM = 4
    NUM_CONV_LAYERS = 16
    N_NODES = 32          # 2 graphs of 16 nodes
    N_GRAPHS = 2
    N_EDGES = 64

    key = jax.random.PRNGKey(0)
    k_x, k_src, k_dst, k_par = jax.random.split(key, 4)

    # Node features (N, input_dim)
    x = jax.random.normal(k_x, (N_NODES, INPUT_DIM), dtype=jnp.float32)

    # Random edge_index (2, E): row 0 = source, row 1 = target
    src = jax.random.randint(k_src, (N_EDGES,), 0, N_NODES, dtype=jnp.int32)
    dst = jax.random.randint(k_dst, (N_EDGES,), 0, N_NODES, dtype=jnp.int32)

    # Dense adjacency adj[dst, src] = 1, plus self loops (add_self_loops=True)
    adj = jnp.zeros((N_NODES, N_NODES), dtype=jnp.float32).at[dst, src].set(1.0)
    adj = jnp.maximum(adj, jnp.eye(N_NODES, dtype=jnp.float32))

    # Batch vector & mean-pool matrix (B, N)
    batch = jnp.repeat(jnp.arange(N_GRAPHS, dtype=jnp.int32),
                       N_NODES // N_GRAPHS)
    pool_mat = (batch[None, :] == jnp.arange(N_GRAPHS)[:, None]).astype(jnp.float32)
    pool_mat = pool_mat / jnp.sum(pool_mat, axis=1, keepdims=True)

    w_stack, vec_stack, mlp_params = init_params(
        k_par, INPUT_DIM, HIDDEN_DIM, OUTPUT_DIM, NUM_CONV_LAYERS)

    out = gat_stack_forward(x, adj, pool_mat, w_stack, vec_stack, mlp_params)
    out = jax.block_until_ready(out)

    assert out.shape == (N_GRAPHS, OUTPUT_DIM)
    assert bool(jnp.all(jnp.isfinite(out)))
    print("KERNEL_OK")
</pallas_src>

<mosaic_0001>
module attributes {stable_mosaic.version = 11 : i64} {
  func.func @fused_gat_stack_kernel(%arg0: memref<32x16xf32, #tpu.memory_space<vmem>>, %arg1: memref<32x32xf32, #tpu.memory_space<vmem>>, %arg2: memref<16x16x16xf32, #tpu.memory_space<vmem>>, %arg3: memref<16x4x16xf32, #tpu.memory_space<vmem>>, %arg4: memref<2x32xf32, #tpu.memory_space<vmem>>, %arg5: memref<16x50xf32, #tpu.memory_space<vmem>>, %arg6: memref<1x50xf32, #tpu.memory_space<vmem>>, %arg7: memref<50x25xf32, #tpu.memory_space<vmem>>, %arg8: memref<1x25xf32, #tpu.memory_space<vmem>>, %arg9: memref<25x4xf32, #tpu.memory_space<vmem>>, %arg10: memref<1x4xf32, #tpu.memory_space<vmem>>, %arg11: memref<2x4xf32, #tpu.memory_space<vmem>>) attributes {dimension_semantics = [], scalar_prefetch = 0 : i64, scratch_operands = 0 : i64, tpu.core_type = #tpu.core_type<tc>} {
    %c0 = arith.constant 0 : index
    %c0_0 = arith.constant 0 : index
    %0 = vector.load %arg1[%c0, %c0_0] : memref<32x32xf32, #tpu.memory_space<vmem>>, vector<32x32xf32>
    %c0_1 = arith.constant 0 : index
    %c0_2 = arith.constant 0 : index
    %1 = vector.load %arg0[%c0_1, %c0_2] : memref<32x16xf32, #tpu.memory_space<vmem>>, vector<32x16xf32>
    %c0_3 = arith.constant 0 : index
    %c0_4 = arith.constant 0 : index
    %c0_5 = arith.constant 0 : index
    %2 = vector.load %arg2[%c0_3, %c0_4, %c0_5] : memref<16x16x16xf32, #tpu.memory_space<vmem>>, vector<1x16x16xf32>
    %3 = vector.shape_cast %2 : vector<1x16x16xf32> to vector<16x16xf32>
    %c0_6 = arith.constant 0 : index
    %c0_7 = arith.constant 0 : index
    %c0_8 = arith.constant 0 : index
    %4 = vector.load %arg3[%c0_6, %c0_7, %c0_8] : memref<16x4x16xf32, #tpu.memory_space<vmem>>, vector<1x4x16xf32>
    %5 = vector.shape_cast %4 : vector<1x4x16xf32> to vector<4x16xf32>
    %6 = vector.extract_strided_slice %5 {offsets = [0, 0], sizes = [1, 16], strides = [1, 1]} : vector<4x16xf32> to vector<1x16xf32>
    %7 = vector.extract_strided_slice %5 {offsets = [1, 0], sizes = [1, 16], strides = [1, 1]} : vector<4x16xf32> to vector<1x16xf32>
    %8 = vector.extract_strided_slice %5 {offsets = [2, 0], sizes = [1, 16], strides = [1, 1]} : vector<4x16xf32> to vector<1x16xf32>
    %9 = vector.extract_strided_slice %5 {offsets = [3, 0], sizes = [1, 16], strides = [1, 1]} : vector<4x16xf32> to vector<1x16xf32>
    %cst = arith.constant dense<0.000000e+00> : vector<32x16xf32>
    %10 = tpu.matmul %1, %3, %cst {dimension_numbers = #tpu.dot_dimension_numbers<[1], [0], [0], [1], [0, 0, 1, 1], [], []>} : vector<32x16xf32>, vector<16x16xf32>, vector<32x16xf32> -> vector<32x16xf32>
    %11 = vector.broadcast %7 : vector<1x16xf32> to vector<32x16xf32>
    %12 = arith.mulf %10, %11 : vector<32x16xf32>
    %cst_9 = arith.constant dense<0.000000e+00> : vector<32xf32>
    %13 = vector.multi_reduction <add>, %12, %cst_9 [1] : vector<32x16xf32> to vector<32xf32>
    %14 = vector.shape_cast %13 : vector<32xf32> to vector<32x1xf32>
    %cst_10 = arith.constant dense<0.000000e+00> : vector<1x32xf32>
    %15 = tpu.matmul %6, %10, %cst_10 {dimension_numbers = #tpu.dot_dimension_numbers<[1], [1], [0], [0], [0, 0, 1, 0], [], []>} : vector<1x16xf32>, vector<32x16xf32>, vector<1x32xf32> -> vector<1x32xf32>
    %16 = vector.broadcast %14 : vector<32x1xf32> to vector<32x32xf32>
    %17 = vector.broadcast %15 : vector<1x32xf32> to vector<32x32xf32>
    %18 = arith.addf %16, %17 : vector<32x32xf32>
    %cst_11 = arith.constant 0.000000e+00 : f32
    %19 = vector.broadcast %cst_11 : f32 to vector<32x32xf32>
    %20 = arith.cmpf ogt, %18, %19 : vector<32x32xf32>
    %cst_12 = arith.constant 2.000000e-01 : f32
    %21 = vector.broadcast %cst_12 : f32 to vector<32x32xf32>
    %22 = arith.mulf %21, %18 : vector<32x32xf32>
    %23 = arith.select %20, %18, %22 : vector<32x32xi1>, vector<32x32xf32>
    %24 = arith.addf %23, %0 : vector<32x32xf32>
    %cst_13 = arith.constant dense<0xFF800000> : vector<32xf32>
    %25 = vector.multi_reduction <maximumf>, %24, %cst_13 [1] : vector<32x32xf32> to vector<32xf32>
    %26 = vector.shape_cast %25 : vector<32xf32> to vector<32x1xf32>
    %27 = vector.broadcast %26 : vector<32x1xf32> to vector<32x32xf32>
    %28 = arith.subf %24, %27 : vector<32x32xf32>
    %29 = math.exp %28 : vector<32x32xf32>
    %cst_14 = arith.constant dense<0.000000e+00> : vector<32xf32>
    %30 = vector.multi_reduction <add>, %29, %cst_14 [1] : vector<32x32xf32> to vector<32xf32>
    %31 = vector.shape_cast %30 : vector<32xf32> to vector<32x1xf32>
    %32 = tpu.reciprocal %31 {approx = true} : vector<32x1xf32> -> vector<32x1xf32>
    %33 = vector.broadcast %32 : vector<32x1xf32> to vector<32x32xf32>
    %34 = arith.mulf %29, %33 : vector<32x32xf32>
    %cst_15 = arith.constant dense<0.000000e+00> : vector<32x16xf32>
    %35 = tpu.matmul %34, %10, %cst_15 {dimension_numbers = #tpu.dot_dimension_numbers<[1], [0], [0], [1], [0, 0, 1, 1], [], []>} : vector<32x32xf32>, vector<32x16xf32>, vector<32x16xf32> -> vector<32x16xf32>
    %cst_16 = arith.constant dense<0.000000e+00> : vector<16xf32>
    %36 = vector.multi_reduction <add>, %35, %cst_16 [0] : vector<32x16xf32> to vector<16xf32>
    %37 = vector.shape_cast %36 : vector<16xf32> to vector<1x16xf32>
    %cst_17 = arith.constant 3.200000e+01 : f32
    %38 = vector.broadcast %cst_17 : f32 to vector<1x16xf32>
    %39 = arith.divf %37, %38 : vector<1x16xf32>
    %40 = vector.broadcast %39 : vector<1x16xf32> to vector<32x16xf32>
    %41 = arith.subf %35, %40 : vector<32x16xf32>
    %42 = arith.mulf %41, %41 : vector<32x16xf32>
    %cst_18 = arith.constant dense<0.000000e+00> : vector<16xf32>
    %43 = vector.multi_reduction <add>, %42, %cst_18 [0] : vector<32x16xf32> to vector<16xf32>
    %44 = vector.shape_cast %43 : vector<16xf32> to vector<1x16xf32>
    %cst_19 = arith.constant 3.200000e+01 : f32
    %45 = vector.broadcast %cst_19 : f32 to vector<1x16xf32>
    %46 = arith.divf %44, %45 : vector<1x16xf32>
    %cst_20 = arith.constant 9.99999974E-6 : f32
    %47 = vector.broadcast %cst_20 : f32 to vector<1x16xf32>
    %48 = arith.addf %46, %47 : vector<1x16xf32>
    %49 = math.rsqrt %48 : vector<1x16xf32>
    %50 = arith.mulf %8, %49 : vector<1x16xf32>
    %51 = arith.mulf %39, %50 : vector<1x16xf32>
    %52 = arith.subf %9, %51 : vector<1x16xf32>
    %53 = vector.broadcast %50 : vector<1x16xf32> to vector<32x16xf32>
    %54 = arith.mulf %35, %53 : vector<32x16xf32>
    %55 = vector.broadcast %52 : vector<1x16xf32> to vector<32x16xf32>
    %56 = arith.addf %54, %55 : vector<32x16xf32>
    %cst_21 = arith.constant 0.000000e+00 : f32
    %57 = vector.broadcast %cst_21 : f32 to vector<32x16xf32>
    %58 = arith.maximumf %56, %57 : vector<32x16xf32>
    %c1 = arith.constant 1 : index
    %c0_22 = arith.constant 0 : index
    %c0_23 = arith.constant 0 : index
    %59 = vector.load %arg2[%c1, %c0_22, %c0_23] : memref<16x16x16xf32, #tpu.memory_space<vmem>>, vector<1x16x16xf32>
    %60 = vector.shape_cast %59 : vector<1x16x16xf32> to vector<16x16xf32>
    %c1_24 = arith.constant 1 : index
    %c0_25 = arith.constant 0 : index
    %c0_26 = arith.constant 0 : index
    %61 = vector.load %arg3[%c1_24, %c0_25, %c0_26] : memref<16x4x16xf32, #tpu.memory_space<vmem>>, vector<1x4x16xf32>
    %62 = vector.shape_cast %61 : vector<1x4x16xf32> to vector<4x16xf32>
    %63 = vector.extract_strided_slice %62 {offsets = [0, 0], sizes = [1, 16], strides = [1, 1]} : vector<4x16xf32> to vector<1x16xf32>
    %64 = vector.extract_strided_slice %62 {offsets = [1, 0], sizes = [1, 16], strides = [1, 1]} : vector<4x16xf32> to vector<1x16xf32>
    %65 = vector.extract_strided_slice %62 {offsets = [2, 0], sizes = [1, 16], strides = [1, 1]} : vector<4x16xf32> to vector<1x16xf32>
    %66 = vector.extract_strided_slice %62 {offsets = [3, 0], sizes = [1, 16], strides = [1, 1]} : vector<4x16xf32> to vector<1x16xf32>
    %cst_27 = arith.constant dense<0.000000e+00> : vector<32x16xf32>
    %67 = tpu.matmul %58, %60, %cst_27 {dimension_numbers = #tpu.dot_dimension_numbers<[1], [0], [0], [1], [0, 0, 1, 1], [], []>} : vector<32x16xf32>, vector<16x16xf32>, vector<32x16xf32> -> vector<32x16xf32>
    %68 = vector.broadcast %64 : vector<1x16xf32> to vector<32x16xf32>
    %69 = arith.mulf %67, %68 : vector<32x16xf32>
    %cst_28 = arith.constant dense<0.000000e+00> : vector<32xf32>
    %70 = vector.multi_reduction <add>, %69, %cst_28 [1] : vector<32x16xf32> to vector<32xf32>
    %71 = vector.shape_cast %70 : vector<32xf32> to vector<32x1xf32>
    %cst_29 = arith.constant dense<0.000000e+00> : vector<1x32xf32>
    %72 = tpu.matmul %63, %67, %cst_29 {dimension_numbers = #tpu.dot_dimension_numbers<[1], [1], [0], [0], [0, 0, 1, 0], [], []>} : vector<1x16xf32>, vector<32x16xf32>, vector<1x32xf32> -> vector<1x32xf32>
    %73 = vector.broadcast %71 : vector<32x1xf32> to vector<32x32xf32>
    %74 = vector.broadcast %72 : vector<1x32xf32> to vector<32x32xf32>
    %75 = arith.addf %73, %74 : vector<32x32xf32>
    %cst_30 = arith.constant 0.000000e+00 : f32
    %76 = vector.broadcast %cst_30 : f32 to vector<32x32xf32>
    %77 = arith.cmpf ogt, %75, %76 : vector<32x32xf32>
    %cst_31 = arith.constant 2.000000e-01 : f32
    %78 = vector.broadcast %cst_31 : f32 to vector<32x32xf32>
    %79 = arith.mulf %78, %75 : vector<32x32xf32>
    %80 = arith.select %77, %75, %79 : vector<32x32xi1>, vector<32x32xf32>
    %81 = arith.addf %80, %0 : vector<32x32xf32>
    %cst_32 = arith.constant dense<0xFF800000> : vector<32xf32>
    %82 = vector.multi_reduction <maximumf>, %81, %cst_32 [1] : vector<32x32xf32> to vector<32xf32>
    %83 = vector.shape_cast %82 : vector<32xf32> to vector<32x1xf32>
    %84 = vector.broadcast %83 : vector<32x1xf32> to vector<32x32xf32>
    %85 = arith.subf %81, %84 : vector<32x32xf32>
    %86 = math.exp %85 : vector<32x32xf32>
    %cst_33 = arith.constant dense<0.000000e+00> : vector<32xf32>
    %87 = vector.multi_reduction <add>, %86, %cst_33 [1] : vector<32x32xf32> to vector<32xf32>
    %88 = vector.shape_cast %87 : vector<32xf32> to vector<32x1xf32>
    %89 = tpu.reciprocal %88 {approx = true} : vector<32x1xf32> -> vector<32x1xf32>
    %90 = vector.broadcast %89 : vector<32x1xf32> to vector<32x32xf32>
    %91 = arith.mulf %86, %90 : vector<32x32xf32>
    %cst_34 = arith.constant dense<0.000000e+00> : vector<32x16xf32>
    %92 = tpu.matmul %91, %67, %cst_34 {dimension_numbers = #tpu.dot_dimension_numbers<[1], [0], [0], [1], [0, 0, 1, 1], [], []>} : vector<32x32xf32>, vector<32x16xf32>, vector<32x16xf32> -> vector<32x16xf32>
    %cst_35 = arith.constant dense<0.000000e+00> : vector<16xf32>
    %93 = vector.multi_reduction <add>, %92, %cst_35 [0] : vector<32x16xf32> to vector<16xf32>
    %94 = vector.shape_cast %93 : vector<16xf32> to vector<1x16xf32>
    %cst_36 = arith.constant 3.200000e+01 : f32
    %95 = vector.broadcast %cst_36 : f32 to vector<1x16xf32>
    %96 = arith.divf %94, %95 : vector<1x16xf32>
    %97 = vector.broadcast %96 : vector<1x16xf32> to vector<32x16xf32>
    %98 = arith.subf %92, %97 : vector<32x16xf32>
    %99 = arith.mulf %98, %98 : vector<32x16xf32>
    %cst_37 = arith.constant dense<0.000000e+00> : vector<16xf32>
    %100 = vector.multi_reduction <add>, %99, %cst_37 [0] : vector<32x16xf32> to vector<16xf32>
    %101 = vector.shape_cast %100 : vector<16xf32> to vector<1x16xf32>
    %cst_38 = arith.constant 3.200000e+01 : f32
    %102 = vector.broadcast %cst_38 : f32 to vector<1x16xf32>
    %103 = arith.divf %101, %102 : vector<1x16xf32>
    %cst_39 = arith.constant 9.99999974E-6 : f32
    %104 = vector.broadcast %cst_39 : f32 to vector<1x16xf32>
    %105 = arith.addf %103, %104 : vector<1x16xf32>
    %106 = math.rsqrt %105 : vector<1x16xf32>
    %107 = arith.mulf %65, %106 : vector<1x16xf32>
    %108 = arith.mulf %96, %107 : vector<1x16xf32>
    %109 = arith.subf %66, %108 : vector<1x16xf32>
    %110 = vector.broadcast %107 : vector<1x16xf32> to vector<32x16xf32>
    %111 = arith.mulf %92, %110 : vector<32x16xf32>
    %112 = vector.broadcast %109 : vector<1x16xf32> to vector<32x16xf32>
    %113 = arith.addf %111, %112 : vector<32x16xf32>
    %cst_40 = arith.constant 0.000000e+00 : f32
    %114 = vector.broadcast %cst_40 : f32 to vector<32x16xf32>
    %115 = arith.maximumf %113, %114 : vector<32x16xf32>
    %c2 = arith.constant 2 : index
    %c0_41 = arith.constant 0 : index
    %c0_42 = arith.constant 0 : index
    %116 = vector.load %arg2[%c2, %c0_41, %c0_42] : memref<16x16x16xf32, #tpu.memory_space<vmem>>, vector<1x16x16xf32>
    %117 = vector.shape_cast %116 : vector<1x16x16xf32> to vector<16x16xf32>
    %c2_43 = arith.constant 2 : index
    %c0_44 = arith.constant 0 : index
    %c0_45 = arith.constant 0 : index
    %118 = vector.load %arg3[%c2_43, %c0_44, %c0_45] : memref<16x4x16xf32, #tpu.memory_space<vmem>>, vector<1x4x16xf32>
    %119 = vector.shape_cast %118 : vector<1x4x16xf32> to vector<4x16xf32>
    %120 = vector.extract_strided_slice %119 {offsets = [0, 0], sizes = [1, 16], strides = [1, 1]} : vector<4x16xf32> to vector<1x16xf32>
    %121 = vector.extract_strided_slice %119 {offsets = [1, 0], sizes = [1, 16], strides = [1, 1]} : vector<4x16xf32> to vector<1x16xf32>
    %122 = vector.extract_strided_slice %119 {offsets = [2, 0], sizes = [1, 16], strides = [1, 1]} : vector<4x16xf32> to vector<1x16xf32>
    %123 = vector.extract_strided_slice %119 {offsets = [3, 0], sizes = [1, 16], strides = [1, 1]} : vector<4x16xf32> to vector<1x16xf32>
    %cst_46 = arith.constant dense<0.000000e+00> : vector<32x16xf32>
    %124 = tpu.matmul %115, %117, %cst_46 {dimension_numbers = #tpu.dot_dimension_numbers<[1], [0], [0], [1], [0, 0, 1, 1], [], []>} : vector<32x16xf32>, vector<16x16xf32>, vector<32x16xf32> -> vector<32x16xf32>
    %125 = vector.broadcast %121 : vector<1x16xf32> to vector<32x16xf32>
    %126 = arith.mulf %124, %125 : vector<32x16xf32>
    %cst_47 = arith.constant dense<0.000000e+00> : vector<32xf32>
    %127 = vector.multi_reduction <add>, %126, %cst_47 [1] : vector<32x16xf32> to vector<32xf32>
    %128 = vector.shape_cast %127 : vector<32xf32> to vector<32x1xf32>
    %cst_48 = arith.constant dense<0.000000e+00> : vector<1x32xf32>
    %129 = tpu.matmul %120, %124, %cst_48 {dimension_numbers = #tpu.dot_dimension_numbers<[1], [1], [0], [0], [0, 0, 1, 0], [], []>} : vector<1x16xf32>, vector<32x16xf32>, vector<1x32xf32> -> vector<1x32xf32>
    %130 = vector.broadcast %128 : vector<32x1xf32> to vector<32x32xf32>
    %131 = vector.broadcast %129 : vector<1x32xf32> to vector<32x32xf32>
    %132 = arith.addf %130, %131 : vector<32x32xf32>
    %cst_49 = arith.constant 0.000000e+00 : f32
    %133 = vector.broadcast %cst_49 : f32 to vector<32x32xf32>
    %134 = arith.cmpf ogt, %132, %133 : vector<32x32xf32>
    %cst_50 = arith.constant 2.000000e-01 : f32
    %135 = vector.broadcast %cst_50 : f32 to vector<32x32xf32>
    %136 = arith.mulf %135, %132 : vector<32x32xf32>
    %137 = arith.select %134, %132, %136 : vector<32x32xi1>, vector<32x32xf32>
    %138 = arith.addf %137, %0 : vector<32x32xf32>
    %cst_51 = arith.constant dense<0xFF800000> : vector<32xf32>
    %139 = vector.multi_reduction <maximumf>, %138, %cst_51 [1] : vector<32x32xf32> to vector<32xf32>
    %140 = vector.shape_cast %139 : vector<32xf32> to vector<32x1xf32>
    %141 = vector.broadcast %140 : vector<32x1xf32> to vector<32x32xf32>
    %142 = arith.subf %138, %141 : vector<32x32xf32>
    %143 = math.exp %142 : vector<32x32xf32>
    %cst_52 = arith.constant dense<0.000000e+00> : vector<32xf32>
    %144 = vector.multi_reduction <add>, %143, %cst_52 [1] : vector<32x32xf32> to vector<32xf32>
    %145 = vector.shape_cast %144 : vector<32xf32> to vector<32x1xf32>
    %146 = tpu.reciprocal %145 {approx = true} : vector<32x1xf32> -> vector<32x1xf32>
    %147 = vector.broadcast %146 : vector<32x1xf32> to vector<32x32xf32>
    %148 = arith.mulf %143, %147 : vector<32x32xf32>
    %cst_53 = arith.constant dense<0.000000e+00> : vector<32x16xf32>
    %149 = tpu.matmul %148, %124, %cst_53 {dimension_numbers = #tpu.dot_dimension_numbers<[1], [0], [0], [1], [0, 0, 1, 1], [], []>} : vector<32x32xf32>, vector<32x16xf32>, vector<32x16xf32> -> vector<32x16xf32>
    %cst_54 = arith.constant dense<0.000000e+00> : vector<16xf32>
    %150 = vector.multi_reduction <add>, %149, %cst_54 [0] : vector<32x16xf32> to vector<16xf32>
    %151 = vector.shape_cast %150 : vector<16xf32> to vector<1x16xf32>
    %cst_55 = arith.constant 3.200000e+01 : f32
    %152 = vector.broadcast %cst_55 : f32 to vector<1x16xf32>
    %153 = arith.divf %151, %152 : vector<1x16xf32>
    %154 = vector.broadcast %153 : vector<1x16xf32> to vector<32x16xf32>
    %155 = arith.subf %149, %154 : vector<32x16xf32>
    %156 = arith.mulf %155, %155 : vector<32x16xf32>
    %cst_56 = arith.constant dense<0.000000e+00> : vector<16xf32>
    %157 = vector.multi_reduction <add>, %156, %cst_56 [0] : vector<32x16xf32> to vector<16xf32>
    %158 = vector.shape_cast %157 : vector<16xf32> to vector<1x16xf32>
    %cst_57 = arith.constant 3.200000e+01 : f32
    %159 = vector.broadcast %cst_57 : f32 to vector<1x16xf32>
    %160 = arith.divf %158, %159 : vector<1x16xf32>
    %cst_58 = arith.constant 9.99999974E-6 : f32
    %161 = vector.broadcast %cst_58 : f32 to vector<1x16xf32>
    %162 = arith.addf %160, %161 : vector<1x16xf32>
    %163 = math.rsqrt %162 : vector<1x16xf32>
    %164 = arith.mulf %122, %163 : vector<1x16xf32>
    %165 = arith.mulf %153, %164 : vector<1x16xf32>
    %166 = arith.subf %123, %165 : vector<1x16xf32>
    %167 = vector.broadcast %164 : vector<1x16xf32> to vector<32x16xf32>
    %168 = arith.mulf %149, %167 : vector<32x16xf32>
    %169 = vector.broadcast %166 : vector<1x16xf32> to vector<32x16xf32>
    %170 = arith.addf %168, %169 : vector<32x16xf32>
    %cst_59 = arith.constant 0.000000e+00 : f32
    %171 = vector.broadcast %cst_59 : f32 to vector<32x16xf32>
    %172 = arith.maximumf %170, %171 : vector<32x16xf32>
    %c3 = arith.constant 3 : index
    %c0_60 = arith.constant 0 : index
    %c0_61 = arith.constant 0 : index
    %173 = vector.load %arg2[%c3, %c0_60, %c0_61] : memref<16x16x16xf32, #tpu.memory_space<vmem>>, vector<1x16x16xf32>
    %174 = vector.shape_cast %173 : vector<1x16x16xf32> to vector<16x16xf32>
    %c3_62 = arith.constant 3 : index
    %c0_63 = arith.constant 0 : index
    %c0_64 = arith.constant 0 : index
    %175 = vector.load %arg3[%c3_62, %c0_63, %c0_64] : memref<16x4x16xf32, #tpu.memory_space<vmem>>, vector<1x4x16xf32>
    %176 = vector.shape_cast %175 : vector<1x4x16xf32> to vector<4x16xf32>
    %177 = vector.extract_strided_slice %176 {offsets = [0, 0], sizes = [1, 16], strides = [1, 1]} : vector<4x16xf32> to vector<1x16xf32>
    %178 = vector.extract_strided_slice %176 {offsets = [1, 0], sizes = [1, 16], strides = [1, 1]} : vector<4x16xf32> to vector<1x16xf32>
    %179 = vector.extract_strided_slice %176 {offsets = [2, 0], sizes = [1, 16], strides = [1, 1]} : vector<4x16xf32> to vector<1x16xf32>
    %180 = vector.extract_strided_slice %176 {offsets = [3, 0], sizes = [1, 16], strides = [1, 1]} : vector<4x16xf32> to vector<1x16xf32>
    %cst_65 = arith.constant dense<0.000000e+00> : vector<32x16xf32>
    %181 = tpu.matmul %172, %174, %cst_65 {dimension_numbers = #tpu.dot_dimension_numbers<[1], [0], [0], [1], [0, 0, 1, 1], [], []>} : vector<32x16xf32>, vector<16x16xf32>, vector<32x16xf32> -> vector<32x16xf32>
    %182 = vector.broadcast %178 : vector<1x16xf32> to vector<32x16xf32>
    %183 = arith.mulf %181, %182 : vector<32x16xf32>
    %cst_66 = arith.constant dense<0.000000e+00> : vector<32xf32>
    %184 = vector.multi_reduction <add>, %183, %cst_66 [1] : vector<32x16xf32> to vector<32xf32>
    %185 = vector.shape_cast %184 : vector<32xf32> to vector<32x1xf32>
    %cst_67 = arith.constant dense<0.000000e+00> : vector<1x32xf32>
    %186 = tpu.matmul %177, %181, %cst_67 {dimension_numbers = #tpu.dot_dimension_numbers<[1], [1], [0], [0], [0, 0, 1, 0], [], []>} : vector<1x16xf32>, vector<32x16xf32>, vector<1x32xf32> -> vector<1x32xf32>
    %187 = vector.broadcast %185 : vector<32x1xf32> to vector<32x32xf32>
    %188 = vector.broadcast %186 : vector<1x32xf32> to vector<32x32xf32>
    %189 = arith.addf %187, %188 : vector<32x32xf32>
    %cst_68 = arith.constant 0.000000e+00 : f32
    %190 = vector.broadcast %cst_68 : f32 to vector<32x32xf32>
    %191 = arith.cmpf ogt, %189, %190 : vector<32x32xf32>
    %cst_69 = arith.constant 2.000000e-01 : f32
    %192 = vector.broadcast %cst_69 : f32 to vector<32x32xf32>
    %193 = arith.mulf %192, %189 : vector<32x32xf32>
    %194 = arith.select %191, %189, %193 : vector<32x32xi1>, vector<32x32xf32>
    %195 = arith.addf %194, %0 : vector<32x32xf32>
    %cst_70 = arith.constant dense<0xFF800000> : vector<32xf32>
    %196 = vector.multi_reduction <maximumf>, %195, %cst_70 [1] : vector<32x32xf32> to vector<32xf32>
    %197 = vector.shape_cast %196 : vector<32xf32> to vector<32x1xf32>
    %198 = vector.broadcast %197 : vector<32x1xf32> to vector<32x32xf32>
    %199 = arith.subf %195, %198 : vector<32x32xf32>
    %200 = math.exp %199 : vector<32x32xf32>
    %cst_71 = arith.constant dense<0.000000e+00> : vector<32xf32>
    %201 = vector.multi_reduction <add>, %200, %cst_71 [1] : vector<32x32xf32> to vector<32xf32>
    %202 = vector.shape_cast %201 : vector<32xf32> to vector<32x1xf32>
    %203 = tpu.reciprocal %202 {approx = true} : vector<32x1xf32> -> vector<32x1xf32>
    %204 = vector.broadcast %203 : vector<32x1xf32> to vector<32x32xf32>
    %205 = arith.mulf %200, %204 : vector<32x32xf32>
    %cst_72 = arith.constant dense<0.000000e+00> : vector<32x16xf32>
    %206 = tpu.matmul %205, %181, %cst_72 {dimension_numbers = #tpu.dot_dimension_numbers<[1], [0], [0], [1], [0, 0, 1, 1], [], []>} : vector<32x32xf32>, vector<32x16xf32>, vector<32x16xf32> -> vector<32x16xf32>
    %cst_73 = arith.constant dense<0.000000e+00> : vector<16xf32>
    %207 = vector.multi_reduction <add>, %206, %cst_73 [0] : vector<32x16xf32> to vector<16xf32>
    %208 = vector.shape_cast %207 : vector<16xf32> to vector<1x16xf32>
    %cst_74 = arith.constant 3.200000e+01 : f32
    %209 = vector.broadcast %cst_74 : f32 to vector<1x16xf32>
    %210 = arith.divf %208, %209 : vector<1x16xf32>
    %211 = vector.broadcast %210 : vector<1x16xf32> to vector<32x16xf32>
    %212 = arith.subf %206, %211 : vector<32x16xf32>
    %213 = arith.mulf %212, %212 : vector<32x16xf32>
    %cst_75 = arith.constant dense<0.000000e+00> : vector<16xf32>
    %214 = vector.multi_reduction <add>, %213, %cst_75 [0] : vector<32x16xf32> to vector<16xf32>
    %215 = vector.shape_cast %214 : vector<16xf32> to vector<1x16xf32>
    %cst_76 = arith.constant 3.200000e+01 : f32
    %216 = vector.broadcast %cst_76 : f32 to vector<1x16xf32>
    %217 = arith.divf %215, %216 : vector<1x16xf32>
    %cst_77 = arith.constant 9.99999974E-6 : f32
    %218 = vector.broadcast %cst_77 : f32 to vector<1x16xf32>
    %219 = arith.addf %217, %218 : vector<1x16xf32>
    %220 = math.rsqrt %219 : vector<1x16xf32>
    %221 = arith.mulf %179, %220 : vector<1x16xf32>
    %222 = arith.mulf %210, %221 : vector<1x16xf32>
    %223 = arith.subf %180, %222 : vector<1x16xf32>
    %224 = vector.broadcast %221 : vector<1x16xf32> to vector<32x16xf32>
    %225 = arith.mulf %206, %224 : vector<32x16xf32>
    %226 = vector.broadcast %223 : vector<1x16xf32> to vector<32x16xf32>
    %227 = arith.addf %225, %226 : vector<32x16xf32>
    %cst_78 = arith.constant 0.000000e+00 : f32
    %228 = vector.broadcast %cst_78 : f32 to vector<32x16xf32>
    %229 = arith.maximumf %227, %228 : vector<32x16xf32>
    %c4 = arith.constant 4 : index
    %c0_79 = arith.constant 0 : index
    %c0_80 = arith.constant 0 : index
    %230 = vector.load %arg2[%c4, %c0_79, %c0_80] : memref<16x16x16xf32, #tpu.memory_space<vmem>>, vector<1x16x16xf32>
    %231 = vector.shape_cast %230 : vector<1x16x16xf32> to vector<16x16xf32>
    %c4_81 = arith.constant 4 : index
    %c0_82 = arith.constant 0 : index
    %c0_83 = arith.constant 0 : index
    %232 = vector.load %arg3[%c4_81, %c0_82, %c0_83] : memref<16x4x16xf32, #tpu.memory_space<vmem>>, vector<1x4x16xf32>
    %233 = vector.shape_cast %232 : vector<1x4x16xf32> to vector<4x16xf32>
    %234 = vector.extract_strided_slice %233 {offsets = [0, 0], sizes = [1, 16], strides = [1, 1]} : vector<4x16xf32> to vector<1x16xf32>
    %235 = vector.extract_strided_slice %233 {offsets = [1, 0], sizes = [1, 16], strides = [1, 1]} : vector<4x16xf32> to vector<1x16xf32>
    %236 = vector.extract_strided_slice %233 {offsets = [2, 0], sizes = [1, 16], strides = [1, 1]} : vector<4x16xf32> to vector<1x16xf32>
    %237 = vector.extract_strided_slice %233 {offsets = [3, 0], sizes = [1, 16], strides = [1, 1]} : vector<4x16xf32> to vector<1x16xf32>
    %cst_84 = arith.constant dense<0.000000e+00> : vector<32x16xf32>
    %238 = tpu.matmul %229, %231, %cst_84 {dimension_numbers = #tpu.dot_dimension_numbers<[1], [0], [0], [1], [0, 0, 1, 1], [], []>} : vector<32x16xf32>, vector<16x16xf32>, vector<32x16xf32> -> vector<32x16xf32>
    %239 = vector.broadcast %235 : vector<1x16xf32> to vector<32x16xf32>
    %240 = arith.mulf %238, %239 : vector<32x16xf32>
    %cst_85 = arith.constant dense<0.000000e+00> : vector<32xf32>
    %241 = vector.multi_reduction <add>, %240, %cst_85 [1] : vector<32x16xf32> to vector<32xf32>
    %242 = vector.shape_cast %241 : vector<32xf32> to vector<32x1xf32>
    %cst_86 = arith.constant dense<0.000000e+00> : vector<1x32xf32>
    %243 = tpu.matmul %234, %238, %cst_86 {dimension_numbers = #tpu.dot_dimension_numbers<[1], [1], [0], [0], [0, 0, 1, 0], [], []>} : vector<1x16xf32>, vector<32x16xf32>, vector<1x32xf32> -> vector<1x32xf32>
    %244 = vector.broadcast %242 : vector<32x1xf32> to vector<32x32xf32>
    %245 = vector.broadcast %243 : vector<1x32xf32> to vector<32x32xf32>
    %246 = arith.addf %244, %245 : vector<32x32xf32>
    %cst_87 = arith.constant 0.000000e+00 : f32
    %247 = vector.broadcast %cst_87 : f32 to vector<32x32xf32>
    %248 = arith.cmpf ogt, %246, %247 : vector<32x32xf32>
    %cst_88 = arith.constant 2.000000e-01 : f32
    %249 = vector.broadcast %cst_88 : f32 to vector<32x32xf32>
    %250 = arith.mulf %249, %246 : vector<32x32xf32>
    %251 = arith.select %248, %246, %250 : vector<32x32xi1>, vector<32x32xf32>
    %252 = arith.addf %251, %0 : vector<32x32xf32>
    %cst_89 = arith.constant dense<0xFF800000> : vector<32xf32>
    %253 = vector.multi_reduction <maximumf>, %252, %cst_89 [1] : vector<32x32xf32> to vector<32xf32>
    %254 = vector.shape_cast %253 : vector<32xf32> to vector<32x1xf32>
    %255 = vector.broadcast %254 : vector<32x1xf32> to vector<32x32xf32>
    %256 = arith.subf %252, %255 : vector<32x32xf32>
    %257 = math.exp %256 : vector<32x32xf32>
    %cst_90 = arith.constant dense<0.000000e+00> : vector<32xf32>
    %258 = vector.multi_reduction <add>, %257, %cst_90 [1] : vector<32x32xf32> to vector<32xf32>
    %259 = vector.shape_cast %258 : vector<32xf32> to vector<32x1xf32>
    %260 = tpu.reciprocal %259 {approx = true} : vector<32x1xf32> -> vector<32x1xf32>
    %261 = vector.broadcast %260 : vector<32x1xf32> to vector<32x32xf32>
    %262 = arith.mulf %257, %261 : vector<32x32xf32>
    %cst_91 = arith.constant dense<0.000000e+00> : vector<32x16xf32>
    %263 = tpu.matmul %262, %238, %cst_91 {dimension_numbers = #tpu.dot_dimension_numbers<[1], [0], [0], [1], [0, 0, 1, 1], [], []>} : vector<32x32xf32>, vector<32x16xf32>, vector<32x16xf32> -> vector<32x16xf32>
    %cst_92 = arith.constant dense<0.000000e+00> : vector<16xf32>
    %264 = vector.multi_reduction <add>, %263, %cst_92 [0] : vector<32x16xf32> to vector<16xf32>
    %265 = vector.shape_cast %264 : vector<16xf32> to vector<1x16xf32>
    %cst_93 = arith.constant 3.200000e+01 : f32
    %266 = vector.broadcast %cst_93 : f32 to vector<1x16xf32>
    %267 = arith.divf %265, %266 : vector<1x16xf32>
    %268 = vector.broadcast %267 : vector<1x16xf32> to vector<32x16xf32>
    %269 = arith.subf %263, %268 : vector<32x16xf32>
    %270 = arith.mulf %269, %269 : vector<32x16xf32>
    %cst_94 = arith.constant dense<0.000000e+00> : vector<16xf32>
    %271 = vector.multi_reduction <add>, %270, %cst_94 [0] : vector<32x16xf32> to vector<16xf32>
    %272 = vector.shape_cast %271 : vector<16xf32> to vector<1x16xf32>
    %cst_95 = arith.constant 3.200000e+01 : f32
    %273 = vector.broadcast %cst_95 : f32 to vector<1x16xf32>
    %274 = arith.divf %272, %273 : vector<1x16xf32>
    %cst_96 = arith.constant 9.99999974E-6 : f32
    %275 = vector.broadcast %cst_96 : f32 to vector<1x16xf32>
    %276 = arith.addf %274, %275 : vector<1x16xf32>
    %277 = math.rsqrt %276 : vector<1x16xf32>
    %278 = arith.mulf %236, %277 : vector<1x16xf32>
    %279 = arith.mulf %267, %278 : vector<1x16xf32>
    %280 = arith.subf %237, %279 : vector<1x16xf32>
    %281 = vector.broadcast %278 : vector<1x16xf32> to vector<32x16xf32>
    %282 = arith.mulf %263, %281 : vector<32x16xf32>
    %283 = vector.broadcast %280 : vector<1x16xf32> to vector<32x16xf32>
    %284 = arith.addf %282, %283 : vector<32x16xf32>
    %cst_97 = arith.constant 0.000000e+00 : f32
    %285 = vector.broadcast %cst_97 : f32 to vector<32x16xf32>
    %286 = arith.maximumf %284, %285 : vector<32x16xf32>
    %c5 = arith.constant 5 : index
    %c0_98 = arith.constant 0 : index
    %c0_99 = arith.constant 0 : index
    %287 = vector.load %arg2[%c5, %c0_98, %c0_99] : memref<16x16x16xf32, #tpu.memory_space<vmem>>, vector<1x16x16xf32>
    %288 = vector.shape_cast %287 : vector<1x16x16xf32> to vector<16x16xf32>
    %c5_100 = arith.constant 5 : index
    %c0_101 = arith.constant 0 : index
    %c0_102 = arith.constant 0 : index
    %289 = vector.load %arg3[%c5_100, %c0_101, %c0_102] : memref<16x4x16xf32, #tpu.memory_space<vmem>>, vector<1x4x16xf32>
    %290 = vector.shape_cast %289 : vector<1x4x16xf32> to vector<4x16xf32>
    %291 = vector.extract_strided_slice %290 {offsets = [0, 0], sizes = [1, 16], strides = [1, 1]} : vector<4x16xf32> to vector<1x16xf32>
    %292 = vector.extract_strided_slice %290 {offsets = [1, 0], sizes = [1, 16], strides = [1, 1]} : vector<4x16xf32> to vector<1x16xf32>
    %293 = vector.extract_strided_slice %290 {offsets = [2, 0], sizes = [1, 16], strides = [1, 1]} : vector<4x16xf32> to vector<1x16xf32>
    %294 = vector.extract_strided_slice %290 {offsets = [3, 0], sizes = [1, 16], strides = [1, 1]} : vector<4x16xf32> to vector<1x16xf32>
    %cst_103 = arith.constant dense<0.000000e+00> : vector<32x16xf32>
    %295 = tpu.matmul %286, %288, %cst_103 {dimension_numbers = #tpu.dot_dimension_numbers<[1], [0], [0], [1], [0, 0, 1, 1], [], []>} : vector<32x16xf32>, vector<16x16xf32>, vector<32x16xf32> -> vector<32x16xf32>
    %296 = vector.broadcast %292 : vector<1x16xf32> to vector<32x16xf32>
    %297 = arith.mulf %295, %296 : vector<32x16xf32>
    %cst_104 = arith.constant dense<0.000000e+00> : vector<32xf32>
    %298 = vector.multi_reduction <add>, %297, %cst_104 [1] : vector<32x16xf32> to vector<32xf32>
    %299 = vector.shape_cast %298 : vector<32xf32> to vector<32x1xf32>
    %cst_105 = arith.constant dense<0.000000e+00> : vector<1x32xf32>
    %300 = tpu.matmul %291, %295, %cst_105 {dimension_numbers = #tpu.dot_dimension_numbers<[1], [1], [0], [0], [0, 0, 1, 0], [], []>} : vector<1x16xf32>, vector<32x16xf32>, vector<1x32xf32> -> vector<1x32xf32>
    %301 = vector.broadcast %299 : vector<32x1xf32> to vector<32x32xf32>
    %302 = vector.broadcast %300 : vector<1x32xf32> to vector<32x32xf32>
    %303 = arith.addf %301, %302 : vector<32x32xf32>
    %cst_106 = arith.constant 0.000000e+00 : f32
    %304 = vector.broadcast %cst_106 : f32 to vector<32x32xf32>
    %305 = arith.cmpf ogt, %303, %304 : vector<32x32xf32>
    %cst_107 = arith.constant 2.000000e-01 : f32
    %306 = vector.broadcast %cst_107 : f32 to vector<32x32xf32>
    %307 = arith.mulf %306, %303 : vector<32x32xf32>
    %308 = arith.select %305, %303, %307 : vector<32x32xi1>, vector<32x32xf32>
    %309 = arith.addf %308, %0 : vector<32x32xf32>
    %cst_108 = arith.constant dense<0xFF800000> : vector<32xf32>
    %310 = vector.multi_reduction <maximumf>, %309, %cst_108 [1] : vector<32x32xf32> to vector<32xf32>
    %311 = vector.shape_cast %310 : vector<32xf32> to vector<32x1xf32>
    %312 = vector.broadcast %311 : vector<32x1xf32> to vector<32x32xf32>
    %313 = arith.subf %309, %312 : vector<32x32xf32>
    %314 = math.exp %313 : vector<32x32xf32>
    %cst_109 = arith.constant dense<0.000000e+00> : vector<32xf32>
    %315 = vector.multi_reduction <add>, %314, %cst_109 [1] : vector<32x32xf32> to vector<32xf32>
    %316 = vector.shape_cast %315 : vector<32xf32> to vector<32x1xf32>
    %317 = tpu.reciprocal %316 {approx = true} : vector<32x1xf32> -> vector<32x1xf32>
    %318 = vector.broadcast %317 : vector<32x1xf32> to vector<32x32xf32>
    %319 = arith.mulf %314, %318 : vector<32x32xf32>
    %cst_110 = arith.constant dense<0.000000e+00> : vector<32x16xf32>
    %320 = tpu.matmul %319, %295, %cst_110 {dimension_numbers = #tpu.dot_dimension_numbers<[1], [0], [0], [1], [0, 0, 1, 1], [], []>} : vector<32x32xf32>, vector<32x16xf32>, vector<32x16xf32> -> vector<32x16xf32>
    %cst_111 = arith.constant dense<0.000000e+00> : vector<16xf32>
    %321 = vector.multi_reduction <add>, %320, %cst_111 [0] : vector<32x16xf32> to vector<16xf32>
    %322 = vector.shape_cast %321 : vector<16xf32> to vector<1x16xf32>
    %cst_112 = arith.constant 3.200000e+01 : f32
    %323 = vector.broadcast %cst_112 : f32 to vector<1x16xf32>
    %324 = arith.divf %322, %323 : vector<1x16xf32>
    %325 = vector.broadcast %324 : vector<1x16xf32> to vector<32x16xf32>
    %326 = arith.subf %320, %325 : vector<32x16xf32>
    %327 = arith.mulf %326, %326 : vector<32x16xf32>
    %cst_113 = arith.constant dense<0.000000e+00> : vector<16xf32>
    %328 = vector.multi_reduction <add>, %327, %cst_113 [0] : vector<32x16xf32> to vector<16xf32>
    %329 = vector.shape_cast %328 : vector<16xf32> to vector<1x16xf32>
    %cst_114 = arith.constant 3.200000e+01 : f32
    %330 = vector.broadcast %cst_114 : f32 to vector<1x16xf32>
    %331 = arith.divf %329, %330 : vector<1x16xf32>
    %cst_115 = arith.constant 9.99999974E-6 : f32
    %332 = vector.broadcast %cst_115 : f32 to vector<1x16xf32>
    %333 = arith.addf %331, %332 : vector<1x16xf32>
    %334 = math.rsqrt %333 : vector<1x16xf32>
    %335 = arith.mulf %293, %334 : vector<1x16xf32>
    %336 = arith.mulf %324, %335 : vector<1x16xf32>
    %337 = arith.subf %294, %336 : vector<1x16xf32>
    %338 = vector.broadcast %335 : vector<1x16xf32> to vector<32x16xf32>
    %339 = arith.mulf %320, %338 : vector<32x16xf32>
    %340 = vector.broadcast %337 : vector<1x16xf32> to vector<32x16xf32>
    %341 = arith.addf %339, %340 : vector<32x16xf32>
    %cst_116 = arith.constant 0.000000e+00 : f32
    %342 = vector.broadcast %cst_116 : f32 to vector<32x16xf32>
    %343 = arith.maximumf %341, %342 : vector<32x16xf32>
    %c6 = arith.constant 6 : index
    %c0_117 = arith.constant 0 : index
    %c0_118 = arith.constant 0 : index
    %344 = vector.load %arg2[%c6, %c0_117, %c0_118] : memref<16x16x16xf32, #tpu.memory_space<vmem>>, vector<1x16x16xf32>
    %345 = vector.shape_cast %344 : vector<1x16x16xf32> to vector<16x16xf32>
    %c6_119 = arith.constant 6 : index
    %c0_120 = arith.constant 0 : index
    %c0_121 = arith.constant 0 : index
    %346 = vector.load %arg3[%c6_119, %c0_120, %c0_121] : memref<16x4x16xf32, #tpu.memory_space<vmem>>, vector<1x4x16xf32>
    %347 = vector.shape_cast %346 : vector<1x4x16xf32> to vector<4x16xf32>
    %348 = vector.extract_strided_slice %347 {offsets = [0, 0], sizes = [1, 16], strides = [1, 1]} : vector<4x16xf32> to vector<1x16xf32>
    %349 = vector.extract_strided_slice %347 {offsets = [1, 0], sizes = [1, 16], strides = [1, 1]} : vector<4x16xf32> to vector<1x16xf32>
    %350 = vector.extract_strided_slice %347 {offsets = [2, 0], sizes = [1, 16], strides = [1, 1]} : vector<4x16xf32> to vector<1x16xf32>
    %351 = vector.extract_strided_slice %347 {offsets = [3, 0], sizes = [1, 16], strides = [1, 1]} : vector<4x16xf32> to vector<1x16xf32>
    %cst_122 = arith.constant dense<0.000000e+00> : vector<32x16xf32>
    %352 = tpu.matmul %343, %345, %cst_122 {dimension_numbers = #tpu.dot_dimension_numbers<[1], [0], [0], [1], [0, 0, 1, 1], [], []>} : vector<32x16xf32>, vector<16x16xf32>, vector<32x16xf32> -> vector<32x16xf32>
    %353 = vector.broadcast %349 : vector<1x16xf32> to vector<32x16xf32>
    %354 = arith.mulf %352, %353 : vector<32x16xf32>
    %cst_123 = arith.constant dense<0.000000e+00> : vector<32xf32>
    %355 = vector.multi_reduction <add>, %354, %cst_123 [1] : vector<32x16xf32> to vector<32xf32>
    %356 = vector.shape_cast %355 : vector<32xf32> to vector<32x1xf32>
    %cst_124 = arith.constant dense<0.000000e+00> : vector<1x32xf32>
    %357 = tpu.matmul %348, %352, %cst_124 {dimension_numbers = #tpu.dot_dimension_numbers<[1], [1], [0], [0], [0, 0, 1, 0], [], []>} : vector<1x16xf32>, vector<32x16xf32>, vector<1x32xf32> -> vector<1x32xf32>
    %358 = vector.broadcast %356 : vector<32x1xf32> to vector<32x32xf32>
    %359 = vector.broadcast %357 : vector<1x32xf32> to vector<32x32xf32>
    %360 = arith.addf %358, %359 : vector<32x32xf32>
    %cst_125 = arith.constant 0.000000e+00 : f32
    %361 = vector.broadcast %cst_125 : f32 to vector<32x32xf32>
    %362 = arith.cmpf ogt, %360, %361 : vector<32x32xf32>
    %cst_126 = arith.constant 2.000000e-01 : f32
    %363 = vector.broadcast %cst_126 : f32 to vector<32x32xf32>
    %364 = arith.mulf %363, %360 : vector<32x32xf32>
    %365 = arith.select %362, %360, %364 : vector<32x32xi1>, vector<32x32xf32>
    %366 = arith.addf %365, %0 : vector<32x32xf32>
    %cst_127 = arith.constant dense<0xFF800000> : vector<32xf32>
    %367 = vector.multi_reduction <maximumf>, %366, %cst_127 [1] : vector<32x32xf32> to vector<32xf32>
    %368 = vector.shape_cast %367 : vector<32xf32> to vector<32x1xf32>
    %369 = vector.broadcast %368 : vector<32x1xf32> to vector<32x32xf32>
    %370 = arith.subf %366, %369 : vector<32x32xf32>
    %371 = math.exp %370 : vector<32x32xf32>
    %cst_128 = arith.constant dense<0.000000e+00> : vector<32xf32>
    %372 = vector.multi_reduction <add>, %371, %cst_128 [1] : vector<32x32xf32> to vector<32xf32>
    %373 = vector.shape_cast %372 : vector<32xf32> to vector<32x1xf32>
    %374 = tpu.reciprocal %373 {approx = true} : vector<32x1xf32> -> vector<32x1xf32>
    %375 = vector.broadcast %374 : vector<32x1xf32> to vector<32x32xf32>
    %376 = arith.mulf %371, %375 : vector<32x32xf32>
    %cst_129 = arith.constant dense<0.000000e+00> : vector<32x16xf32>
    %377 = tpu.matmul %376, %352, %cst_129 {dimension_numbers = #tpu.dot_dimension_numbers<[1], [0], [0], [1], [0, 0, 1, 1], [], []>} : vector<32x32xf32>, vector<32x16xf32>, vector<32x16xf32> -> vector<32x16xf32>
    %cst_130 = arith.constant dense<0.000000e+00> : vector<16xf32>
    %378 = vector.multi_reduction <add>, %377, %cst_130 [0] : vector<32x16xf32> to vector<16xf32>
    %379 = vector.shape_cast %378 : vector<16xf32> to vector<1x16xf32>
    %cst_131 = arith.constant 3.200000e+01 : f32
    %380 = vector.broadcast %cst_131 : f32 to vector<1x16xf32>
    %381 = arith.divf %379, %380 : vector<1x16xf32>
    %382 = vector.broadcast %381 : vector<1x16xf32> to vector<32x16xf32>
    %383 = arith.subf %377, %382 : vector<32x16xf32>
    %384 = arith.mulf %383, %383 : vector<32x16xf32>
    %cst_132 = arith.constant dense<0.000000e+00> : vector<16xf32>
    %385 = vector.multi_reduction <add>, %384, %cst_132 [0] : vector<32x16xf32> to vector<16xf32>
    %386 = vector.shape_cast %385 : vector<16xf32> to vector<1x16xf32>
    %cst_133 = arith.constant 3.200000e+01 : f32
    %387 = vector.broadcast %cst_133 : f32 to vector<1x16xf32>
    %388 = arith.divf %386, %387 : vector<1x16xf32>
    %cst_134 = arith.constant 9.99999974E-6 : f32
    %389 = vector.broadcast %cst_134 : f32 to vector<1x16xf32>
    %390 = arith.addf %388, %389 : vector<1x16xf32>
    %391 = math.rsqrt %390 : vector<1x16xf32>
    %392 = arith.mulf %350, %391 : vector<1x16xf32>
    %393 = arith.mulf %381, %392 : vector<1x16xf32>
    %394 = arith.subf %351, %393 : vector<1x16xf32>
    %395 = vector.broadcast %392 : vector<1x16xf32> to vector<32x16xf32>
    %396 = arith.mulf %377, %395 : vector<32x16xf32>
    %397 = vector.broadcast %394 : vector<1x16xf32> to vector<32x16xf32>
    %398 = arith.addf %396, %397 : vector<32x16xf32>
    %cst_135 = arith.constant 0.000000e+00 : f32
    %399 = vector.broadcast %cst_135 : f32 to vector<32x16xf32>
    %400 = arith.maximumf %398, %399 : vector<32x16xf32>
    %c7 = arith.constant 7 : index
    %c0_136 = arith.constant 0 : index
    %c0_137 = arith.constant 0 : index
    %401 = vector.load %arg2[%c7, %c0_136, %c0_137] : memref<16x16x16xf32, #tpu.memory_space<vmem>>, vector<1x16x16xf32>
    %402 = vector.shape_cast %401 : vector<1x16x16xf32> to vector<16x16xf32>
    %c7_138 = arith.constant 7 : index
    %c0_139 = arith.constant 0 : index
    %c0_140 = arith.constant 0 : index
    %403 = vector.load %arg3[%c7_138, %c0_139, %c0_140] : memref<16x4x16xf32, #tpu.memory_space<vmem>>, vector<1x4x16xf32>
    %404 = vector.shape_cast %403 : vector<1x4x16xf32> to vector<4x16xf32>
    %405 = vector.extract_strided_slice %404 {offsets = [0, 0], sizes = [1, 16], strides = [1, 1]} : vector<4x16xf32> to vector<1x16xf32>
    %406 = vector.extract_strided_slice %404 {offsets = [1, 0], sizes = [1, 16], strides = [1, 1]} : vector<4x16xf32> to vector<1x16xf32>
    %407 = vector.extract_strided_slice %404 {offsets = [2, 0], sizes = [1, 16], strides = [1, 1]} : vector<4x16xf32> to vector<1x16xf32>
    %408 = vector.extract_strided_slice %404 {offsets = [3, 0], sizes = [1, 16], strides = [1, 1]} : vector<4x16xf32> to vector<1x16xf32>
    %cst_141 = arith.constant dense<0.000000e+00> : vector<32x16xf32>
    %409 = tpu.matmul %400, %402, %cst_141 {dimension_numbers = #tpu.dot_dimension_numbers<[1], [0], [0], [1], [0, 0, 1, 1], [], []>} : vector<32x16xf32>, vector<16x16xf32>, vector<32x16xf32> -> vector<32x16xf32>
    %410 = vector.broadcast %406 : vector<1x16xf32> to vector<32x16xf32>
    %411 = arith.mulf %409, %410 : vector<32x16xf32>
    %cst_142 = arith.constant dense<0.000000e+00> : vector<32xf32>
    %412 = vector.multi_reduction <add>, %411, %cst_142 [1] : vector<32x16xf32> to vector<32xf32>
    %413 = vector.shape_cast %412 : vector<32xf32> to vector<32x1xf32>
    %cst_143 = arith.constant dense<0.000000e+00> : vector<1x32xf32>
    %414 = tpu.matmul %405, %409, %cst_143 {dimension_numbers = #tpu.dot_dimension_numbers<[1], [1], [0], [0], [0, 0, 1, 0], [], []>} : vector<1x16xf32>, vector<32x16xf32>, vector<1x32xf32> -> vector<1x32xf32>
    %415 = vector.broadcast %413 : vector<32x1xf32> to vector<32x32xf32>
    %416 = vector.broadcast %414 : vector<1x32xf32> to vector<32x32xf32>
    %417 = arith.addf %415, %416 : vector<32x32xf32>
    %cst_144 = arith.constant 0.000000e+00 : f32
    %418 = vector.broadcast %cst_144 : f32 to vector<32x32xf32>
    %419 = arith.cmpf ogt, %417, %418 : vector<32x32xf32>
    %cst_145 = arith.constant 2.000000e-01 : f32
    %420 = vector.broadcast %cst_145 : f32 to vector<32x32xf32>
    %421 = arith.mulf %420, %417 : vector<32x32xf32>
    %422 = arith.select %419, %417, %421 : vector<32x32xi1>, vector<32x32xf32>
    %423 = arith.addf %422, %0 : vector<32x32xf32>
    %cst_146 = arith.constant dense<0xFF800000> : vector<32xf32>
    %424 = vector.multi_reduction <maximumf>, %423, %cst_146 [1] : vector<32x32xf32> to vector<32xf32>
    %425 = vector.shape_cast %424 : vector<32xf32> to vector<32x1xf32>
    %426 = vector.broadcast %425 : vector<32x1xf32> to vector<32x32xf32>
    %427 = arith.subf %423, %426 : vector<32x32xf32>
    %428 = math.exp %427 : vector<32x32xf32>
    %cst_147 = arith.constant dense<0.000000e+00> : vector<32xf32>
    %429 = vector.multi_reduction <add>, %428, %cst_147 [1] : vector<32x32xf32> to vector<32xf32>
    %430 = vector.shape_cast %429 : vector<32xf32> to vector<32x1xf32>
    %431 = tpu.reciprocal %430 {approx = true} : vector<32x1xf32> -> vector<32x1xf32>
    %432 = vector.broadcast %431 : vector<32x1xf32> to vector<32x32xf32>
    %433 = arith.mulf %428, %432 : vector<32x32xf32>
    %cst_148 = arith.constant dense<0.000000e+00> : vector<32x16xf32>
    %434 = tpu.matmul %433, %409, %cst_148 {dimension_numbers = #tpu.dot_dimension_numbers<[1], [0], [0], [1], [0, 0, 1, 1], [], []>} : vector<32x32xf32>, vector<32x16xf32>, vector<32x16xf32> -> vector<32x16xf32>
    %cst_149 = arith.constant dense<0.000000e+00> : vector<16xf32>
    %435 = vector.multi_reduction <add>, %434, %cst_149 [0] : vector<32x16xf32> to vector<16xf32>
    %436 = vector.shape_cast %435 : vector<16xf32> to vector<1x16xf32>
    %cst_150 = arith.constant 3.200000e+01 : f32
    %437 = vector.broadcast %cst_150 : f32 to vector<1x16xf32>
    %438 = arith.divf %436, %437 : vector<1x16xf32>
    %439 = vector.broadcast %438 : vector<1x16xf32> to vector<32x16xf32>
    %440 = arith.subf %434, %439 : vector<32x16xf32>
    %441 = arith.mulf %440, %440 : vector<32x16xf32>
    %cst_151 = arith.constant dense<0.000000e+00> : vector<16xf32>
    %442 = vector.multi_reduction <add>, %441, %cst_151 [0] : vector<32x16xf32> to vector<16xf32>
    %443 = vector.shape_cast %442 : vector<16xf32> to vector<1x16xf32>
    %cst_152 = arith.constant 3.200000e+01 : f32
    %444 = vector.broadcast %cst_152 : f32 to vector<1x16xf32>
    %445 = arith.divf %443, %444 : vector<1x16xf32>
    %cst_153 = arith.constant 9.99999974E-6 : f32
    %446 = vector.broadcast %cst_153 : f32 to vector<1x16xf32>
    %447 = arith.addf %445, %446 : vector<1x16xf32>
    %448 = math.rsqrt %447 : vector<1x16xf32>
    %449 = arith.mulf %407, %448 : vector<1x16xf32>
    %450 = arith.mulf %438, %449 : vector<1x16xf32>
    %451 = arith.subf %408, %450 : vector<1x16xf32>
    %452 = vector.broadcast %449 : vector<1x16xf32> to vector<32x16xf32>
    %453 = arith.mulf %434, %452 : vector<32x16xf32>
    %454 = vector.broadcast %451 : vector<1x16xf32> to vector<32x16xf32>
    %455 = arith.addf %453, %454 : vector<32x16xf32>
    %cst_154 = arith.constant 0.000000e+00 : f32
    %456 = vector.broadcast %cst_154 : f32 to vector<32x16xf32>
    %457 = arith.maximumf %455, %456 : vector<32x16xf32>
    %c8 = arith.constant 8 : index
    %c0_155 = arith.constant 0 : index
    %c0_156 = arith.constant 0 : index
    %458 = vector.load %arg2[%c8, %c0_155, %c0_156] : memref<16x16x16xf32, #tpu.memory_space<vmem>>, vector<1x16x16xf32>
    %459 = vector.shape_cast %458 : vector<1x16x16xf32> to vector<16x16xf32>
    %c8_157 = arith.constant 8 : index
    %c0_158 = arith.constant 0 : index
    %c0_159 = arith.constant 0 : index
    %460 = vector.load %arg3[%c8_157, %c0_158, %c0_159] : memref<16x4x16xf32, #tpu.memory_space<vmem>>, vector<1x4x16xf32>
    %461 = vector.shape_cast %460 : vector<1x4x16xf32> to vector<4x16xf32>
    %462 = vector.extract_strided_slice %461 {offsets = [0, 0], sizes = [1, 16], strides = [1, 1]} : vector<4x16xf32> to vector<1x16xf32>
    %463 = vector.extract_strided_slice %461 {offsets = [1, 0], sizes = [1, 16], strides = [1, 1]} : vector<4x16xf32> to vector<1x16xf32>
    %464 = vector.extract_strided_slice %461 {offsets = [2, 0], sizes = [1, 16], strides = [1, 1]} : vector<4x16xf32> to vector<1x16xf32>
    %465 = vector.extract_strided_slice %461 {offsets = [3, 0], sizes = [1, 16], strides = [1, 1]} : vector<4x16xf32> to vector<1x16xf32>
    %cst_160 = arith.constant dense<0.000000e+00> : vector<32x16xf32>
    %466 = tpu.matmul %457, %459, %cst_160 {dimension_numbers = #tpu.dot_dimension_numbers<[1], [0], [0], [1], [0, 0, 1, 1], [], []>} : vector<32x16xf32>, vector<16x16xf32>, vector<32x16xf32> -> vector<32x16xf32>
    %467 = vector.broadcast %463 : vector<1x16xf32> to vector<32x16xf32>
    %468 = arith.mulf %466, %467 : vector<32x16xf32>
    %cst_161 = arith.constant dense<0.000000e+00> : vector<32xf32>
    %469 = vector.multi_reduction <add>, %468, %cst_161 [1] : vector<32x16xf32> to vector<32xf32>
    %470 = vector.shape_cast %469 : vector<32xf32> to vector<32x1xf32>
    %cst_162 = arith.constant dense<0.000000e+00> : vector<1x32xf32>
    %471 = tpu.matmul %462, %466, %cst_162 {dimension_numbers = #tpu.dot_dimension_numbers<[1], [1], [0], [0], [0, 0, 1, 0], [], []>} : vector<1x16xf32>, vector<32x16xf32>, vector<1x32xf32> -> vector<1x32xf32>
    %472 = vector.broadcast %470 : vector<32x1xf32> to vector<32x32xf32>
    %473 = vector.broadcast %471 : vector<1x32xf32> to vector<32x32xf32>
    %474 = arith.addf %472, %473 : vector<32x32xf32>
    %cst_163 = arith.constant 0.000000e+00 : f32
    %475 = vector.broadcast %cst_163 : f32 to vector<32x32xf32>
    %476 = arith.cmpf ogt, %474, %475 : vector<32x32xf32>
    %cst_164 = arith.constant 2.000000e-01 : f32
    %477 = vector.broadcast %cst_164 : f32 to vector<32x32xf32>
    %478 = arith.mulf %477, %474 : vector<32x32xf32>
    %479 = arith.select %476, %474, %478 : vector<32x32xi1>, vector<32x32xf32>
    %480 = arith.addf %479, %0 : vector<32x32xf32>
    %cst_165 = arith.constant dense<0xFF800000> : vector<32xf32>
    %481 = vector.multi_reduction <maximumf>, %480, %cst_165 [1] : vector<32x32xf32> to vector<32xf32>
    %482 = vector.shape_cast %481 : vector<32xf32> to vector<32x1xf32>
    %483 = vector.broadcast %482 : vector<32x1xf32> to vector<32x32xf32>
    %484 = arith.subf %480, %483 : vector<32x32xf32>
    %485 = math.exp %484 : vector<32x32xf32>
    %cst_166 = arith.constant dense<0.000000e+00> : vector<32xf32>
    %486 = vector.multi_reduction <add>, %485, %cst_166 [1] : vector<32x32xf32> to vector<32xf32>
    %487 = vector.shape_cast %486 : vector<32xf32> to vector<32x1xf32>
    %488 = tpu.reciprocal %487 {approx = true} : vector<32x1xf32> -> vector<32x1xf32>
    %489 = vector.broadcast %488 : vector<32x1xf32> to vector<32x32xf32>
    %490 = arith.mulf %485, %489 : vector<32x32xf32>
    %cst_167 = arith.constant dense<0.000000e+00> : vector<32x16xf32>
    %491 = tpu.matmul %490, %466, %cst_167 {dimension_numbers = #tpu.dot_dimension_numbers<[1], [0], [0], [1], [0, 0, 1, 1], [], []>} : vector<32x32xf32>, vector<32x16xf32>, vector<32x16xf32> -> vector<32x16xf32>
    %cst_168 = arith.constant dense<0.000000e+00> : vector<16xf32>
    %492 = vector.multi_reduction <add>, %491, %cst_168 [0] : vector<32x16xf32> to vector<16xf32>
    %493 = vector.shape_cast %492 : vector<16xf32> to vector<1x16xf32>
    %cst_169 = arith.constant 3.200000e+01 : f32
    %494 = vector.broadcast %cst_169 : f32 to vector<1x16xf32>
    %495 = arith.divf %493, %494 : vector<1x16xf32>
    %496 = vector.broadcast %495 : vector<1x16xf32> to vector<32x16xf32>
    %497 = arith.subf %491, %496 : vector<32x16xf32>
    %498 = arith.mulf %497, %497 : vector<32x16xf32>
    %cst_170 = arith.constant dense<0.000000e+00> : vector<16xf32>
    %499 = vector.multi_reduction <add>, %498, %cst_170 [0] : vector<32x16xf32> to vector<16xf32>
    %500 = vector.shape_cast %499 : vector<16xf32> to vector<1x16xf32>
    %cst_171 = arith.constant 3.200000e+01 : f32
    %501 = vector.broadcast %cst_171 : f32 to vector<1x16xf32>
    %502 = arith.divf %500, %501 : vector<1x16xf32>
    %cst_172 = arith.constant 9.99999974E-6 : f32
    %503 = vector.broadcast %cst_172 : f32 to vector<1x16xf32>
    %504 = arith.addf %502, %503 : vector<1x16xf32>
    %505 = math.rsqrt %504 : vector<1x16xf32>
    %506 = arith.mulf %464, %505 : vector<1x16xf32>
    %507 = arith.mulf %495, %506 : vector<1x16xf32>
    %508 = arith.subf %465, %507 : vector<1x16xf32>
    %509 = vector.broadcast %506 : vector<1x16xf32> to vector<32x16xf32>
    %510 = arith.mulf %491, %509 : vector<32x16xf32>
    %511 = vector.broadcast %508 : vector<1x16xf32> to vector<32x16xf32>
    %512 = arith.addf %510, %511 : vector<32x16xf32>
    %cst_173 = arith.constant 0.000000e+00 : f32
    %513 = vector.broadcast %cst_173 : f32 to vector<32x16xf32>
    %514 = arith.maximumf %512, %513 : vector<32x16xf32>
    %c9 = arith.constant 9 : index
    %c0_174 = arith.constant 0 : index
    %c0_175 = arith.constant 0 : index
    %515 = vector.load %arg2[%c9, %c0_174, %c0_175] : memref<16x16x16xf32, #tpu.memory_space<vmem>>, vector<1x16x16xf32>
    %516 = vector.shape_cast %515 : vector<1x16x16xf32> to vector<16x16xf32>
    %c9_176 = arith.constant 9 : index
    %c0_177 = arith.constant 0 : index
    %c0_178 = arith.constant 0 : index
    %517 = vector.load %arg3[%c9_176, %c0_177, %c0_178] : memref<16x4x16xf32, #tpu.memory_space<vmem>>, vector<1x4x16xf32>
    %518 = vector.shape_cast %517 : vector<1x4x16xf32> to vector<4x16xf32>
    %519 = vector.extract_strided_slice %518 {offsets = [0, 0], sizes = [1, 16], strides = [1, 1]} : vector<4x16xf32> to vector<1x16xf32>
    %520 = vector.extract_strided_slice %518 {offsets = [1, 0], sizes = [1, 16], strides = [1, 1]} : vector<4x16xf32> to vector<1x16xf32>
    %521 = vector.extract_strided_slice %518 {offsets = [2, 0], sizes = [1, 16], strides = [1, 1]} : vector<4x16xf32> to vector<1x16xf32>
    %522 = vector.extract_strided_slice %518 {offsets = [3, 0], sizes = [1, 16], strides = [1, 1]} : vector<4x16xf32> to vector<1x16xf32>
    %cst_179 = arith.constant dense<0.000000e+00> : vector<32x16xf32>
    %523 = tpu.matmul %514, %516, %cst_179 {dimension_numbers = #tpu.dot_dimension_numbers<[1], [0], [0], [1], [0, 0, 1, 1], [], []>} : vector<32x16xf32>, vector<16x16xf32>, vector<32x16xf32> -> vector<32x16xf32>
    %524 = vector.broadcast %520 : vector<1x16xf32> to vector<32x16xf32>
    %525 = arith.mulf %523, %524 : vector<32x16xf32>
    %cst_180 = arith.constant dense<0.000000e+00> : vector<32xf32>
    %526 = vector.multi_reduction <add>, %525, %cst_180 [1] : vector<32x16xf32> to vector<32xf32>
    %527 = vector.shape_cast %526 : vector<32xf32> to vector<32x1xf32>
    %cst_181 = arith.constant dense<0.000000e+00> : vector<1x32xf32>
    %528 = tpu.matmul %519, %523, %cst_181 {dimension_numbers = #tpu.dot_dimension_numbers<[1], [1], [0], [0], [0, 0, 1, 0], [], []>} : vector<1x16xf32>, vector<32x16xf32>, vector<1x32xf32> -> vector<1x32xf32>
    %529 = vector.broadcast %527 : vector<32x1xf32> to vector<32x32xf32>
    %530 = vector.broadcast %528 : vector<1x32xf32> to vector<32x32xf32>
    %531 = arith.addf %529, %530 : vector<32x32xf32>
    %cst_182 = arith.constant 0.000000e+00 : f32
    %532 = vector.broadcast %cst_182 : f32 to vector<32x32xf32>
    %533 = arith.cmpf ogt, %531, %532 : vector<32x32xf32>
    %cst_183 = arith.constant 2.000000e-01 : f32
    %534 = vector.broadcast %cst_183 : f32 to vector<32x32xf32>
    %535 = arith.mulf %534, %531 : vector<32x32xf32>
    %536 = arith.select %533, %531, %535 : vector<32x32xi1>, vector<32x32xf32>
    %537 = arith.addf %536, %0 : vector<32x32xf32>
    %cst_184 = arith.constant dense<0xFF800000> : vector<32xf32>
    %538 = vector.multi_reduction <maximumf>, %537, %cst_184 [1] : vector<32x32xf32> to vector<32xf32>
    %539 = vector.shape_cast %538 : vector<32xf32> to vector<32x1xf32>
    %540 = vector.broadcast %539 : vector<32x1xf32> to vector<32x32xf32>
    %541 = arith.subf %537, %540 : vector<32x32xf32>
    %542 = math.exp %541 : vector<32x32xf32>
    %cst_185 = arith.constant dense<0.000000e+00> : vector<32xf32>
    %543 = vector.multi_reduction <add>, %542, %cst_185 [1] : vector<32x32xf32> to vector<32xf32>
    %544 = vector.shape_cast %543 : vector<32xf32> to vector<32x1xf32>
    %545 = tpu.reciprocal %544 {approx = true} : vector<32x1xf32> -> vector<32x1xf32>
    %546 = vector.broadcast %545 : vector<32x1xf32> to vector<32x32xf32>
    %547 = arith.mulf %542, %546 : vector<32x32xf32>
    %cst_186 = arith.constant dense<0.000000e+00> : vector<32x16xf32>
    %548 = tpu.matmul %547, %523, %cst_186 {dimension_numbers = #tpu.dot_dimension_numbers<[1], [0], [0], [1], [0, 0, 1, 1], [], []>} : vector<32x32xf32>, vector<32x16xf32>, vector<32x16xf32> -> vector<32x16xf32>
    %cst_187 = arith.constant dense<0.000000e+00> : vector<16xf32>
    %549 = vector.multi_reduction <add>, %548, %cst_187 [0] : vector<32x16xf32> to vector<16xf32>
    %550 = vector.shape_cast %549 : vector<16xf32> to vector<1x16xf32>
    %cst_188 = arith.constant 3.200000e+01 : f32
    %551 = vector.broadcast %cst_188 : f32 to vector<1x16xf32>
    %552 = arith.divf %550, %551 : vector<1x16xf32>
    %553 = vector.broadcast %552 : vector<1x16xf32> to vector<32x16xf32>
    %554 = arith.subf %548, %553 : vector<32x16xf32>
    %555 = arith.mulf %554, %554 : vector<32x16xf32>
    %cst_189 = arith.constant dense<0.000000e+00> : vector<16xf32>
    %556 = vector.multi_reduction <add>, %555, %cst_189 [0] : vector<32x16xf32> to vector<16xf32>
    %557 = vector.shape_cast %556 : vector<16xf32> to vector<1x16xf32>
    %cst_190 = arith.constant 3.200000e+01 : f32
    %558 = vector.broadcast %cst_190 : f32 to vector<1x16xf32>
    %559 = arith.divf %557, %558 : vector<1x16xf32>
    %cst_191 = arith.constant 9.99999974E-6 : f32
    %560 = vector.broadcast %cst_191 : f32 to vector<1x16xf32>
    %561 = arith.addf %559, %560 : vector<1x16xf32>
    %562 = math.rsqrt %561 : vector<1x16xf32>
    %563 = arith.mulf %521, %562 : vector<1x16xf32>
    %564 = arith.mulf %552, %563 : vector<1x16xf32>
    %565 = arith.subf %522, %564 : vector<1x16xf32>
    %566 = vector.broadcast %563 : vector<1x16xf32> to vector<32x16xf32>
    %567 = arith.mulf %548, %566 : vector<32x16xf32>
    %568 = vector.broadcast %565 : vector<1x16xf32> to vector<32x16xf32>
    %569 = arith.addf %567, %568 : vector<32x16xf32>
    %cst_192 = arith.constant 0.000000e+00 : f32
    %570 = vector.broadcast %cst_192 : f32 to vector<32x16xf32>
    %571 = arith.maximumf %569, %570 : vector<32x16xf32>
    %c10 = arith.constant 10 : index
    %c0_193 = arith.constant 0 : index
    %c0_194 = arith.constant 0 : index
    %572 = vector.load %arg2[%c10, %c0_193, %c0_194] : memref<16x16x16xf32, #tpu.memory_space<vmem>>, vector<1x16x16xf32>
    %573 = vector.shape_cast %572 : vector<1x16x16xf32> to vector<16x16xf32>
    %c10_195 = arith.constant 10 : index
    %c0_196 = arith.constant 0 : index
    %c0_197 = arith.constant 0 : index
    %574 = vector.load %arg3[%c10_195, %c0_196, %c0_197] : memref<16x4x16xf32, #tpu.memory_space<vmem>>, vector<1x4x16xf32>
    %575 = vector.shape_cast %574 : vector<1x4x16xf32> to vector<4x16xf32>
    %576 = vector.extract_strided_slice %575 {offsets = [0, 0], sizes = [1, 16], strides = [1, 1]} : vector<4x16xf32> to vector<1x16xf32>
    %577 = vector.extract_strided_slice %575 {offsets = [1, 0], sizes = [1, 16], strides = [1, 1]} : vector<4x16xf32> to vector<1x16xf32>
    %578 = vector.extract_strided_slice %575 {offsets = [2, 0], sizes = [1, 16], strides = [1, 1]} : vector<4x16xf32> to vector<1x16xf32>
    %579 = vector.extract_strided_slice %575 {offsets = [3, 0], sizes = [1, 16], strides = [1, 1]} : vector<4x16xf32> to vector<1x16xf32>
    %cst_198 = arith.constant dense<0.000000e+00> : vector<32x16xf32>
    %580 = tpu.matmul %571, %573, %cst_198 {dimension_numbers = #tpu.dot_dimension_numbers<[1], [0], [0], [1], [0, 0, 1, 1], [], []>} : vector<32x16xf32>, vector<16x16xf32>, vector<32x16xf32> -> vector<32x16xf32>
    %581 = vector.broadcast %577 : vector<1x16xf32> to vector<32x16xf32>
    %582 = arith.mulf %580, %581 : vector<32x16xf32>
    %cst_199 = arith.constant dense<0.000000e+00> : vector<32xf32>
    %583 = vector.multi_reduction <add>, %582, %cst_199 [1] : vector<32x16xf32> to vector<32xf32>
    %584 = vector.shape_cast %583 : vector<32xf32> to vector<32x1xf32>
    %cst_200 = arith.constant dense<0.000000e+00> : vector<1x32xf32>
    %585 = tpu.matmul %576, %580, %cst_200 {dimension_numbers = #tpu.dot_dimension_numbers<[1], [1], [0], [0], [0, 0, 1, 0], [], []>} : vector<1x16xf32>, vector<32x16xf32>, vector<1x32xf32> -> vector<1x32xf32>
    %586 = vector.broadcast %584 : vector<32x1xf32> to vector<32x32xf32>
    %587 = vector.broadcast %585 : vector<1x32xf32> to vector<32x32xf32>
    %588 = arith.addf %586, %587 : vector<32x32xf32>
    %cst_201 = arith.constant 0.000000e+00 : f32
    %589 = vector.broadcast %cst_201 : f32 to vector<32x32xf32>
    %590 = arith.cmpf ogt, %588, %589 : vector<32x32xf32>
    %cst_202 = arith.constant 2.000000e-01 : f32
    %591 = vector.broadcast %cst_202 : f32 to vector<32x32xf32>
    %592 = arith.mulf %591, %588 : vector<32x32xf32>
    %593 = arith.select %590, %588, %592 : vector<32x32xi1>, vector<32x32xf32>
    %594 = arith.addf %593, %0 : vector<32x32xf32>
    %cst_203 = arith.constant dense<0xFF800000> : vector<32xf32>
    %595 = vector.multi_reduction <maximumf>, %594, %cst_203 [1] : vector<32x32xf32> to vector<32xf32>
    %596 = vector.shape_cast %595 : vector<32xf32> to vector<32x1xf32>
    %597 = vector.broadcast %596 : vector<32x1xf32> to vector<32x32xf32>
    %598 = arith.subf %594, %597 : vector<32x32xf32>
    %599 = math.exp %598 : vector<32x32xf32>
    %cst_204 = arith.constant dense<0.000000e+00> : vector<32xf32>
    %600 = vector.multi_reduction <add>, %599, %cst_204 [1] : vector<32x32xf32> to vector<32xf32>
    %601 = vector.shape_cast %600 : vector<32xf32> to vector<32x1xf32>
    %602 = tpu.reciprocal %601 {approx = true} : vector<32x1xf32> -> vector<32x1xf32>
    %603 = vector.broadcast %602 : vector<32x1xf32> to vector<32x32xf32>
    %604 = arith.mulf %599, %603 : vector<32x32xf32>
    %cst_205 = arith.constant dense<0.000000e+00> : vector<32x16xf32>
    %605 = tpu.matmul %604, %580, %cst_205 {dimension_numbers = #tpu.dot_dimension_numbers<[1], [0], [0], [1], [0, 0, 1, 1], [], []>} : vector<32x32xf32>, vector<32x16xf32>, vector<32x16xf32> -> vector<32x16xf32>
    %cst_206 = arith.constant dense<0.000000e+00> : vector<16xf32>
    %606 = vector.multi_reduction <add>, %605, %cst_206 [0] : vector<32x16xf32> to vector<16xf32>
    %607 = vector.shape_cast %606 : vector<16xf32> to vector<1x16xf32>
    %cst_207 = arith.constant 3.200000e+01 : f32
    %608 = vector.broadcast %cst_207 : f32 to vector<1x16xf32>
    %609 = arith.divf %607, %608 : vector<1x16xf32>
    %610 = vector.broadcast %609 : vector<1x16xf32> to vector<32x16xf32>
    %611 = arith.subf %605, %610 : vector<32x16xf32>
    %612 = arith.mulf %611, %611 : vector<32x16xf32>
    %cst_208 = arith.constant dense<0.000000e+00> : vector<16xf32>
    %613 = vector.multi_reduction <add>, %612, %cst_208 [0] : vector<32x16xf32> to vector<16xf32>
    %614 = vector.shape_cast %613 : vector<16xf32> to vector<1x16xf32>
    %cst_209 = arith.constant 3.200000e+01 : f32
    %615 = vector.broadcast %cst_209 : f32 to vector<1x16xf32>
    %616 = arith.divf %614, %615 : vector<1x16xf32>
    %cst_210 = arith.constant 9.99999974E-6 : f32
    %617 = vector.broadcast %cst_210 : f32 to vector<1x16xf32>
    %618 = arith.addf %616, %617 : vector<1x16xf32>
    %619 = math.rsqrt %618 : vector<1x16xf32>
    %620 = arith.mulf %578, %619 : vector<1x16xf32>
    %621 = arith.mulf %609, %620 : vector<1x16xf32>
    %622 = arith.subf %579, %621 : vector<1x16xf32>
    %623 = vector.broadcast %620 : vector<1x16xf32> to vector<32x16xf32>
    %624 = arith.mulf %605, %623 : vector<32x16xf32>
    %625 = vector.broadcast %622 : vector<1x16xf32> to vector<32x16xf32>
    %626 = arith.addf %624, %625 : vector<32x16xf32>
    %cst_211 = arith.constant 0.000000e+00 : f32
    %627 = vector.broadcast %cst_211 : f32 to vector<32x16xf32>
    %628 = arith.maximumf %626, %627 : vector<32x16xf32>
    %c11 = arith.constant 11 : index
    %c0_212 = arith.constant 0 : index
    %c0_213 = arith.constant 0 : index
    %629 = vector.load %arg2[%c11, %c0_212, %c0_213] : memref<16x16x16xf32, #tpu.memory_space<vmem>>, vector<1x16x16xf32>
    %630 = vector.shape_cast %629 : vector<1x16x16xf32> to vector<16x16xf32>
    %c11_214 = arith.constant 11 : index
    %c0_215 = arith.constant 0 : index
    %c0_216 = arith.constant 0 : index
    %631 = vector.load %arg3[%c11_214, %c0_215, %c0_216] : memref<16x4x16xf32, #tpu.memory_space<vmem>>, vector<1x4x16xf32>
    %632 = vector.shape_cast %631 : vector<1x4x16xf32> to vector<4x16xf32>
    %633 = vector.extract_strided_slice %632 {offsets = [0, 0], sizes = [1, 16], strides = [1, 1]} : vector<4x16xf32> to vector<1x16xf32>
    %634 = vector.extract_strided_slice %632 {offsets = [1, 0], sizes = [1, 16], strides = [1, 1]} : vector<4x16xf32> to vector<1x16xf32>
    %635 = vector.extract_strided_slice %632 {offsets = [2, 0], sizes = [1, 16], strides = [1, 1]} : vector<4x16xf32> to vector<1x16xf32>
    %636 = vector.extract_strided_slice %632 {offsets = [3, 0], sizes = [1, 16], strides = [1, 1]} : vector<4x16xf32> to vector<1x16xf32>
    %cst_217 = arith.constant dense<0.000000e+00> : vector<32x16xf32>
    %637 = tpu.matmul %628, %630, %cst_217 {dimension_numbers = #tpu.dot_dimension_numbers<[1], [0], [0], [1], [0, 0, 1, 1], [], []>} : vector<32x16xf32>, vector<16x16xf32>, vector<32x16xf32> -> vector<32x16xf32>
    %638 = vector.broadcast %634 : vector<1x16xf32> to vector<32x16xf32>
    %639 = arith.mulf %637, %638 : vector<32x16xf32>
    %cst_218 = arith.constant dense<0.000000e+00> : vector<32xf32>
    %640 = vector.multi_reduction <add>, %639, %cst_218 [1] : vector<32x16xf32> to vector<32xf32>
    %641 = vector.shape_cast %640 : vector<32xf32> to vector<32x1xf32>
    %cst_219 = arith.constant dense<0.000000e+00> : vector<1x32xf32>
    %642 = tpu.matmul %633, %637, %cst_219 {dimension_numbers = #tpu.dot_dimension_numbers<[1], [1], [0], [0], [0, 0, 1, 0], [], []>} : vector<1x16xf32>, vector<32x16xf32>, vector<1x32xf32> -> vector<1x32xf32>
    %643 = vector.broadcast %641 : vector<32x1xf32> to vector<32x32xf32>
    %644 = vector.broadcast %642 : vector<1x32xf32> to vector<32x32xf32>
    %645 = arith.addf %643, %644 : vector<32x32xf32>
    %cst_220 = arith.constant 0.000000e+00 : f32
    %646 = vector.broadcast %cst_220 : f32 to vector<32x32xf32>
    %647 = arith.cmpf ogt, %645, %646 : vector<32x32xf32>
    %cst_221 = arith.constant 2.000000e-01 : f32
    %648 = vector.broadcast %cst_221 : f32 to vector<32x32xf32>
    %649 = arith.mulf %648, %645 : vector<32x32xf32>
    %650 = arith.select %647, %645, %649 : vector<32x32xi1>, vector<32x32xf32>
    %651 = arith.addf %650, %0 : vector<32x32xf32>
    %cst_222 = arith.constant dense<0xFF800000> : vector<32xf32>
    %652 = vector.multi_reduction <maximumf>, %651, %cst_222 [1] : vector<32x32xf32> to vector<32xf32>
    %653 = vector.shape_cast %652 : vector<32xf32> to vector<32x1xf32>
    %654 = vector.broadcast %653 : vector<32x1xf32> to vector<32x32xf32>
    %655 = arith.subf %651, %654 : vector<32x32xf32>
    %656 = math.exp %655 : vector<32x32xf32>
    %cst_223 = arith.constant dense<0.000000e+00> : vector<32xf32>
    %657 = vector.multi_reduction <add>, %656, %cst_223 [1] : vector<32x32xf32> to vector<32xf32>
    %658 = vector.shape_cast %657 : vector<32xf32> to vector<32x1xf32>
    %659 = tpu.reciprocal %658 {approx = true} : vector<32x1xf32> -> vector<32x1xf32>
    %660 = vector.broadcast %659 : vector<32x1xf32> to vector<32x32xf32>
    %661 = arith.mulf %656, %660 : vector<32x32xf32>
    %cst_224 = arith.constant dense<0.000000e+00> : vector<32x16xf32>
    %662 = tpu.matmul %661, %637, %cst_224 {dimension_numbers = #tpu.dot_dimension_numbers<[1], [0], [0], [1], [0, 0, 1, 1], [], []>} : vector<32x32xf32>, vector<32x16xf32>, vector<32x16xf32> -> vector<32x16xf32>
    %cst_225 = arith.constant dense<0.000000e+00> : vector<16xf32>
    %663 = vector.multi_reduction <add>, %662, %cst_225 [0] : vector<32x16xf32> to vector<16xf32>
    %664 = vector.shape_cast %663 : vector<16xf32> to vector<1x16xf32>
    %cst_226 = arith.constant 3.200000e+01 : f32
    %665 = vector.broadcast %cst_226 : f32 to vector<1x16xf32>
    %666 = arith.divf %664, %665 : vector<1x16xf32>
    %667 = vector.broadcast %666 : vector<1x16xf32> to vector<32x16xf32>
    %668 = arith.subf %662, %667 : vector<32x16xf32>
    %669 = arith.mulf %668, %668 : vector<32x16xf32>
    %cst_227 = arith.constant dense<0.000000e+00> : vector<16xf32>
    %670 = vector.multi_reduction <add>, %669, %cst_227 [0] : vector<32x16xf32> to vector<16xf32>
    %671 = vector.shape_cast %670 : vector<16xf32> to vector<1x16xf32>
    %cst_228 = arith.constant 3.200000e+01 : f32
    %672 = vector.broadcast %cst_228 : f32 to vector<1x16xf32>
    %673 = arith.divf %671, %672 : vector<1x16xf32>
    %cst_229 = arith.constant 9.99999974E-6 : f32
    %674 = vector.broadcast %cst_229 : f32 to vector<1x16xf32>
    %675 = arith.addf %673, %674 : vector<1x16xf32>
    %676 = math.rsqrt %675 : vector<1x16xf32>
    %677 = arith.mulf %635, %676 : vector<1x16xf32>
    %678 = arith.mulf %666, %677 : vector<1x16xf32>
    %679 = arith.subf %636, %678 : vector<1x16xf32>
    %680 = vector.broadcast %677 : vector<1x16xf32> to vector<32x16xf32>
    %681 = arith.mulf %662, %680 : vector<32x16xf32>
    %682 = vector.broadcast %679 : vector<1x16xf32> to vector<32x16xf32>
    %683 = arith.addf %681, %682 : vector<32x16xf32>
    %cst_230 = arith.constant 0.000000e+00 : f32
    %684 = vector.broadcast %cst_230 : f32 to vector<32x16xf32>
    %685 = arith.maximumf %683, %684 : vector<32x16xf32>
    %c12 = arith.constant 12 : index
    %c0_231 = arith.constant 0 : index
    %c0_232 = arith.constant 0 : index
    %686 = vector.load %arg2[%c12, %c0_231, %c0_232] : memref<16x16x16xf32, #tpu.memory_space<vmem>>, vector<1x16x16xf32>
    %687 = vector.shape_cast %686 : vector<1x16x16xf32> to vector<16x16xf32>
    %c12_233 = arith.constant 12 : index
    %c0_234 = arith.constant 0 : index
    %c0_235 = arith.constant 0 : index
    %688 = vector.load %arg3[%c12_233, %c0_234, %c0_235] : memref<16x4x16xf32, #tpu.memory_space<vmem>>, vector<1x4x16xf32>
    %689 = vector.shape_cast %688 : vector<1x4x16xf32> to vector<4x16xf32>
    %690 = vector.extract_strided_slice %689 {offsets = [0, 0], sizes = [1, 16], strides = [1, 1]} : vector<4x16xf32> to vector<1x16xf32>
    %691 = vector.extract_strided_slice %689 {offsets = [1, 0], sizes = [1, 16], strides = [1, 1]} : vector<4x16xf32> to vector<1x16xf32>
    %692 = vector.extract_strided_slice %689 {offsets = [2, 0], sizes = [1, 16], strides = [1, 1]} : vector<4x16xf32> to vector<1x16xf32>
    %693 = vector.extract_strided_slice %689 {offsets = [3, 0], sizes = [1, 16], strides = [1, 1]} : vector<4x16xf32> to vector<1x16xf32>
    %cst_236 = arith.constant dense<0.000000e+00> : vector<32x16xf32>
    %694 = tpu.matmul %685, %687, %cst_236 {dimension_numbers = #tpu.dot_dimension_numbers<[1], [0], [0], [1], [0, 0, 1, 1], [], []>} : vector<32x16xf32>, vector<16x16xf32>, vector<32x16xf32> -> vector<32x16xf32>
    %695 = vector.broadcast %691 : vector<1x16xf32> to vector<32x16xf32>
    %696 = arith.mulf %694, %695 : vector<32x16xf32>
    %cst_237 = arith.constant dense<0.000000e+00> : vector<32xf32>
    %697 = vector.multi_reduction <add>, %696, %cst_237 [1] : vector<32x16xf32> to vector<32xf32>
    %698 = vector.shape_cast %697 : vector<32xf32> to vector<32x1xf32>
    %cst_238 = arith.constant dense<0.000000e+00> : vector<1x32xf32>
    %699 = tpu.matmul %690, %694, %cst_238 {dimension_numbers = #tpu.dot_dimension_numbers<[1], [1], [0], [0], [0, 0, 1, 0], [], []>} : vector<1x16xf32>, vector<32x16xf32>, vector<1x32xf32> -> vector<1x32xf32>
    %700 = vector.broadcast %698 : vector<32x1xf32> to vector<32x32xf32>
    %701 = vector.broadcast %699 : vector<1x32xf32> to vector<32x32xf32>
    %702 = arith.addf %700, %701 : vector<32x32xf32>
    %cst_239 = arith.constant 0.000000e+00 : f32
    %703 = vector.broadcast %cst_239 : f32 to vector<32x32xf32>
    %704 = arith.cmpf ogt, %702, %703 : vector<32x32xf32>
    %cst_240 = arith.constant 2.000000e-01 : f32
    %705 = vector.broadcast %cst_240 : f32 to vector<32x32xf32>
    %706 = arith.mulf %705, %702 : vector<32x32xf32>
    %707 = arith.select %704, %702, %706 : vector<32x32xi1>, vector<32x32xf32>
    %708 = arith.addf %707, %0 : vector<32x32xf32>
    %cst_241 = arith.constant dense<0xFF800000> : vector<32xf32>
    %709 = vector.multi_reduction <maximumf>, %708, %cst_241 [1] : vector<32x32xf32> to vector<32xf32>
    %710 = vector.shape_cast %709 : vector<32xf32> to vector<32x1xf32>
    %711 = vector.broadcast %710 : vector<32x1xf32> to vector<32x32xf32>
    %712 = arith.subf %708, %711 : vector<32x32xf32>
    %713 = math.exp %712 : vector<32x32xf32>
    %cst_242 = arith.constant dense<0.000000e+00> : vector<32xf32>
    %714 = vector.multi_reduction <add>, %713, %cst_242 [1] : vector<32x32xf32> to vector<32xf32>
    %715 = vector.shape_cast %714 : vector<32xf32> to vector<32x1xf32>
    %716 = tpu.reciprocal %715 {approx = true} : vector<32x1xf32> -> vector<32x1xf32>
    %717 = vector.broadcast %716 : vector<32x1xf32> to vector<32x32xf32>
    %718 = arith.mulf %713, %717 : vector<32x32xf32>
    %cst_243 = arith.constant dense<0.000000e+00> : vector<32x16xf32>
    %719 = tpu.matmul %718, %694, %cst_243 {dimension_numbers = #tpu.dot_dimension_numbers<[1], [0], [0], [1], [0, 0, 1, 1], [], []>} : vector<32x32xf32>, vector<32x16xf32>, vector<32x16xf32> -> vector<32x16xf32>
    %cst_244 = arith.constant dense<0.000000e+00> : vector<16xf32>
    %720 = vector.multi_reduction <add>, %719, %cst_244 [0] : vector<32x16xf32> to vector<16xf32>
    %721 = vector.shape_cast %720 : vector<16xf32> to vector<1x16xf32>
    %cst_245 = arith.constant 3.200000e+01 : f32
    %722 = vector.broadcast %cst_245 : f32 to vector<1x16xf32>
    %723 = arith.divf %721, %722 : vector<1x16xf32>
    %724 = vector.broadcast %723 : vector<1x16xf32> to vector<32x16xf32>
    %725 = arith.subf %719, %724 : vector<32x16xf32>
    %726 = arith.mulf %725, %725 : vector<32x16xf32>
    %cst_246 = arith.constant dense<0.000000e+00> : vector<16xf32>
    %727 = vector.multi_reduction <add>, %726, %cst_246 [0] : vector<32x16xf32> to vector<16xf32>
    %728 = vector.shape_cast %727 : vector<16xf32> to vector<1x16xf32>
    %cst_247 = arith.constant 3.200000e+01 : f32
    %729 = vector.broadcast %cst_247 : f32 to vector<1x16xf32>
    %730 = arith.divf %728, %729 : vector<1x16xf32>
    %cst_248 = arith.constant 9.99999974E-6 : f32
    %731 = vector.broadcast %cst_248 : f32 to vector<1x16xf32>
    %732 = arith.addf %730, %731 : vector<1x16xf32>
    %733 = math.rsqrt %732 : vector<1x16xf32>
    %734 = arith.mulf %692, %733 : vector<1x16xf32>
    %735 = arith.mulf %723, %734 : vector<1x16xf32>
    %736 = arith.subf %693, %735 : vector<1x16xf32>
    %737 = vector.broadcast %734 : vector<1x16xf32> to vector<32x16xf32>
    %738 = arith.mulf %719, %737 : vector<32x16xf32>
    %739 = vector.broadcast %736 : vector<1x16xf32> to vector<32x16xf32>
    %740 = arith.addf %738, %739 : vector<32x16xf32>
    %cst_249 = arith.constant 0.000000e+00 : f32
    %741 = vector.broadcast %cst_249 : f32 to vector<32x16xf32>
    %742 = arith.maximumf %740, %741 : vector<32x16xf32>
    %c13 = arith.constant 13 : index
    %c0_250 = arith.constant 0 : index
    %c0_251 = arith.constant 0 : index
    %743 = vector.load %arg2[%c13, %c0_250, %c0_251] : memref<16x16x16xf32, #tpu.memory_space<vmem>>, vector<1x16x16xf32>
    %744 = vector.shape_cast %743 : vector<1x16x16xf32> to vector<16x16xf32>
    %c13_252 = arith.constant 13 : index
    %c0_253 = arith.constant 0 : index
    %c0_254 = arith.constant 0 : index
    %745 = vector.load %arg3[%c13_252, %c0_253, %c0_254] : memref<16x4x16xf32, #tpu.memory_space<vmem>>, vector<1x4x16xf32>
    %746 = vector.shape_cast %745 : vector<1x4x16xf32> to vector<4x16xf32>
    %747 = vector.extract_strided_slice %746 {offsets = [0, 0], sizes = [1, 16], strides = [1, 1]} : vector<4x16xf32> to vector<1x16xf32>
    %748 = vector.extract_strided_slice %746 {offsets = [1, 0], sizes = [1, 16], strides = [1, 1]} : vector<4x16xf32> to vector<1x16xf32>
    %749 = vector.extract_strided_slice %746 {offsets = [2, 0], sizes = [1, 16], strides = [1, 1]} : vector<4x16xf32> to vector<1x16xf32>
    %750 = vector.extract_strided_slice %746 {offsets = [3, 0], sizes = [1, 16], strides = [1, 1]} : vector<4x16xf32> to vector<1x16xf32>
    %cst_255 = arith.constant dense<0.000000e+00> : vector<32x16xf32>
    %751 = tpu.matmul %742, %744, %cst_255 {dimension_numbers = #tpu.dot_dimension_numbers<[1], [0], [0], [1], [0, 0, 1, 1], [], []>} : vector<32x16xf32>, vector<16x16xf32>, vector<32x16xf32> -> vector<32x16xf32>
    %752 = vector.broadcast %748 : vector<1x16xf32> to vector<32x16xf32>
    %753 = arith.mulf %751, %752 : vector<32x16xf32>
    %cst_256 = arith.constant dense<0.000000e+00> : vector<32xf32>
    %754 = vector.multi_reduction <add>, %753, %cst_256 [1] : vector<32x16xf32> to vector<32xf32>
    %755 = vector.shape_cast %754 : vector<32xf32> to vector<32x1xf32>
    %cst_257 = arith.constant dense<0.000000e+00> : vector<1x32xf32>
    %756 = tpu.matmul %747, %751, %cst_257 {dimension_numbers = #tpu.dot_dimension_numbers<[1], [1], [0], [0], [0, 0, 1, 0], [], []>} : vector<1x16xf32>, vector<32x16xf32>, vector<1x32xf32> -> vector<1x32xf32>
    %757 = vector.broadcast %755 : vector<32x1xf32> to vector<32x32xf32>
    %758 = vector.broadcast %756 : vector<1x32xf32> to vector<32x32xf32>
    %759 = arith.addf %757, %758 : vector<32x32xf32>
    %cst_258 = arith.constant 0.000000e+00 : f32
    %760 = vector.broadcast %cst_258 : f32 to vector<32x32xf32>
    %761 = arith.cmpf ogt, %759, %760 : vector<32x32xf32>
    %cst_259 = arith.constant 2.000000e-01 : f32
    %762 = vector.broadcast %cst_259 : f32 to vector<32x32xf32>
    %763 = arith.mulf %762, %759 : vector<32x32xf32>
    %764 = arith.select %761, %759, %763 : vector<32x32xi1>, vector<32x32xf32>
    %765 = arith.addf %764, %0 : vector<32x32xf32>
    %cst_260 = arith.constant dense<0xFF800000> : vector<32xf32>
    %766 = vector.multi_reduction <maximumf>, %765, %cst_260 [1] : vector<32x32xf32> to vector<32xf32>
    %767 = vector.shape_cast %766 : vector<32xf32> to vector<32x1xf32>
    %768 = vector.broadcast %767 : vector<32x1xf32> to vector<32x32xf32>
    %769 = arith.subf %765, %768 : vector<32x32xf32>
    %770 = math.exp %769 : vector<32x32xf32>
    %cst_261 = arith.constant dense<0.000000e+00> : vector<32xf32>
    %771 = vector.multi_reduction <add>, %770, %cst_261 [1] : vector<32x32xf32> to vector<32xf32>
    %772 = vector.shape_cast %771 : vector<32xf32> to vector<32x1xf32>
    %773 = tpu.reciprocal %772 {approx = true} : vector<32x1xf32> -> vector<32x1xf32>
    %774 = vector.broadcast %773 : vector<32x1xf32> to vector<32x32xf32>
    %775 = arith.mulf %770, %774 : vector<32x32xf32>
    %cst_262 = arith.constant dense<0.000000e+00> : vector<32x16xf32>
    %776 = tpu.matmul %775, %751, %cst_262 {dimension_numbers = #tpu.dot_dimension_numbers<[1], [0], [0], [1], [0, 0, 1, 1], [], []>} : vector<32x32xf32>, vector<32x16xf32>, vector<32x16xf32> -> vector<32x16xf32>
    %cst_263 = arith.constant dense<0.000000e+00> : vector<16xf32>
    %777 = vector.multi_reduction <add>, %776, %cst_263 [0] : vector<32x16xf32> to vector<16xf32>
    %778 = vector.shape_cast %777 : vector<16xf32> to vector<1x16xf32>
    %cst_264 = arith.constant 3.200000e+01 : f32
    %779 = vector.broadcast %cst_264 : f32 to vector<1x16xf32>
    %780 = arith.divf %778, %779 : vector<1x16xf32>
    %781 = vector.broadcast %780 : vector<1x16xf32> to vector<32x16xf32>
    %782 = arith.subf %776, %781 : vector<32x16xf32>
    %783 = arith.mulf %782, %782 : vector<32x16xf32>
    %cst_265 = arith.constant dense<0.000000e+00> : vector<16xf32>
    %784 = vector.multi_reduction <add>, %783, %cst_265 [0] : vector<32x16xf32> to vector<16xf32>
    %785 = vector.shape_cast %784 : vector<16xf32> to vector<1x16xf32>
    %cst_266 = arith.constant 3.200000e+01 : f32
    %786 = vector.broadcast %cst_266 : f32 to vector<1x16xf32>
    %787 = arith.divf %785, %786 : vector<1x16xf32>
    %cst_267 = arith.constant 9.99999974E-6 : f32
    %788 = vector.broadcast %cst_267 : f32 to vector<1x16xf32>
    %789 = arith.addf %787, %788 : vector<1x16xf32>
    %790 = math.rsqrt %789 : vector<1x16xf32>
    %791 = arith.mulf %749, %790 : vector<1x16xf32>
    %792 = arith.mulf %780, %791 : vector<1x16xf32>
    %793 = arith.subf %750, %792 : vector<1x16xf32>
    %794 = vector.broadcast %791 : vector<1x16xf32> to vector<32x16xf32>
    %795 = arith.mulf %776, %794 : vector<32x16xf32>
    %796 = vector.broadcast %793 : vector<1x16xf32> to vector<32x16xf32>
    %797 = arith.addf %795, %796 : vector<32x16xf32>
    %cst_268 = arith.constant 0.000000e+00 : f32
    %798 = vector.broadcast %cst_268 : f32 to vector<32x16xf32>
    %799 = arith.maximumf %797, %798 : vector<32x16xf32>
    %c14 = arith.constant 14 : index
    %c0_269 = arith.constant 0 : index
    %c0_270 = arith.constant 0 : index
    %800 = vector.load %arg2[%c14, %c0_269, %c0_270] : memref<16x16x16xf32, #tpu.memory_space<vmem>>, vector<1x16x16xf32>
    %801 = vector.shape_cast %800 : vector<1x16x16xf32> to vector<16x16xf32>
    %c14_271 = arith.constant 14 : index
    %c0_272 = arith.constant 0 : index
    %c0_273 = arith.constant 0 : index
    %802 = vector.load %arg3[%c14_271, %c0_272, %c0_273] : memref<16x4x16xf32, #tpu.memory_space<vmem>>, vector<1x4x16xf32>
    %803 = vector.shape_cast %802 : vector<1x4x16xf32> to vector<4x16xf32>
    %804 = vector.extract_strided_slice %803 {offsets = [0, 0], sizes = [1, 16], strides = [1, 1]} : vector<4x16xf32> to vector<1x16xf32>
    %805 = vector.extract_strided_slice %803 {offsets = [1, 0], sizes = [1, 16], strides = [1, 1]} : vector<4x16xf32> to vector<1x16xf32>
    %806 = vector.extract_strided_slice %803 {offsets = [2, 0], sizes = [1, 16], strides = [1, 1]} : vector<4x16xf32> to vector<1x16xf32>
    %807 = vector.extract_strided_slice %803 {offsets = [3, 0], sizes = [1, 16], strides = [1, 1]} : vector<4x16xf32> to vector<1x16xf32>
    %cst_274 = arith.constant dense<0.000000e+00> : vector<32x16xf32>
    %808 = tpu.matmul %799, %801, %cst_274 {dimension_numbers = #tpu.dot_dimension_numbers<[1], [0], [0], [1], [0, 0, 1, 1], [], []>} : vector<32x16xf32>, vector<16x16xf32>, vector<32x16xf32> -> vector<32x16xf32>
    %809 = vector.broadcast %805 : vector<1x16xf32> to vector<32x16xf32>
    %810 = arith.mulf %808, %809 : vector<32x16xf32>
    %cst_275 = arith.constant dense<0.000000e+00> : vector<32xf32>
    %811 = vector.multi_reduction <add>, %810, %cst_275 [1] : vector<32x16xf32> to vector<32xf32>
    %812 = vector.shape_cast %811 : vector<32xf32> to vector<32x1xf32>
    %cst_276 = arith.constant dense<0.000000e+00> : vector<1x32xf32>
    %813 = tpu.matmul %804, %808, %cst_276 {dimension_numbers = #tpu.dot_dimension_numbers<[1], [1], [0], [0], [0, 0, 1, 0], [], []>} : vector<1x16xf32>, vector<32x16xf32>, vector<1x32xf32> -> vector<1x32xf32>
    %814 = vector.broadcast %812 : vector<32x1xf32> to vector<32x32xf32>
    %815 = vector.broadcast %813 : vector<1x32xf32> to vector<32x32xf32>
    %816 = arith.addf %814, %815 : vector<32x32xf32>
    %cst_277 = arith.constant 0.000000e+00 : f32
    %817 = vector.broadcast %cst_277 : f32 to vector<32x32xf32>
    %818 = arith.cmpf ogt, %816, %817 : vector<32x32xf32>
    %cst_278 = arith.constant 2.000000e-01 : f32
    %819 = vector.broadcast %cst_278 : f32 to vector<32x32xf32>
    %820 = arith.mulf %819, %816 : vector<32x32xf32>
    %821 = arith.select %818, %816, %820 : vector<32x32xi1>, vector<32x32xf32>
    %822 = arith.addf %821, %0 : vector<32x32xf32>
    %cst_279 = arith.constant dense<0xFF800000> : vector<32xf32>
    %823 = vector.multi_reduction <maximumf>, %822, %cst_279 [1] : vector<32x32xf32> to vector<32xf32>
    %824 = vector.shape_cast %823 : vector<32xf32> to vector<32x1xf32>
    %825 = vector.broadcast %824 : vector<32x1xf32> to vector<32x32xf32>
    %826 = arith.subf %822, %825 : vector<32x32xf32>
    %827 = math.exp %826 : vector<32x32xf32>
    %cst_280 = arith.constant dense<0.000000e+00> : vector<32xf32>
    %828 = vector.multi_reduction <add>, %827, %cst_280 [1] : vector<32x32xf32> to vector<32xf32>
    %829 = vector.shape_cast %828 : vector<32xf32> to vector<32x1xf32>
    %830 = tpu.reciprocal %829 {approx = true} : vector<32x1xf32> -> vector<32x1xf32>
    %831 = vector.broadcast %830 : vector<32x1xf32> to vector<32x32xf32>
    %832 = arith.mulf %827, %831 : vector<32x32xf32>
    %cst_281 = arith.constant dense<0.000000e+00> : vector<32x16xf32>
    %833 = tpu.matmul %832, %808, %cst_281 {dimension_numbers = #tpu.dot_dimension_numbers<[1], [0], [0], [1], [0, 0, 1, 1], [], []>} : vector<32x32xf32>, vector<32x16xf32>, vector<32x16xf32> -> vector<32x16xf32>
    %cst_282 = arith.constant dense<0.000000e+00> : vector<16xf32>
    %834 = vector.multi_reduction <add>, %833, %cst_282 [0] : vector<32x16xf32> to vector<16xf32>
    %835 = vector.shape_cast %834 : vector<16xf32> to vector<1x16xf32>
    %cst_283 = arith.constant 3.200000e+01 : f32
    %836 = vector.broadcast %cst_283 : f32 to vector<1x16xf32>
    %837 = arith.divf %835, %836 : vector<1x16xf32>
    %838 = vector.broadcast %837 : vector<1x16xf32> to vector<32x16xf32>
    %839 = arith.subf %833, %838 : vector<32x16xf32>
    %840 = arith.mulf %839, %839 : vector<32x16xf32>
    %cst_284 = arith.constant dense<0.000000e+00> : vector<16xf32>
    %841 = vector.multi_reduction <add>, %840, %cst_284 [0] : vector<32x16xf32> to vector<16xf32>
    %842 = vector.shape_cast %841 : vector<16xf32> to vector<1x16xf32>
    %cst_285 = arith.constant 3.200000e+01 : f32
    %843 = vector.broadcast %cst_285 : f32 to vector<1x16xf32>
    %844 = arith.divf %842, %843 : vector<1x16xf32>
    %cst_286 = arith.constant 9.99999974E-6 : f32
    %845 = vector.broadcast %cst_286 : f32 to vector<1x16xf32>
    %846 = arith.addf %844, %845 : vector<1x16xf32>
    %847 = math.rsqrt %846 : vector<1x16xf32>
    %848 = arith.mulf %806, %847 : vector<1x16xf32>
    %849 = arith.mulf %837, %848 : vector<1x16xf32>
    %850 = arith.subf %807, %849 : vector<1x16xf32>
    %851 = vector.broadcast %848 : vector<1x16xf32> to vector<32x16xf32>
    %852 = arith.mulf %833, %851 : vector<32x16xf32>
    %853 = vector.broadcast %850 : vector<1x16xf32> to vector<32x16xf32>
    %854 = arith.addf %852, %853 : vector<32x16xf32>
    %cst_287 = arith.constant 0.000000e+00 : f32
    %855 = vector.broadcast %cst_287 : f32 to vector<32x16xf32>
    %856 = arith.maximumf %854, %855 : vector<32x16xf32>
    %c15 = arith.constant 15 : index
    %c0_288 = arith.constant 0 : index
    %c0_289 = arith.constant 0 : index
    %857 = vector.load %arg2[%c15, %c0_288, %c0_289] : memref<16x16x16xf32, #tpu.memory_space<vmem>>, vector<1x16x16xf32>
    %858 = vector.shape_cast %857 : vector<1x16x16xf32> to vector<16x16xf32>
    %c15_290 = arith.constant 15 : index
    %c0_291 = arith.constant 0 : index
    %c0_292 = arith.constant 0 : index
    %859 = vector.load %arg3[%c15_290, %c0_291, %c0_292] : memref<16x4x16xf32, #tpu.memory_space<vmem>>, vector<1x4x16xf32>
    %860 = vector.shape_cast %859 : vector<1x4x16xf32> to vector<4x16xf32>
    %861 = vector.extract_strided_slice %860 {offsets = [0, 0], sizes = [1, 16], strides = [1, 1]} : vector<4x16xf32> to vector<1x16xf32>
    %862 = vector.extract_strided_slice %860 {offsets = [1, 0], sizes = [1, 16], strides = [1, 1]} : vector<4x16xf32> to vector<1x16xf32>
    %863 = vector.extract_strided_slice %860 {offsets = [2, 0], sizes = [1, 16], strides = [1, 1]} : vector<4x16xf32> to vector<1x16xf32>
    %864 = vector.extract_strided_slice %860 {offsets = [3, 0], sizes = [1, 16], strides = [1, 1]} : vector<4x16xf32> to vector<1x16xf32>
    %cst_293 = arith.constant dense<0.000000e+00> : vector<32x16xf32>
    %865 = tpu.matmul %856, %858, %cst_293 {dimension_numbers = #tpu.dot_dimension_numbers<[1], [0], [0], [1], [0, 0, 1, 1], [], []>} : vector<32x16xf32>, vector<16x16xf32>, vector<32x16xf32> -> vector<32x16xf32>
    %866 = vector.broadcast %862 : vector<1x16xf32> to vector<32x16xf32>
    %867 = arith.mulf %865, %866 : vector<32x16xf32>
    %cst_294 = arith.constant dense<0.000000e+00> : vector<32xf32>
    %868 = vector.multi_reduction <add>, %867, %cst_294 [1] : vector<32x16xf32> to vector<32xf32>
    %869 = vector.shape_cast %868 : vector<32xf32> to vector<32x1xf32>
    %cst_295 = arith.constant dense<0.000000e+00> : vector<1x32xf32>
    %870 = tpu.matmul %861, %865, %cst_295 {dimension_numbers = #tpu.dot_dimension_numbers<[1], [1], [0], [0], [0, 0, 1, 0], [], []>} : vector<1x16xf32>, vector<32x16xf32>, vector<1x32xf32> -> vector<1x32xf32>
    %871 = vector.broadcast %869 : vector<32x1xf32> to vector<32x32xf32>
    %872 = vector.broadcast %870 : vector<1x32xf32> to vector<32x32xf32>
    %873 = arith.addf %871, %872 : vector<32x32xf32>
    %cst_296 = arith.constant 0.000000e+00 : f32
    %874 = vector.broadcast %cst_296 : f32 to vector<32x32xf32>
    %875 = arith.cmpf ogt, %873, %874 : vector<32x32xf32>
    %cst_297 = arith.constant 2.000000e-01 : f32
    %876 = vector.broadcast %cst_297 : f32 to vector<32x32xf32>
    %877 = arith.mulf %876, %873 : vector<32x32xf32>
    %878 = arith.select %875, %873, %877 : vector<32x32xi1>, vector<32x32xf32>
    %879 = arith.addf %878, %0 : vector<32x32xf32>
    %cst_298 = arith.constant dense<0xFF800000> : vector<32xf32>
    %880 = vector.multi_reduction <maximumf>, %879, %cst_298 [1] : vector<32x32xf32> to vector<32xf32>
    %881 = vector.shape_cast %880 : vector<32xf32> to vector<32x1xf32>
    %882 = vector.broadcast %881 : vector<32x1xf32> to vector<32x32xf32>
    %883 = arith.subf %879, %882 : vector<32x32xf32>
    %884 = math.exp %883 : vector<32x32xf32>
    %cst_299 = arith.constant dense<0.000000e+00> : vector<32xf32>
    %885 = vector.multi_reduction <add>, %884, %cst_299 [1] : vector<32x32xf32> to vector<32xf32>
    %886 = vector.shape_cast %885 : vector<32xf32> to vector<32x1xf32>
    %887 = tpu.reciprocal %886 {approx = true} : vector<32x1xf32> -> vector<32x1xf32>
    %888 = vector.broadcast %887 : vector<32x1xf32> to vector<32x32xf32>
    %889 = arith.mulf %884, %888 : vector<32x32xf32>
    %cst_300 = arith.constant dense<0.000000e+00> : vector<32x16xf32>
    %890 = tpu.matmul %889, %865, %cst_300 {dimension_numbers = #tpu.dot_dimension_numbers<[1], [0], [0], [1], [0, 0, 1, 1], [], []>} : vector<32x32xf32>, vector<32x16xf32>, vector<32x16xf32> -> vector<32x16xf32>
    %cst_301 = arith.constant dense<0.000000e+00> : vector<16xf32>
    %891 = vector.multi_reduction <add>, %890, %cst_301 [0] : vector<32x16xf32> to vector<16xf32>
    %892 = vector.shape_cast %891 : vector<16xf32> to vector<1x16xf32>
    %cst_302 = arith.constant 3.200000e+01 : f32
    %893 = vector.broadcast %cst_302 : f32 to vector<1x16xf32>
    %894 = arith.divf %892, %893 : vector<1x16xf32>
    %895 = vector.broadcast %894 : vector<1x16xf32> to vector<32x16xf32>
    %896 = arith.subf %890, %895 : vector<32x16xf32>
    %897 = arith.mulf %896, %896 : vector<32x16xf32>
    %cst_303 = arith.constant dense<0.000000e+00> : vector<16xf32>
    %898 = vector.multi_reduction <add>, %897, %cst_303 [0] : vector<32x16xf32> to vector<16xf32>
    %899 = vector.shape_cast %898 : vector<16xf32> to vector<1x16xf32>
    %cst_304 = arith.constant 3.200000e+01 : f32
    %900 = vector.broadcast %cst_304 : f32 to vector<1x16xf32>
    %901 = arith.divf %899, %900 : vector<1x16xf32>
    %cst_305 = arith.constant 9.99999974E-6 : f32
    %902 = vector.broadcast %cst_305 : f32 to vector<1x16xf32>
    %903 = arith.addf %901, %902 : vector<1x16xf32>
    %904 = math.rsqrt %903 : vector<1x16xf32>
    %905 = arith.mulf %863, %904 : vector<1x16xf32>
    %906 = arith.mulf %894, %905 : vector<1x16xf32>
    %907 = arith.subf %864, %906 : vector<1x16xf32>
    %908 = vector.broadcast %905 : vector<1x16xf32> to vector<32x16xf32>
    %909 = arith.mulf %890, %908 : vector<32x16xf32>
    %910 = vector.broadcast %907 : vector<1x16xf32> to vector<32x16xf32>
    %911 = arith.addf %909, %910 : vector<32x16xf32>
    %cst_306 = arith.constant 0.000000e+00 : f32
    %912 = vector.broadcast %cst_306 : f32 to vector<32x16xf32>
    %913 = arith.maximumf %911, %912 : vector<32x16xf32>
    %c0_307 = arith.constant 0 : index
    %c0_308 = arith.constant 0 : index
    %914 = vector.load %arg4[%c0_307, %c0_308] : memref<2x32xf32, #tpu.memory_space<vmem>>, vector<2x32xf32>
    %cst_309 = arith.constant dense<0.000000e+00> : vector<2x16xf32>
    %915 = tpu.matmul %914, %913, %cst_309 {dimension_numbers = #tpu.dot_dimension_numbers<[1], [0], [0], [1], [0, 0, 1, 1], [], []>} : vector<2x32xf32>, vector<32x16xf32>, vector<2x16xf32> -> vector<2x16xf32>
    %c0_310 = arith.constant 0 : index
    %c0_311 = arith.constant 0 : index
    %916 = vector.load %arg5[%c0_310, %c0_311] : memref<16x50xf32, #tpu.memory_space<vmem>>, vector<16x50xf32>
    %cst_312 = arith.constant dense<0.000000e+00> : vector<2x50xf32>
    %917 = tpu.matmul %915, %916, %cst_312 {dimension_numbers = #tpu.dot_dimension_numbers<[1], [0], [0], [1], [0, 0, 1, 1], [], []>} : vector<2x16xf32>, vector<16x50xf32>, vector<2x50xf32> -> vector<2x50xf32>
    %c0_313 = arith.constant 0 : index
    %c0_314 = arith.constant 0 : index
    %918 = vector.load %arg6[%c0_313, %c0_314] : memref<1x50xf32, #tpu.memory_space<vmem>>, vector<1x50xf32>
    %919 = vector.broadcast %918 : vector<1x50xf32> to vector<2x50xf32>
    %920 = arith.addf %917, %919 : vector<2x50xf32>
    %cst_315 = arith.constant 0.000000e+00 : f32
    %921 = vector.broadcast %cst_315 : f32 to vector<2x50xf32>
    %922 = arith.maximumf %920, %921 : vector<2x50xf32>
    %c0_316 = arith.constant 0 : index
    %c0_317 = arith.constant 0 : index
    %923 = vector.load %arg7[%c0_316, %c0_317] : memref<50x25xf32, #tpu.memory_space<vmem>>, vector<50x25xf32>
    %cst_318 = arith.constant dense<0.000000e+00> : vector<2x25xf32>
    %924 = tpu.matmul %922, %923, %cst_318 {dimension_numbers = #tpu.dot_dimension_numbers<[1], [0], [0], [1], [0, 0, 1, 1], [], []>} : vector<2x50xf32>, vector<50x25xf32>, vector<2x25xf32> -> vector<2x25xf32>
    %c0_319 = arith.constant 0 : index
    %c0_320 = arith.constant 0 : index
    %925 = vector.load %arg8[%c0_319, %c0_320] : memref<1x25xf32, #tpu.memory_space<vmem>>, vector<1x25xf32>
    %926 = vector.broadcast %925 : vector<1x25xf32> to vector<2x25xf32>
    %927 = arith.addf %924, %926 : vector<2x25xf32>
    %cst_321 = arith.constant 0.000000e+00 : f32
    %928 = vector.broadcast %cst_321 : f32 to vector<2x25xf32>
    %929 = arith.maximumf %927, %928 : vector<2x25xf32>
    %c0_322 = arith.constant 0 : index
    %c0_323 = arith.constant 0 : index
    %930 = vector.load %arg9[%c0_322, %c0_323] : memref<25x4xf32, #tpu.memory_space<vmem>>, vector<25x4xf32>
    %cst_324 = arith.constant dense<0.000000e+00> : vector<2x4xf32>
    %931 = tpu.matmul %929, %930, %cst_324 {dimension_numbers = #tpu.dot_dimension_numbers<[1], [0], [0], [1], [0, 0, 1, 1], [], []>} : vector<2x25xf32>, vector<25x4xf32>, vector<2x4xf32> -> vector<2x4xf32>
    %c0_325 = arith.constant 0 : index
    %c0_326 = arith.constant 0 : index
    %932 = vector.load %arg10[%c0_325, %c0_326] : memref<1x4xf32, #tpu.memory_space<vmem>>, vector<1x4xf32>
    %933 = vector.broadcast %932 : vector<1x4xf32> to vector<2x4xf32>
    %934 = arith.addf %931, %933 : vector<2x4xf32>
    %c0_327 = arith.constant 0 : index
    %c0_328 = arith.constant 0 : index
    %935 = vector.load %arg11[%c0_327, %c0_328] : memref<2x4xf32, #tpu.memory_space<vmem>>, vector<2x4xf32>
    tpu.vector_store %arg11[%c0_327, %c0_328], %934 {strides = array<i32>} : memref<2x4xf32, #tpu.memory_space<vmem>>, vector<2x4xf32>,
    return
  }
}

</mosaic_0001>

<llo_original>
// kernel: tpu_custom_call.1
$region0: #{tpu_custom_call.1}
  #allocation0 [shape = 'u32[]', space=smem, size = 0x4, offset = 0x4, fixed_abs, tag = 'smem constant byte address 0x4 - core index']
  #allocation1 [shape = 'u32[144,128]{1,0:T(1,128)}', space=vmem, size = 0x12000, scoped, tag = 'internal scratch']
  %s0 = inlined_call_operand.vmem [shape: f32[32,16], index: 0, kind: input, shape index: {}]
  %s1 = inlined_call_operand.vmem [shape: f32[32,32], index: 1, kind: input, shape index: {}]
  %s2 = inlined_call_operand.hbm [shape: f32[16,16,16], index: 2, kind: input, shape index: {}]
  %s3 = inlined_call_operand.vmem [shape: f32[16,4,16], index: 3, kind: input, shape index: {}]
  %s4 = inlined_call_operand.vmem [shape: f32[2,32], index: 4, kind: input, shape index: {}]
  %s5 = inlined_call_operand.vmem [shape: f32[16,50], index: 5, kind: input, shape index: {}]
  %s6 = inlined_call_operand.vmem [shape: f32[1,50], index: 6, kind: input, shape index: {}]
  %s7 = inlined_call_operand.vmem [shape: f32[50,25], index: 7, kind: input, shape index: {}]
  %s8 = inlined_call_operand.vmem [shape: f32[1,25], index: 8, kind: input, shape index: {}]
  %s9 = inlined_call_operand.vmem [shape: f32[25,4], index: 9, kind: input, shape index: {}]
  %s10 = inlined_call_operand.vmem [shape: f32[1,4], index: 10, kind: input, shape index: {}]
  %s11 = inlined_call_operand.hbm [shape: f32[2,4], index: 11, kind: output, shape index: {}]
  %s12 = sld [smem:[#allocation0]]
  $region58: #{tpu_custom_call.1} parent=0
    _
  %s14 = ssub.s32 1, %s12
  %s15 = scalar_select 0, %s14, %s12
  $region1: #{tpu_custom_call.1} parent=0
    #allocation2 [shape = 'u8[131072]{0}', space=vmem, size = 0x20000, scoped, tag = 'input window, operand 2, single buffered']
    #allocation3 [shape = 's32[1]{0}', space=sflag, size = 0x4, scoped, tag = 'scoped memory for tpu_custom_call.1']
    #allocation4 [shape = 's32[1]{0}', space=sflag, size = 0x4, scoped, tag = 'scoped memory for tpu_custom_call.1']
    #allocation5 [shape = 'u8[1024]{0}', space=vmem, size = 0x400, scoped, tag = 'output window, operand 0, single buffered']
    %16 = vsyncpa [#allocation3], 0
    %17 = vsyncpa [#allocation4], 0
    // Predicated region
    $region2: #{tpu_custom_call.1} parent=1 // pred_check
      _
    $region3: #{tpu_custom_call.1} parent=1 // pred_check_branch
      %19 = sbr.rel (0) target = $region5
    $region4: #{tpu_custom_call.1} parent=1 // pred_region
      _
    $region5: #{tpu_custom_call.1} parent=1 // pred_fallthru
      _
    // Predicated region
    $region6: #{tpu_custom_call.1} parent=1 // pred_check
      _
    $region7: #{tpu_custom_call.1} parent=1 // pred_check_branch
      %21 = sbr.rel (0) target = $region9
    $region8: #{tpu_custom_call.1} parent=1 // pred_region
      _
    $region9: #{tpu_custom_call.1} parent=1 // pred_fallthru
      _
    // Predicated region
    $region10: #{tpu_custom_call.1} parent=1 // pred_check
      _
    $region11: #{tpu_custom_call.1} parent=1 // pred_check_branch
      %23 = sbr.rel (0) target = $region13
    $region12: #{tpu_custom_call.1} parent=1 // pred_region
      %s25 = ssub.s32 4096, 4096
      %26 = vsyncadd [#allocation3], %s25
      %s27 = sshll.u32 [#allocation2], 4
      %s28 = int_to_ptr.vmem [resolvable:$true] %s27
      %33 = dma.hbm_to_vmem [thread:$0]  %s2, 4096, %s28, [#allocation3], 128, 128, 8
    $region13: #{tpu_custom_call.1} parent=1 // pred_fallthru
      _
    // Predicated region
    $region14: #{tpu_custom_call.1} parent=1 // pred_check
      _
    $region15: #{tpu_custom_call.1} parent=1 // pred_check_branch
      %35 = sbr.rel (0) target = $region17
    $region16: #{tpu_custom_call.1} parent=1 // pred_region
      _
    $region17: #{tpu_custom_call.1} parent=1 // pred_fallthru
      _
    // Predicated region
    $region18: #{tpu_custom_call.1} parent=1 // pred_check
      _
    $region19: #{tpu_custom_call.1} parent=1 // pred_check_branch
      %37 = sbr.rel (0) target = $region21
    $region20: #{tpu_custom_call.1} parent=1 // pred_region
      _
    $region21: #{tpu_custom_call.1} parent=1 // pred_fallthru
      _
    // Predicated region
    $region22: #{tpu_custom_call.1} parent=1 // pred_check
      _
    $region23: #{tpu_custom_call.1} parent=1 // pred_check_branch
      %39 = sbr.rel (0) target = $region25
    $region24: #{tpu_custom_call.1} parent=1 // pred_region
      _
    $region25: #{tpu_custom_call.1} parent=1 // pred_fallthru
      _
    // Predicated region
    $region26: #{tpu_custom_call.1} parent=1 // pred_check
      _
    $region27: #{tpu_custom_call.1} parent=1 // pred_check_branch
      %41 = sbr.rel (0) target = $region29
    $region28: #{tpu_custom_call.1} parent=1 // pred_region
      _
    $region29: #{tpu_custom_call.1} parent=1 // pred_fallthru
      _
    // Predicated region
    $region30: #{tpu_custom_call.1} parent=1 // pred_check
      _
    $region31: #{tpu_custom_call.1} parent=1 // pred_check_branch
      %43 = sbr.rel (0) target = $region33
    $region32: #{tpu_custom_call.1} parent=1 // pred_region
      _
    $region33: #{tpu_custom_call.1} parent=1 // pred_fallthru
      _
    // Predicated region
    $region34: #{tpu_custom_call.1} parent=1 // pred_check
      _
    $region35: #{tpu_custom_call.1} parent=1 // pred_check_branch
      %45 = sbr.rel (0) target = $region37
    $region36: #{tpu_custom_call.1} parent=1 // pred_region
      _
    $region37: #{tpu_custom_call.1} parent=1 // pred_fallthru
      _
    // Predicated region
    $region38: #{tpu_custom_call.1} parent=1 // pred_check
      _
    $region39: #{tpu_custom_call.1} parent=1 // pred_check_branch
      %47 = sbr.rel (0) target = $region41
    $region40: #{tpu_custom_call.1} parent=1 // pred_region
      _
    $region41: #{tpu_custom_call.1} parent=1 // pred_fallthru
      _
    // Predicated region
    $region42: #{tpu_custom_call.1} parent=1 // pred_check
      _
    $region43: #{tpu_custom_call.1} parent=1 // pred_check_branch
      %49 = sbr.rel (0) target = $region45
    $region44: #{tpu_custom_call.1} parent=1 // pred_region
      _
    $region45: #{tpu_custom_call.1} parent=1 // pred_fallthru
      _
    // Predicated region
    $region46: #{tpu_custom_call.1} parent=1 // pred_check
      _
    $region47: #{tpu_custom_call.1} parent=1 // pred_check_branch
      %51 = sbr.rel (0) target = $region49
    $region48: #{tpu_custom_call.1} parent=1 // pred_region
      %52 = dma.done [#allocation3], 4096
    $region49: #{tpu_custom_call.1} parent=1 // pred_fallthru
      _
    %v53 = vld [vmem:[%s1] sm:$0xff]
    %v54 = vld [vmem:[%s1 + $0x8] sm:$0xff]
    %v55 = vld [vmem:[%s1 + $0x10] sm:$0xff]
    %v56 = vld [vmem:[%s1 + $0x18] sm:$0xff]
    %v57 = vld [vmem:[%s0] sm:$0xff]
    %v58 = vld [vmem:[%s0 + $0x8] sm:$0xff]
    %v59 = vld [vmem:[%s0 + $0x10] sm:$0xff]
    %v60 = vld [vmem:[%s0 + $0x18] sm:$0xff]
    %v61 = vld [vmem:[#allocation2] sm:$0xff]
    %v62 = vld [vmem:[#allocation2 + $0x8] sm:$0xff]
    %v63 = vld [vmem:[%s3] sm:$0xf]
    %vm64 = vcmask 130048
    %v66 = vsel %vm64, %v57, 0
    %v69 = vsel %vm64, %v58, 0
    %v72 = vsel %vm64, %v59, 0
    %v75 = vsel %vm64, %v60, 0
    %77 = vmatprep.subr.mxu0 0.0
    %78 = vmatpush1.msra.mxu0 %v61
    %79 = vmatprep.subr.mxu0 0.0
    %80 = vmatpush1.msra.mxu0 %v62
    %81 = vmatprep.subr.mxu0 0.0
    %82 = vmatpush1.msra.mxu0 0.0
    %83 = vmatprep.subr.mxu0 0.0
    %84 = vmatpush1.msra.mxu0 0.0
    %85 = vmatprep.subr.mxu0 0.0
    %86 = vmatpush1.msra.mxu0 0.0
    %87 = vmatprep.subr.mxu0 0.0
    %88 = vmatpush1.msra.mxu0 0.0
    %89 = vmatprep.subr.mxu0 0.0
    %90 = vmatpush1.msra.mxu0 0.0
    %91 = vmatprep.subr.mxu0 0.0
    %92 = vmatpush1.msra.mxu0 0.0
    %93 = vmatprep.subr.mxu0 0.0
    %94 = vmatpush1.msra.mxu0 0.0
    %95 = vmatprep.subr.mxu0 0.0
    %96 = vmatpush1.msra.mxu0 0.0
    %97 = vmatprep.subr.mxu0 0.0
    %98 = vmatpush1.msra.mxu0 0.0
    %99 = vmatprep.subr.mxu0 0.0
    %100 = vmatpush1.msra.mxu0 0.0
    %101 = vmatprep.subr.mxu0 0.0
    %102 = vmatpush1.msra.mxu0 0.0
    %103 = vmatprep.subr.mxu0 0.0
    %104 = vmatpush1.msra.mxu0 0.0
    %105 = vmatprep.subr.mxu0 0.0
    %106 = vmatpush1.msra.mxu0 0.0
    %107 = vmatprep.subr.mxu0 0.0
    %108 = vmatpush1.msra.mxu0 0.0
    %109 = vmatprep.subr.mxu0 0.0
    %110 = vmatpush1.msra.mxu0 0.0
    %111 = vmatprep.subr.mxu0 0.0
    %112 = vmatpush1.msra.mxu0 0.0
    %113 = vmatprep.subr.mxu0 0.0
    %114 = vmatpush1.msra.mxu0 0.0
    %115 = vmatprep.subr.mxu0 0.0
    %116 = vmatpush1.msra.mxu0 0.0
    %117 = vmatprep.subr.mxu0 0.0
    %118 = vmatpush1.msra.mxu0 0.0
    %119 = vmatprep.subr.mxu0 0.0
    %120 = vmatpush1.msra.mxu0 0.0
    %121 = vmatprep.subr.mxu0 0.0
    %122 = vmatpush1.msra.mxu0 0.0
    %123 = vmatprep.subr.mxu0 0.0
    %124 = vmatpush1.msra.mxu0 0.0
    %125 = vmatprep.subr.mxu0 0.0
    %126 = vmatpush1.msra.mxu0 0.0
    %127 = vmatprep.subr.mxu0 0.0
    %128 = vmatpush1.msra.mxu0 0.0
    %129 = vmatprep.subr.mxu0 0.0
    %130 = vmatpush1.msra.mxu0 0.0
    %131 = vmatprep.subr.mxu0 0.0
    %132 = vmatpush1.msra.mxu0 0.0
    %133 = vmatprep.subr.mxu0 0.0
    %134 = vmatpush1.msra.mxu0 0.0
    %135 = vmatprep.subr.mxu0 0.0
    %136 = vmatpush1.msra.mxu0 0.0
    %137 = vmatprep.subr.mxu0 0.0
    %138 = vmatpush1.msra.mxu0 0.0
    %139 = vmatprep.subr.mxu0 0.0
    %140 = vmatpush1.msra.mxu0 0.0
    %141 = vmatprep.mubr.f32.mxu0 0.0
    %142 = vmatmul.mubr.f32.gmra.mrb[0].mxu0 %v66
    %v143 = vpop.f32.mrb[0].mxu0
    %v144 = vadd.f32 0.0, %v143
    %v145 = vpop.f32.mrb[0].mxu0
    %146 = vmatprep.mubr.f32.mxu0 0.0
    %147 = vmatmul.mubr.f32.gmra.mrb[0].mxu0 %v69
    %v148 = vpop.f32.mrb[0].mxu0
    %v149 = vadd.f32 0.0, %v148
    %v150 = vpop.f32.mrb[0].mxu0
    %151 = vmatprep.mubr.f32.mxu0 0.0
    %152 = vmatmul.mubr.f32.gmra.mrb[0].mxu0 %v72
    %v153 = vpop.f32.mrb[0].mxu0
    %v154 = vadd.f32 0.0, %v153
    %v155 = vpop.f32.mrb[0].mxu0
    %156 = vmatprep.mubr.f32.mxu0 0.0
    %157 = vmatmul.mubr.f32.gmra.mrb[0].mxu0 %v75
    %v158 = vpop.f32.mrb[0].mxu0
    %v159 = vadd.f32 0.0, %v158
    %v160 = vpop.f32.mrb[0].mxu0
    %161 = vdwg.mxu0
    %v162 = vlaneseq
    %v163 = vshrl.u32 %v162, 7
    %v164 = vsub.s32 1, %v163
    %v165 = vrot.slane %v63, %v164
    %v166 = vmul.f32 %v144, %v165
    %v167 = vmul.f32 %v149, %v165
    %v168 = vmul.f32 %v154, %v165
    %v169 = vmul.f32 %v159, %v165
    %v170 = vsel %vm64, %v166, 0.0
    %171 = vadd.xlane.f32.xlu0 %v170
    %v172 = vpop.xlane.xlu0 %171
    %v173 = vsel %vm64, %v167, 0.0
    %174 = vadd.xlane.f32.xlu0 %v173
    %v175 = vpop.xlane.xlu0 %174
    %v176 = vsel %vm64, %v168, 0.0
    %177 = vadd.xlane.f32.xlu0 %v176
    %v178 = vpop.xlane.xlu0 %177
    %v179 = vsel %vm64, %v169, 0.0
    %180 = vadd.xlane.f32.xlu0 %v179
    %v181 = vpop.xlane.xlu0 %180
    %v183 = vsel %vm64, %v63, 0
    %v186 = vsel %vm64, %v144, 0
    %v189 = vsel %vm64, %v149, 0
    %v192 = vsel %vm64, %v154, 0
    %v195 = vsel %vm64, %v159, 0
    %197 = vmatprep.subr.mxu0 0.0
    %198 = vmatpush1.xpose.msra.mxu0 %v186
    %199 = vmatprep.subr.mxu0 0.0
    %200 = vmatpush1.xpose.msra.mxu0 %v189
    %201 = vmatprep.subr.mxu0 0.0
    %202 = vmatpush1.xpose.msra.mxu0 %v192
    %203 = vmatprep.subr.mxu0 0.0
    %204 = vmatpush1.xpose.msra.mxu0 %v195
    %205 = vmatprep.subr.mxu0 0.0
    %206 = vmatpush1.xpose.msra.mxu0 0.0
    %207 = vmatprep.subr.mxu0 0.0
    %208 = vmatpush1.xpose.msra.mxu0 0.0
    %209 = vmatprep.subr.mxu0 0.0
    %210 = vmatpush1.xpose.msra.mxu0 0.0
    %211 = vmatprep.subr.mxu0 0.0
    %212 = vmatpush1.xpose.msra.mxu0 0.0
    %213 = vmatprep.subr.mxu0 0.0
    %214 = vmatpush1.xpose.msra.mxu0 0.0
    %215 = vmatprep.subr.mxu0 0.0
    %216 = vmatpush1.xpose.msra.mxu0 0.0
    %217 = vmatprep.subr.mxu0 0.0
    %218 = vmatpush1.xpose.msra.mxu0 0.0
    %219 = vmatprep.subr.mxu0 0.0
    %220 = vmatpush1.xpose.msra.mxu0 0.0
    %221 = vmatprep.subr.mxu0 0.0
    %222 = vmatpush1.xpose.msra.mxu0 0.0
    %223 = vmatprep.subr.mxu0 0.0
    %224 = vmatpush1.xpose.msra.mxu0 0.0
    %225 = vmatprep.subr.mxu0 0.0
    %226 = vmatpush1.xpose.msra.mxu0 0.0
    %227 = vmatprep.subr.mxu0 0.0
    %228 = vmatpush1.xpose.msra.mxu0 0.0
    %229 = vmatprep.subr.mxu0 0.0
    %230 = vmatpush1.xpose.msra.mxu0 0.0
    %231 = vmatprep.subr.mxu0 0.0
    %232 = vmatpush1.xpose.msra.mxu0 0.0
    %233 = vmatprep.subr.mxu0 0.0
    %234 = vmatpush1.xpose.msra.mxu0 0.0
    %235 = vmatprep.subr.mxu0 0.0
    %236 = vmatpush1.xpose.msra.mxu0 0.0
    %237 = vmatprep.subr.mxu0 0.0
    %238 = vmatpush1.xpose.msra.mxu0 0.0
    %239 = vmatprep.subr.mxu0 0.0
    %240 = vmatpush1.xpose.msra.mxu0 0.0
    %241 = vmatprep.subr.mxu0 0.0
    %242 = vmatpush1.xpose.msra.mxu0 0.0
    %243 = vmatprep.subr.mxu0 0.0
    %244 = vmatpush1.xpose.msra.mxu0 0.0
    %245 = vmatprep.subr.mxu0 0.0
    %246 = vmatpush1.xpose.msra.mxu0 0.0
    %247 = vmatprep.subr.mxu0 0.0
    %248 = vmatpush1.xpose.msra.mxu0 0.0
    %249 = vmatprep.subr.mxu0 0.0
    %250 = vmatpush1.xpose.msra.mxu0 0.0
    %251 = vmatprep.subr.mxu0 0.0
    %252 = vmatpush1.xpose.msra.mxu0 0.0
    %253 = vmatprep.subr.mxu0 0.0
    %254 = vmatpush1.xpose.msra.mxu0 0.0
    %255 = vmatprep.subr.mxu0 0.0
    %256 = vmatpush1.xpose.msra.mxu0 0.0
    %257 = vmatprep.subr.mxu0 0.0
    %258 = vmatpush1.xpose.msra.mxu0 0.0
    %259 = vmatprep.subr.mxu0 0.0
    %260 = vmatpush1.xpose.msra.mxu0 0.0
    %261 = vmatprep.mubr.f32.mxu0 0.0
    %262 = vmatmul.mubr.f32.gmra.mrb[0].mxu0 %v183
    %v263 = vpop.f32.mrb[0].mxu0
    %v264 = vadd.f32 0.0, %v263
    %v265 = vpop.f32.mrb[0].mxu0
    %266 = vdwg.mxu0
    %v267 = vlaneseq
    %v268 = vshrl.u32 %v267, 7
    %v269 = vsub.s32 0, %v268
    %v270 = vrot.slane %v264, %v269
    %v271 = vadd.f32 %v172, %v270
    %v272 = vadd.f32 %v175, %v270
    %v273 = vadd.f32 %v178, %v270
    %v274 = vadd.f32 %v181, %v270
    %vm275 = vcmp.gt.f32.partialorder %v271, 0.0
    %vm276 = vcmp.gt.f32.partialorder %v272, 0.0
    %vm277 = vcmp.gt.f32.partialorder %v273, 0.0
    %vm278 = vcmp.gt.f32.partialorder %v274, 0.0
    %v279 = vmul.f32 %v271, 0.2
    %v280 = vmul.f32 %v272, 0.2
    %v281 = vmul.f32 %v273, 0.2
    %v282 = vmul.f32 %v274, 0.2
    %v283 = vsel %vm275, %v271, %v279
    %v284 = vsel %vm276, %v272, %v280
    %v285 = vsel %vm277, %v273, %v281
    %v286 = vsel %vm278, %v274, %v282
    %v287 = vadd.f32 %v283, %v53
    %v288 = vadd.f32 %v284, %v54
    %v289 = vadd.f32 %v285, %v55
    %v290 = vadd.f32 %v286, %v56
    %vm291 = vcmask 261120
    %v292 = vsel %vm291, %v287, -inf
    %293 = vmax.xlane.f32.xlu0 %v292
    %v294 = vpop.xlane.xlu0 %293
    %v295 = vsel %vm291, %v288, -inf
    %296 = vmax.xlane.f32.xlu0 %v295
    %v297 = vpop.xlane.xlu0 %296
    %v298 = vsel %vm291, %v289, -inf
    %299 = vmax.xlane.f32.xlu0 %v298
    %v300 = vpop.xlane.xlu0 %299
    %v301 = vsel %vm291, %v290, -inf
    %302 = vmax.xlane.f32.xlu0 %v301
    %v303 = vpop.xlane.xlu0 %302
    %v304 = vsub.f32 %v287, %v294
    %v305 = vsub.f32 %v288, %v297
    %v306 = vsub.f32 %v289, %v300
    %v307 = vsub.f32 %v290, %v303
    %v308 = vmul.f32 %v304, 1.442695
    %v309 = vpow.pop %v308
    %v310 = vmul.f32 %v305, 1.442695
    %v311 = vpow.pop %v310
    %v312 = vmul.f32 %v306, 1.442695
    %v313 = vpow.pop %v312
    %v314 = vmul.f32 %v307, 1.442695
    %v315 = vpow.pop %v314
    %v316 = vsel %vm291, %v309, 0.0
    %317 = vadd.xlane.f32.xlu0 %v316
    %v318 = vpop.xlane.xlu0 %317
    %v319 = vsel %vm291, %v311, 0.0
    %320 = vadd.xlane.f32.xlu0 %v319
    %v321 = vpop.xlane.xlu0 %320
    %v322 = vsel %vm291, %v313, 0.0
    %323 = vadd.xlane.f32.xlu0 %v322
    %v324 = vpop.xlane.xlu0 %323
    %v325 = vsel %vm291, %v315, 0.0
    %326 = vadd.xlane.f32.xlu0 %v325
    %v327 = vpop.xlane.xlu0 %326
    %v328 = vrcp.pop %v318
    %v329 = vrcp.pop %v321
    %v330 = vrcp.pop %v324
    %v331 = vrcp.pop %v327
    %v332 = vmul.f32 %v309, %v328
    %v333 = vmul.f32 %v311, %v329
    %v334 = vmul.f32 %v313, %v330
    %v335 = vmul.f32 %v315, %v331
    %v337 = vsel %vm291, %v332, 0
    %v340 = vsel %vm291, %v333, 0
    %v343 = vsel %vm291, %v334, 0
    %v346 = vsel %vm291, %v335, 0
    %348 = vmatprep.subr.mxu0 0.0
    %349 = vmatpush1.msra.mxu0 %v144
    %350 = vmatprep.subr.mxu0 0.0
    %351 = vmatpush1.msra.mxu0 %v149
    %352 = vmatprep.subr.mxu0 0.0
    %353 = vmatpush1.msra.mxu0 %v154
    %354 = vmatprep.subr.mxu0 0.0
    %355 = vmatpush1.msra.mxu0 %v159
    %356 = vmatprep.subr.mxu0 0.0
    %357 = vmatpush1.msra.mxu0 0.0
    %358 = vmatprep.subr.mxu0 0.0
    %359 = vmatpush1.msra.mxu0 0.0
    %360 = vmatprep.subr.mxu0 0.0
    %361 = vmatpush1.msra.mxu0 0.0
    %362 = vmatprep.subr.mxu0 0.0
    %363 = vmatpush1.msra.mxu0 0.0
    %364 = vmatprep.subr.mxu0 0.0
    %365 = vmatpush1.msra.mxu0 0.0
    %366 = vmatprep.subr.mxu0 0.0
    %367 = vmatpush1.msra.mxu0 0.0
    %368 = vmatprep.subr.mxu0 0.0
    %369 = vmatpush1.msra.mxu0 0.0
    %370 = vmatprep.subr.mxu0 0.0
    %371 = vmatpush1.msra.mxu0 0.0
    %372 = vmatprep.subr.mxu0 0.0
    %373 = vmatpush1.msra.mxu0 0.0
    %374 = vmatprep.subr.mxu0 0.0
    %375 = vmatpush1.msra.mxu0 0.0
    %376 = vmatprep.subr.mxu0 0.0
    %377 = vmatpush1.msra.mxu0 0.0
    %378 = vmatprep.subr.mxu0 0.0
    %379 = vmatpush1.msra.mxu0 0.0
    %380 = vmatprep.subr.mxu0 0.0
    %381 = vmatpush1.msra.mxu0 0.0
    %382 = vmatprep.subr.mxu0 0.0
    %383 = vmatpush1.msra.mxu0 0.0
    %384 = vmatprep.subr.mxu0 0.0
    %385 = vmatpush1.msra.mxu0 0.0
    %386 = vmatprep.subr.mxu0 0.0
    %387 = vmatpush1.msra.mxu0 0.0
    %388 = vmatprep.subr.mxu0 0.0
    %389 = vmatpush1.msra.mxu0 0.0
    %390 = vmatprep.subr.mxu0 0.0
    %391 = vmatpush1.msra.mxu0 0.0
    %392 = vmatprep.subr.mxu0 0.0
    %393 = vmatpush1.msra.mxu0 0.0
    %394 = vmatprep.subr.mxu0 0.0
    %395 = vmatpush1.msra.mxu0 0.0
    %396 = vmatprep.subr.mxu0 0.0
    %397 = vmatpush1.msra.mxu0 0.0
    %398 = vmatprep.subr.mxu0 0.0
    %399 = vmatpush1.msra.mxu0 0.0
    %400 = vmatprep.subr.mxu0 0.0
    %401 = vmatpush1.msra.mxu0 0.0
    %402 = vmatprep.subr.mxu0 0.0
    %403 = vmatpush1.msra.mxu0 0.0
    %404 = vmatprep.subr.mxu0 0.0
    %405 = vmatpush1.msra.mxu0 0.0
    %406 = vmatprep.subr.mxu0 0.0
    %407 = vmatpush1.msra.mxu0 0.0
    %408 = vmatprep.subr.mxu0 0.0
    %409 = vmatpush1.msra.mxu0 0.0
    %410 = vmatprep.subr.mxu0 0.0
    %411 = vmatpush1.msra.mxu0 0.0
    %412 = vmatprep.mubr.f32.mxu0 0.0
    %413 = vmatmul.mubr.f32.gmra.mrb[0].mxu0 %v337
    %v414 = vpop.f32.mrb[0].mxu0
    %v415 = vadd.f32 0.0, %v414
    %v416 = vpop.f32.mrb[0].mxu0
    %417 = vmatprep.mubr.f32.mxu0 0.0
    %418 = vmatmul.mubr.f32.gmra.mrb[0].mxu0 %v340
    %v419 = vpop.f32.mrb[0].mxu0
    %v420 = vadd.f32 0.0, %v419
    %v421 = vpop.f32.mrb[0].mxu0
    %422 = vmatprep.mubr.f32.mxu0 0.0
    %423 = vmatmul.mubr.f32.gmra.mrb[0].mxu0 %v343
    %v424 = vpop.f32.mrb[0].mxu0
    %v425 = vadd.f32 0.0, %v424
    %v426 = vpop.f32.mrb[0].mxu0
    %427 = vmatprep.mubr.f32.mxu0 0.0
    %428 = vmatmul.mubr.f32.gmra.mrb[0].mxu0 %v346
    %v429 = vpop.f32.mrb[0].mxu0
    %v430 = vadd.f32 0.0, %v429
    %v431 = vpop.f32.mrb[0].mxu0
    %432 = vdwg.mxu0
    %v433 = vsel %vm64, %v415, 0.0
    %v434 = vsel %vm64, %v420, 0.0
    %v435 = vadd.f32 %v433, %v434
    %v436 = vsel %vm64, %v425, 0.0
    %v437 = vadd.f32 %v435, %v436
    %v438 = vsel %vm64, %v430, 0.0
    %v439 = vadd.f32 %v437, %v438
    %v440 = vrot.slane %v439, 4
    %v441 = vadd.f32 %v439, %v440
    %v442 = vrot.slane %v441, 2
    %v443 = vadd.f32 %v441, %v442
    %v444 = vrot.slane %v443, 1
    %v445 = vadd.f32 %v443, %v444
    %v446 = vrcp.pop 32.0
    %v447 = vmul.f32 %v445, %v446
    %v448 = vsub.f32 %v415, %v447
    %v449 = vsub.f32 %v420, %v447
    %v450 = vsub.f32 %v425, %v447
    %v451 = vsub.f32 %v430, %v447
    %v452 = vmul.f32 %v448, %v448
    %v453 = vmul.f32 %v449, %v449
    %v454 = vmul.f32 %v450, %v450
    %v455 = vmul.f32 %v451, %v451
    %v456 = vsel %vm64, %v452, 0.0
    %v457 = vsel %vm64, %v453, 0.0
    %v458 = vadd.f32 %v456, %v457
    %v459 = vsel %vm64, %v454, 0.0
    %v460 = vadd.f32 %v458, %v459
    %v461 = vsel %vm64, %v455, 0.0
    %v462 = vadd.f32 %v460, %v461
    %v463 = vrot.slane %v462, 4
    %v464 = vadd.f32 %v462, %v463
    %v465 = vrot.slane %v464, 2
    %v466 = vadd.f32 %v464, %v465
    %v467 = vrot.slane %v466, 1
    %v468 = vadd.f32 %v466, %v467
    %v469 = vmul.f32 %v468, %v446
    %v470 = vadd.f32 %v469, 1e-05
    %v471 = vrsqrt.pop %v470
    %v472 = vmul.f32 %v63, %v471
    %v473 = vmul.f32 %v447, %v472
    %v475 = vrot.slane %v473, 7
    %v477 = vsub.f32 %v63, %v475
    %v478 = vlaneseq
    %v479 = vshrl.u32 %v478, 7
    %v480 = vsub.s32 2, %v479
    %v481 = vrot.slane %v472, %v480
    %v482 = vmul.f32 %v415, %v481
    %v483 = vmul.f32 %v420, %v481
    %v484 = vmul.f32 %v425, %v481
    %v485 = vmul.f32 %v430, %v481
    %v486 = vlaneseq
    %v487 = vshrl.u32 %v486, 7
    %v488 = vsub.s32 3, %v487
    %v489 = vrot.slane %v477, %v488
    %v490 = vadd.f32 %v482, %v489
    %v491 = vadd.f32 %v483, %v489
    %v492 = vadd.f32 %v484, %v489
    %v493 = vadd.f32 %v485, %v489
    %v494 = vmax.f32 %v490, 0.0
    %v495 = vmax.f32 %v491, 0.0
    %v496 = vmax.f32 %v492, 0.0
    %v497 = vmax.f32 %v493, 0.0
    %s498 = scalar_lea.vmem [#allocation2], 16
    %v499 = vld [vmem:[%s498] sm:$0xff]
    %v500 = vld [vmem:[%s498 + $0x8] sm:$0xff]
    %s501 = scalar_lea.vmem %s3, 4
    %v502 = vld [vmem:[%s501] sm:$0xf]
    %v504 = vsel %vm64, %v494, 0
    %v507 = vsel %vm64, %v495, 0
    %v510 = vsel %vm64, %v496, 0
    %v513 = vsel %vm64, %v497, 0
    %515 = vmatprep.subr.mxu0 0.0
    %516 = vmatpush1.msra.mxu0 %v499
    %517 = vmatprep.subr.mxu0 0.0
    %518 = vmatpush1.msra.mxu0 %v500
    %519 = vmatprep.subr.mxu0 0.0
    %520 = vmatpush1.msra.mxu0 0.0
    %521 = vmatprep.subr.mxu0 0.0
    %522 = vmatpush1.msra.mxu0 0.0
    %523 = vmatprep.subr.mxu0 0.0
    %524 = vmatpush1.msra.mxu0 0.0
    %525 = vmatprep.subr.mxu0 0.0
    %526 = vmatpush1.msra.mxu0 0.0
    %527 = vmatprep.subr.mxu0 0.0
    %528 = vmatpush1.msra.mxu0 0.0
    %529 = vmatprep.subr.mxu0 0.0
    %530 = vmatpush1.msra.mxu0 0.0
    %531 = vmatprep.subr.mxu0 0.0
    %532 = vmatpush1.msra.mxu0 0.0
    %533 = vmatprep.subr.mxu0 0.0
    %534 = vmatpush1.msra.mxu0 0.0
    %535 = vmatprep.subr.mxu0 0.0
    %536 = vmatpush1.msra.mxu0 0.0
    %537 = vmatprep.subr.mxu0 0.0
    %538 = vmatpush1.msra.mxu0 0.0
    %539 = vmatprep.subr.mxu0 0.0
    %540 = vmatpush1.msra.mxu0 0.0
    %541 = vmatprep.subr.mxu0 0.0
    %542 = vmatpush1.msra.mxu0 0.0
    %543 = vmatprep.subr.mxu0 0.0
    %544 = vmatpush1.msra.mxu0 0.0
    %545 = vmatprep.subr.mxu0 0.0
    %546 = vmatpush1.msra.mxu0 0.0
    %547 = vmatprep.subr.mxu0 0.0
    %548 = vmatpush1.msra.mxu0 0.0
    %549 = vmatprep.subr.mxu0 0.0
    %550 = vmatpush1.msra.mxu0 0.0
    %551 = vmatprep.subr.mxu0 0.0
    %552 = vmatpush1.msra.mxu0 0.0
    %553 = vmatprep.subr.mxu0 0.0
    %554 = vmatpush1.msra.mxu0 0.0
    %555 = vmatprep.subr.mxu0 0.0
    %556 = vmatpush1.msra.mxu0 0.0
    %557 = vmatprep.subr.mxu0 0.0
    %558 = vmatpush1.msra.mxu0 0.0
    %559 = vmatprep.subr.mxu0 0.0
    %560 = vmatpush1.msra.mxu0 0.0
    %561 = vmatprep.subr.mxu0 0.0
    %562 = vmatpush1.msra.mxu0 0.0
    %563 = vmatprep.subr.mxu0 0.0
    %564 = vmatpush1.msra.mxu0 0.0
    %565 = vmatprep.subr.mxu0 0.0
    %566 = vmatpush1.msra.mxu0 0.0
    %567 = vmatprep.subr.mxu0 0.0
    %568 = vmatpush1.msra.mxu0 0.0
    %569 = vmatprep.subr.mxu0 0.0
    %570 = vmatpush1.msra.mxu0 0.0
    %571 = vmatprep.subr.mxu0 0.0
    %572 = vmatpush1.msra.mxu0 0.0
    %573 = vmatprep.subr.mxu0 0.0
    %574 = vmatpush1.msra.mxu0 0.0
    %575 = vmatprep.subr.mxu0 0.0
    %576 = vmatpush1.msra.mxu0 0.0
    %577 = vmatprep.subr.mxu0 0.0
    %578 = vmatpush1.msra.mxu0 0.0
    %579 = vmatprep.mubr.f32.mxu0 0.0
    %580 = vmatmul.mubr.f32.gmra.mrb[0].mxu0 %v504
    %v581 = vpop.f32.mrb[0].mxu0
    %v582 = vadd.f32 0.0, %v581
    %v583 = vpop.f32.mrb[0].mxu0
    %584 = vmatprep.mubr.f32.mxu0 0.0
    %585 = vmatmul.mubr.f32.gmra.mrb[0].mxu0 %v507
    %v586 = vpop.f32.mrb[0].mxu0
    %v587 = vadd.f32 0.0, %v586
    %v588 = vpop.f32.mrb[0].mxu0
    %589 = vmatprep.mubr.f32.mxu0 0.0
    %590 = vmatmul.mubr.f32.gmra.mrb[0].mxu0 %v510
    %v591 = vpop.f32.mrb[0].mxu0
    %v592 = vadd.f32 0.0, %v591
    %v593 = vpop.f32.mrb[0].mxu0
    %594 = vmatprep.mubr.f32.mxu0 0.0
    %595 = vmatmul.mubr.f32.gmra.mrb[0].mxu0 %v513
    %v596 = vpop.f32.mrb[0].mxu0
    %v597 = vadd.f32 0.0, %v596
    %v598 = vpop.f32.mrb[0].mxu0
    %599 = vdwg.mxu0
    %v600 = vlaneseq
    %v601 = vshrl.u32 %v600, 7
    %v602 = vsub.s32 1, %v601
    %v603 = vrot.slane %v502, %v602
    %v604 = vmul.f32 %v582, %v603
    %v605 = vmul.f32 %v587, %v603
    %v606 = vmul.f32 %v592, %v603
    %v607 = vmul.f32 %v597, %v603
    %v608 = vsel %vm64, %v604, 0.0
    %609 = vadd.xlane.f32.xlu0 %v608
    %v610 = vpop.xlane.xlu0 %609
    %v611 = vsel %vm64, %v605, 0.0
    %612 = vadd.xlane.f32.xlu0 %v611
    %v613 = vpop.xlane.xlu0 %612
    %v614 = vsel %vm64, %v606, 0.0
    %615 = vadd.xlane.f32.xlu0 %v614
    %v616 = vpop.xlane.xlu0 %615
    %v617 = vsel %vm64, %v607, 0.0
    %618 = vadd.xlane.f32.xlu0 %v617
    %v619 = vpop.xlane.xlu0 %618
    %v621 = vsel %vm64, %v502, 0
    %v624 = vsel %vm64, %v582, 0
    %v627 = vsel %vm64, %v587, 0
    %v630 = vsel %vm64, %v592, 0
    %v633 = vsel %vm64, %v597, 0
    %635 = vmatprep.subr.mxu0 0.0
    %636 = vmatpush1.xpose.msra.mxu0 %v624
    %637 = vmatprep.subr.mxu0 0.0
    %638 = vmatpush1.xpose.msra.mxu0 %v627
    %639 = vmatprep.subr.mxu0 0.0
    %640 = vmatpush1.xpose.msra.mxu0 %v630
    %641 = vmatprep.subr.mxu0 0.0
    %642 = vmatpush1.xpose.msra.mxu0 %v633
    %643 = vmatprep.subr.mxu0 0.0
    %644 = vmatpush1.xpose.msra.mxu0 0.0
    %645 = vmatprep.subr.mxu0 0.0
    %646 = vmatpush1.xpose.msra.mxu0 0.0
    %647 = vmatprep.subr.mxu0 0.0
    %648 = vmatpush1.xpose.msra.mxu0 0.0
    %649 = vmatprep.subr.mxu0 0.0
    %650 = vmatpush1.xpose.msra.mxu0 0.0
    %651 = vmatprep.subr.mxu0 0.0
    %652 = vmatpush1.xpose.msra.mxu0 0.0
    %653 = vmatprep.subr.mxu0 0.0
    %654 = vmatpush1.xpose.msra.mxu0 0.0
    %655 = vmatprep.subr.mxu0 0.0
    %656 = vmatpush1.xpose.msra.mxu0 0.0
    %657 = vmatprep.subr.mxu0 0.0
    %658 = vmatpush1.xpose.msra.mxu0 0.0
    %659 = vmatprep.subr.mxu0 0.0
    %660 = vmatpush1.xpose.msra.mxu0 0.0
    %661 = vmatprep.subr.mxu0 0.0
    %662 = vmatpush1.xpose.msra.mxu0 0.0
    %663 = vmatprep.subr.mxu0 0.0
    %664 = vmatpush1.xpose.msra.mxu0 0.0
    %665 = vmatprep.subr.mxu0 0.0
    %666 = vmatpush1.xpose.msra.mxu0 0.0
    %667 = vmatprep.subr.mxu0 0.0
    %668 = vmatpush1.xpose.msra.mxu0 0.0
    %669 = vmatprep.subr.mxu0 0.0
    %670 = vmatpush1.xpose.msra.mxu0 0.0
    %671 = vmatprep.subr.mxu0 0.0
    %672 = vmatpush1.xpose.msra.mxu0 0.0
    %673 = vmatprep.subr.mxu0 0.0
    %674 = vmatpush1.xpose.msra.mxu0 0.0
    %675 = vmatprep.subr.mxu0 0.0
    %676 = vmatpush1.xpose.msra.mxu0 0.0
    %677 = vmatprep.subr.mxu0 0.0
    %678 = vmatpush1.xpose.msra.mxu0 0.0
    %679 = vmatprep.subr.mxu0 0.0
    %680 = vmatpush1.xpose.msra.mxu0 0.0
    %681 = vmatprep.subr.mxu0 0.0
    %682 = vmatpush1.xpose.msra.mxu0 0.0
    %683 = vmatprep.subr.mxu0 0.0
    %684 = vmatpush1.xpose.msra.mxu0 0.0
    %685 = vmatprep.subr.mxu0 0.0
    %686 = vmatpush1.xpose.msra.mxu0 0.0
    %687 = vmatprep.subr.mxu0 0.0
    %688 = vmatpush1.xpose.msra.mxu0 0.0
    %689 = vmatprep.subr.mxu0 0.0
    %690 = vmatpush1.xpose.msra.mxu0 0.0
    %691 = vmatprep.subr.mxu0 0.0
    %692 = vmatpush1.xpose.msra.mxu0 0.0
    %693 = vmatprep.subr.mxu0 0.0
    %694 = vmatpush1.xpose.msra.mxu0 0.0
    %695 = vmatprep.subr.mxu0 0.0
    %696 = vmatpush1.xpose.msra.mxu0 0.0
    %697 = vmatprep.subr.mxu0 0.0
    %698 = vmatpush1.xpose.msra.mxu0 0.0
    %699 = vmatprep.mubr.f32.mxu0 0.0
    %700 = vmatmul.mubr.f32.gmra.mrb[0].mxu0 %v621
    %v701 = vpop.f32.mrb[0].mxu0
    %v702 = vadd.f32 0.0, %v701
    %v703 = vpop.f32.mrb[0].mxu0
    %704 = vdwg.mxu0
    %v705 = vlaneseq
    %v706 = vshrl.u32 %v705, 7
    %v707 = vsub.s32 0, %v706
    %v708 = vrot.slane %v702, %v707
    %v709 = vadd.f32 %v610, %v708
    %v710 = vadd.f32 %v613, %v708
    %v711 = vadd.f32 %v616, %v708
    %v712 = vadd.f32 %v619, %v708
    %vm713 = vcmp.gt.f32.partialorder %v709, 0.0
    %vm714 = vcmp.gt.f32.partialorder %v710, 0.0
    %vm715 = vcmp.gt.f32.partialorder %v711, 0.0
    %vm716 = vcmp.gt.f32.partialorder %v712, 0.0
    %v717 = vmul.f32 %v709, 0.2
    %v718 = vmul.f32 %v710, 0.2
    %v719 = vmul.f32 %v711, 0.2
    %v720 = vmul.f32 %v712, 0.2
    %v721 = vsel %vm713, %v709, %v717
    %v722 = vsel %vm714, %v710, %v718
    %v723 = vsel %vm715, %v711, %v719
    %v724 = vsel %vm716, %v712, %v720
    %v725 = vadd.f32 %v721, %v53
    %v726 = vadd.f32 %v722, %v54
    %v727 = vadd.f32 %v723, %v55
    %v728 = vadd.f32 %v724, %v56
    %v729 = vsel %vm291, %v725, -inf
    %730 = vmax.xlane.f32.xlu0 %v729
    %v731 = vpop.xlane.xlu0 %730
    %v732 = vsel %vm291, %v726, -inf
    %733 = vmax.xlane.f32.xlu0 %v732
    %v734 = vpop.xlane.xlu0 %733
    %v735 = vsel %vm291, %v727, -inf
    %736 = vmax.xlane.f32.xlu0 %v735
    %v737 = vpop.xlane.xlu0 %736
    %v738 = vsel %vm291, %v728, -inf
    %739 = vmax.xlane.f32.xlu0 %v738
    %v740 = vpop.xlane.xlu0 %739
    %v741 = vsub.f32 %v725, %v731
    %v742 = vsub.f32 %v726, %v734
    %v743 = vsub.f32 %v727, %v737
    %v744 = vsub.f32 %v728, %v740
    %v745 = vmul.f32 %v741, 1.442695
    %v746 = vpow.pop %v745
    %v747 = vmul.f32 %v742, 1.442695
    %v748 = vpow.pop %v747
    %v749 = vmul.f32 %v743, 1.442695
    %v750 = vpow.pop %v749
    %v751 = vmul.f32 %v744, 1.442695
    %v752 = vpow.pop %v751
    %v753 = vsel %vm291, %v746, 0.0
    %754 = vadd.xlane.f32.xlu0 %v753
    %v755 = vpop.xlane.xlu0 %754
    %v756 = vsel %vm291, %v748, 0.0
    %757 = vadd.xlane.f32.xlu0 %v756
    %v758 = vpop.xlane.xlu0 %757
    %v759 = vsel %vm291, %v750, 0.0
    %760 = vadd.xlane.f32.xlu0 %v759
    %v761 = vpop.xlane.xlu0 %760
    %v762 = vsel %vm291, %v752, 0.0
    %763 = vadd.xlane.f32.xlu0 %v762
    %v764 = vpop.xlane.xlu0 %763
    %v765 = vrcp.pop %v755
    %v766 = vrcp.pop %v758
    %v767 = vrcp.pop %v761
    %v768 = vrcp.pop %v764
    %v769 = vmul.f32 %v746, %v765
    %v770 = vmul.f32 %v748, %v766
    %v771 = vmul.f32 %v750, %v767
    %v772 = vmul.f32 %v752, %v768
    %v774 = vsel %vm291, %v769, 0
    %v777 = vsel %vm291, %v770, 0
    %v780 = vsel %vm291, %v771, 0
    %v783 = vsel %vm291, %v772, 0
    %785 = vmatprep.subr.mxu0 0.0
    %786 = vmatpush1.msra.mxu0 %v582
    %787 = vmatprep.subr.mxu0 0.0
    %788 = vmatpush1.msra.mxu0 %v587
    %789 = vmatprep.subr.mxu0 0.0
    %790 = vmatpush1.msra.mxu0 %v592
    %791 = vmatprep.subr.mxu0 0.0
    %792 = vmatpush1.msra.mxu0 %v597
    %793 = vmatprep.subr.mxu0 0.0
    %794 = vmatpush1.msra.mxu0 0.0
    %795 = vmatprep.subr.mxu0 0.0
    %796 = vmatpush1.msra.mxu0 0.0
    %797 = vmatprep.subr.mxu0 0.0
    %798 = vmatpush1.msra.mxu0 0.0
    %799 = vmatprep.subr.mxu0 0.0
    %800 = vmatpush1.msra.mxu0 0.0
    %801 = vmatprep.subr.mxu0 0.0
    %802 = vmatpush1.msra.mxu0 0.0
    %803 = vmatprep.subr.mxu0 0.0
    %804 = vmatpush1.msra.mxu0 0.0
    %805 = vmatprep.subr.mxu0 0.0
    %806 = vmatpush1.msra.mxu0 0.0
    %807 = vmatprep.subr.mxu0 0.0
    %808 = vmatpush1.msra.mxu0 0.0
    %809 = vmatprep.subr.mxu0 0.0
    %810 = vmatpush1.msra.mxu0 0.0
    %811 = vmatprep.subr.mxu0 0.0
    %812 = vmatpush1.msra.mxu0 0.0
    %813 = vmatprep.subr.mxu0 0.0
    %814 = vmatpush1.msra.mxu0 0.0
    %815 = vmatprep.subr.mxu0 0.0
    %816 = vmatpush1.msra.mxu0 0.0
    %817 = vmatprep.subr.mxu0 0.0
    %818 = vmatpush1.msra.mxu0 0.0
    %819 = vmatprep.subr.mxu0 0.0
    %820 = vmatpush1.msra.mxu0 0.0
    %821 = vmatprep.subr.mxu0 0.0
    %822 = vmatpush1.msra.mxu0 0.0
    %823 = vmatprep.subr.mxu0 0.0
    %824 = vmatpush1.msra.mxu0 0.0
    %825 = vmatprep.subr.mxu0 0.0
    %826 = vmatpush1.msra.mxu0 0.0
    %827 = vmatprep.subr.mxu0 0.0
    %828 = vmatpush1.msra.mxu0 0.0
    %829 = vmatprep.subr.mxu0 0.0
    %830 = vmatpush1.msra.mxu0 0.0
    %831 = vmatprep.subr.mxu0 0.0
    %832 = vmatpush1.msra.mxu0 0.0
    %833 = vmatprep.subr.mxu0 0.0
    %834 = vmatpush1.msra.mxu0 0.0
    %835 = vmatprep.subr.mxu0 0.0
    %836 = vmatpush1.msra.mxu0 0.0
    %837 = vmatprep.subr.mxu0 0.0
    %838 = vmatpush1.msra.mxu0 0.0
    %839 = vmatprep.subr.mxu0 0.0
    %840 = vmatpush1.msra.mxu0 0.0
    %841 = vmatprep.subr.mxu0 0.0
    %842 = vmatpush1.msra.mxu0 0.0
    %843 = vmatprep.subr.mxu0 0.0
    %844 = vmatpush1.msra.mxu0 0.0
    %845 = vmatprep.subr.mxu0 0.0
    %846 = vmatpush1.msra.mxu0 0.0
    %847 = vmatprep.subr.mxu0 0.0
    %848 = vmatpush1.msra.mxu0 0.0
    %849 = vmatprep.mubr.f32.mxu0 0.0
    %850 = vmatmul.mubr.f32.gmra.mrb[0].mxu0 %v774
    %v851 = vpop.f32.mrb[0].mxu0
    %v852 = vadd.f32 0.0, %v851
    %v853 = vpop.f32.mrb[0].mxu0
    %854 = vmatprep.mubr.f32.mxu0 0.0
    %855 = vmatmul.mubr.f32.gmra.mrb[0].mxu0 %v777
    %v856 = vpop.f32.mrb[0].mxu0
    %v857 = vadd.f32 0.0, %v856
    %v858 = vpop.f32.mrb[0].mxu0
    %859 = vmatprep.mubr.f32.mxu0 0.0
    %860 = vmatmul.mubr.f32.gmra.mrb[0].mxu0 %v780
    %v861 = vpop.f32.mrb[0].mxu0
    %v862 = vadd.f32 0.0, %v861
    %v863 = vpop.f32.mrb[0].mxu0
    %864 = vmatprep.mubr.f32.mxu0 0.0
    %865 = vmatmul.mubr.f32.gmra.mrb[0].mxu0 %v783
    %v866 = vpop.f32.mrb[0].mxu0
    %v867 = vadd.f32 0.0, %v866
    %v868 = vpop.f32.mrb[0].mxu0
    %869 = vdwg.mxu0
    %v870 = vsel %vm64, %v852, 0.0
    %v871 = vsel %vm64, %v857, 0.0
    %v872 = vadd.f32 %v870, %v871
    %v873 = vsel %vm64, %v862, 0.0
    %v874 = vadd.f32 %v872, %v873
    %v875 = vsel %vm64, %v867, 0.0
    %v876 = vadd.f32 %v874, %v875
    %v877 = vrot.slane %v876, 4
    %v878 = vadd.f32 %v876, %v877
    %v879 = vrot.slane %v878, 2
    %v880 = vadd.f32 %v878, %v879
    %v881 = vrot.slane %v880, 1
    %v882 = vadd.f32 %v880, %v881
    %v883 = vmul.f32 %v882, %v446
    %v884 = vsub.f32 %v852, %v883
    %v885 = vsub.f32 %v857, %v883
    %v886 = vsub.f32 %v862, %v883
    %v887 = vsub.f32 %v867, %v883
    %v888 = vmul.f32 %v884, %v884
    %v889 = vmul.f32 %v885, %v885
    %v890 = vmul.f32 %v886, %v886
    %v891 = vmul.f32 %v887, %v887
    %v892 = vsel %vm64, %v888, 0.0
    %v893 = vsel %vm64, %v889, 0.0
    %v894 = vadd.f32 %v892, %v893
    %v895 = vsel %vm64, %v890, 0.0
    %v896 = vadd.f32 %v894, %v895
    %v897 = vsel %vm64, %v891, 0.0
    %v898 = vadd.f32 %v896, %v897
    %v899 = vrot.slane %v898, 4
    %v900 = vadd.f32 %v898, %v899
    %v901 = vrot.slane %v900, 2
    %v902 = vadd.f32 %v900, %v901
    %v903 = vrot.slane %v902, 1
    %v904 = vadd.f32 %v902, %v903
    %v905 = vmul.f32 %v904, %v446
    %v906 = vadd.f32 %v905, 1e-05
    %v907 = vrsqrt.pop %v906
    %v908 = vmul.f32 %v502, %v907
    %v909 = vmul.f32 %v883, %v908
    %v911 = vrot.slane %v909, 7
    %v913 = vsub.f32 %v502, %v911
    %v914 = vlaneseq
    %v915 = vshrl.u32 %v914, 7
    %v916 = vsub.s32 2, %v915
    %v917 = vrot.slane %v908, %v916
    %v918 = vmul.f32 %v852, %v917
    %v919 = vmul.f32 %v857, %v917
    %v920 = vmul.f32 %v862, %v917
    %v921 = vmul.f32 %v867, %v917
    %v922 = vlaneseq
    %v923 = vshrl.u32 %v922, 7
    %v924 = vsub.s32 3, %v923
    %v925 = vrot.slane %v913, %v924
    %v926 = vadd.f32 %v918, %v925
    %v927 = vadd.f32 %v919, %v925
    %v928 = vadd.f32 %v920, %v925
    %v929 = vadd.f32 %v921, %v925
    %v930 = vmax.f32 %v926, 0.0
    %v931 = vmax.f32 %v927, 0.0
    %v932 = vmax.f32 %v928, 0.0
    %v933 = vmax.f32 %v929, 0.0
    %s934 = scalar_lea.vmem [#allocation2], 32
    %v935 = vld [vmem:[%s934] sm:$0xff]
    %v936 = vld [vmem:[%s934 + $0x8] sm:$0xff]
    %s937 = scalar_lea.vmem %s3, 8
    %v938 = vld [vmem:[%s937] sm:$0xf]
    %v940 = vsel %vm64, %v930, 0
    %v943 = vsel %vm64, %v931, 0
    %v946 = vsel %vm64, %v932, 0
    %v949 = vsel %vm64, %v933, 0
    %951 = vmatprep.subr.mxu0 0.0
    %952 = vmatpush1.msra.mxu0 %v935
    %953 = vmatprep.subr.mxu0 0.0
    %954 = vmatpush1.msra.mxu0 %v936
    %955 = vmatprep.subr.mxu0 0.0
    %956 = vmatpush1.msra.mxu0 0.0
    %957 = vmatprep.subr.mxu0 0.0
    %958 = vmatpush1.msra.mxu0 0.0
    %959 = vmatprep.subr.mxu0 0.0
    %960 = vmatpush1.msra.mxu0 0.0
    %961 = vmatprep.subr.mxu0 0.0
    %962 = vmatpush1.msra.mxu0 0.0
    %963 = vmatprep.subr.mxu0 0.0
    %964 = vmatpush1.msra.mxu0 0.0
    %965 = vmatprep.subr.mxu0 0.0
    %966 = vmatpush1.msra.mxu0 0.0
    %967 = vmatprep.subr.mxu0 0.0
    %968 = vmatpush1.msra.mxu0 0.0
    %969 = vmatprep.subr.mxu0 0.0
    %970 = vmatpush1.msra.mxu0 0.0
    %971 = vmatprep.subr.mxu0 0.0
    %972 = vmatpush1.msra.mxu0 0.0
    %973 = vmatprep.subr.mxu0 0.0
    %974 = vmatpush1.msra.mxu0 0.0
    %975 = vmatprep.subr.mxu0 0.0
    %976 = vmatpush1.msra.mxu0 0.0
    %977 = vmatprep.subr.mxu0 0.0
    %978 = vmatpush1.msra.mxu0 0.0
    %979 = vmatprep.subr.mxu0 0.0
    %980 = vmatpush1.msra.mxu0 0.0
    %981 = vmatprep.subr.mxu0 0.0
    %982 = vmatpush1.msra.mxu0 0.0
    %983 = vmatprep.subr.mxu0 0.0
    %984 = vmatpush1.msra.mxu0 0.0
    %985 = vmatprep.subr.mxu0 0.0
    %986 = vmatpush1.msra.mxu0 0.0
    %987 = vmatprep.subr.mxu0 0.0
    %988 = vmatpush1.msra.mxu0 0.0
    %989 = vmatprep.subr.mxu0 0.0
    %990 = vmatpush1.msra.mxu0 0.0
    %991 = vmatprep.subr.mxu0 0.0
    %992 = vmatpush1.msra.mxu0 0.0
    %993 = vmatprep.subr.mxu0 0.0
    %994 = vmatpush1.msra.mxu0 0.0
    %995 = vmatprep.subr.mxu0 0.0
    %996 = vmatpush1.msra.mxu0 0.0
    %997 = vmatprep.subr.mxu0 0.0
    %998 = vmatpush1.msra.mxu0 0.0
    %999 = vmatprep.subr.mxu0 0.0
    %1000 = vmatpush1.msra.mxu0 0.0
    %1001 = vmatprep.subr.mxu0 0.0
    %1002 = vmatpush1.msra.mxu0 0.0
    %1003 = vmatprep.subr.mxu0 0.0
    %1004 = vmatpush1.msra.mxu0 0.0
    %1005 = vmatprep.subr.mxu0 0.0
    %1006 = vmatpush1.msra.mxu0 0.0
    %1007 = vmatprep.subr.mxu0 0.0
    %1008 = vmatpush1.msra.mxu0 0.0
    %1009 = vmatprep.subr.mxu0 0.0
    %1010 = vmatpush1.msra.mxu0 0.0
    %1011 = vmatprep.subr.mxu0 0.0
    %1012 = vmatpush1.msra.mxu0 0.0
    %1013 = vmatprep.subr.mxu0 0.0
    %1014 = vmatpush1.msra.mxu0 0.0
    %1015 = vmatprep.mubr.f32.mxu0 0.0
    %1016 = vmatmul.mubr.f32.gmra.mrb[0].mxu0 %v940
    %v1017 = vpop.f32.mrb[0].mxu0
    %v1018 = vadd.f32 0.0, %v1017
    %v1019 = vpop.f32.mrb[0].mxu0
    %1020 = vmatprep.mubr.f32.mxu0 0.0
    %1021 = vmatmul.mubr.f32.gmra.mrb[0].mxu0 %v943
    %v1022 = vpop.f32.mrb[0].mxu0
    %v1023 = vadd.f32 0.0, %v1022
    %v1024 = vpop.f32.mrb[0].mxu0
    %1025 = vmatprep.mubr.f32.mxu0 0.0
    %1026 = vmatmul.mubr.f32.gmra.mrb[0].mxu0 %v946
    %v1027 = vpop.f32.mrb[0].mxu0
    %v1028 = vadd.f32 0.0, %v1027
    %v1029 = vpop.f32.mrb[0].mxu0
    %1030 = vmatprep.mubr.f32.mxu0 0.0
    %1031 = vmatmul.mubr.f32.gmra.mrb[0].mxu0 %v949
    %v1032 = vpop.f32.mrb[0].mxu0
    %v1033 = vadd.f32 0.0, %v1032
    %v1034 = vpop.f32.mrb[0].mxu0
    %1035 = vdwg.mxu0
    %v1036 = vlaneseq
    %v1037 = vshrl.u32 %v1036, 7
    %v1038 = vsub.s32 1, %v1037
    %v1039 = vrot.slane %v938, %v1038
    %v1040 = vmul.f32 %v1018, %v1039
    %v1041 = vmul.f32 %v1023, %v1039
    %v1042 = vmul.f32 %v1028, %v1039
    %v1043 = vmul.f32 %v1033, %v1039
    %v1044 = vsel %vm64, %v1040, 0.0
    %1045 = vadd.xlane.f32.xlu0 %v1044
    %v1046 = vpop.xlane.xlu0 %1045
    %v1047 = vsel %vm64, %v1041, 0.0
    %1048 = vadd.xlane.f32.xlu0 %v1047
    %v1049 = vpop.xlane.xlu0 %1048
    %v1050 = vsel %vm64, %v1042, 0.0
    %1051 = vadd.xlane.f32.xlu0 %v1050
    %v1052 = vpop.xlane.xlu0 %1051
    %v1053 = vsel %vm64, %v1043, 0.0
    %1054 = vadd.xlane.f32.xlu0 %v1053
    %v1055 = vpop.xlane.xlu0 %1054
    %v1057 = vsel %vm64, %v938, 0
    %v1060 = vsel %vm64, %v1018, 0
    %v1063 = vsel %vm64, %v1023, 0
    %v1066 = vsel %vm64, %v1028, 0
    %v1069 = vsel %vm64, %v1033, 0
    %1071 = vmatprep.subr.mxu0 0.0
    %1072 = vmatpush1.xpose.msra.mxu0 %v1060
    %1073 = vmatprep.subr.mxu0 0.0
    %1074 = vmatpush1.xpose.msra.mxu0 %v1063
    %1075 = vmatprep.subr.mxu0 0.0
    %1076 = vmatpush1.xpose.msra.mxu0 %v1066
    %1077 = vmatprep.subr.mxu0 0.0
    %1078 = vmatpush1.xpose.msra.mxu0 %v1069
    %1079 = vmatprep.subr.mxu0 0.0
    %1080 = vmatpush1.xpose.msra.mxu0 0.0
    %1081 = vmatprep.subr.mxu0 0.0
    %1082 = vmatpush1.xpose.msra.mxu0 0.0
    %1083 = vmatprep.subr.mxu0 0.0
    %1084 = vmatpush1.xpose.msra.mxu0 0.0
    %1085 = vmatprep.subr.mxu0 0.0
    %1086 = vmatpush1.xpose.msra.mxu0 0.0
    %1087 = vmatprep.subr.mxu0 0.0
    %1088 = vmatpush1.xpose.msra.mxu0 0.0
    %1089 = vmatprep.subr.mxu0 0.0
    %1090 = vmatpush1.xpose.msra.mxu0 0.0
    %1091 = vmatprep.subr.mxu0 0.0
    %1092 = vmatpush1.xpose.msra.mxu0 0.0
    %1093 = vmatprep.subr.mxu0 0.0
    %1094 = vmatpush1.xpose.msra.mxu0 0.0
    %1095 = vmatprep.subr.mxu0 0.0
    %1096 = vmatpush1.xpose.msra.mxu0 0.0
    %1097 = vmatprep.subr.mxu0 0.0
    %1098 = vmatpush1.xpose.msra.mxu0 0.0
    %1099 = vmatprep.subr.mxu0 0.0
    %1100 = vmatpush1.xpose.msra.mxu0 0.0
    %1101 = vmatprep.subr.mxu0 0.0
    %1102 = vmatpush1.xpose.msra.mxu0 0.0
    %1103 = vmatprep.subr.mxu0 0.0
    %1104 = vmatpush1.xpose.msra.mxu0 0.0
    %1105 = vmatprep.subr.mxu0 0.0
    %1106 = vmatpush1.xpose.msra.mxu0 0.0
    %1107 = vmatprep.subr.mxu0 0.0
    %1108 = vmatpush1.xpose.msra.mxu0 0.0
    %1109 = vmatprep.subr.mxu0 0.0
    %1110 = vmatpush1.xpose.msra.mxu0 0.0
    %1111 = vmatprep.subr.mxu0 0.0
    %1112 = vmatpush1.xpose.msra.mxu0 0.0
    %1113 = vmatprep.subr.mxu0 0.0
    %1114 = vmatpush1.xpose.msra.mxu0 0.0
    %1115 = vmatprep.subr.mxu0 0.0
    %1116 = vmatpush1.xpose.msra.mxu0 0.0
    %1117 = vmatprep.subr.mxu0 0.0
    %1118 = vmatpush1.xpose.msra.mxu0 0.0
    %1119 = vmatprep.subr.mxu0 0.0
    %1120 = vmatpush1.xpose.msra.mxu0 0.0
    %1121 = vmatprep.subr.mxu0 0.0
    %1122 = vmatpush1.xpose.msra.mxu0 0.0
    %1123 = vmatprep.subr.mxu0 0.0
    %1124 = vmatpush1.xpose.msra.mxu0 0.0
    %1125 = vmatprep.subr.mxu0 0.0
    %1126 = vmatpush1.xpose.msra.mxu0 0.0
    %1127 = vmatprep.subr.mxu0 0.0
    %1128 = vmatpush1.xpose.msra.mxu0 0.0
    %1129 = vmatprep.subr.mxu0 0.0
    %1130 = vmatpush1.xpose.msra.mxu0 0.0
    %1131 = vmatprep.subr.mxu0 0.0
    %1132 = vmatpush1.xpose.msra.mxu0 0.0
    %1133 = vmatprep.subr.mxu0 0.0
    %1134 = vmatpush1.xpose.msra.mxu0 0.0
    %1135 = vmatprep.mubr.f32.mxu0 0.0
    %1136 = vmatmul.mubr.f32.gmra.mrb[0].mxu0 %v1057
    %v1137 = vpop.f32.mrb[0].mxu0
    %v1138 = vadd.f32 0.0, %v1137
    %v1139 = vpop.f32.mrb[0].mxu0
    %1140 = vdwg.mxu0
    %v1141 = vlaneseq
    %v1142 = vshrl.u32 %v1141, 7
    %v1143 = vsub.s32 0, %v1142
    %v1144 = vrot.slane %v1138, %v1143
    %v1145 = vadd.f32 %v1046, %v1144
    %v1146 = vadd.f32 %v1049, %v1144
    %v1147 = vadd.f32 %v1052, %v1144
    %v1148 = vadd.f32 %v1055, %v1144
    %vm1149 = vcmp.gt.f32.partialorder %v1145, 0.0
    %vm1150 = vcmp.gt.f32.partialorder %v1146, 0.0
    %vm1151 = vcmp.gt.f32.partialorder %v1147, 0.0
    %vm1152 = vcmp.gt.f32.partialorder %v1148, 0.0
    %v1153 = vmul.f32 %v1145, 0.2
    %v1154 = vmul.f32 %v1146, 0.2
    %v1155 = vmul.f32 %v1147, 0.2
    %v1156 = vmul.f32 %v1148, 0.2
    %v1157 = vsel %vm1149, %v1145, %v1153
    %v1158 = vsel %vm1150, %v1146, %v1154
    %v1159 = vsel %vm1151, %v1147, %v1155
    %v1160 = vsel %vm1152, %v1148, %v1156
    %v1161 = vadd.f32 %v1157, %v53
    %v1162 = vadd.f32 %v1158, %v54
    %v1163 = vadd.f32 %v1159, %v55
    %v1164 = vadd.f32 %v1160, %v56
    %v1165 = vsel %vm291, %v1161, -inf
    %1166 = vmax.xlane.f32.xlu0 %v1165
    %v1167 = vpop.xlane.xlu0 %1166
    %v1168 = vsel %vm291, %v1162, -inf
    %1169 = vmax.xlane.f32.xlu0 %v1168
    %v1170 = vpop.xlane.xlu0 %1169
    %v1171 = vsel %vm291, %v1163, -inf
    %1172 = vmax.xlane.f32.xlu0 %v1171
    %v1173 = vpop.xlane.xlu0 %1172
    %v1174 = vsel %vm291, %v1164, -inf
    %1175 = vmax.xlane.f32.xlu0 %v1174
    %v1176 = vpop.xlane.xlu0 %1175
    %v1177 = vsub.f32 %v1161, %v1167
    %v1178 = vsub.f32 %v1162, %v1170
    %v1179 = vsub.f32 %v1163, %v1173
    %v1180 = vsub.f32 %v1164, %v1176
    %v1181 = vmul.f32 %v1177, 1.442695
    %v1182 = vpow.pop %v1181
    %v1183 = vmul.f32 %v1178, 1.442695
    %v1184 = vpow.pop %v1183
    %v1185 = vmul.f32 %v1179, 1.442695
    %v1186 = vpow.pop %v1185
    %v1187 = vmul.f32 %v1180, 1.442695
    %v1188 = vpow.pop %v1187
    %v1189 = vsel %vm291, %v1182, 0.0
    %1190 = vadd.xlane.f32.xlu0 %v1189
    %v1191 = vpop.xlane.xlu0 %1190
    %v1192 = vsel %vm291, %v1184, 0.0
    %1193 = vadd.xlane.f32.xlu0 %v1192
    %v1194 = vpop.xlane.xlu0 %1193
    %v1195 = vsel %vm291, %v1186, 0.0
    %1196 = vadd.xlane.f32.xlu0 %v1195
    %v1197 = vpop.xlane.xlu0 %1196
    %v1198 = vsel %vm291, %v1188, 0.0
    %1199 = vadd.xlane.f32.xlu0 %v1198
    %v1200 = vpop.xlane.xlu0 %1199
    %v1201 = vrcp.pop %v1191
    %v1202 = vrcp.pop %v1194
    %v1203 = vrcp.pop %v1197
    %v1204 = vrcp.pop %v1200
    %v1205 = vmul.f32 %v1182, %v1201
    %v1206 = vmul.f32 %v1184, %v1202
    %v1207 = vmul.f32 %v1186, %v1203
    %v1208 = vmul.f32 %v1188, %v1204
    %v1210 = vsel %vm291, %v1205, 0
    %v1213 = vsel %vm291, %v1206, 0
    %v1216 = vsel %vm291, %v1207, 0
    %v1219 = vsel %vm291, %v1208, 0
    %1221 = vmatprep.subr.mxu0 0.0
    %1222 = vmatpush1.msra.mxu0 %v1018
    %1223 = vmatprep.subr.mxu0 0.0
    %1224 = vmatpush1.msra.mxu0 %v1023
    %1225 = vmatprep.subr.mxu0 0.0
    %1226 = vmatpush1.msra.mxu0 %v1028
    %1227 = vmatprep.subr.mxu0 0.0
    %1228 = vmatpush1.msra.mxu0 %v1033
    %1229 = vmatprep.subr.mxu0 0.0
    %1230 = vmatpush1.msra.mxu0 0.0
    %1231 = vmatprep.subr.mxu0 0.0
    %1232 = vmatpush1.msra.mxu0 0.0
    %1233 = vmatprep.subr.mxu0 0.0
    %1234 = vmatpush1.msra.mxu0 0.0
    %1235 = vmatprep.subr.mxu0 0.0
    %1236 = vmatpush1.msra.mxu0 0.0
    %1237 = vmatprep.subr.mxu0 0.0
    %1238 = vmatpush1.msra.mxu0 0.0
    %1239 = vmatprep.subr.mxu0 0.0
    %1240 = vmatpush1.msra.mxu0 0.0
    %1241 = vmatprep.subr.mxu0 0.0
    %1242 = vmatpush1.msra.mxu0 0.0
    %1243 = vmatprep.subr.mxu0 0.0
    %1244 = vmatpush1.msra.mxu0 0.0
    %1245 = vmatprep.subr.mxu0 0.0
    %1246 = vmatpush1.msra.mxu0 0.0
    %1247 = vmatprep.subr.mxu0 0.0
    %1248 = vmatpush1.msra.mxu0 0.0
    %1249 = vmatprep.subr.mxu0 0.0
    %1250 = vmatpush1.msra.mxu0 0.0
    %1251 = vmatprep.subr.mxu0 0.0
    %1252 = vmatpush1.msra.mxu0 0.0
    %1253 = vmatprep.subr.mxu0 0.0
    %1254 = vmatpush1.msra.mxu0 0.0
    %1255 = vmatprep.subr.mxu0 0.0
    %1256 = vmatpush1.msra.mxu0 0.0
    %1257 = vmatprep.subr.mxu0 0.0
    %1258 = vmatpush1.msra.mxu0 0.0
    %1259 = vmatprep.subr.mxu0 0.0
    %1260 = vmatpush1.msra.mxu0 0.0
    %1261 = vmatprep.subr.mxu0 0.0
    %1262 = vmatpush1.msra.mxu0 0.0
    %1263 = vmatprep.subr.mxu0 0.0
    %1264 = vmatpush1.msra.mxu0 0.0
    %1265 = vmatprep.subr.mxu0 0.0
    %1266 = vmatpush1.msra.mxu0 0.0
    %1267 = vmatprep.subr.mxu0 0.0
    %1268 = vmatpush1.msra.mxu0 0.0
    %1269 = vmatprep.subr.mxu0 0.0
    %1270 = vmatpush1.msra.mxu0 0.0
    %1271 = vmatprep.subr.mxu0 0.0
    %1272 = vmatpush1.msra.mxu0 0.0
    %1273 = vmatprep.subr.mxu0 0.0
    %1274 = vmatpush1.msra.mxu0 0.0
    %1275 = vmatprep.subr.mxu0 0.0
    %1276 = vmatpush1.msra.mxu0 0.0
    %1277 = vmatprep.subr.mxu0 0.0
    %1278 = vmatpush1.msra.mxu0 0.0
    %1279 = vmatprep.subr.mxu0 0.0
    %1280 = vmatpush1.msra.mxu0 0.0
    %1281 = vmatprep.subr.mxu0 0.0
    %1282 = vmatpush1.msra.mxu0 0.0
    %1283 = vmatprep.subr.mxu0 0.0
    %1284 = vmatpush1.msra.mxu0 0.0
    %1285 = vmatprep.mubr.f32.mxu0 0.0
    %1286 = vmatmul.mubr.f32.gmra.mrb[0].mxu0 %v1210
    %v1287 = vpop.f32.mrb[0].mxu0
    %v1288 = vadd.f32 0.0, %v1287
    %v1289 = vpop.f32.mrb[0].mxu0
    %1290 = vmatprep.mubr.f32.mxu0 0.0
    %1291 = vmatmul.mubr.f32.gmra.mrb[0].mxu0 %v1213
    %v1292 = vpop.f32.mrb[0].mxu0
    %v1293 = vadd.f32 0.0, %v1292
    %v1294 = vpop.f32.mrb[0].mxu0
    %1295 = vmatprep.mubr.f32.mxu0 0.0
    %1296 = vmatmul.mubr.f32.gmra.mrb[0].mxu0 %v1216
    %v1297 = vpop.f32.mrb[0].mxu0
    %v1298 = vadd.f32 0.0, %v1297
    %v1299 = vpop.f32.mrb[0].mxu0
    %1300 = vmatprep.mubr.f32.mxu0 0.0
    %1301 = vmatmul.mubr.f32.gmra.mrb[0].mxu0 %v1219
    %v1302 = vpop.f32.mrb[0].mxu0
    %v1303 = vadd.f32 0.0, %v1302
    %v1304 = vpop.f32.mrb[0].mxu0
    %1305 = vdwg.mxu0
    %v1306 = vsel %vm64, %v1288, 0.0
    %v1307 = vsel %vm64, %v1293, 0.0
    %v1308 = vadd.f32 %v1306, %v1307
    %v1309 = vsel %vm64, %v1298, 0.0
    %v1310 = vadd.f32 %v1308, %v1309
    %v1311 = vsel %vm64, %v1303, 0.0
    %v1312 = vadd.f32 %v1310, %v1311
    %v1313 = vrot.slane %v1312, 4
    %v1314 = vadd.f32 %v1312, %v1313
    %v1315 = vrot.slane %v1314, 2
    %v1316 = vadd.f32 %v1314, %v1315
    %v1317 = vrot.slane %v1316, 1
    %v1318 = vadd.f32 %v1316, %v1317
    %v1319 = vmul.f32 %v1318, %v446
    %v1320 = vsub.f32 %v1288, %v1319
    %v1321 = vsub.f32 %v1293, %v1319
    %v1322 = vsub.f32 %v1298, %v1319
    %v1323 = vsub.f32 %v1303, %v1319
    %v1324 = vmul.f32 %v1320, %v1320
    %v1325 = vmul.f32 %v1321, %v1321
    %v1326 = vmul.f32 %v1322, %v1322
    %v1327 = vmul.f32 %v1323, %v1323
    %v1328 = vsel %vm64, %v1324, 0.0
    %v1329 = vsel %vm64, %v1325, 0.0
    %v1330 = vadd.f32 %v1328, %v1329
    %v1331 = vsel %vm64, %v1326, 0.0
    %v1332 = vadd.f32 %v1330, %v1331
    %v1333 = vsel %vm64, %v1327, 0.0
    %v1334 = vadd.f32 %v1332, %v1333
    %v1335 = vrot.slane %v1334, 4
    %v1336 = vadd.f32 %v1334, %v1335
    %v1337 = vrot.slane %v1336, 2
    %v1338 = vadd.f32 %v1336, %v1337
    %v1339 = vrot.slane %v1338, 1
    %v1340 = vadd.f32 %v1338, %v1339
    %v1341 = vmul.f32 %v1340, %v446
    %v1342 = vadd.f32 %v1341, 1e-05
    %v1343 = vrsqrt.pop %v1342
    %v1344 = vmul.f32 %v938, %v1343
    %v1345 = vmul.f32 %v1319, %v1344
    %v1347 = vrot.slane %v1345, 7
    %v1349 = vsub.f32 %v938, %v1347
    %v1350 = vlaneseq
    %v1351 = vshrl.u32 %v1350, 7
    %v1352 = vsub.s32 2, %v1351
    %v1353 = vrot.slane %v1344, %v1352
    %v1354 = vmul.f32 %v1288, %v1353
    %v1355 = vmul.f32 %v1293, %v1353
    %v1356 = vmul.f32 %v1298, %v1353
    %v1357 = vmul.f32 %v1303, %v1353
    %v1358 = vlaneseq
    %v1359 = vshrl.u32 %v1358, 7
    %v1360 = vsub.s32 3, %v1359
    %v1361 = vrot.slane %v1349, %v1360
    %v1362 = vadd.f32 %v1354, %v1361
    %v1363 = vadd.f32 %v1355, %v1361
    %v1364 = vadd.f32 %v1356, %v1361
    %v1365 = vadd.f32 %v1357, %v1361
    %v1366 = vmax.f32 %v1362, 0.0
    %v1367 = vmax.f32 %v1363, 0.0
    %v1368 = vmax.f32 %v1364, 0.0
    %v1369 = vmax.f32 %v1365, 0.0
    %s1370 = scalar_lea.vmem [#allocation2], 48
    %v1371 = vld [vmem:[%s1370] sm:$0xff]
    %v1372 = vld [vmem:[%s1370 + $0x8] sm:$0xff]
    %s1373 = scalar_lea.vmem %s3, 12
    %v1374 = vld [vmem:[%s1373] sm:$0xf]
    %v1376 = vsel %vm64, %v1366, 0
    %v1379 = vsel %vm64, %v1367, 0
    %v1382 = vsel %vm64, %v1368, 0
    %v1385 = vsel %vm64, %v1369, 0
    %1387 = vmatprep.subr.mxu0 0.0
    %1388 = vmatpush1.msra.mxu0 %v1371
    %1389 = vmatprep.subr.mxu0 0.0
    %1390 = vmatpush1.msra.mxu0 %v1372
    %1391 = vmatprep.subr.mxu0 0.0
    %1392 = vmatpush1.msra.mxu0 0.0
    %1393 = vmatprep.subr.mxu0 0.0
    %1394 = vmatpush1.msra.mxu0 0.0
    %1395 = vmatprep.subr.mxu0 0.0
    %1396 = vmatpush1.msra.mxu0 0.0
    %1397 = vmatprep.subr.mxu0 0.0
    %1398 = vmatpush1.msra.mxu0 0.0
    %1399 = vmatprep.subr.mxu0 0.0
    %1400 = vmatpush1.msra.mxu0 0.0
    %1401 = vmatprep.subr.mxu0 0.0
    %1402 = vmatpush1.msra.mxu0 0.0
    %1403 = vmatprep.subr.mxu0 0.0
    %1404 = vmatpush1.msra.mxu0 0.0
    %1405 = vmatprep.subr.mxu0 0.0
    %1406 = vmatpush1.msra.mxu0 0.0
    %1407 = vmatprep.subr.mxu0 0.0
    %1408 = vmatpush1.msra.mxu0 0.0
    %1409 = vmatprep.subr.mxu0 0.0
    %1410 = vmatpush1.msra.mxu0 0.0
    %1411 = vmatprep.subr.mxu0 0.0
    %1412 = vmatpush1.msra.mxu0 0.0
    %1413 = vmatprep.subr.mxu0 0.0
    %1414 = vmatpush1.msra.mxu0 0.0
    %1415 = vmatprep.subr.mxu0 0.0
    %1416 = vmatpush1.msra.mxu0 0.0
    %1417 = vmatprep.subr.mxu0 0.0
    %1418 = vmatpush1.msra.mxu0 0.0
    %1419 = vmatprep.subr.mxu0 0.0
    %1420 = vmatpush1.msra.mxu0 0.0
    %1421 = vmatprep.subr.mxu0 0.0
    %1422 = vmatpush1.msra.mxu0 0.0
    %1423 = vmatprep.subr.mxu0 0.0
    %1424 = vmatpush1.msra.mxu0 0.0
    %1425 = vmatprep.subr.mxu0 0.0
    %1426 = vmatpush1.msra.mxu0 0.0
    %1427 = vmatprep.subr.mxu0 0.0
    %1428 = vmatpush1.msra.mxu0 0.0
    %1429 = vmatprep.subr.mxu0 0.0
    %1430 = vmatpush1.msra.mxu0 0.0
    %1431 = vmatprep.subr.mxu0 0.0
    %1432 = vmatpush1.msra.mxu0 0.0
    %1433 = vmatprep.subr.mxu0 0.0
    %1434 = vmatpush1.msra.mxu0 0.0
    %1435 = vmatprep.subr.mxu0 0.0
    %1436 = vmatpush1.msra.mxu0 0.0
    %1437 = vmatprep.subr.mxu0 0.0
    %1438 = vmatpush1.msra.mxu0 0.0
    %1439 = vmatprep.subr.mxu0 0.0
    %1440 = vmatpush1.msra.mxu0 0.0
    %1441 = vmatprep.subr.mxu0 0.0
    %1442 = vmatpush1.msra.mxu0 0.0
    %1443 = vmatprep.subr.mxu0 0.0
    %1444 = vmatpush1.msra.mxu0 0.0
    %1445 = vmatprep.subr.mxu0 0.0
    %1446 = vmatpush1.msra.mxu0 0.0
    %1447 = vmatprep.subr.mxu0 0.0
    %1448 = vmatpush1.msra.mxu0 0.0
    %1449 = vmatprep.subr.mxu0 0.0
    %1450 = vmatpush1.msra.mxu0 0.0
    %1451 = vmatprep.mubr.f32.mxu0 0.0
    %1452 = vmatmul.mubr.f32.gmra.mrb[0].mxu0 %v1376
    %v1453 = vpop.f32.mrb[0].mxu0
    %v1454 = vadd.f32 0.0, %v1453
    %v1455 = vpop.f32.mrb[0].mxu0
    %1456 = vmatprep.mubr.f32.mxu0 0.0
    %1457 = vmatmul.mubr.f32.gmra.mrb[0].mxu0 %v1379
    %v1458 = vpop.f32.mrb[0].mxu0
    %v1459 = vadd.f32 0.0, %v1458
    %v1460 = vpop.f32.mrb[0].mxu0
    %1461 = vmatprep.mubr.f32.mxu0 0.0
    %1462 = vmatmul.mubr.f32.gmra.mrb[0].mxu0 %v1382
    %v1463 = vpop.f32.mrb[0].mxu0
    %v1464 = vadd.f32 0.0, %v1463
    %v1465 = vpop.f32.mrb[0].mxu0
    %1466 = vmatprep.mubr.f32.mxu0 0.0
    %1467 = vmatmul.mubr.f32.gmra.mrb[0].mxu0 %v1385
    %v1468 = vpop.f32.mrb[0].mxu0
    %v1469 = vadd.f32 0.0, %v1468
    %v1470 = vpop.f32.mrb[0].mxu0
    %1471 = vdwg.mxu0
    %v1472 = vlaneseq
    %v1473 = vshrl.u32 %v1472, 7
    %v1474 = vsub.s32 1, %v1473
    %v1475 = vrot.slane %v1374, %v1474
    %v1476 = vmul.f32 %v1454, %v1475
    %v1477 = vmul.f32 %v1459, %v1475
    %v1478 = vmul.f32 %v1464, %v1475
    %v1479 = vmul.f32 %v1469, %v1475
    %v1480 = vsel %vm64, %v1476, 0.0
    %1481 = vadd.xlane.f32.xlu0 %v1480
    %v1482 = vpop.xlane.xlu0 %1481
    %v1483 = vsel %vm64, %v1477, 0.0
    %1484 = vadd.xlane.f32.xlu0 %v1483
    %v1485 = vpop.xlane.xlu0 %1484
    %v1486 = vsel %vm64, %v1478, 0.0
    %1487 = vadd.xlane.f32.xlu0 %v1486
    %v1488 = vpop.xlane.xlu0 %1487
    %v1489 = vsel %vm64, %v1479, 0.0
    %1490 = vadd.xlane.f32.xlu0 %v1489
    %v1491 = vpop.xlane.xlu0 %1490
    %v1493 = vsel %vm64, %v1374, 0
    %v1496 = vsel %vm64, %v1454, 0
    %v1499 = vsel %vm64, %v1459, 0
    %v1502 = vsel %vm64, %v1464, 0
    %v1505 = vsel %vm64, %v1469, 0
    %1507 = vmatprep.subr.mxu0 0.0
    %1508 = vmatpush1.xpose.msra.mxu0 %v1496
    %1509 = vmatprep.subr.mxu0 0.0
    %1510 = vmatpush1.xpose.msra.mxu0 %v1499
    %1511 = vmatprep.subr.mxu0 0.0
    %1512 = vmatpush1.xpose.msra.mxu0 %v1502
    %1513 = vmatprep.subr.mxu0 0.0
    %1514 = vmatpush1.xpose.msra.mxu0 %v1505
    %1515 = vmatprep.subr.mxu0 0.0
    %1516 = vmatpush1.xpose.msra.mxu0 0.0
    %1517 = vmatprep.subr.mxu0 0.0
    %1518 = vmatpush1.xpose.msra.mxu0 0.0
    %1519 = vmatprep.subr.mxu0 0.0
    %1520 = vmatpush1.xpose.msra.mxu0 0.0
    %1521 = vmatprep.subr.mxu0 0.0
    %1522 = vmatpush1.xpose.msra.mxu0 0.0
    %1523 = vmatprep.subr.mxu0 0.0
    %1524 = vmatpush1.xpose.msra.mxu0 0.0
    %1525 = vmatprep.subr.mxu0 0.0
    %1526 = vmatpush1.xpose.msra.mxu0 0.0
    %1527 = vmatprep.subr.mxu0 0.0
    %1528 = vmatpush1.xpose.msra.mxu0 0.0
    %1529 = vmatprep.subr.mxu0 0.0
    %1530 = vmatpush1.xpose.msra.mxu0 0.0
    %1531 = vmatprep.subr.mxu0 0.0
    %1532 = vmatpush1.xpose.msra.mxu0 0.0
    %1533 = vmatprep.subr.mxu0 0.0
    %1534 = vmatpush1.xpose.msra.mxu0 0.0
    %1535 = vmatprep.subr.mxu0 0.0
    %1536 = vmatpush1.xpose.msra.mxu0 0.0
    %1537 = vmatprep.subr.mxu0 0.0
    %1538 = vmatpush1.xpose.msra.mxu0 0.0
    %1539 = vmatprep.subr.mxu0 0.0
    %1540 = vmatpush1.xpose.msra.mxu0 0.0
    %1541 = vmatprep.subr.mxu0 0.0
    %1542 = vmatpush1.xpose.msra.mxu0 0.0
    %1543 = vmatprep.subr.mxu0 0.0
    %1544 = vmatpush1.xpose.msra.mxu0 0.0
    %1545 = vmatprep.subr.mxu0 0.0
    %1546 = vmatpush1.xpose.msra.mxu0 0.0
    %1547 = vmatprep.subr.mxu0 0.0
    %1548 = vmatpush1.xpose.msra.mxu0 0.0
    %1549 = vmatprep.subr.mxu0 0.0
    %1550 = vmatpush1.xpose.msra.mxu0 0.0
    %1551 = vmatprep.subr.mxu0 0.0
    %1552 = vmatpush1.xpose.msra.mxu0 0.0
    %1553 = vmatprep.subr.mxu0 0.0
    %1554 = vmatpush1.xpose.msra.mxu0 0.0
    %1555 = vmatprep.subr.mxu0 0.0
    %1556 = vmatpush1.xpose.msra.mxu0 0.0
    %1557 = vmatprep.subr.mxu0 0.0
    %1558 = vmatpush1.xpose.msra.mxu0 0.0
    %1559 = vmatprep.subr.mxu0 0.0
    %1560 = vmatpush1.xpose.msra.mxu0 0.0
    %1561 = vmatprep.subr.mxu0 0.0
    %1562 = vmatpush1.xpose.msra.mxu0 0.0
    %1563 = vmatprep.subr.mxu0 0.0
    %1564 = vmatpush1.xpose.msra.mxu0 0.0
    %1565 = vmatprep.subr.mxu0 0.0
    %1566 = vmatpush1.xpose.msra.mxu0 0.0
    %1567 = vmatprep.subr.mxu0 0.0
    %1568 = vmatpush1.xpose.msra.mxu0 0.0
    %1569 = vmatprep.subr.mxu0 0.0
    %1570 = vmatpush1.xpose.msra.mxu0 0.0
    %1571 = vmatprep.mubr.f32.mxu0 0.0
    %1572 = vmatmul.mubr.f32.gmra.mrb[0].mxu0 %v1493
    %v1573 = vpop.f32.mrb[0].mxu0
    %v1574 = vadd.f32 0.0, %v1573
    %v1575 = vpop.f32.mrb[0].mxu0
    %1576 = vdwg.mxu0
    %v1577 = vlaneseq
    %v1578 = vshrl.u32 %v1577, 7
    %v1579 = vsub.s32 0, %v1578
    %v1580 = vrot.slane %v1574, %v1579
    %v1581 = vadd.f32 %v1482, %v1580
    %v1582 = vadd.f32 %v1485, %v1580
    %v1583 = vadd.f32 %v1488, %v1580
    %v1584 = vadd.f32 %v1491, %v1580
    %vm1585 = vcmp.gt.f32.partialorder %v1581, 0.0
    %vm1586 = vcmp.gt.f32.partialorder %v1582, 0.0
    %vm1587 = vcmp.gt.f32.partialorder %v1583, 0.0
    %vm1588 = vcmp.gt.f32.partialorder %v1584, 0.0
    %v1589 = vmul.f32 %v1581, 0.2
    %v1590 = vmul.f32 %v1582, 0.2
    %v1591 = vmul.f32 %v1583, 0.2
    %v1592 = vmul.f32 %v1584, 0.2
    %v1593 = vsel %vm1585, %v1581, %v1589
    %v1594 = vsel %vm1586, %v1582, %v1590
    %v1595 = vsel %vm1587, %v1583, %v1591
    %v1596 = vsel %vm1588, %v1584, %v1592
    %v1597 = vadd.f32 %v1593, %v53
    %v1598 = vadd.f32 %v1594, %v54
    %v1599 = vadd.f32 %v1595, %v55
    %v1600 = vadd.f32 %v1596, %v56
    %v1601 = vsel %vm291, %v1597, -inf
    %1602 = vmax.xlane.f32.xlu0 %v1601
    %v1603 = vpop.xlane.xlu0 %1602
    %v1604 = vsel %vm291, %v1598, -inf
    %1605 = vmax.xlane.f32.xlu0 %v1604
    %v1606 = vpop.xlane.xlu0 %1605
    %v1607 = vsel %vm291, %v1599, -inf
    %1608 = vmax.xlane.f32.xlu0 %v1607
    %v1609 = vpop.xlane.xlu0 %1608
    %v1610 = vsel %vm291, %v1600, -inf
    %1611 = vmax.xlane.f32.xlu0 %v1610
    %v1612 = vpop.xlane.xlu0 %1611
    %v1613 = vsub.f32 %v1597, %v1603
    %v1614 = vsub.f32 %v1598, %v1606
    %v1615 = vsub.f32 %v1599, %v1609
    %v1616 = vsub.f32 %v1600, %v1612
    %v1617 = vmul.f32 %v1613, 1.442695
    %v1618 = vpow.pop %v1617
    %v1619 = vmul.f32 %v1614, 1.442695
    %v1620 = vpow.pop %v1619
    %v1621 = vmul.f32 %v1615, 1.442695
    %v1622 = vpow.pop %v1621
    %v1623 = vmul.f32 %v1616, 1.442695
    %v1624 = vpow.pop %v1623
    %v1625 = vsel %vm291, %v1618, 0.0
    %1626 = vadd.xlane.f32.xlu0 %v1625
    %v1627 = vpop.xlane.xlu0 %1626
    %v1628 = vsel %vm291, %v1620, 0.0
    %1629 = vadd.xlane.f32.xlu0 %v1628
    %v1630 = vpop.xlane.xlu0 %1629
    %v1631 = vsel %vm291, %v1622, 0.0
    %1632 = vadd.xlane.f32.xlu0 %v1631
    %v1633 = vpop.xlane.xlu0 %1632
    %v1634 = vsel %vm291, %v1624, 0.0
    %1635 = vadd.xlane.f32.xlu0 %v1634
    %v1636 = vpop.xlane.xlu0 %1635
    %v1637 = vrcp.pop %v1627
    %v1638 = vrcp.pop %v1630
    %v1639 = vrcp.pop %v1633
    %v1640 = vrcp.pop %v1636
    %v1641 = vmul.f32 %v1618, %v1637
    %v1642 = vmul.f32 %v1620, %v1638
    %v1643 = vmul.f32 %v1622, %v1639
    %v1644 = vmul.f32 %v1624, %v1640
    %v1646 = vsel %vm291, %v1641, 0
    %v1649 = vsel %vm291, %v1642, 0
    %v1652 = vsel %vm291, %v1643, 0
    %v1655 = vsel %vm291, %v1644, 0
    %1657 = vmatprep.subr.mxu0 0.0
    %1658 = vmatpush1.msra.mxu0 %v1454
    %1659 = vmatprep.subr.mxu0 0.0
    %1660 = vmatpush1.msra.mxu0 %v1459
    %1661 = vmatprep.subr.mxu0 0.0
    %1662 = vmatpush1.msra.mxu0 %v1464
    %1663 = vmatprep.subr.mxu0 0.0
    %1664 = vmatpush1.msra.mxu0 %v1469
    %1665 = vmatprep.subr.mxu0 0.0
    %1666 = vmatpush1.msra.mxu0 0.0
    %1667 = vmatprep.subr.mxu0 0.0
    %1668 = vmatpush1.msra.mxu0 0.0
    %1669 = vmatprep.subr.mxu0 0.0
    %1670 = vmatpush1.msra.mxu0 0.0
    %1671 = vmatprep.subr.mxu0 0.0
    %1672 = vmatpush1.msra.mxu0 0.0
    %1673 = vmatprep.subr.mxu0 0.0
    %1674 = vmatpush1.msra.mxu0 0.0
    %1675 = vmatprep.subr.mxu0 0.0
    %1676 = vmatpush1.msra.mxu0 0.0
    %1677 = vmatprep.subr.mxu0 0.0
    %1678 = vmatpush1.msra.mxu0 0.0
    %1679 = vmatprep.subr.mxu0 0.0
    %1680 = vmatpush1.msra.mxu0 0.0
    %1681 = vmatprep.subr.mxu0 0.0
    %1682 = vmatpush1.msra.mxu0 0.0
    %1683 = vmatprep.subr.mxu0 0.0
    %1684 = vmatpush1.msra.mxu0 0.0
    %1685 = vmatprep.subr.mxu0 0.0
    %1686 = vmatpush1.msra.mxu0 0.0
    %1687 = vmatprep.subr.mxu0 0.0
    %1688 = vmatpush1.msra.mxu0 0.0
    %1689 = vmatprep.subr.mxu0 0.0
    %1690 = vmatpush1.msra.mxu0 0.0
    %1691 = vmatprep.subr.mxu0 0.0
    %1692 = vmatpush1.msra.mxu0 0.0
    %1693 = vmatprep.subr.mxu0 0.0
    %1694 = vmatpush1.msra.mxu0 0.0
    %1695 = vmatprep.subr.mxu0 0.0
    %1696 = vmatpush1.msra.mxu0 0.0
    %1697 = vmatprep.subr.mxu0 0.0
    %1698 = vmatpush1.msra.mxu0 0.0
    %1699 = vmatprep.subr.mxu0 0.0
    %1700 = vmatpush1.msra.mxu0 0.0
    %1701 = vmatprep.subr.mxu0 0.0
    %1702 = vmatpush1.msra.mxu0 0.0
    %1703 = vmatprep.subr.mxu0 0.0
    %1704 = vmatpush1.msra.mxu0 0.0
    %1705 = vmatprep.subr.mxu0 0.0
    %1706 = vmatpush1.msra.mxu0 0.0
    %1707 = vmatprep.subr.mxu0 0.0
    %1708 = vmatpush1.msra.mxu0 0.0
    %1709 = vmatprep.subr.mxu0 0.0
    %1710 = vmatpush1.msra.mxu0 0.0
    %1711 = vmatprep.subr.mxu0 0.0
    %1712 = vmatpush1.msra.mxu0 0.0
    %1713 = vmatprep.subr.mxu0 0.0
    %1714 = vmatpush1.msra.mxu0 0.0
    %1715 = vmatprep.subr.mxu0 0.0
    %1716 = vmatpush1.msra.mxu0 0.0
    %1717 = vmatprep.subr.mxu0 0.0
    %1718 = vmatpush1.msra.mxu0 0.0
    %1719 = vmatprep.subr.mxu0 0.0
    %1720 = vmatpush1.msra.mxu0 0.0
    %1721 = vmatprep.mubr.f32.mxu0 0.0
    %1722 = vmatmul.mubr.f32.gmra.mrb[0].mxu0 %v1646
    %v1723 = vpop.f32.mrb[0].mxu0
    %v1724 = vadd.f32 0.0, %v1723
    %v1725 = vpop.f32.mrb[0].mxu0
    %1726 = vmatprep.mubr.f32.mxu0 0.0
    %1727 = vmatmul.mubr.f32.gmra.mrb[0].mxu0 %v1649
    %v1728 = vpop.f32.mrb[0].mxu0
    %v1729 = vadd.f32 0.0, %v1728
    %v1730 = vpop.f32.mrb[0].mxu0
    %1731 = vmatprep.mubr.f32.mxu0 0.0
    %1732 = vmatmul.mubr.f32.gmra.mrb[0].mxu0 %v1652
    %v1733 = vpop.f32.mrb[0].mxu0
    %v1734 = vadd.f32 0.0, %v1733
    %v1735 = vpop.f32.mrb[0].mxu0
    %1736 = vmatprep.mubr.f32.mxu0 0.0
    %1737 = vmatmul.mubr.f32.gmra.mrb[0].mxu0 %v1655
    %v1738 = vpop.f32.mrb[0].mxu0
    %v1739 = vadd.f32 0.0, %v1738
    %v1740 = vpop.f32.mrb[0].mxu0
    %1741 = vdwg.mxu0
    %v1742 = vsel %vm64, %v1724, 0.0
    %v1743 = vsel %vm64, %v1729, 0.0
    %v1744 = vadd.f32 %v1742, %v1743
    %v1745 = vsel %vm64, %v1734, 0.0
    %v1746 = vadd.f32 %v1744, %v1745
    %v1747 = vsel %vm64, %v1739, 0.0
    %v1748 = vadd.f32 %v1746, %v1747
    %v1749 = vrot.slane %v1748, 4
    %v1750 = vadd.f32 %v1748, %v1749
    %v1751 = vrot.slane %v1750, 2
    %v1752 = vadd.f32 %v1750, %v1751
    %v1753 = vrot.slane %v1752, 1
    %v1754 = vadd.f32 %v1752, %v1753
    %v1755 = vmul.f32 %v1754, %v446
    %v1756 = vsub.f32 %v1724, %v1755
    %v1757 = vsub.f32 %v1729, %v1755
    %v1758 = vsub.f32 %v1734, %v1755
    %v1759 = vsub.f32 %v1739, %v1755
    %v1760 = vmul.f32 %v1756, %v1756
    %v1761 = vmul.f32 %v1757, %v1757
    %v1762 = vmul.f32 %v1758, %v1758
    %v1763 = vmul.f32 %v1759, %v1759
    %v1764 = vsel %vm64, %v1760, 0.0
    %v1765 = vsel %vm64, %v1761, 0.0
    %v1766 = vadd.f32 %v1764, %v1765
    %v1767 = vsel %vm64, %v1762, 0.0
    %v1768 = vadd.f32 %v1766, %v1767
    %v1769 = vsel %vm64, %v1763, 0.0
    %v1770 = vadd.f32 %v1768, %v1769
    %v1771 = vrot.slane %v1770, 4
    %v1772 = vadd.f32 %v1770, %v1771
    %v1773 = vrot.slane %v1772, 2
    %v1774 = vadd.f32 %v1772, %v1773
    %v1775 = vrot.slane %v1774, 1
    %v1776 = vadd.f32 %v1774, %v1775
    %v1777 = vmul.f32 %v1776, %v446
    %v1778 = vadd.f32 %v1777, 1e-05
    %v1779 = vrsqrt.pop %v1778
    %v1780 = vmul.f32 %v1374, %v1779
    %v1781 = vmul.f32 %v1755, %v1780
    %v1783 = vrot.slane %v1781, 7
    %v1785 = vsub.f32 %v1374, %v1783
    %v1786 = vlaneseq
    %v1787 = vshrl.u32 %v1786, 7
    %v1788 = vsub.s32 2, %v1787
    %v1789 = vrot.slane %v1780, %v1788
    %v1790 = vmul.f32 %v1724, %v1789
    %v1791 = vmul.f32 %v1729, %v1789
    %v1792 = vmul.f32 %v1734, %v1789
    %v1793 = vmul.f32 %v1739, %v1789
    %v1794 = vlaneseq
    %v1795 = vshrl.u32 %v1794, 7
    %v1796 = vsub.s32 3, %v1795
    %v1797 = vrot.slane %v1785, %v1796
    %v1798 = vadd.f32 %v1790, %v1797
    %v1799 = vadd.f32 %v1791, %v1797
    %v1800 = vadd.f32 %v1792, %v1797
    %v1801 = vadd.f32 %v1793, %v1797
    %v1802 = vmax.f32 %v1798, 0.0
    %v1803 = vmax.f32 %v1799, 0.0
    %v1804 = vmax.f32 %v1800, 0.0
    %v1805 = vmax.f32 %v1801, 0.0
    %s1806 = scalar_lea.vmem [#allocation2], 64
    %v1807 = vld [vmem:[%s1806] sm:$0xff]
    %v1808 = vld [vmem:[%s1806 + $0x8] sm:$0xff]
    %s1809 = scalar_lea.vmem %s3, 16
    %v1810 = vld [vmem:[%s1809] sm:$0xf]
    %v1812 = vsel %vm64, %v1802, 0
    %v1815 = vsel %vm64, %v1803, 0
    %v1818 = vsel %vm64, %v1804, 0
    %v1821 = vsel %vm64, %v1805, 0
    %1823 = vmatprep.subr.mxu0 0.0
    %1824 = vmatpush1.msra.mxu0 %v1807
    %1825 = vmatprep.subr.mxu0 0.0
    %1826 = vmatpush1.msra.mxu0 %v1808
    %1827 = vmatprep.subr.mxu0 0.0
    %1828 = vmatpush1.msra.mxu0 0.0
    %1829 = vmatprep.subr.mxu0 0.0
    %1830 = vmatpush1.msra.mxu0 0.0
    %1831 = vmatprep.subr.mxu0 0.0
    %1832 = vmatpush1.msra.mxu0 0.0
    %1833 = vmatprep.subr.mxu0 0.0
    %1834 = vmatpush1.msra.mxu0 0.0
    %1835 = vmatprep.subr.mxu0 0.0
    %1836 = vmatpush1.msra.mxu0 0.0
    %1837 = vmatprep.subr.mxu0 0.0
    %1838 = vmatpush1.msra.mxu0 0.0
    %1839 = vmatprep.subr.mxu0 0.0
    %1840 = vmatpush1.msra.mxu0 0.0
    %1841 = vmatprep.subr.mxu0 0.0
    %1842 = vmatpush1.msra.mxu0 0.0
    %1843 = vmatprep.subr.mxu0 0.0
    %1844 = vmatpush1.msra.mxu0 0.0
    %1845 = vmatprep.subr.mxu0 0.0
    %1846 = vmatpush1.msra.mxu0 0.0
    %1847 = vmatprep.subr.mxu0 0.0
    %1848 = vmatpush1.msra.mxu0 0.0
    %1849 = vmatprep.subr.mxu0 0.0
    %1850 = vmatpush1.msra.mxu0 0.0
    %1851 = vmatprep.subr.mxu0 0.0
    %1852 = vmatpush1.msra.mxu0 0.0
    %1853 = vmatprep.subr.mxu0 0.0
    %1854 = vmatpush1.msra.mxu0 0.0
    %1855 = vmatprep.subr.mxu0 0.0
    %1856 = vmatpush1.msra.mxu0 0.0
    %1857 = vmatprep.subr.mxu0 0.0
    %1858 = vmatpush1.msra.mxu0 0.0
    %1859 = vmatprep.subr.mxu0 0.0
    %1860 = vmatpush1.msra.mxu0 0.0
    %1861 = vmatprep.subr.mxu0 0.0
    %1862 = vmatpush1.msra.mxu0 0.0
    %1863 = vmatprep.subr.mxu0 0.0
    %1864 = vmatpush1.msra.mxu0 0.0
    %1865 = vmatprep.subr.mxu0 0.0
    %1866 = vmatpush1.msra.mxu0 0.0
    %1867 = vmatprep.subr.mxu0 0.0
    %1868 = vmatpush1.msra.mxu0 0.0
    %1869 = vmatprep.subr.mxu0 0.0
    %1870 = vmatpush1.msra.mxu0 0.0
    %1871 = vmatprep.subr.mxu0 0.0
    %1872 = vmatpush1.msra.mxu0 0.0
    %1873 = vmatprep.subr.mxu0 0.0
    %1874 = vmatpush1.msra.mxu0 0.0
    %1875 = vmatprep.subr.mxu0 0.0
    %1876 = vmatpush1.msra.mxu0 0.0
    %1877 = vmatprep.subr.mxu0 0.0
    %1878 = vmatpush1.msra.mxu0 0.0
    %1879 = vmatprep.subr.mxu0 0.0
    %1880 = vmatpush1.msra.mxu0 0.0
    %1881 = vmatprep.subr.mxu0 0.0
    %1882 = vmatpush1.msra.mxu0 0.0
    %1883 = vmatprep.subr.mxu0 0.0
    %1884 = vmatpush1.msra.mxu0 0.0
    %1885 = vmatprep.subr.mxu0 0.0
    %1886 = vmatpush1.msra.mxu0 0.0
    %1887 = vmatprep.mubr.f32.mxu0 0.0
    %1888 = vmatmul.mubr.f32.gmra.mrb[0].mxu0 %v1812
    %v1889 = vpop.f32.mrb[0].mxu0
    %v1890 = vadd.f32 0.0, %v1889
    %v1891 = vpop.f32.mrb[0].mxu0
    %1892 = vmatprep.mubr.f32.mxu0 0.0
    %1893 = vmatmul.mubr.f32.gmra.mrb[0].mxu0 %v1815
    %v1894 = vpop.f32.mrb[0].mxu0
    %v1895 = vadd.f32 0.0, %v1894
    %v1896 = vpop.f32.mrb[0].mxu0
    %1897 = vmatprep.mubr.f32.mxu0 0.0
    %1898 = vmatmul.mubr.f32.gmra.mrb[0].mxu0 %v1818
    %v1899 = vpop.f32.mrb[0].mxu0
    %v1900 = vadd.f32 0.0, %v1899
    %v1901 = vpop.f32.mrb[0].mxu0
    %1902 = vmatprep.mubr.f32.mxu0 0.0
    %1903 = vmatmul.mubr.f32.gmra.mrb[0].mxu0 %v1821
    %v1904 = vpop.f32.mrb[0].mxu0
    %v1905 = vadd.f32 0.0, %v1904
    %v1906 = vpop.f32.mrb[0].mxu0
    %1907 = vdwg.mxu0
    %v1908 = vlaneseq
    %v1909 = vshrl.u32 %v1908, 7
    %v1910 = vsub.s32 1, %v1909
    %v1911 = vrot.slane %v1810, %v1910
    %v1912 = vmul.f32 %v1890, %v1911
    %v1913 = vmul.f32 %v1895, %v1911
    %v1914 = vmul.f32 %v1900, %v1911
    %v1915 = vmul.f32 %v1905, %v1911
    %v1916 = vsel %vm64, %v1912, 0.0
    %1917 = vadd.xlane.f32.xlu0 %v1916
    %v1918 = vpop.xlane.xlu0 %1917
    %v1919 = vsel %vm64, %v1913, 0.0
    %1920 = vadd.xlane.f32.xlu0 %v1919
    %v1921 = vpop.xlane.xlu0 %1920
    %v1922 = vsel %vm64, %v1914, 0.0
    %1923 = vadd.xlane.f32.xlu0 %v1922
    %v1924 = vpop.xlane.xlu0 %1923
    %v1925 = vsel %vm64, %v1915, 0.0
    %1926 = vadd.xlane.f32.xlu0 %v1925
    %v1927 = vpop.xlane.xlu0 %1926
    %v1929 = vsel %vm64, %v1810, 0
    %v1932 = vsel %vm64, %v1890, 0
    %v1935 = vsel %vm64, %v1895, 0
    %v1938 = vsel %vm64, %v1900, 0
    %v1941 = vsel %vm64, %v1905, 0
    %1943 = vmatprep.subr.mxu0 0.0
    %1944 = vmatpush1.xpose.msra.mxu0 %v1932
    %1945 = vmatprep.subr.mxu0 0.0
    %1946 = vmatpush1.xpose.msra.mxu0 %v1935
    %1947 = vmatprep.subr.mxu0 0.0
    %1948 = vmatpush1.xpose.msra.mxu0 %v1938
    %1949 = vmatprep.subr.mxu0 0.0
    %1950 = vmatpush1.xpose.msra.mxu0 %v1941
    %1951 = vmatprep.subr.mxu0 0.0
    %1952 = vmatpush1.xpose.msra.mxu0 0.0
    %1953 = vmatprep.subr.mxu0 0.0
    %1954 = vmatpush1.xpose.msra.mxu0 0.0
    %1955 = vmatprep.subr.mxu0 0.0
    %1956 = vmatpush1.xpose.msra.mxu0 0.0
    %1957 = vmatprep.subr.mxu0 0.0
    %1958 = vmatpush1.xpose.msra.mxu0 0.0
    %1959 = vmatprep.subr.mxu0 0.0
    %1960 = vmatpush1.xpose.msra.mxu0 0.0
    %1961 = vmatprep.subr.mxu0 0.0
    %1962 = vmatpush1.xpose.msra.mxu0 0.0
    %1963 = vmatprep.subr.mxu0 0.0
    %1964 = vmatpush1.xpose.msra.mxu0 0.0
    %1965 = vmatprep.subr.mxu0 0.0
    %1966 = vmatpush1.xpose.msra.mxu0 0.0
    %1967 = vmatprep.subr.mxu0 0.0
    %1968 = vmatpush1.xpose.msra.mxu0 0.0
    %1969 = vmatprep.subr.mxu0 0.0
    %1970 = vmatpush1.xpose.msra.mxu0 0.0
    %1971 = vmatprep.subr.mxu0 0.0
    %1972 = vmatpush1.xpose.msra.mxu0 0.0
    %1973 = vmatprep.subr.mxu0 0.0
    %1974 = vmatpush1.xpose.msra.mxu0 0.0
    %1975 = vmatprep.subr.mxu0 0.0
    %1976 = vmatpush1.xpose.msra.mxu0 0.0
    %1977 = vmatprep.subr.mxu0 0.0
    %1978 = vmatpush1.xpose.msra.mxu0 0.0
    %1979 = vmatprep.subr.mxu0 0.0
    %1980 = vmatpush1.xpose.msra.mxu0 0.0
    %1981 = vmatprep.subr.mxu0 0.0
    %1982 = vmatpush1.xpose.msra.mxu0 0.0
    %1983 = vmatprep.subr.mxu0 0.0
    %1984 = vmatpush1.xpose.msra.mxu0 0.0
    %1985 = vmatprep.subr.mxu0 0.0
    %1986 = vmatpush1.xpose.msra.mxu0 0.0
    %1987 = vmatprep.subr.mxu0 0.0
    %1988 = vmatpush1.xpose.msra.mxu0 0.0
    %1989 = vmatprep.subr.mxu0 0.0
    %1990 = vmatpush1.xpose.msra.mxu0 0.0
    %1991 = vmatprep.subr.mxu0 0.0
    %1992 = vmatpush1.xpose.msra.mxu0 0.0
    %1993 = vmatprep.subr.mxu0 0.0
    %1994 = vmatpush1.xpose.msra.mxu0 0.0
    %1995 = vmatprep.subr.mxu0 0.0
    %1996 = vmatpush1.xpose.msra.mxu0 0.0
    %1997 = vmatprep.subr.mxu0 0.0
    %1998 = vmatpush1.xpose.msra.mxu0 0.0
    %1999 = vmatprep.subr.mxu0 0.0
    %2000 = vmatpush1.xpose.msra.mxu0 0.0
    %2001 = vmatprep.subr.mxu0 0.0
    %2002 = vmatpush1.xpose.msra.mxu0 0.0
    %2003 = vmatprep.subr.mxu0 0.0
    %2004 = vmatpush1.xpose.msra.mxu0 0.0
    %2005 = vmatprep.subr.mxu0 0.0
    %2006 = vmatpush1.xpose.msra.mxu0 0.0
    %2007 = vmatprep.mubr.f32.mxu0 0.0
    %2008 = vmatmul.mubr.f32.gmra.mrb[0].mxu0 %v1929
    %v2009 = vpop.f32.mrb[0].mxu0
    %v2010 = vadd.f32 0.0, %v2009
    %v2011 = vpop.f32.mrb[0].mxu0
    %2012 = vdwg.mxu0
    %v2013 = vlaneseq
    %v2014 = vshrl.u32 %v2013, 7
    %v2015 = vsub.s32 0, %v2014
    %v2016 = vrot.slane %v2010, %v2015
    %v2017 = vadd.f32 %v1918, %v2016
    %v2018 = vadd.f32 %v1921, %v2016
    %v2019 = vadd.f32 %v1924, %v2016
    %v2020 = vadd.f32 %v1927, %v2016
    %vm2021 = vcmp.gt.f32.partialorder %v2017, 0.0
    %vm2022 = vcmp.gt.f32.partialorder %v2018, 0.0
    %vm2023 = vcmp.gt.f32.partialorder %v2019, 0.0
    %vm2024 = vcmp.gt.f32.partialorder %v2020, 0.0
    %v2025 = vmul.f32 %v2017, 0.2
    %v2026 = vmul.f32 %v2018, 0.2
    %v2027 = vmul.f32 %v2019, 0.2
    %v2028 = vmul.f32 %v2020, 0.2
    %v2029 = vsel %vm2021, %v2017, %v2025
    %v2030 = vsel %vm2022, %v2018, %v2026
    %v2031 = vsel %vm2023, %v2019, %v2027
    %v2032 = vsel %vm2024, %v2020, %v2028
    %v2033 = vadd.f32 %v2029, %v53
    %v2034 = vadd.f32 %v2030, %v54
    %v2035 = vadd.f32 %v2031, %v55
    %v2036 = vadd.f32 %v2032, %v56
    %v2037 = vsel %vm291, %v2033, -inf
    %2038 = vmax.xlane.f32.xlu0 %v2037
    %v2039 = vpop.xlane.xlu0 %2038
    %v2040 = vsel %vm291, %v2034, -inf
    %2041 = vmax.xlane.f32.xlu0 %v2040
    %v2042 = vpop.xlane.xlu0 %2041
    %v2043 = vsel %vm291, %v2035, -inf
    %2044 = vmax.xlane.f32.xlu0 %v2043
    %v2045 = vpop.xlane.xlu0 %2044
    %v2046 = vsel %vm291, %v2036, -inf
    %2047 = vmax.xlane.f32.xlu0 %v2046
    %v2048 = vpop.xlane.xlu0 %2047
    %v2049 = vsub.f32 %v2033, %v2039
    %v2050 = vsub.f32 %v2034, %v2042
    %v2051 = vsub.f32 %v2035, %v2045
    %v2052 = vsub.f32 %v2036, %v2048
    %v2053 = vmul.f32 %v2049, 1.442695
    %v2054 = vpow.pop %v2053
    %v2055 = vmul.f32 %v2050, 1.442695
    %v2056 = vpow.pop %v2055
    %v2057 = vmul.f32 %v2051, 1.442695
    %v2058 = vpow.pop %v2057
    %v2059 = vmul.f32 %v2052, 1.442695
    %v2060 = vpow.pop %v2059
    %v2061 = vsel %vm291, %v2054, 0.0
    %2062 = vadd.xlane.f32.xlu0 %v2061
    %v2063 = vpop.xlane.xlu0 %2062
    %v2064 = vsel %vm291, %v2056, 0.0
    %2065 = vadd.xlane.f32.xlu0 %v2064
    %v2066 = vpop.xlane.xlu0 %2065
    %v2067 = vsel %vm291, %v2058, 0.0
    %2068 = vadd.xlane.f32.xlu0 %v2067
    %v2069 = vpop.xlane.xlu0 %2068
    %v2070 = vsel %vm291, %v2060, 0.0
    %2071 = vadd.xlane.f32.xlu0 %v2070
    %v2072 = vpop.xlane.xlu0 %2071
    %v2073 = vrcp.pop %v2063
    %v2074 = vrcp.pop %v2066
    %v2075 = vrcp.pop %v2069
    %v2076 = vrcp.pop %v2072
    %v2077 = vmul.f32 %v2054, %v2073
    %v2078 = vmul.f32 %v2056, %v2074
    %v2079 = vmul.f32 %v2058, %v2075
    %v2080 = vmul.f32 %v2060, %v2076
    %v2082 = vsel %vm291, %v2077, 0
    %v2085 = vsel %vm291, %v2078, 0
    %v2088 = vsel %vm291, %v2079, 0
    %v2091 = vsel %vm291, %v2080, 0
    %2093 = vmatprep.subr.mxu0 0.0
    %2094 = vmatpush1.msra.mxu0 %v1890
    %2095 = vmatprep.subr.mxu0 0.0
    %2096 = vmatpush1.msra.mxu0 %v1895
    %2097 = vmatprep.subr.mxu0 0.0
    %2098 = vmatpush1.msra.mxu0 %v1900
    %2099 = vmatprep.subr.mxu0 0.0
    %2100 = vmatpush1.msra.mxu0 %v1905
    %2101 = vmatprep.subr.mxu0 0.0
    %2102 = vmatpush1.msra.mxu0 0.0
    %2103 = vmatprep.subr.mxu0 0.0
    %2104 = vmatpush1.msra.mxu0 0.0
    %2105 = vmatprep.subr.mxu0 0.0
    %2106 = vmatpush1.msra.mxu0 0.0
    %2107 = vmatprep.subr.mxu0 0.0
    %2108 = vmatpush1.msra.mxu0 0.0
    %2109 = vmatprep.subr.mxu0 0.0
    %2110 = vmatpush1.msra.mxu0 0.0
    %2111 = vmatprep.subr.mxu0 0.0
    %2112 = vmatpush1.msra.mxu0 0.0
    %2113 = vmatprep.subr.mxu0 0.0
    %2114 = vmatpush1.msra.mxu0 0.0
    %2115 = vmatprep.subr.mxu0 0.0
    %2116 = vmatpush1.msra.mxu0 0.0
    %2117 = vmatprep.subr.mxu0 0.0
    %2118 = vmatpush1.msra.mxu0 0.0
    %2119 = vmatprep.subr.mxu0 0.0
    %2120 = vmatpush1.msra.mxu0 0.0
    %2121 = vmatprep.subr.mxu0 0.0
    %2122 = vmatpush1.msra.mxu0 0.0
    %2123 = vmatprep.subr.mxu0 0.0
    %2124 = vmatpush1.msra.mxu0 0.0
    %2125 = vmatprep.subr.mxu0 0.0
    %2126 = vmatpush1.msra.mxu0 0.0
    %2127 = vmatprep.subr.mxu0 0.0
    %2128 = vmatpush1.msra.mxu0 0.0
    %2129 = vmatprep.subr.mxu0 0.0
    %2130 = vmatpush1.msra.mxu0 0.0
    %2131 = vmatprep.subr.mxu0 0.0
    %2132 = vmatpush1.msra.mxu0 0.0
    %2133 = vmatprep.subr.mxu0 0.0
    %2134 = vmatpush1.msra.mxu0 0.0
    %2135 = vmatprep.subr.mxu0 0.0
    %2136 = vmatpush1.msra.mxu0 0.0
    %2137 = vmatprep.subr.mxu0 0.0
    %2138 = vmatpush1.msra.mxu0 0.0
    %2139 = vmatprep.subr.mxu0 0.0
    %2140 = vmatpush1.msra.mxu0 0.0
    %2141 = vmatprep.subr.mxu0 0.0
    %2142 = vmatpush1.msra.mxu0 0.0
    %2143 = vmatprep.subr.mxu0 0.0
    %2144 = vmatpush1.msra.mxu0 0.0
    %2145 = vmatprep.subr.mxu0 0.0
    %2146 = vmatpush1.msra.mxu0 0.0
    %2147 = vmatprep.subr.mxu0 0.0
    %2148 = vmatpush1.msra.mxu0 0.0
    %2149 = vmatprep.subr.mxu0 0.0
    %2150 = vmatpush1.msra.mxu0 0.0
    %2151 = vmatprep.subr.mxu0 0.0
    %2152 = vmatpush1.msra.mxu0 0.0
    %2153 = vmatprep.subr.mxu0 0.0
    %2154 = vmatpush1.msra.mxu0 0.0
    %2155 = vmatprep.subr.mxu0 0.0
    %2156 = vmatpush1.msra.mxu0 0.0
    %2157 = vmatprep.mubr.f32.mxu0 0.0
    %2158 = vmatmul.mubr.f32.gmra.mrb[0].mxu0 %v2082
    %v2159 = vpop.f32.mrb[0].mxu0
    %v2160 = vadd.f32 0.0, %v2159
    %v2161 = vpop.f32.mrb[0].mxu0
    %2162 = vmatprep.mubr.f32.mxu0 0.0
    %2163 = vmatmul.mubr.f32.gmra.mrb[0].mxu0 %v2085
    %v2164 = vpop.f32.mrb[0].mxu0
    %v2165 = vadd.f32 0.0, %v2164
    %v2166 = vpop.f32.mrb[0].mxu0
    %2167 = vmatprep.mubr.f32.mxu0 0.0
    %2168 = vmatmul.mubr.f32.gmra.mrb[0].mxu0 %v2088
    %v2169 = vpop.f32.mrb[0].mxu0
    %v2170 = vadd.f32 0.0, %v2169
    %v2171 = vpop.f32.mrb[0].mxu0
    %2172 = vmatprep.mubr.f32.mxu0 0.0
    %2173 = vmatmul.mubr.f32.gmra.mrb[0].mxu0 %v2091
    %v2174 = vpop.f32.mrb[0].mxu0
    %v2175 = vadd.f32 0.0, %v2174
    %v2176 = vpop.f32.mrb[0].mxu0
    %2177 = vdwg.mxu0
    %v2178 = vsel %vm64, %v2160, 0.0
    %v2179 = vsel %vm64, %v2165, 0.0
    %v2180 = vadd.f32 %v2178, %v2179
    %v2181 = vsel %vm64, %v2170, 0.0
    %v2182 = vadd.f32 %v2180, %v2181
    %v2183 = vsel %vm64, %v2175, 0.0
    %v2184 = vadd.f32 %v2182, %v2183
    %v2185 = vrot.slane %v2184, 4
    %v2186 = vadd.f32 %v2184, %v2185
    %v2187 = vrot.slane %v2186, 2
    %v2188 = vadd.f32 %v2186, %v2187
    %v2189 = vrot.slane %v2188, 1
    %v2190 = vadd.f32 %v2188, %v2189
    %v2191 = vmul.f32 %v2190, %v446
    %v2192 = vsub.f32 %v2160, %v2191
    %v2193 = vsub.f32 %v2165, %v2191
    %v2194 = vsub.f32 %v2170, %v2191
    %v2195 = vsub.f32 %v2175, %v2191
    %v2196 = vmul.f32 %v2192, %v2192
    %v2197 = vmul.f32 %v2193, %v2193
    %v2198 = vmul.f32 %v2194, %v2194
    %v2199 = vmul.f32 %v2195, %v2195
    %v2200 = vsel %vm64, %v2196, 0.0
    %v2201 = vsel %vm64, %v2197, 0.0
    %v2202 = vadd.f32 %v2200, %v2201
    %v2203 = vsel %vm64, %v2198, 0.0
    %v2204 = vadd.f32 %v2202, %v2203
    %v2205 = vsel %vm64, %v2199, 0.0
    %v2206 = vadd.f32 %v2204, %v2205
    %v2207 = vrot.slane %v2206, 4
    %v2208 = vadd.f32 %v2206, %v2207
    %v2209 = vrot.slane %v2208, 2
    %v2210 = vadd.f32 %v2208, %v2209
    %v2211 = vrot.slane %v2210, 1
    %v2212 = vadd.f32 %v2210, %v2211
    %v2213 = vmul.f32 %v2212, %v446
    %v2214 = vadd.f32 %v2213, 1e-05
    %v2215 = vrsqrt.pop %v2214
    %v2216 = vmul.f32 %v1810, %v2215
    %v2217 = vmul.f32 %v2191, %v2216
    %v2219 = vrot.slane %v2217, 7
    %v2221 = vsub.f32 %v1810, %v2219
    %v2222 = vlaneseq
    %v2223 = vshrl.u32 %v2222, 7
    %v2224 = vsub.s32 2, %v2223
    %v2225 = vrot.slane %v2216, %v2224
    %v2226 = vmul.f32 %v2160, %v2225
    %v2227 = vmul.f32 %v2165, %v2225
    %v2228 = vmul.f32 %v2170, %v2225
    %v2229 = vmul.f32 %v2175, %v2225
    %v2230 = vlaneseq
    %v2231 = vshrl.u32 %v2230, 7
    %v2232 = vsub.s32 3, %v2231
    %v2233 = vrot.slane %v2221, %v2232
    %v2234 = vadd.f32 %v2226, %v2233
    %v2235 = vadd.f32 %v2227, %v2233
    %v2236 = vadd.f32 %v2228, %v2233
    %v2237 = vadd.f32 %v2229, %v2233
    %v2238 = vmax.f32 %v2234, 0.0
    %v2239 = vmax.f32 %v2235, 0.0
    %v2240 = vmax.f32 %v2236, 0.0
    %v2241 = vmax.f32 %v2237, 0.0
    %s2242 = scalar_lea.vmem [#allocation2], 80
    %v2243 = vld [vmem:[%s2242] sm:$0xff]
    %v2244 = vld [vmem:[%s2242 + $0x8] sm:$0xff]
    %s2245 = scalar_lea.vmem %s3, 20
    %v2246 = vld [vmem:[%s2245] sm:$0xf]
    %v2248 = vsel %vm64, %v2238, 0
    %v2251 = vsel %vm64, %v2239, 0
    %v2254 = vsel %vm64, %v2240, 0
    %v2257 = vsel %vm64, %v2241, 0
    %2259 = vmatprep.subr.mxu0 0.0
    %2260 = vmatpush1.msra.mxu0 %v2243
    %2261 = vmatprep.subr.mxu0 0.0
    %2262 = vmatpush1.msra.mxu0 %v2244
    %2263 = vmatprep.subr.mxu0 0.0
    %2264 = vmatpush1.msra.mxu0 0.0
    %2265 = vmatprep.subr.mxu0 0.0
    %2266 = vmatpush1.msra.mxu0 0.0
    %2267 = vmatprep.subr.mxu0 0.0
    %2268 = vmatpush1.msra.mxu0 0.0
    %2269 = vmatprep.subr.mxu0 0.0
    %2270 = vmatpush1.msra.mxu0 0.0
    %2271 = vmatprep.subr.mxu0 0.0
    %2272 = vmatpush1.msra.mxu0 0.0
    %2273 = vmatprep.subr.mxu0 0.0
    %2274 = vmatpush1.msra.mxu0 0.0
    %2275 = vmatprep.subr.mxu0 0.0
    %2276 = vmatpush1.msra.mxu0 0.0
    %2277 = vmatprep.subr.mxu0 0.0
    %2278 = vmatpush1.msra.mxu0 0.0
    %2279 = vmatprep.subr.mxu0 0.0
    %2280 = vmatpush1.msra.mxu0 0.0
    %2281 = vmatprep.subr.mxu0 0.0
    %2282 = vmatpush1.msra.mxu0 0.0
    %2283 = vmatprep.subr.mxu0 0.0
    %2284 = vmatpush1.msra.mxu0 0.0
    %2285 = vmatprep.subr.mxu0 0.0
    %2286 = vmatpush1.msra.mxu0 0.0
    %2287 = vmatprep.subr.mxu0 0.0
    %2288 = vmatpush1.msra.mxu0 0.0
    %2289 = vmatprep.subr.mxu0 0.0
    %2290 = vmatpush1.msra.mxu0 0.0
    %2291 = vmatprep.subr.mxu0 0.0
    %2292 = vmatpush1.msra.mxu0 0.0
    %2293 = vmatprep.subr.mxu0 0.0
    %2294 = vmatpush1.msra.mxu0 0.0
    %2295 = vmatprep.subr.mxu0 0.0
    %2296 = vmatpush1.msra.mxu0 0.0
    %2297 = vmatprep.subr.mxu0 0.0
    %2298 = vmatpush1.msra.mxu0 0.0
    %2299 = vmatprep.subr.mxu0 0.0
    %2300 = vmatpush1.msra.mxu0 0.0
    %2301 = vmatprep.subr.mxu0 0.0
    %2302 = vmatpush1.msra.mxu0 0.0
    %2303 = vmatprep.subr.mxu0 0.0
    %2304 = vmatpush1.msra.mxu0 0.0
    %2305 = vmatprep.subr.mxu0 0.0
    %2306 = vmatpush1.msra.mxu0 0.0
    %2307 = vmatprep.subr.mxu0 0.0
    %2308 = vmatpush1.msra.mxu0 0.0
    %2309 = vmatprep.subr.mxu0 0.0
    %2310 = vmatpush1.msra.mxu0 0.0
    %2311 = vmatprep.subr.mxu0 0.0
    %2312 = vmatpush1.msra.mxu0 0.0
    %2313 = vmatprep.subr.mxu0 0.0
    %2314 = vmatpush1.msra.mxu0 0.0
    %2315 = vmatprep.subr.mxu0 0.0
    %2316 = vmatpush1.msra.mxu0 0.0
    %2317 = vmatprep.subr.mxu0 0.0
    %2318 = vmatpush1.msra.mxu0 0.0
    %2319 = vmatprep.subr.mxu0 0.0
    %2320 = vmatpush1.msra.mxu0 0.0
    %2321 = vmatprep.subr.mxu0 0.0
    %2322 = vmatpush1.msra.mxu0 0.0
    %2323 = vmatprep.mubr.f32.mxu0 0.0
    %2324 = vmatmul.mubr.f32.gmra.mrb[0].mxu0 %v2248
    %v2325 = vpop.f32.mrb[0].mxu0
    %v2326 = vadd.f32 0.0, %v2325
    %v2327 = vpop.f32.mrb[0].mxu0
    %2328 = vmatprep.mubr.f32.mxu0 0.0
    %2329 = vmatmul.mubr.f32.gmra.mrb[0].mxu0 %v2251
    %v2330 = vpop.f32.mrb[0].mxu0
    %v2331 = vadd.f32 0.0, %v2330
    %v2332 = vpop.f32.mrb[0].mxu0
    %2333 = vmatprep.mubr.f32.mxu0 0.0
    %2334 = vmatmul.mubr.f32.gmra.mrb[0].mxu0 %v2254
    %v2335 = vpop.f32.mrb[0].mxu0
    %v2336 = vadd.f32 0.0, %v2335
    %v2337 = vpop.f32.mrb[0].mxu0
    %2338 = vmatprep.mubr.f32.mxu0 0.0
    %2339 = vmatmul.mubr.f32.gmra.mrb[0].mxu0 %v2257
    %v2340 = vpop.f32.mrb[0].mxu0
    %v2341 = vadd.f32 0.0, %v2340
    %v2342 = vpop.f32.mrb[0].mxu0
    %2343 = vdwg.mxu0
    %v2344 = vlaneseq
    %v2345 = vshrl.u32 %v2344, 7
    %v2346 = vsub.s32 1, %v2345
    %v2347 = vrot.slane %v2246, %v2346
    %v2348 = vmul.f32 %v2326, %v2347
    %v2349 = vmul.f32 %v2331, %v2347
    %v2350 = vmul.f32 %v2336, %v2347
    %v2351 = vmul.f32 %v2341, %v2347
    %v2352 = vsel %vm64, %v2348, 0.0
    %2353 = vadd.xlane.f32.xlu0 %v2352
    %v2354 = vpop.xlane.xlu0 %2353
    %v2355 = vsel %vm64, %v2349, 0.0
    %2356 = vadd.xlane.f32.xlu0 %v2355
    %v2357 = vpop.xlane.xlu0 %2356
    %v2358 = vsel %vm64, %v2350, 0.0
    %2359 = vadd.xlane.f32.xlu0 %v2358
    %v2360 = vpop.xlane.xlu0 %2359
    %v2361 = vsel %vm64, %v2351, 0.0
    %2362 = vadd.xlane.f32.xlu0 %v2361
    %v2363 = vpop.xlane.xlu0 %2362
    %v2365 = vsel %vm64, %v2246, 0
    %v2368 = vsel %vm64, %v2326, 0
    %v2371 = vsel %vm64, %v2331, 0
    %v2374 = vsel %vm64, %v2336, 0
    %v2377 = vsel %vm64, %v2341, 0
    %2379 = vmatprep.subr.mxu0 0.0
    %2380 = vmatpush1.xpose.msra.mxu0 %v2368
    %2381 = vmatprep.subr.mxu0 0.0
    %2382 = vmatpush1.xpose.msra.mxu0 %v2371
    %2383 = vmatprep.subr.mxu0 0.0
    %2384 = vmatpush1.xpose.msra.mxu0 %v2374
    %2385 = vmatprep.subr.mxu0 0.0
    %2386 = vmatpush1.xpose.msra.mxu0 %v2377
    %2387 = vmatprep.subr.mxu0 0.0
    %2388 = vmatpush1.xpose.msra.mxu0 0.0
    %2389 = vmatprep.subr.mxu0 0.0
    %2390 = vmatpush1.xpose.msra.mxu0 0.0
    %2391 = vmatprep.subr.mxu0 0.0
    %2392 = vmatpush1.xpose.msra.mxu0 0.0
    %2393 = vmatprep.subr.mxu0 0.0
    %2394 = vmatpush1.xpose.msra.mxu0 0.0
    %2395 = vmatprep.subr.mxu0 0.0
    %2396 = vmatpush1.xpose.msra.mxu0 0.0
    %2397 = vmatprep.subr.mxu0 0.0
    %2398 = vmatpush1.xpose.msra.mxu0 0.0
    %2399 = vmatprep.subr.mxu0 0.0
    %2400 = vmatpush1.xpose.msra.mxu0 0.0
    %2401 = vmatprep.subr.mxu0 0.0
    %2402 = vmatpush1.xpose.msra.mxu0 0.0
    %2403 = vmatprep.subr.mxu0 0.0
    %2404 = vmatpush1.xpose.msra.mxu0 0.0
    %2405 = vmatprep.subr.mxu0 0.0
    %2406 = vmatpush1.xpose.msra.mxu0 0.0
    %2407 = vmatprep.subr.mxu0 0.0
    %2408 = vmatpush1.xpose.msra.mxu0 0.0
    %2409 = vmatprep.subr.mxu0 0.0
    %2410 = vmatpush1.xpose.msra.mxu0 0.0
    %2411 = vmatprep.subr.mxu0 0.0
    %2412 = vmatpush1.xpose.msra.mxu0 0.0
    %2413 = vmatprep.subr.mxu0 0.0
    %2414 = vmatpush1.xpose.msra.mxu0 0.0
    %2415 = vmatprep.subr.mxu0 0.0
    %2416 = vmatpush1.xpose.msra.mxu0 0.0
    %2417 = vmatprep.subr.mxu0 0.0
    %2418 = vmatpush1.xpose.msra.mxu0 0.0
    %2419 = vmatprep.subr.mxu0 0.0
    %2420 = vmatpush1.xpose.msra.mxu0 0.0
    %2421 = vmatprep.subr.mxu0 0.0
    %2422 = vmatpush1.xpose.msra.mxu0 0.0
    %2423 = vmatprep.subr.mxu0 0.0
    %2424 = vmatpush1.xpose.msra.mxu0 0.0
    %2425 = vmatprep.subr.mxu0 0.0
    %2426 = vmatpush1.xpose.msra.mxu0 0.0
    %2427 = vmatprep.subr.mxu0 0.0
    %2428 = vmatpush1.xpose.msra.mxu0 0.0
    %2429 = vmatprep.subr.mxu0 0.0
    %2430 = vmatpush1.xpose.msra.mxu0 0.0
    %2431 = vmatprep.subr.mxu0 0.0
    %2432 = vmatpush1.xpose.msra.mxu0 0.0
    %2433 = vmatprep.subr.mxu0 0.0
    %2434 = vmatpush1.xpose.msra.mxu0 0.0
    %2435 = vmatprep.subr.mxu0 0.0
    %2436 = vmatpush1.xpose.msra.mxu0 0.0
    %2437 = vmatprep.subr.mxu0 0.0
    %2438 = vmatpush1.xpose.msra.mxu0 0.0
    %2439 = vmatprep.subr.mxu0 0.0
    %2440 = vmatpush1.xpose.msra.mxu0 0.0
    %2441 = vmatprep.subr.mxu0 0.0
    %2442 = vmatpush1.xpose.msra.mxu0 0.0
    %2443 = vmatprep.mubr.f32.mxu0 0.0
    %2444 = vmatmul.mubr.f32.gmra.mrb[0].mxu0 %v2365
    %v2445 = vpop.f32.mrb[0].mxu0
    %v2446 = vadd.f32 0.0, %v2445
    %v2447 = vpop.f32.mrb[0].mxu0
    %2448 = vdwg.mxu0
    %v2449 = vlaneseq
    %v2450 = vshrl.u32 %v2449, 7
    %v2451 = vsub.s32 0, %v2450
    %v2452 = vrot.slane %v2446, %v2451
    %v2453 = vadd.f32 %v2354, %v2452
    %v2454 = vadd.f32 %v2357, %v2452
    %v2455 = vadd.f32 %v2360, %v2452
    %v2456 = vadd.f32 %v2363, %v2452
    %vm2457 = vcmp.gt.f32.partialorder %v2453, 0.0
    %vm2458 = vcmp.gt.f32.partialorder %v2454, 0.0
    %vm2459 = vcmp.gt.f32.partialorder %v2455, 0.0
    %vm2460 = vcmp.gt.f32.partialorder %v2456, 0.0
    %v2461 = vmul.f32 %v2453, 0.2
    %v2462 = vmul.f32 %v2454, 0.2
    %v2463 = vmul.f32 %v2455, 0.2
    %v2464 = vmul.f32 %v2456, 0.2
    %v2465 = vsel %vm2457, %v2453, %v2461
    %v2466 = vsel %vm2458, %v2454, %v2462
    %v2467 = vsel %vm2459, %v2455, %v2463
    %v2468 = vsel %vm2460, %v2456, %v2464
    %v2469 = vadd.f32 %v2465, %v53
    %v2470 = vadd.f32 %v2466, %v54
    %v2471 = vadd.f32 %v2467, %v55
    %v2472 = vadd.f32 %v2468, %v56
    %v2473 = vsel %vm291, %v2469, -inf
    %2474 = vmax.xlane.f32.xlu0 %v2473
    %v2475 = vpop.xlane.xlu0 %2474
    %v2476 = vsel %vm291, %v2470, -inf
    %2477 = vmax.xlane.f32.xlu0 %v2476
    %v2478 = vpop.xlane.xlu0 %2477
    %v2479 = vsel %vm291, %v2471, -inf
    %2480 = vmax.xlane.f32.xlu0 %v2479
    %v2481 = vpop.xlane.xlu0 %2480
    %v2482 = vsel %vm291, %v2472, -inf
    %2483 = vmax.xlane.f32.xlu0 %v2482
    %v2484 = vpop.xlane.xlu0 %2483
    %v2485 = vsub.f32 %v2469, %v2475
    %v2486 = vsub.f32 %v2470, %v2478
    %v2487 = vsub.f32 %v2471, %v2481
    %v2488 = vsub.f32 %v2472, %v2484
    %v2489 = vmul.f32 %v2485, 1.442695
    %v2490 = vpow.pop %v2489
    %v2491 = vmul.f32 %v2486, 1.442695
    %v2492 = vpow.pop %v2491
    %v2493 = vmul.f32 %v2487, 1.442695
    %v2494 = vpow.pop %v2493
    %v2495 = vmul.f32 %v2488, 1.442695
    %v2496 = vpow.pop %v2495
    %v2497 = vsel %vm291, %v2490, 0.0
    %2498 = vadd.xlane.f32.xlu0 %v2497
    %v2499 = vpop.xlane.xlu0 %2498
    %v2500 = vsel %vm291, %v2492, 0.0
    %2501 = vadd.xlane.f32.xlu0 %v2500
    %v2502 = vpop.xlane.xlu0 %2501
    %v2503 = vsel %vm291, %v2494, 0.0
    %2504 = vadd.xlane.f32.xlu0 %v2503
    %v2505 = vpop.xlane.xlu0 %2504
    %v2506 = vsel %vm291, %v2496, 0.0
    %2507 = vadd.xlane.f32.xlu0 %v2506
    %v2508 = vpop.xlane.xlu0 %2507
    %v2509 = vrcp.pop %v2499
    %v2510 = vrcp.pop %v2502
    %v2511 = vrcp.pop %v2505
    %v2512 = vrcp.pop %v2508
    %v2513 = vmul.f32 %v2490, %v2509
    %v2514 = vmul.f32 %v2492, %v2510
    %v2515 = vmul.f32 %v2494, %v2511
    %v2516 = vmul.f32 %v2496, %v2512
    %v2518 = vsel %vm291, %v2513, 0
    %v2521 = vsel %vm291, %v2514, 0
    %v2524 = vsel %vm291, %v2515, 0
    %v2527 = vsel %vm291, %v2516, 0
    %2529 = vmatprep.subr.mxu0 0.0
    %2530 = vmatpush1.msra.mxu0 %v2326
    %2531 = vmatprep.subr.mxu0 0.0
    %2532 = vmatpush1.msra.mxu0 %v2331
    %2533 = vmatprep.subr.mxu0 0.0
    %2534 = vmatpush1.msra.mxu0 %v2336
    %2535 = vmatprep.subr.mxu0 0.0
    %2536 = vmatpush1.msra.mxu0 %v2341
    %2537 = vmatprep.subr.mxu0 0.0
    %2538 = vmatpush1.msra.mxu0 0.0
    %2539 = vmatprep.subr.mxu0 0.0
    %2540 = vmatpush1.msra.mxu0 0.0
    %2541 = vmatprep.subr.mxu0 0.0
    %2542 = vmatpush1.msra.mxu0 0.0
    %2543 = vmatprep.subr.mxu0 0.0
    %2544 = vmatpush1.msra.mxu0 0.0
    %2545 = vmatprep.subr.mxu0 0.0
    %2546 = vmatpush1.msra.mxu0 0.0
    %2547 = vmatprep.subr.mxu0 0.0
    %2548 = vmatpush1.msra.mxu0 0.0
    %2549 = vmatprep.subr.mxu0 0.0
    %2550 = vmatpush1.msra.mxu0 0.0
    %2551 = vmatprep.subr.mxu0 0.0
    %2552 = vmatpush1.msra.mxu0 0.0
    %2553 = vmatprep.subr.mxu0 0.0
    %2554 = vmatpush1.msra.mxu0 0.0
    %2555 = vmatprep.subr.mxu0 0.0
    %2556 = vmatpush1.msra.mxu0 0.0
    %2557 = vmatprep.subr.mxu0 0.0
    %2558 = vmatpush1.msra.mxu0 0.0
    %2559 = vmatprep.subr.mxu0 0.0
    %2560 = vmatpush1.msra.mxu0 0.0
    %2561 = vmatprep.subr.mxu0 0.0
    %2562 = vmatpush1.msra.mxu0 0.0
    %2563 = vmatprep.subr.mxu0 0.0
    %2564 = vmatpush1.msra.mxu0 0.0
    %2565 = vmatprep.subr.mxu0 0.0
    %2566 = vmatpush1.msra.mxu0 0.0
    %2567 = vmatprep.subr.mxu0 0.0
    %2568 = vmatpush1.msra.mxu0 0.0
    %2569 = vmatprep.subr.mxu0 0.0
    %2570 = vmatpush1.msra.mxu0 0.0
    %2571 = vmatprep.subr.mxu0 0.0
    %2572 = vmatpush1.msra.mxu0 0.0
    %2573 = vmatprep.subr.mxu0 0.0
    %2574 = vmatpush1.msra.mxu0 0.0
    %2575 = vmatprep.subr.mxu0 0.0
    %2576 = vmatpush1.msra.mxu0 0.0
    %2577 = vmatprep.subr.mxu0 0.0
    %2578 = vmatpush1.msra.mxu0 0.0
    %2579 = vmatprep.subr.mxu0 0.0
    %2580 = vmatpush1.msra.mxu0 0.0
    %2581 = vmatprep.subr.mxu0 0.0
    %2582 = vmatpush1.msra.mxu0 0.0
    %2583 = vmatprep.subr.mxu0 0.0
    %2584 = vmatpush1.msra.mxu0 0.0
    %2585 = vmatprep.subr.mxu0 0.0
    %2586 = vmatpush1.msra.mxu0 0.0
    %2587 = vmatprep.subr.mxu0 0.0
    %2588 = vmatpush1.msra.mxu0 0.0
    %2589 = vmatprep.subr.mxu0 0.0
    %2590 = vmatpush1.msra.mxu0 0.0
    %2591 = vmatprep.subr.mxu0 0.0
    %2592 = vmatpush1.msra.mxu0 0.0
    %2593 = vmatprep.mubr.f32.mxu0 0.0
    %2594 = vmatmul.mubr.f32.gmra.mrb[0].mxu0 %v2518
    %v2595 = vpop.f32.mrb[0].mxu0
    %v2596 = vadd.f32 0.0, %v2595
    %v2597 = vpop.f32.mrb[0].mxu0
    %2598 = vmatprep.mubr.f32.mxu0 0.0
    %2599 = vmatmul.mubr.f32.gmra.mrb[0].mxu0 %v2521
    %v2600 = vpop.f32.mrb[0].mxu0
    %v2601 = vadd.f32 0.0, %v2600
    %v2602 = vpop.f32.mrb[0].mxu0
    %2603 = vmatprep.mubr.f32.mxu0 0.0
    %2604 = vmatmul.mubr.f32.gmra.mrb[0].mxu0 %v2524
    %v2605 = vpop.f32.mrb[0].mxu0
    %v2606 = vadd.f32 0.0, %v2605
    %v2607 = vpop.f32.mrb[0].mxu0
    %2608 = vmatprep.mubr.f32.mxu0 0.0
    %2609 = vmatmul.mubr.f32.gmra.mrb[0].mxu0 %v2527
    %v2610 = vpop.f32.mrb[0].mxu0
    %v2611 = vadd.f32 0.0, %v2610
    %v2612 = vpop.f32.mrb[0].mxu0
    %2613 = vdwg.mxu0
    %v2614 = vsel %vm64, %v2596, 0.0
    %v2615 = vsel %vm64, %v2601, 0.0
    %v2616 = vadd.f32 %v2614, %v2615
    %v2617 = vsel %vm64, %v2606, 0.0
    %v2618 = vadd.f32 %v2616, %v2617
    %v2619 = vsel %vm64, %v2611, 0.0
    %v2620 = vadd.f32 %v2618, %v2619
    %v2621 = vrot.slane %v2620, 4
    %v2622 = vadd.f32 %v2620, %v2621
    %v2623 = vrot.slane %v2622, 2
    %v2624 = vadd.f32 %v2622, %v2623
    %v2625 = vrot.slane %v2624, 1
    %v2626 = vadd.f32 %v2624, %v2625
    %v2627 = vmul.f32 %v2626, %v446
    %v2628 = vsub.f32 %v2596, %v2627
    %v2629 = vsub.f32 %v2601, %v2627
    %v2630 = vsub.f32 %v2606, %v2627
    %v2631 = vsub.f32 %v2611, %v2627
    %v2632 = vmul.f32 %v2628, %v2628
    %v2633 = vmul.f32 %v2629, %v2629
    %v2634 = vmul.f32 %v2630, %v2630
    %v2635 = vmul.f32 %v2631, %v2631
    %v2636 = vsel %vm64, %v2632, 0.0
    %v2637 = vsel %vm64, %v2633, 0.0
    %v2638 = vadd.f32 %v2636, %v2637
    %v2639 = vsel %vm64, %v2634, 0.0
    %v2640 = vadd.f32 %v2638, %v2639
    %v2641 = vsel %vm64, %v2635, 0.0
    %v2642 = vadd.f32 %v2640, %v2641
    %v2643 = vrot.slane %v2642, 4
    %v2644 = vadd.f32 %v2642, %v2643
    %v2645 = vrot.slane %v2644, 2
    %v2646 = vadd.f32 %v2644, %v2645
    %v2647 = vrot.slane %v2646, 1
    %v2648 = vadd.f32 %v2646, %v2647
    %v2649 = vmul.f32 %v2648, %v446
    %v2650 = vadd.f32 %v2649, 1e-05
    %v2651 = vrsqrt.pop %v2650
    %v2652 = vmul.f32 %v2246, %v2651
    %v2653 = vmul.f32 %v2627, %v2652
    %v2655 = vrot.slane %v2653, 7
    %v2657 = vsub.f32 %v2246, %v2655
    %v2658 = vlaneseq
    %v2659 = vshrl.u32 %v2658, 7
    %v2660 = vsub.s32 2, %v2659
    %v2661 = vrot.slane %v2652, %v2660
    %v2662 = vmul.f32 %v2596, %v2661
    %v2663 = vmul.f32 %v2601, %v2661
    %v2664 = vmul.f32 %v2606, %v2661
    %v2665 = vmul.f32 %v2611, %v2661
    %v2666 = vlaneseq
    %v2667 = vshrl.u32 %v2666, 7
    %v2668 = vsub.s32 3, %v2667
    %v2669 = vrot.slane %v2657, %v2668
    %v2670 = vadd.f32 %v2662, %v2669
    %v2671 = vadd.f32 %v2663, %v2669
    %v2672 = vadd.f32 %v2664, %v2669
    %v2673 = vadd.f32 %v2665, %v2669
    %v2674 = vmax.f32 %v2670, 0.0
    %v2675 = vmax.f32 %v2671, 0.0
    %v2676 = vmax.f32 %v2672, 0.0
    %v2677 = vmax.f32 %v2673, 0.0
    %s2678 = scalar_lea.vmem [#allocation2], 96
    %v2679 = vld [vmem:[%s2678] sm:$0xff]
    %v2680 = vld [vmem:[%s2678 + $0x8] sm:$0xff]
    %s2681 = scalar_lea.vmem %s3, 24
    %v2682 = vld [vmem:[%s2681] sm:$0xf]
    %v2684 = vsel %vm64, %v2674, 0
    %v2687 = vsel %vm64, %v2675, 0
    %v2690 = vsel %vm64, %v2676, 0
    %v2693 = vsel %vm64, %v2677, 0
    %2695 = vmatprep.subr.mxu0 0.0
    %2696 = vmatpush1.msra.mxu0 %v2679
    %2697 = vmatprep.subr.mxu0 0.0
    %2698 = vmatpush1.msra.mxu0 %v2680
    %2699 = vmatprep.subr.mxu0 0.0
    %2700 = vmatpush1.msra.mxu0 0.0
    %2701 = vmatprep.subr.mxu0 0.0
    %2702 = vmatpush1.msra.mxu0 0.0
    %2703 = vmatprep.subr.mxu0 0.0
    %2704 = vmatpush1.msra.mxu0 0.0
    %2705 = vmatprep.subr.mxu0 0.0
    %2706 = vmatpush1.msra.mxu0 0.0
    %2707 = vmatprep.subr.mxu0 0.0
    %2708 = vmatpush1.msra.mxu0 0.0
    %2709 = vmatprep.subr.mxu0 0.0
    %2710 = vmatpush1.msra.mxu0 0.0
    %2711 = vmatprep.subr.mxu0 0.0
    %2712 = vmatpush1.msra.mxu0 0.0
    %2713 = vmatprep.subr.mxu0 0.0
    %2714 = vmatpush1.msra.mxu0 0.0
    %2715 = vmatprep.subr.mxu0 0.0
    %2716 = vmatpush1.msra.mxu0 0.0
    %2717 = vmatprep.subr.mxu0 0.0
    %2718 = vmatpush1.msra.mxu0 0.0
    %2719 = vmatprep.subr.mxu0 0.0
    %2720 = vmatpush1.msra.mxu0 0.0
    %2721 = vmatprep.subr.mxu0 0.0
    %2722 = vmatpush1.msra.mxu0 0.0
    %2723 = vmatprep.subr.mxu0 0.0
    %2724 = vmatpush1.msra.mxu0 0.0
    %2725 = vmatprep.subr.mxu0 0.0
    %2726 = vmatpush1.msra.mxu0 0.0
    %2727 = vmatprep.subr.mxu0 0.0
    %2728 = vmatpush1.msra.mxu0 0.0
    %2729 = vmatprep.subr.mxu0 0.0
    %2730 = vmatpush1.msra.mxu0 0.0
    %2731 = vmatprep.subr.mxu0 0.0
    %2732 = vmatpush1.msra.mxu0 0.0
    %2733 = vmatprep.subr.mxu0 0.0
    %2734 = vmatpush1.msra.mxu0 0.0
    %2735 = vmatprep.subr.mxu0 0.0
    %2736 = vmatpush1.msra.mxu0 0.0
    %2737 = vmatprep.subr.mxu0 0.0
    %2738 = vmatpush1.msra.mxu0 0.0
    %2739 = vmatprep.subr.mxu0 0.0
    %2740 = vmatpush1.msra.mxu0 0.0
    %2741 = vmatprep.subr.mxu0 0.0
    %2742 = vmatpush1.msra.mxu0 0.0
    %2743 = vmatprep.subr.mxu0 0.0
    %2744 = vmatpush1.msra.mxu0 0.0
    %2745 = vmatprep.subr.mxu0 0.0
    %2746 = vmatpush1.msra.mxu0 0.0
    %2747 = vmatprep.subr.mxu0 0.0
    %2748 = vmatpush1.msra.mxu0 0.0
    %2749 = vmatprep.subr.mxu0 0.0
    %2750 = vmatpush1.msra.mxu0 0.0
    %2751 = vmatprep.subr.mxu0 0.0
    %2752 = vmatpush1.msra.mxu0 0.0
    %2753 = vmatprep.subr.mxu0 0.0
    %2754 = vmatpush1.msra.mxu0 0.0
    %2755 = vmatprep.subr.mxu0 0.0
    %2756 = vmatpush1.msra.mxu0 0.0
    %2757 = vmatprep.subr.mxu0 0.0
    %2758 = vmatpush1.msra.mxu0 0.0
    %2759 = vmatprep.mubr.f32.mxu0 0.0
    %2760 = vmatmul.mubr.f32.gmra.mrb[0].mxu0 %v2684
    %v2761 = vpop.f32.mrb[0].mxu0
    %v2762 = vadd.f32 0.0, %v2761
    %v2763 = vpop.f32.mrb[0].mxu0
    %2764 = vmatprep.mubr.f32.mxu0 0.0
    %2765 = vmatmul.mubr.f32.gmra.mrb[0].mxu0 %v2687
    %v2766 = vpop.f32.mrb[0].mxu0
    %v2767 = vadd.f32 0.0, %v2766
    %v2768 = vpop.f32.mrb[0].mxu0
    %2769 = vmatprep.mubr.f32.mxu0 0.0
    %2770 = vmatmul.mubr.f32.gmra.mrb[0].mxu0 %v2690
    %v2771 = vpop.f32.mrb[0].mxu0
    %v2772 = vadd.f32 0.0, %v2771
    %v2773 = vpop.f32.mrb[0].mxu0
    %2774 = vmatprep.mubr.f32.mxu0 0.0
    %2775 = vmatmul.mubr.f32.gmra.mrb[0].mxu0 %v2693
    %v2776 = vpop.f32.mrb[0].mxu0
    %v2777 = vadd.f32 0.0, %v2776
    %v2778 = vpop.f32.mrb[0].mxu0
    %2779 = vdwg.mxu0
    %v2780 = vlaneseq
    %v2781 = vshrl.u32 %v2780, 7
    %v2782 = vsub.s32 1, %v2781
    %v2783 = vrot.slane %v2682, %v2782
    %v2784 = vmul.f32 %v2762, %v2783
    %v2785 = vmul.f32 %v2767, %v2783
    %v2786 = vmul.f32 %v2772, %v2783
    %v2787 = vmul.f32 %v2777, %v2783
    %v2788 = vsel %vm64, %v2784, 0.0
    %2789 = vadd.xlane.f32.xlu0 %v2788
    %v2790 = vpop.xlane.xlu0 %2789
    %v2791 = vsel %vm64, %v2785, 0.0
    %2792 = vadd.xlane.f32.xlu0 %v2791
    %v2793 = vpop.xlane.xlu0 %2792
    %v2794 = vsel %vm64, %v2786, 0.0
    %2795 = vadd.xlane.f32.xlu0 %v2794
    %v2796 = vpop.xlane.xlu0 %2795
    %v2797 = vsel %vm64, %v2787, 0.0
    %2798 = vadd.xlane.f32.xlu0 %v2797
    %v2799 = vpop.xlane.xlu0 %2798
    %v2801 = vsel %vm64, %v2682, 0
    %v2804 = vsel %vm64, %v2762, 0
    %v2807 = vsel %vm64, %v2767, 0
    %v2810 = vsel %vm64, %v2772, 0
    %v2813 = vsel %vm64, %v2777, 0
    %2815 = vmatprep.subr.mxu0 0.0
    %2816 = vmatpush1.xpose.msra.mxu0 %v2804
    %2817 = vmatprep.subr.mxu0 0.0
    %2818 = vmatpush1.xpose.msra.mxu0 %v2807
    %2819 = vmatprep.subr.mxu0 0.0
    %2820 = vmatpush1.xpose.msra.mxu0 %v2810
    %2821 = vmatprep.subr.mxu0 0.0
    %2822 = vmatpush1.xpose.msra.mxu0 %v2813
    %2823 = vmatprep.subr.mxu0 0.0
    %2824 = vmatpush1.xpose.msra.mxu0 0.0
    %2825 = vmatprep.subr.mxu0 0.0
    %2826 = vmatpush1.xpose.msra.mxu0 0.0
    %2827 = vmatprep.subr.mxu0 0.0
    %2828 = vmatpush1.xpose.msra.mxu0 0.0
    %2829 = vmatprep.subr.mxu0 0.0
    %2830 = vmatpush1.xpose.msra.mxu0 0.0
    %2831 = vmatprep.subr.mxu0 0.0
    %2832 = vmatpush1.xpose.msra.mxu0 0.0
    %2833 = vmatprep.subr.mxu0 0.0
    %2834 = vmatpush1.xpose.msra.mxu0 0.0
    %2835 = vmatprep.subr.mxu0 0.0
    %2836 = vmatpush1.xpose.msra.mxu0 0.0
    %2837 = vmatprep.subr.mxu0 0.0
    %2838 = vmatpush1.xpose.msra.mxu0 0.0
    %2839 = vmatprep.subr.mxu0 0.0
    %2840 = vmatpush1.xpose.msra.mxu0 0.0
    %2841 = vmatprep.subr.mxu0 0.0
    %2842 = vmatpush1.xpose.msra.mxu0 0.0
    %2843 = vmatprep.subr.mxu0 0.0
    %2844 = vmatpush1.xpose.msra.mxu0 0.0
    %2845 = vmatprep.subr.mxu0 0.0
    %2846 = vmatpush1.xpose.msra.mxu0 0.0
    %2847 = vmatprep.subr.mxu0 0.0
    %2848 = vmatpush1.xpose.msra.mxu0 0.0
    %2849 = vmatprep.subr.mxu0 0.0
    %2850 = vmatpush1.xpose.msra.mxu0 0.0
    %2851 = vmatprep.subr.mxu0 0.0
    %2852 = vmatpush1.xpose.msra.mxu0 0.0
    %2853 = vmatprep.subr.mxu0 0.0
    %2854 = vmatpush1.xpose.msra.mxu0 0.0
    %2855 = vmatprep.subr.mxu0 0.0
    %2856 = vmatpush1.xpose.msra.mxu0 0.0
    %2857 = vmatprep.subr.mxu0 0.0
    %2858 = vmatpush1.xpose.msra.mxu0 0.0
    %2859 = vmatprep.subr.mxu0 0.0
    %2860 = vmatpush1.xpose.msra.mxu0 0.0
    %2861 = vmatprep.subr.mxu0 0.0
    %2862 = vmatpush1.xpose.msra.mxu0 0.0
    %2863 = vmatprep.subr.mxu0 0.0
    %2864 = vmatpush1.xpose.msra.mxu0 0.0
    %2865 = vmatprep.subr.mxu0 0.0
    %2866 = vmatpush1.xpose.msra.mxu0 0.0
    %2867 = vmatprep.subr.mxu0 0.0
    %2868 = vmatpush1.xpose.msra.mxu0 0.0
    %2869 = vmatprep.subr.mxu0 0.0
    %2870 = vmatpush1.xpose.msra.mxu0 0.0
    %2871 = vmatprep.subr.mxu0 0.0
    %2872 = vmatpush1.xpose.msra.mxu0 0.0
    %2873 = vmatprep.subr.mxu0 0.0
    %2874 = vmatpush1.xpose.msra.mxu0 0.0
    %2875 = vmatprep.subr.mxu0 0.0
    %2876 = vmatpush1.xpose.msra.mxu0 0.0
    %2877 = vmatprep.subr.mxu0 0.0
    %2878 = vmatpush1.xpose.msra.mxu0 0.0
    %2879 = vmatprep.mubr.f32.mxu0 0.0
    %2880 = vmatmul.mubr.f32.gmra.mrb[0].mxu0 %v2801
    %v2881 = vpop.f32.mrb[0].mxu0
    %v2882 = vadd.f32 0.0, %v2881
    %v2883 = vpop.f32.mrb[0].mxu0
    %2884 = vdwg.mxu0
    %v2885 = vlaneseq
    %v2886 = vshrl.u32 %v2885, 7
    %v2887 = vsub.s32 0, %v2886
    %v2888 = vrot.slane %v2882, %v2887
    %v2889 = vadd.f32 %v2790, %v2888
    %v2890 = vadd.f32 %v2793, %v2888
    %v2891 = vadd.f32 %v2796, %v2888
    %v2892 = vadd.f32 %v2799, %v2888
    %vm2893 = vcmp.gt.f32.partialorder %v2889, 0.0
    %vm2894 = vcmp.gt.f32.partialorder %v2890, 0.0
    %vm2895 = vcmp.gt.f32.partialorder %v2891, 0.0
    %vm2896 = vcmp.gt.f32.partialorder %v2892, 0.0
    %v2897 = vmul.f32 %v2889, 0.2
    %v2898 = vmul.f32 %v2890, 0.2
    %v2899 = vmul.f32 %v2891, 0.2
    %v2900 = vmul.f32 %v2892, 0.2
    %v2901 = vsel %vm2893, %v2889, %v2897
    %v2902 = vsel %vm2894, %v2890, %v2898
    %v2903 = vsel %vm2895, %v2891, %v2899
    %v2904 = vsel %vm2896, %v2892, %v2900
    %v2905 = vadd.f32 %v2901, %v53
    %v2906 = vadd.f32 %v2902, %v54
    %v2907 = vadd.f32 %v2903, %v55
    %v2908 = vadd.f32 %v2904, %v56
    %v2909 = vsel %vm291, %v2905, -inf
    %2910 = vmax.xlane.f32.xlu0 %v2909
    %v2911 = vpop.xlane.xlu0 %2910
    %v2912 = vsel %vm291, %v2906, -inf
    %2913 = vmax.xlane.f32.xlu0 %v2912
    %v2914 = vpop.xlane.xlu0 %2913
    %v2915 = vsel %vm291, %v2907, -inf
    %2916 = vmax.xlane.f32.xlu0 %v2915
    %v2917 = vpop.xlane.xlu0 %2916
    %v2918 = vsel %vm291, %v2908, -inf
    %2919 = vmax.xlane.f32.xlu0 %v2918
    %v2920 = vpop.xlane.xlu0 %2919
    %v2921 = vsub.f32 %v2905, %v2911
    %v2922 = vsub.f32 %v2906, %v2914
    %v2923 = vsub.f32 %v2907, %v2917
    %v2924 = vsub.f32 %v2908, %v2920
    %v2925 = vmul.f32 %v2921, 1.442695
    %v2926 = vpow.pop %v2925
    %v2927 = vmul.f32 %v2922, 1.442695
    %v2928 = vpow.pop %v2927
    %v2929 = vmul.f32 %v2923, 1.442695
    %v2930 = vpow.pop %v2929
    %v2931 = vmul.f32 %v2924, 1.442695
    %v2932 = vpow.pop %v2931
    %v2933 = vsel %vm291, %v2926, 0.0
    %2934 = vadd.xlane.f32.xlu0 %v2933
    %v2935 = vpop.xlane.xlu0 %2934
    %v2936 = vsel %vm291, %v2928, 0.0
    %2937 = vadd.xlane.f32.xlu0 %v2936
    %v2938 = vpop.xlane.xlu0 %2937
    %v2939 = vsel %vm291, %v2930, 0.0
    %2940 = vadd.xlane.f32.xlu0 %v2939
    %v2941 = vpop.xlane.xlu0 %2940
    %v2942 = vsel %vm291, %v2932, 0.0
    %2943 = vadd.xlane.f32.xlu0 %v2942
    %v2944 = vpop.xlane.xlu0 %2943
    %v2945 = vrcp.pop %v2935
    %v2946 = vrcp.pop %v2938
    %v2947 = vrcp.pop %v2941
    %v2948 = vrcp.pop %v2944
    %v2949 = vmul.f32 %v2926, %v2945
    %v2950 = vmul.f32 %v2928, %v2946
    %v2951 = vmul.f32 %v2930, %v2947
    %v2952 = vmul.f32 %v2932, %v2948
    %v2954 = vsel %vm291, %v2949, 0
    %v2957 = vsel %vm291, %v2950, 0
    %v2960 = vsel %vm291, %v2951, 0
    %v2963 = vsel %vm291, %v2952, 0
    %2965 = vmatprep.subr.mxu0 0.0
    %2966 = vmatpush1.msra.mxu0 %v2762
    %2967 = vmatprep.subr.mxu0 0.0
    %2968 = vmatpush1.msra.mxu0 %v2767
    %2969 = vmatprep.subr.mxu0 0.0
    %2970 = vmatpush1.msra.mxu0 %v2772
    %2971 = vmatprep.subr.mxu0 0.0
    %2972 = vmatpush1.msra.mxu0 %v2777
    %2973 = vmatprep.subr.mxu0 0.0
    %2974 = vmatpush1.msra.mxu0 0.0
    %2975 = vmatprep.subr.mxu0 0.0
    %2976 = vmatpush1.msra.mxu0 0.0
    %2977 = vmatprep.subr.mxu0 0.0
    %2978 = vmatpush1.msra.mxu0 0.0
    %2979 = vmatprep.subr.mxu0 0.0
    %2980 = vmatpush1.msra.mxu0 0.0
    %2981 = vmatprep.subr.mxu0 0.0
    %2982 = vmatpush1.msra.mxu0 0.0
    %2983 = vmatprep.subr.mxu0 0.0
    %2984 = vmatpush1.msra.mxu0 0.0
    %2985 = vmatprep.subr.mxu0 0.0
    %2986 = vmatpush1.msra.mxu0 0.0
    %2987 = vmatprep.subr.mxu0 0.0
    %2988 = vmatpush1.msra.mxu0 0.0
    %2989 = vmatprep.subr.mxu0 0.0
    %2990 = vmatpush1.msra.mxu0 0.0
    %2991 = vmatprep.subr.mxu0 0.0
    %2992 = vmatpush1.msra.mxu0 0.0
    %2993 = vmatprep.subr.mxu0 0.0
    %2994 = vmatpush1.msra.mxu0 0.0
    %2995 = vmatprep.subr.mxu0 0.0
    %2996 = vmatpush1.msra.mxu0 0.0
    %2997 = vmatprep.subr.mxu0 0.0
    %2998 = vmatpush1.msra.mxu0 0.0
    %2999 = vmatprep.subr.mxu0 0.0
    %3000 = vmatpush1.msra.mxu0 0.0
    %3001 = vmatprep.subr.mxu0 0.0
    %3002 = vmatpush1.msra.mxu0 0.0
    %3003 = vmatprep.subr.mxu0 0.0
    %3004 = vmatpush1.msra.mxu0 0.0
    %3005 = vmatprep.subr.mxu0 0.0
    %3006 = vmatpush1.msra.mxu0 0.0
    %3007 = vmatprep.subr.mxu0 0.0
    %3008 = vmatpush1.msra.mxu0 0.0
    %3009 = vmatprep.subr.mxu0 0.0
    %3010 = vmatpush1.msra.mxu0 0.0
    %3011 = vmatprep.subr.mxu0 0.0
    %3012 = vmatpush1.msra.mxu0 0.0
    %3013 = vmatprep.subr.mxu0 0.0
    %3014 = vmatpush1.msra.mxu0 0.0
    %3015 = vmatprep.subr.mxu0 0.0
    %3016 = vmatpush1.msra.mxu0 0.0
    %3017 = vmatprep.subr.mxu0 0.0
    %3018 = vmatpush1.msra.mxu0 0.0
    %3019 = vmatprep.subr.mxu0 0.0
    %3020 = vmatpush1.msra.mxu0 0.0
    %3021 = vmatprep.subr.mxu0 0.0
    %3022 = vmatpush1.msra.mxu0 0.0
    %3023 = vmatprep.subr.mxu0 0.0
    %3024 = vmatpush1.msra.mxu0 0.0
    %3025 = vmatprep.subr.mxu0 0.0
    %3026 = vmatpush1.msra.mxu0 0.0
    %3027 = vmatprep.subr.mxu0 0.0
    %3028 = vmatpush1.msra.mxu0 0.0
    %3029 = vmatprep.mubr.f32.mxu0 0.0
    %3030 = vmatmul.mubr.f32.gmra.mrb[0].mxu0 %v2954
    %v3031 = vpop.f32.mrb[0].mxu0
    %v3032 = vadd.f32 0.0, %v3031
    %v3033 = vpop.f32.mrb[0].mxu0
    %3034 = vmatprep.mubr.f32.mxu0 0.0
    %3035 = vmatmul.mubr.f32.gmra.mrb[0].mxu0 %v2957
    %v3036 = vpop.f32.mrb[0].mxu0
    %v3037 = vadd.f32 0.0, %v3036
    %v3038 = vpop.f32.mrb[0].mxu0
    %3039 = vmatprep.mubr.f32.mxu0 0.0
    %3040 = vmatmul.mubr.f32.gmra.mrb[0].mxu0 %v2960
    %v3041 = vpop.f32.mrb[0].mxu0
    %v3042 = vadd.f32 0.0, %v3041
    %v3043 = vpop.f32.mrb[0].mxu0
    %3044 = vmatprep.mubr.f32.mxu0 0.0
    %3045 = vmatmul.mubr.f32.gmra.mrb[0].mxu0 %v2963
    %v3046 = vpop.f32.mrb[0].mxu0
    %v3047 = vadd.f32 0.0, %v3046
    %v3048 = vpop.f32.mrb[0].mxu0
    %3049 = vdwg.mxu0
    %v3050 = vsel %vm64, %v3032, 0.0
    %v3051 = vsel %vm64, %v3037, 0.0
    %v3052 = vadd.f32 %v3050, %v3051
    %v3053 = vsel %vm64, %v3042, 0.0
    %v3054 = vadd.f32 %v3052, %v3053
    %v3055 = vsel %vm64, %v3047, 0.0
    %v3056 = vadd.f32 %v3054, %v3055
    %v3057 = vrot.slane %v3056, 4
    %v3058 = vadd.f32 %v3056, %v3057
    %v3059 = vrot.slane %v3058, 2
    %v3060 = vadd.f32 %v3058, %v3059
    %v3061 = vrot.slane %v3060, 1
    %v3062 = vadd.f32 %v3060, %v3061
    %v3063 = vmul.f32 %v3062, %v446
    %v3064 = vsub.f32 %v3032, %v3063
    %v3065 = vsub.f32 %v3037, %v3063
    %v3066 = vsub.f32 %v3042, %v3063
    %v3067 = vsub.f32 %v3047, %v3063
    %v3068 = vmul.f32 %v3064, %v3064
    %v3069 = vmul.f32 %v3065, %v3065
    %v3070 = vmul.f32 %v3066, %v3066
    %v3071 = vmul.f32 %v3067, %v3067
    %v3072 = vsel %vm64, %v3068, 0.0
    %v3073 = vsel %vm64, %v3069, 0.0
    %v3074 = vadd.f32 %v3072, %v3073
    %v3075 = vsel %vm64, %v3070, 0.0
    %v3076 = vadd.f32 %v3074, %v3075
    %v3077 = vsel %vm64, %v3071, 0.0
    %v3078 = vadd.f32 %v3076, %v3077
    %v3079 = vrot.slane %v3078, 4
    %v3080 = vadd.f32 %v3078, %v3079
    %v3081 = vrot.slane %v3080, 2
    %v3082 = vadd.f32 %v3080, %v3081
    %v3083 = vrot.slane %v3082, 1
    %v3084 = vadd.f32 %v3082, %v3083
    %v3085 = vmul.f32 %v3084, %v446
    %v3086 = vadd.f32 %v3085, 1e-05
    %v3087 = vrsqrt.pop %v3086
    %v3088 = vmul.f32 %v2682, %v3087
    %v3089 = vmul.f32 %v3063, %v3088
    %v3091 = vrot.slane %v3089, 7
    %v3093 = vsub.f32 %v2682, %v3091
    %v3094 = vlaneseq
    %v3095 = vshrl.u32 %v3094, 7
    %v3096 = vsub.s32 2, %v3095
    %v3097 = vrot.slane %v3088, %v3096
    %v3098 = vmul.f32 %v3032, %v3097
    %v3099 = vmul.f32 %v3037, %v3097
    %v3100 = vmul.f32 %v3042, %v3097
    %v3101 = vmul.f32 %v3047, %v3097
    %v3102 = vlaneseq
    %v3103 = vshrl.u32 %v3102, 7
    %v3104 = vsub.s32 3, %v3103
    %v3105 = vrot.slane %v3093, %v3104
    %v3106 = vadd.f32 %v3098, %v3105
    %v3107 = vadd.f32 %v3099, %v3105
    %v3108 = vadd.f32 %v3100, %v3105
    %v3109 = vadd.f32 %v3101, %v3105
    %v3110 = vmax.f32 %v3106, 0.0
    %v3111 = vmax.f32 %v3107, 0.0
    %v3112 = vmax.f32 %v3108, 0.0
    %v3113 = vmax.f32 %v3109, 0.0
    %s3114 = scalar_lea.vmem [#allocation2], 112
    %v3115 = vld [vmem:[%s3114] sm:$0xff]
    %v3116 = vld [vmem:[%s3114 + $0x8] sm:$0xff]
    %s3117 = scalar_lea.vmem %s3, 28
    %v3118 = vld [vmem:[%s3117] sm:$0xf]
    %v3120 = vsel %vm64, %v3110, 0
    %v3123 = vsel %vm64, %v3111, 0
    %v3126 = vsel %vm64, %v3112, 0
    %v3129 = vsel %vm64, %v3113, 0
    %3131 = vmatprep.subr.mxu0 0.0
    %3132 = vmatpush1.msra.mxu0 %v3115
    %3133 = vmatprep.subr.mxu0 0.0
    %3134 = vmatpush1.msra.mxu0 %v3116
    %3135 = vmatprep.subr.mxu0 0.0
    %3136 = vmatpush1.msra.mxu0 0.0
    %3137 = vmatprep.subr.mxu0 0.0
    %3138 = vmatpush1.msra.mxu0 0.0
    %3139 = vmatprep.subr.mxu0 0.0
    %3140 = vmatpush1.msra.mxu0 0.0
    %3141 = vmatprep.subr.mxu0 0.0
    %3142 = vmatpush1.msra.mxu0 0.0
    %3143 = vmatprep.subr.mxu0 0.0
    %3144 = vmatpush1.msra.mxu0 0.0
    %3145 = vmatprep.subr.mxu0 0.0
    %3146 = vmatpush1.msra.mxu0 0.0
    %3147 = vmatprep.subr.mxu0 0.0
    %3148 = vmatpush1.msra.mxu0 0.0
    %3149 = vmatprep.subr.mxu0 0.0
    %3150 = vmatpush1.msra.mxu0 0.0
    %3151 = vmatprep.subr.mxu0 0.0
    %3152 = vmatpush1.msra.mxu0 0.0
    %3153 = vmatprep.subr.mxu0 0.0
    %3154 = vmatpush1.msra.mxu0 0.0
    %3155 = vmatprep.subr.mxu0 0.0
    %3156 = vmatpush1.msra.mxu0 0.0
    %3157 = vmatprep.subr.mxu0 0.0
    %3158 = vmatpush1.msra.mxu0 0.0
    %3159 = vmatprep.subr.mxu0 0.0
    %3160 = vmatpush1.msra.mxu0 0.0
    %3161 = vmatprep.subr.mxu0 0.0
    %3162 = vmatpush1.msra.mxu0 0.0
    %3163 = vmatprep.subr.mxu0 0.0
    %3164 = vmatpush1.msra.mxu0 0.0
    %3165 = vmatprep.subr.mxu0 0.0
    %3166 = vmatpush1.msra.mxu0 0.0
    %3167 = vmatprep.subr.mxu0 0.0
    %3168 = vmatpush1.msra.mxu0 0.0
    %3169 = vmatprep.subr.mxu0 0.0
    %3170 = vmatpush1.msra.mxu0 0.0
    %3171 = vmatprep.subr.mxu0 0.0
    %3172 = vmatpush1.msra.mxu0 0.0
    %3173 = vmatprep.subr.mxu0 0.0
    %3174 = vmatpush1.msra.mxu0 0.0
    %3175 = vmatprep.subr.mxu0 0.0
    %3176 = vmatpush1.msra.mxu0 0.0
    %3177 = vmatprep.subr.mxu0 0.0
    %3178 = vmatpush1.msra.mxu0 0.0
    %3179 = vmatprep.subr.mxu0 0.0
    %3180 = vmatpush1.msra.mxu0 0.0
    %3181 = vmatprep.subr.mxu0 0.0
    %3182 = vmatpush1.msra.mxu0 0.0
    %3183 = vmatprep.subr.mxu0 0.0
    %3184 = vmatpush1.msra.mxu0 0.0
    %3185 = vmatprep.subr.mxu0 0.0
    %3186 = vmatpush1.msra.mxu0 0.0
    %3187 = vmatprep.subr.mxu0 0.0
    %3188 = vmatpush1.msra.mxu0 0.0
    %3189 = vmatprep.subr.mxu0 0.0
    %3190 = vmatpush1.msra.mxu0 0.0
    %3191 = vmatprep.subr.mxu0 0.0
    %3192 = vmatpush1.msra.mxu0 0.0
    %3193 = vmatprep.subr.mxu0 0.0
    %3194 = vmatpush1.msra.mxu0 0.0
    %3195 = vmatprep.mubr.f32.mxu0 0.0
    %3196 = vmatmul.mubr.f32.gmra.mrb[0].mxu0 %v3120
    %v3197 = vpop.f32.mrb[0].mxu0
    %v3198 = vadd.f32 0.0, %v3197
    %v3199 = vpop.f32.mrb[0].mxu0
    %3200 = vmatprep.mubr.f32.mxu0 0.0
    %3201 = vmatmul.mubr.f32.gmra.mrb[0].mxu0 %v3123
    %v3202 = vpop.f32.mrb[0].mxu0
    %v3203 = vadd.f32 0.0, %v3202
    %v3204 = vpop.f32.mrb[0].mxu0
    %3205 = vmatprep.mubr.f32.mxu0 0.0
    %3206 = vmatmul.mubr.f32.gmra.mrb[0].mxu0 %v3126
    %v3207 = vpop.f32.mrb[0].mxu0
    %v3208 = vadd.f32 0.0, %v3207
    %v3209 = vpop.f32.mrb[0].mxu0
    %3210 = vmatprep.mubr.f32.mxu0 0.0
    %3211 = vmatmul.mubr.f32.gmra.mrb[0].mxu0 %v3129
    %v3212 = vpop.f32.mrb[0].mxu0
    %v3213 = vadd.f32 0.0, %v3212
    %v3214 = vpop.f32.mrb[0].mxu0
    %3215 = vdwg.mxu0
    %v3216 = vlaneseq
    %v3217 = vshrl.u32 %v3216, 7
    %v3218 = vsub.s32 1, %v3217
    %v3219 = vrot.slane %v3118, %v3218
    %v3220 = vmul.f32 %v3198, %v3219
    %v3221 = vmul.f32 %v3203, %v3219
    %v3222 = vmul.f32 %v3208, %v3219
    %v3223 = vmul.f32 %v3213, %v3219
    %v3224 = vsel %vm64, %v3220, 0.0
    %3225 = vadd.xlane.f32.xlu0 %v3224
    %v3226 = vpop.xlane.xlu0 %3225
    %v3227 = vsel %vm64, %v3221, 0.0
    %3228 = vadd.xlane.f32.xlu0 %v3227
    %v3229 = vpop.xlane.xlu0 %3228
    %v3230 = vsel %vm64, %v3222, 0.0
    %3231 = vadd.xlane.f32.xlu0 %v3230
    %v3232 = vpop.xlane.xlu0 %3231
    %v3233 = vsel %vm64, %v3223, 0.0
    %3234 = vadd.xlane.f32.xlu0 %v3233
    %v3235 = vpop.xlane.xlu0 %3234
    %v3237 = vsel %vm64, %v3118, 0
    %v3240 = vsel %vm64, %v3198, 0
    %v3243 = vsel %vm64, %v3203, 0
    %v3246 = vsel %vm64, %v3208, 0
    %v3249 = vsel %vm64, %v3213, 0
    %3251 = vmatprep.subr.mxu0 0.0
    %3252 = vmatpush1.xpose.msra.mxu0 %v3240
    %3253 = vmatprep.subr.mxu0 0.0
    %3254 = vmatpush1.xpose.msra.mxu0 %v3243
    %3255 = vmatprep.subr.mxu0 0.0
    %3256 = vmatpush1.xpose.msra.mxu0 %v3246
    %3257 = vmatprep.subr.mxu0 0.0
    %3258 = vmatpush1.xpose.msra.mxu0 %v3249
    %3259 = vmatprep.subr.mxu0 0.0
    %3260 = vmatpush1.xpose.msra.mxu0 0.0
    %3261 = vmatprep.subr.mxu0 0.0
    %3262 = vmatpush1.xpose.msra.mxu0 0.0
    %3263 = vmatprep.subr.mxu0 0.0
    %3264 = vmatpush1.xpose.msra.mxu0 0.0
    %3265 = vmatprep.subr.mxu0 0.0
    %3266 = vmatpush1.xpose.msra.mxu0 0.0
    %3267 = vmatprep.subr.mxu0 0.0
    %3268 = vmatpush1.xpose.msra.mxu0 0.0
    %3269 = vmatprep.subr.mxu0 0.0
    %3270 = vmatpush1.xpose.msra.mxu0 0.0
    %3271 = vmatprep.subr.mxu0 0.0
    %3272 = vmatpush1.xpose.msra.mxu0 0.0
    %3273 = vmatprep.subr.mxu0 0.0
    %3274 = vmatpush1.xpose.msra.mxu0 0.0
    %3275 = vmatprep.subr.mxu0 0.0
    %3276 = vmatpush1.xpose.msra.mxu0 0.0
    %3277 = vmatprep.subr.mxu0 0.0
    %3278 = vmatpush1.xpose.msra.mxu0 0.0
    %3279 = vmatprep.subr.mxu0 0.0
    %3280 = vmatpush1.xpose.msra.mxu0 0.0
    %3281 = vmatprep.subr.mxu0 0.0
    %3282 = vmatpush1.xpose.msra.mxu0 0.0
    %3283 = vmatprep.subr.mxu0 0.0
    %3284 = vmatpush1.xpose.msra.mxu0 0.0
    %3285 = vmatprep.subr.mxu0 0.0
    %3286 = vmatpush1.xpose.msra.mxu0 0.0
    %3287 = vmatprep.subr.mxu0 0.0
    %3288 = vmatpush1.xpose.msra.mxu0 0.0
    %3289 = vmatprep.subr.mxu0 0.0
    %3290 = vmatpush1.xpose.msra.mxu0 0.0
    %3291 = vmatprep.subr.mxu0 0.0
    %3292 = vmatpush1.xpose.msra.mxu0 0.0
    %3293 = vmatprep.subr.mxu0 0.0
    %3294 = vmatpush1.xpose.msra.mxu0 0.0
    %3295 = vmatprep.subr.mxu0 0.0
    %3296 = vmatpush1.xpose.msra.mxu0 0.0
    %3297 = vmatprep.subr.mxu0 0.0
    %3298 = vmatpush1.xpose.msra.mxu0 0.0
    %3299 = vmatprep.subr.mxu0 0.0
    %3300 = vmatpush1.xpose.msra.mxu0 0.0
    %3301 = vmatprep.subr.mxu0 0.0
    %3302 = vmatpush1.xpose.msra.mxu0 0.0
    %3303 = vmatprep.subr.mxu0 0.0
    %3304 = vmatpush1.xpose.msra.mxu0 0.0
    %3305 = vmatprep.subr.mxu0 0.0
    %3306 = vmatpush1.xpose.msra.mxu0 0.0
    %3307 = vmatprep.subr.mxu0 0.0
    %3308 = vmatpush1.xpose.msra.mxu0 0.0
    %3309 = vmatprep.subr.mxu0 0.0
    %3310 = vmatpush1.xpose.msra.mxu0 0.0
    %3311 = vmatprep.subr.mxu0 0.0
    %3312 = vmatpush1.xpose.msra.mxu0 0.0
    %3313 = vmatprep.subr.mxu0 0.0
    %3314 = vmatpush1.xpose.msra.mxu0 0.0
    %3315 = vmatprep.mubr.f32.mxu0 0.0
    %3316 = vmatmul.mubr.f32.gmra.mrb[0].mxu0 %v3237
    %v3317 = vpop.f32.mrb[0].mxu0
    %v3318 = vadd.f32 0.0, %v3317
    %v3319 = vpop.f32.mrb[0].mxu0
    %3320 = vdwg.mxu0
    %v3321 = vlaneseq
    %v3322 = vshrl.u32 %v3321, 7
    %v3323 = vsub.s32 0, %v3322
    %v3324 = vrot.slane %v3318, %v3323
    %v3325 = vadd.f32 %v3226, %v3324
    %v3326 = vadd.f32 %v3229, %v3324
    %v3327 = vadd.f32 %v3232, %v3324
    %v3328 = vadd.f32 %v3235, %v3324
    %vm3329 = vcmp.gt.f32.partialorder %v3325, 0.0
    %vm3330 = vcmp.gt.f32.partialorder %v3326, 0.0
    %vm3331 = vcmp.gt.f32.partialorder %v3327, 0.0
    %vm3332 = vcmp.gt.f32.partialorder %v3328, 0.0
    %v3333 = vmul.f32 %v3325, 0.2
    %v3334 = vmul.f32 %v3326, 0.2
    %v3335 = vmul.f32 %v3327, 0.2
    %v3336 = vmul.f32 %v3328, 0.2
    %v3337 = vsel %vm3329, %v3325, %v3333
    %v3338 = vsel %vm3330, %v3326, %v3334
    %v3339 = vsel %vm3331, %v3327, %v3335
    %v3340 = vsel %vm3332, %v3328, %v3336
    %v3341 = vadd.f32 %v3337, %v53
    %v3342 = vadd.f32 %v3338, %v54
    %v3343 = vadd.f32 %v3339, %v55
    %v3344 = vadd.f32 %v3340, %v56
    %v3345 = vsel %vm291, %v3341, -inf
    %3346 = vmax.xlane.f32.xlu0 %v3345
    %v3347 = vpop.xlane.xlu0 %3346
    %v3348 = vsel %vm291, %v3342, -inf
    %3349 = vmax.xlane.f32.xlu0 %v3348
    %v3350 = vpop.xlane.xlu0 %3349
    %v3351 = vsel %vm291, %v3343, -inf
    %3352 = vmax.xlane.f32.xlu0 %v3351
    %v3353 = vpop.xlane.xlu0 %3352
    %v3354 = vsel %vm291, %v3344, -inf
    %3355 = vmax.xlane.f32.xlu0 %v3354
    %v3356 = vpop.xlane.xlu0 %3355
    %v3357 = vsub.f32 %v3341, %v3347
    %v3358 = vsub.f32 %v3342, %v3350
    %v3359 = vsub.f32 %v3343, %v3353
    %v3360 = vsub.f32 %v3344, %v3356
    %v3361 = vmul.f32 %v3357, 1.442695
    %v3362 = vpow.pop %v3361
    %v3363 = vmul.f32 %v3358, 1.442695
    %v3364 = vpow.pop %v3363
    %v3365 = vmul.f32 %v3359, 1.442695
    %v3366 = vpow.pop %v3365
    %v3367 = vmul.f32 %v3360, 1.442695
    %v3368 = vpow.pop %v3367
    %v3369 = vsel %vm291, %v3362, 0.0
    %3370 = vadd.xlane.f32.xlu0 %v3369
    %v3371 = vpop.xlane.xlu0 %3370
    %v3372 = vsel %vm291, %v3364, 0.0
    %3373 = vadd.xlane.f32.xlu0 %v3372
    %v3374 = vpop.xlane.xlu0 %3373
    %v3375 = vsel %vm291, %v3366, 0.0
    %3376 = vadd.xlane.f32.xlu0 %v3375
    %v3377 = vpop.xlane.xlu0 %3376
    %v3378 = vsel %vm291, %v3368, 0.0
    %3379 = vadd.xlane.f32.xlu0 %v3378
    %v3380 = vpop.xlane.xlu0 %3379
    %v3381 = vrcp.pop %v3371
    %v3382 = vrcp.pop %v3374
    %v3383 = vrcp.pop %v3377
    %v3384 = vrcp.pop %v3380
    %v3385 = vmul.f32 %v3362, %v3381
    %v3386 = vmul.f32 %v3364, %v3382
    %v3387 = vmul.f32 %v3366, %v3383
    %v3388 = vmul.f32 %v3368, %v3384
    %v3390 = vsel %vm291, %v3385, 0
    %v3393 = vsel %vm291, %v3386, 0
    %v3396 = vsel %vm291, %v3387, 0
    %v3399 = vsel %vm291, %v3388, 0
    %3401 = vmatprep.subr.mxu0 0.0
    %3402 = vmatpush1.msra.mxu0 %v3198
    %3403 = vmatprep.subr.mxu0 0.0
    %3404 = vmatpush1.msra.mxu0 %v3203
    %3405 = vmatprep.subr.mxu0 0.0
    %3406 = vmatpush1.msra.mxu0 %v3208
    %3407 = vmatprep.subr.mxu0 0.0
    %3408 = vmatpush1.msra.mxu0 %v3213
    %3409 = vmatprep.subr.mxu0 0.0
    %3410 = vmatpush1.msra.mxu0 0.0
    %3411 = vmatprep.subr.mxu0 0.0
    %3412 = vmatpush1.msra.mxu0 0.0
    %3413 = vmatprep.subr.mxu0 0.0
    %3414 = vmatpush1.msra.mxu0 0.0
    %3415 = vmatprep.subr.mxu0 0.0
    %3416 = vmatpush1.msra.mxu0 0.0
    %3417 = vmatprep.subr.mxu0 0.0
    %3418 = vmatpush1.msra.mxu0 0.0
    %3419 = vmatprep.subr.mxu0 0.0
    %3420 = vmatpush1.msra.mxu0 0.0
    %3421 = vmatprep.subr.mxu0 0.0
    %3422 = vmatpush1.msra.mxu0 0.0
    %3423 = vmatprep.subr.mxu0 0.0
    %3424 = vmatpush1.msra.mxu0 0.0
    %3425 = vmatprep.subr.mxu0 0.0
    %3426 = vmatpush1.msra.mxu0 0.0
    %3427 = vmatprep.subr.mxu0 0.0
    %3428 = vmatpush1.msra.mxu0 0.0
    %3429 = vmatprep.subr.mxu0 0.0
    %3430 = vmatpush1.msra.mxu0 0.0
    %3431 = vmatprep.subr.mxu0 0.0
    %3432 = vmatpush1.msra.mxu0 0.0
    %3433 = vmatprep.subr.mxu0 0.0
    %3434 = vmatpush1.msra.mxu0 0.0
    %3435 = vmatprep.subr.mxu0 0.0
    %3436 = vmatpush1.msra.mxu0 0.0
    %3437 = vmatprep.subr.mxu0 0.0
    %3438 = vmatpush1.msra.mxu0 0.0
    %3439 = vmatprep.subr.mxu0 0.0
    %3440 = vmatpush1.msra.mxu0 0.0
    %3441 = vmatprep.subr.mxu0 0.0
    %3442 = vmatpush1.msra.mxu0 0.0
    %3443 = vmatprep.subr.mxu0 0.0
    %3444 = vmatpush1.msra.mxu0 0.0
    %3445 = vmatprep.subr.mxu0 0.0
    %3446 = vmatpush1.msra.mxu0 0.0
    %3447 = vmatprep.subr.mxu0 0.0
    %3448 = vmatpush1.msra.mxu0 0.0
    %3449 = vmatprep.subr.mxu0 0.0
    %3450 = vmatpush1.msra.mxu0 0.0
    %3451 = vmatprep.subr.mxu0 0.0
    %3452 = vmatpush1.msra.mxu0 0.0
    %3453 = vmatprep.subr.mxu0 0.0
    %3454 = vmatpush1.msra.mxu0 0.0
    %3455 = vmatprep.subr.mxu0 0.0
    %3456 = vmatpush1.msra.mxu0 0.0
    %3457 = vmatprep.subr.mxu0 0.0
    %3458 = vmatpush1.msra.mxu0 0.0
    %3459 = vmatprep.subr.mxu0 0.0
    %3460 = vmatpush1.msra.mxu0 0.0
    %3461 = vmatprep.subr.mxu0 0.0
    %3462 = vmatpush1.msra.mxu0 0.0
    %3463 = vmatprep.subr.mxu0 0.0
    %3464 = vmatpush1.msra.mxu0 0.0
    %3465 = vmatprep.mubr.f32.mxu0 0.0
    %3466 = vmatmul.mubr.f32.gmra.mrb[0].mxu0 %v3390
    %v3467 = vpop.f32.mrb[0].mxu0
    %v3468 = vadd.f32 0.0, %v3467
    %v3469 = vpop.f32.mrb[0].mxu0
    %3470 = vmatprep.mubr.f32.mxu0 0.0
    %3471 = vmatmul.mubr.f32.gmra.mrb[0].mxu0 %v3393
    %v3472 = vpop.f32.mrb[0].mxu0
    %v3473 = vadd.f32 0.0, %v3472
    %v3474 = vpop.f32.mrb[0].mxu0
    %3475 = vmatprep.mubr.f32.mxu0 0.0
    %3476 = vmatmul.mubr.f32.gmra.mrb[0].mxu0 %v3396
    %v3477 = vpop.f32.mrb[0].mxu0
    %v3478 = vadd.f32 0.0, %v3477
    %v3479 = vpop.f32.mrb[0].mxu0
    %3480 = vmatprep.mubr.f32.mxu0 0.0
    %3481 = vmatmul.mubr.f32.gmra.mrb[0].mxu0 %v3399
    %v3482 = vpop.f32.mrb[0].mxu0
    %v3483 = vadd.f32 0.0, %v3482
    %v3484 = vpop.f32.mrb[0].mxu0
    %3485 = vdwg.mxu0
    %v3486 = vsel %vm64, %v3468, 0.0
    %v3487 = vsel %vm64, %v3473, 0.0
    %v3488 = vadd.f32 %v3486, %v3487
    %v3489 = vsel %vm64, %v3478, 0.0
    %v3490 = vadd.f32 %v3488, %v3489
    %v3491 = vsel %vm64, %v3483, 0.0
    %v3492 = vadd.f32 %v3490, %v3491
    %v3493 = vrot.slane %v3492, 4
    %v3494 = vadd.f32 %v3492, %v3493
    %v3495 = vrot.slane %v3494, 2
    %v3496 = vadd.f32 %v3494, %v3495
    %v3497 = vrot.slane %v3496, 1
    %v3498 = vadd.f32 %v3496, %v3497
    %v3499 = vmul.f32 %v3498, %v446
    %v3500 = vsub.f32 %v3468, %v3499
    %v3501 = vsub.f32 %v3473, %v3499
    %v3502 = vsub.f32 %v3478, %v3499
    %v3503 = vsub.f32 %v3483, %v3499
    %v3504 = vmul.f32 %v3500, %v3500
    %v3505 = vmul.f32 %v3501, %v3501
    %v3506 = vmul.f32 %v3502, %v3502
    %v3507 = vmul.f32 %v3503, %v3503
    %v3508 = vsel %vm64, %v3504, 0.0
    %v3509 = vsel %vm64, %v3505, 0.0
    %v3510 = vadd.f32 %v3508, %v3509
    %v3511 = vsel %vm64, %v3506, 0.0
    %v3512 = vadd.f32 %v3510, %v3511
    %v3513 = vsel %vm64, %v3507, 0.0
    %v3514 = vadd.f32 %v3512, %v3513
    %v3515 = vrot.slane %v3514, 4
    %v3516 = vadd.f32 %v3514, %v3515
    %v3517 = vrot.slane %v3516, 2
    %v3518 = vadd.f32 %v3516, %v3517
    %v3519 = vrot.slane %v3518, 1
    %v3520 = vadd.f32 %v3518, %v3519
    %v3521 = vmul.f32 %v3520, %v446
    %v3522 = vadd.f32 %v3521, 1e-05
    %v3523 = vrsqrt.pop %v3522
    %v3524 = vmul.f32 %v3118, %v3523
    %v3525 = vmul.f32 %v3499, %v3524
    %v3527 = vrot.slane %v3525, 7
    %v3529 = vsub.f32 %v3118, %v3527
    %v3530 = vlaneseq
    %v3531 = vshrl.u32 %v3530, 7
    %v3532 = vsub.s32 2, %v3531
    %v3533 = vrot.slane %v3524, %v3532
    %v3534 = vmul.f32 %v3468, %v3533
    %v3535 = vmul.f32 %v3473, %v3533
    %v3536 = vmul.f32 %v3478, %v3533
    %v3537 = vmul.f32 %v3483, %v3533
    %v3538 = vlaneseq
    %v3539 = vshrl.u32 %v3538, 7
    %v3540 = vsub.s32 3, %v3539
    %v3541 = vrot.slane %v3529, %v3540
    %v3542 = vadd.f32 %v3534, %v3541
    %v3543 = vadd.f32 %v3535, %v3541
    %v3544 = vadd.f32 %v3536, %v3541
    %v3545 = vadd.f32 %v3537, %v3541
    %v3546 = vmax.f32 %v3542, 0.0
    %v3547 = vmax.f32 %v3543, 0.0
    %v3548 = vmax.f32 %v3544, 0.0
    %v3549 = vmax.f32 %v3545, 0.0
    %s3550 = scalar_lea.vmem [#allocation2], 128
    %v3551 = vld [vmem:[%s3550] sm:$0xff]
    %v3552 = vld [vmem:[%s3550 + $0x8] sm:$0xff]
    %s3553 = scalar_lea.vmem %s3, 32
    %v3554 = vld [vmem:[%s3553] sm:$0xf]
    %v3556 = vsel %vm64, %v3546, 0
    %v3559 = vsel %vm64, %v3547, 0
    %v3562 = vsel %vm64, %v3548, 0
    %v3565 = vsel %vm64, %v3549, 0
    %3567 = vmatprep.subr.mxu0 0.0
    %3568 = vmatpush1.msra.mxu0 %v3551
    %3569 = vmatprep.subr.mxu0 0.0
    %3570 = vmatpush1.msra.mxu0 %v3552
    %3571 = vmatprep.subr.mxu0 0.0
    %3572 = vmatpush1.msra.mxu0 0.0
    %3573 = vmatprep.subr.mxu0 0.0
    %3574 = vmatpush1.msra.mxu0 0.0
    %3575 = vmatprep.subr.mxu0 0.0
    %3576 = vmatpush1.msra.mxu0 0.0
    %3577 = vmatprep.subr.mxu0 0.0
    %3578 = vmatpush1.msra.mxu0 0.0
    %3579 = vmatprep.subr.mxu0 0.0
    %3580 = vmatpush1.msra.mxu0 0.0
    %3581 = vmatprep.subr.mxu0 0.0
    %3582 = vmatpush1.msra.mxu0 0.0
    %3583 = vmatprep.subr.mxu0 0.0
    %3584 = vmatpush1.msra.mxu0 0.0
    %3585 = vmatprep.subr.mxu0 0.0
    %3586 = vmatpush1.msra.mxu0 0.0
    %3587 = vmatprep.subr.mxu0 0.0
    %3588 = vmatpush1.msra.mxu0 0.0
    %3589 = vmatprep.subr.mxu0 0.0
    %3590 = vmatpush1.msra.mxu0 0.0
    %3591 = vmatprep.subr.mxu0 0.0
    %3592 = vmatpush1.msra.mxu0 0.0
    %3593 = vmatprep.subr.mxu0 0.0
    %3594 = vmatpush1.msra.mxu0 0.0
    %3595 = vmatprep.subr.mxu0 0.0
    %3596 = vmatpush1.msra.mxu0 0.0
    %3597 = vmatprep.subr.mxu0 0.0
    %3598 = vmatpush1.msra.mxu0 0.0
    %3599 = vmatprep.subr.mxu0 0.0
    %3600 = vmatpush1.msra.mxu0 0.0
    %3601 = vmatprep.subr.mxu0 0.0
    %3602 = vmatpush1.msra.mxu0 0.0
    %3603 = vmatprep.subr.mxu0 0.0
    %3604 = vmatpush1.msra.mxu0 0.0
    %3605 = vmatprep.subr.mxu0 0.0
    %3606 = vmatpush1.msra.mxu0 0.0
    %3607 = vmatprep.subr.mxu0 0.0
    %3608 = vmatpush1.msra.mxu0 0.0
    %3609 = vmatprep.subr.mxu0 0.0
    %3610 = vmatpush1.msra.mxu0 0.0
    %3611 = vmatprep.subr.mxu0 0.0
    %3612 = vmatpush1.msra.mxu0 0.0
    %3613 = vmatprep.subr.mxu0 0.0
    %3614 = vmatpush1.msra.mxu0 0.0
    %3615 = vmatprep.subr.mxu0 0.0
    %3616 = vmatpush1.msra.mxu0 0.0
    %3617 = vmatprep.subr.mxu0 0.0
    %3618 = vmatpush1.msra.mxu0 0.0
    %3619 = vmatprep.subr.mxu0 0.0
    %3620 = vmatpush1.msra.mxu0 0.0
    %3621 = vmatprep.subr.mxu0 0.0
    %3622 = vmatpush1.msra.mxu0 0.0
    %3623 = vmatprep.subr.mxu0 0.0
    %3624 = vmatpush1.msra.mxu0 0.0
    %3625 = vmatprep.subr.mxu0 0.0
    %3626 = vmatpush1.msra.mxu0 0.0
    %3627 = vmatprep.subr.mxu0 0.0
    %3628 = vmatpush1.msra.mxu0 0.0
    %3629 = vmatprep.subr.mxu0 0.0
    %3630 = vmatpush1.msra.mxu0 0.0
    %3631 = vmatprep.mubr.f32.mxu0 0.0
    %3632 = vmatmul.mubr.f32.gmra.mrb[0].mxu0 %v3556
    %v3633 = vpop.f32.mrb[0].mxu0
    %v3634 = vadd.f32 0.0, %v3633
    %v3635 = vpop.f32.mrb[0].mxu0
    %3636 = vmatprep.mubr.f32.mxu0 0.0
    %3637 = vmatmul.mubr.f32.gmra.mrb[0].mxu0 %v3559
    %v3638 = vpop.f32.mrb[0].mxu0
    %v3639 = vadd.f32 0.0, %v3638
    %v3640 = vpop.f32.mrb[0].mxu0
    %3641 = vmatprep.mubr.f32.mxu0 0.0
    %3642 = vmatmul.mubr.f32.gmra.mrb[0].mxu0 %v3562
    %v3643 = vpop.f32.mrb[0].mxu0
    %v3644 = vadd.f32 0.0, %v3643
    %v3645 = vpop.f32.mrb[0].mxu0
    %3646 = vmatprep.mubr.f32.mxu0 0.0
    %3647 = vmatmul.mubr.f32.gmra.mrb[0].mxu0 %v3565
    %v3648 = vpop.f32.mrb[0].mxu0
    %v3649 = vadd.f32 0.0, %v3648
    %v3650 = vpop.f32.mrb[0].mxu0
    %3651 = vdwg.mxu0
    %v3652 = vlaneseq
    %v3653 = vshrl.u32 %v3652, 7
    %v3654 = vsub.s32 1, %v3653
    %v3655 = vrot.slane %v3554, %v3654
    %v3656 = vmul.f32 %v3634, %v3655
    %v3657 = vmul.f32 %v3639, %v3655
    %v3658 = vmul.f32 %v3644, %v3655
    %v3659 = vmul.f32 %v3649, %v3655
    %v3660 = vsel %vm64, %v3656, 0.0
    %3661 = vadd.xlane.f32.xlu0 %v3660
    %v3662 = vpop.xlane.xlu0 %3661
    %v3663 = vsel %vm64, %v3657, 0.0
    %3664 = vadd.xlane.f32.xlu0 %v3663
    %v3665 = vpop.xlane.xlu0 %3664
    %v3666 = vsel %vm64, %v3658, 0.0
    %3667 = vadd.xlane.f32.xlu0 %v3666
    %v3668 = vpop.xlane.xlu0 %3667
    %v3669 = vsel %vm64, %v3659, 0.0
    %3670 = vadd.xlane.f32.xlu0 %v3669
    %v3671 = vpop.xlane.xlu0 %3670
    %v3673 = vsel %vm64, %v3554, 0
    %v3676 = vsel %vm64, %v3634, 0
    %v3679 = vsel %vm64, %v3639, 0
    %v3682 = vsel %vm64, %v3644, 0
    %v3685 = vsel %vm64, %v3649, 0
    %3687 = vmatprep.subr.mxu0 0.0
    %3688 = vmatpush1.xpose.msra.mxu0 %v3676
    %3689 = vmatprep.subr.mxu0 0.0
    %3690 = vmatpush1.xpose.msra.mxu0 %v3679
    %3691 = vmatprep.subr.mxu0 0.0
    %3692 = vmatpush1.xpose.msra.mxu0 %v3682
    %3693 = vmatprep.subr.mxu0 0.0
    %3694 = vmatpush1.xpose.msra.mxu0 %v3685
    %3695 = vmatprep.subr.mxu0 0.0
    %3696 = vmatpush1.xpose.msra.mxu0 0.0
    %3697 = vmatprep.subr.mxu0 0.0
    %3698 = vmatpush1.xpose.msra.mxu0 0.0
    %3699 = vmatprep.subr.mxu0 0.0
    %3700 = vmatpush1.xpose.msra.mxu0 0.0
    %3701 = vmatprep.subr.mxu0 0.0
    %3702 = vmatpush1.xpose.msra.mxu0 0.0
    %3703 = vmatprep.subr.mxu0 0.0
    %3704 = vmatpush1.xpose.msra.mxu0 0.0
    %3705 = vmatprep.subr.mxu0 0.0
    %3706 = vmatpush1.xpose.msra.mxu0 0.0
    %3707 = vmatprep.subr.mxu0 0.0
    %3708 = vmatpush1.xpose.msra.mxu0 0.0
    %3709 = vmatprep.subr.mxu0 0.0
    %3710 = vmatpush1.xpose.msra.mxu0 0.0
    %3711 = vmatprep.subr.mxu0 0.0
    %3712 = vmatpush1.xpose.msra.mxu0 0.0
    %3713 = vmatprep.subr.mxu0 0.0
    %3714 = vmatpush1.xpose.msra.mxu0 0.0
    %3715 = vmatprep.subr.mxu0 0.0
    %3716 = vmatpush1.xpose.msra.mxu0 0.0
    %3717 = vmatprep.subr.mxu0 0.0
    %3718 = vmatpush1.xpose.msra.mxu0 0.0
    %3719 = vmatprep.subr.mxu0 0.0
    %3720 = vmatpush1.xpose.msra.mxu0 0.0
    %3721 = vmatprep.subr.mxu0 0.0
    %3722 = vmatpush1.xpose.msra.mxu0 0.0
    %3723 = vmatprep.subr.mxu0 0.0
    %3724 = vmatpush1.xpose.msra.mxu0 0.0
    %3725 = vmatprep.subr.mxu0 0.0
    %3726 = vmatpush1.xpose.msra.mxu0 0.0
    %3727 = vmatprep.subr.mxu0 0.0
    %3728 = vmatpush1.xpose.msra.mxu0 0.0
    %3729 = vmatprep.subr.mxu0 0.0
    %3730 = vmatpush1.xpose.msra.mxu0 0.0
    %3731 = vmatprep.subr.mxu0 0.0
    %3732 = vmatpush1.xpose.msra.mxu0 0.0
    %3733 = vmatprep.subr.mxu0 0.0
    %3734 = vmatpush1.xpose.msra.mxu0 0.0
    %3735 = vmatprep.subr.mxu0 0.0
    %3736 = vmatpush1.xpose.msra.mxu0 0.0
    %3737 = vmatprep.subr.mxu0 0.0
    %3738 = vmatpush1.xpose.msra.mxu0 0.0
    %3739 = vmatprep.subr.mxu0 0.0
    %3740 = vmatpush1.xpose.msra.mxu0 0.0
    %3741 = vmatprep.subr.mxu0 0.0
    %3742 = vmatpush1.xpose.msra.mxu0 0.0
    %3743 = vmatprep.subr.mxu0 0.0
    %3744 = vmatpush1.xpose.msra.mxu0 0.0
    %3745 = vmatprep.subr.mxu0 0.0
    %3746 = vmatpush1.xpose.msra.mxu0 0.0
    %3747 = vmatprep.subr.mxu0 0.0
    %3748 = vmatpush1.xpose.msra.mxu0 0.0
    %3749 = vmatprep.subr.mxu0 0.0
    %3750 = vmatpush1.xpose.msra.mxu0 0.0
    %3751 = vmatprep.mubr.f32.mxu0 0.0
    %3752 = vmatmul.mubr.f32.gmra.mrb[0].mxu0 %v3673
    %v3753 = vpop.f32.mrb[0].mxu0
    %v3754 = vadd.f32 0.0, %v3753
    %v3755 = vpop.f32.mrb[0].mxu0
    %3756 = vdwg.mxu0
    %v3757 = vlaneseq
    %v3758 = vshrl.u32 %v3757, 7
    %v3759 = vsub.s32 0, %v3758
    %v3760 = vrot.slane %v3754, %v3759
    %v3761 = vadd.f32 %v3662, %v3760
    %v3762 = vadd.f32 %v3665, %v3760
    %v3763 = vadd.f32 %v3668, %v3760
    %v3764 = vadd.f32 %v3671, %v3760
    %vm3765 = vcmp.gt.f32.partialorder %v3761, 0.0
    %vm3766 = vcmp.gt.f32.partialorder %v3762, 0.0
    %vm3767 = vcmp.gt.f32.partialorder %v3763, 0.0
    %vm3768 = vcmp.gt.f32.partialorder %v3764, 0.0
    %v3769 = vmul.f32 %v3761, 0.2
    %v3770 = vmul.f32 %v3762, 0.2
    %v3771 = vmul.f32 %v3763, 0.2
    %v3772 = vmul.f32 %v3764, 0.2
    %v3773 = vsel %vm3765, %v3761, %v3769
    %v3774 = vsel %vm3766, %v3762, %v3770
    %v3775 = vsel %vm3767, %v3763, %v3771
    %v3776 = vsel %vm3768, %v3764, %v3772
    %v3777 = vadd.f32 %v3773, %v53
    %v3778 = vadd.f32 %v3774, %v54
    %v3779 = vadd.f32 %v3775, %v55
    %v3780 = vadd.f32 %v3776, %v56
    %v3781 = vsel %vm291, %v3777, -inf
    %3782 = vmax.xlane.f32.xlu0 %v3781
    %v3783 = vpop.xlane.xlu0 %3782
    %v3784 = vsel %vm291, %v3778, -inf
    %3785 = vmax.xlane.f32.xlu0 %v3784
    %v3786 = vpop.xlane.xlu0 %3785
    %v3787 = vsel %vm291, %v3779, -inf
    %3788 = vmax.xlane.f32.xlu0 %v3787
    %v3789 = vpop.xlane.xlu0 %3788
    %v3790 = vsel %vm291, %v3780, -inf
    %3791 = vmax.xlane.f32.xlu0 %v3790
    %v3792 = vpop.xlane.xlu0 %3791
    %v3793 = vsub.f32 %v3777, %v3783
    %v3794 = vsub.f32 %v3778, %v3786
    %v3795 = vsub.f32 %v3779, %v3789
    %v3796 = vsub.f32 %v3780, %v3792
    %v3797 = vmul.f32 %v3793, 1.442695
    %v3798 = vpow.pop %v3797
    %v3799 = vmul.f32 %v3794, 1.442695
    %v3800 = vpow.pop %v3799
    %v3801 = vmul.f32 %v3795, 1.442695
    %v3802 = vpow.pop %v3801
    %v3803 = vmul.f32 %v3796, 1.442695
    %v3804 = vpow.pop %v3803
    %v3805 = vsel %vm291, %v3798, 0.0
    %3806 = vadd.xlane.f32.xlu0 %v3805
    %v3807 = vpop.xlane.xlu0 %3806
    %v3808 = vsel %vm291, %v3800, 0.0
    %3809 = vadd.xlane.f32.xlu0 %v3808
    %v3810 = vpop.xlane.xlu0 %3809
    %v3811 = vsel %vm291, %v3802, 0.0
    %3812 = vadd.xlane.f32.xlu0 %v3811
    %v3813 = vpop.xlane.xlu0 %3812
    %v3814 = vsel %vm291, %v3804, 0.0
    %3815 = vadd.xlane.f32.xlu0 %v3814
    %v3816 = vpop.xlane.xlu0 %3815
    %v3817 = vrcp.pop %v3807
    %v3818 = vrcp.pop %v3810
    %v3819 = vrcp.pop %v3813
    %v3820 = vrcp.pop %v3816
    %v3821 = vmul.f32 %v3798, %v3817
    %v3822 = vmul.f32 %v3800, %v3818
    %v3823 = vmul.f32 %v3802, %v3819
    %v3824 = vmul.f32 %v3804, %v3820
    %v3826 = vsel %vm291, %v3821, 0
    %v3829 = vsel %vm291, %v3822, 0
    %v3832 = vsel %vm291, %v3823, 0
    %v3835 = vsel %vm291, %v3824, 0
    %3837 = vmatprep.subr.mxu0 0.0
    %3838 = vmatpush1.msra.mxu0 %v3634
    %3839 = vmatprep.subr.mxu0 0.0
    %3840 = vmatpush1.msra.mxu0 %v3639
    %3841 = vmatprep.subr.mxu0 0.0
    %3842 = vmatpush1.msra.mxu0 %v3644
    %3843 = vmatprep.subr.mxu0 0.0
    %3844 = vmatpush1.msra.mxu0 %v3649
    %3845 = vmatprep.subr.mxu0 0.0
    %3846 = vmatpush1.msra.mxu0 0.0
    %3847 = vmatprep.subr.mxu0 0.0
    %3848 = vmatpush1.msra.mxu0 0.0
    %3849 = vmatprep.subr.mxu0 0.0
    %3850 = vmatpush1.msra.mxu0 0.0
    %3851 = vmatprep.subr.mxu0 0.0
    %3852 = vmatpush1.msra.mxu0 0.0
    %3853 = vmatprep.subr.mxu0 0.0
    %3854 = vmatpush1.msra.mxu0 0.0
    %3855 = vmatprep.subr.mxu0 0.0
    %3856 = vmatpush1.msra.mxu0 0.0
    %3857 = vmatprep.subr.mxu0 0.0
    %3858 = vmatpush1.msra.mxu0 0.0
    %3859 = vmatprep.subr.mxu0 0.0
    %3860 = vmatpush1.msra.mxu0 0.0
    %3861 = vmatprep.subr.mxu0 0.0
    %3862 = vmatpush1.msra.mxu0 0.0
    %3863 = vmatprep.subr.mxu0 0.0
    %3864 = vmatpush1.msra.mxu0 0.0
    %3865 = vmatprep.subr.mxu0 0.0
    %3866 = vmatpush1.msra.mxu0 0.0
    %3867 = vmatprep.subr.mxu0 0.0
    %3868 = vmatpush1.msra.mxu0 0.0
    %3869 = vmatprep.subr.mxu0 0.0
    %3870 = vmatpush1.msra.mxu0 0.0
    %3871 = vmatprep.subr.mxu0 0.0
    %3872 = vmatpush1.msra.mxu0 0.0
    %3873 = vmatprep.subr.mxu0 0.0
    %3874 = vmatpush1.msra.mxu0 0.0
    %3875 = vmatprep.subr.mxu0 0.0
    %3876 = vmatpush1.msra.mxu0 0.0
    %3877 = vmatprep.subr.mxu0 0.0
    %3878 = vmatpush1.msra.mxu0 0.0
    %3879 = vmatprep.subr.mxu0 0.0
    %3880 = vmatpush1.msra.mxu0 0.0
    %3881 = vmatprep.subr.mxu0 0.0
    %3882 = vmatpush1.msra.mxu0 0.0
    %3883 = vmatprep.subr.mxu0 0.0
    %3884 = vmatpush1.msra.mxu0 0.0
    %3885 = vmatprep.subr.mxu0 0.0
    %3886 = vmatpush1.msra.mxu0 0.0
    %3887 = vmatprep.subr.mxu0 0.0
    %3888 = vmatpush1.msra.mxu0 0.0
    %3889 = vmatprep.subr.mxu0 0.0
    %3890 = vmatpush1.msra.mxu0 0.0
    %3891 = vmatprep.subr.mxu0 0.0
    %3892 = vmatpush1.msra.mxu0 0.0
    %3893 = vmatprep.subr.mxu0 0.0
    %3894 = vmatpush1.msra.mxu0 0.0
    %3895 = vmatprep.subr.mxu0 0.0
    %3896 = vmatpush1.msra.mxu0 0.0
    %3897 = vmatprep.subr.mxu0 0.0
    %3898 = vmatpush1.msra.mxu0 0.0
    %3899 = vmatprep.subr.mxu0 0.0
    %3900 = vmatpush1.msra.mxu0 0.0
    %3901 = vmatprep.mubr.f32.mxu0 0.0
    %3902 = vmatmul.mubr.f32.gmra.mrb[0].mxu0 %v3826
    %v3903 = vpop.f32.mrb[0].mxu0
    %v3904 = vadd.f32 0.0, %v3903
    %v3905 = vpop.f32.mrb[0].mxu0
    %3906 = vmatprep.mubr.f32.mxu0 0.0
    %3907 = vmatmul.mubr.f32.gmra.mrb[0].mxu0 %v3829
    %v3908 = vpop.f32.mrb[0].mxu0
    %v3909 = vadd.f32 0.0, %v3908
    %v3910 = vpop.f32.mrb[0].mxu0
    %3911 = vmatprep.mubr.f32.mxu0 0.0
    %3912 = vmatmul.mubr.f32.gmra.mrb[0].mxu0 %v3832
    %v3913 = vpop.f32.mrb[0].mxu0
    %v3914 = vadd.f32 0.0, %v3913
    %v3915 = vpop.f32.mrb[0].mxu0
    %3916 = vmatprep.mubr.f32.mxu0 0.0
    %3917 = vmatmul.mubr.f32.gmra.mrb[0].mxu0 %v3835
    %v3918 = vpop.f32.mrb[0].mxu0
    %v3919 = vadd.f32 0.0, %v3918
    %v3920 = vpop.f32.mrb[0].mxu0
    %3921 = vdwg.mxu0
    %v3922 = vsel %vm64, %v3904, 0.0
    %v3923 = vsel %vm64, %v3909, 0.0
    %v3924 = vadd.f32 %v3922, %v3923
    %v3925 = vsel %vm64, %v3914, 0.0
    %v3926 = vadd.f32 %v3924, %v3925
    %v3927 = vsel %vm64, %v3919, 0.0
    %v3928 = vadd.f32 %v3926, %v3927
    %v3929 = vrot.slane %v3928, 4
    %v3930 = vadd.f32 %v3928, %v3929
    %v3931 = vrot.slane %v3930, 2
    %v3932 = vadd.f32 %v3930, %v3931
    %v3933 = vrot.slane %v3932, 1
    %v3934 = vadd.f32 %v3932, %v3933
    %v3935 = vmul.f32 %v3934, %v446
    %v3936 = vsub.f32 %v3904, %v3935
    %v3937 = vsub.f32 %v3909, %v3935
    %v3938 = vsub.f32 %v3914, %v3935
    %v3939 = vsub.f32 %v3919, %v3935
    %v3940 = vmul.f32 %v3936, %v3936
    %v3941 = vmul.f32 %v3937, %v3937
    %v3942 = vmul.f32 %v3938, %v3938
    %v3943 = vmul.f32 %v3939, %v3939
    %v3944 = vsel %vm64, %v3940, 0.0
    %v3945 = vsel %vm64, %v3941, 0.0
    %v3946 = vadd.f32 %v3944, %v3945
    %v3947 = vsel %vm64, %v3942, 0.0
    %v3948 = vadd.f32 %v3946, %v3947
    %v3949 = vsel %vm64, %v3943, 0.0
    %v3950 = vadd.f32 %v3948, %v3949
    %v3951 = vrot.slane %v3950, 4
    %v3952 = vadd.f32 %v3950, %v3951
    %v3953 = vrot.slane %v3952, 2
    %v3954 = vadd.f32 %v3952, %v3953
    %v3955 = vrot.slane %v3954, 1
    %v3956 = vadd.f32 %v3954, %v3955
    %v3957 = vmul.f32 %v3956, %v446
    %v3958 = vadd.f32 %v3957, 1e-05
    %v3959 = vrsqrt.pop %v3958
    %v3960 = vmul.f32 %v3554, %v3959
    %v3961 = vmul.f32 %v3935, %v3960
    %v3963 = vrot.slane %v3961, 7
    %v3965 = vsub.f32 %v3554, %v3963
    %v3966 = vlaneseq
    %v3967 = vshrl.u32 %v3966, 7
    %v3968 = vsub.s32 2, %v3967
    %v3969 = vrot.slane %v3960, %v3968
    %v3970 = vmul.f32 %v3904, %v3969
    %v3971 = vmul.f32 %v3909, %v3969
    %v3972 = vmul.f32 %v3914, %v3969
    %v3973 = vmul.f32 %v3919, %v3969
    %v3974 = vlaneseq
    %v3975 = vshrl.u32 %v3974, 7
    %v3976 = vsub.s32 3, %v3975
    %v3977 = vrot.slane %v3965, %v3976
    %v3978 = vadd.f32 %v3970, %v3977
    %v3979 = vadd.f32 %v3971, %v3977
    %v3980 = vadd.f32 %v3972, %v3977
    %v3981 = vadd.f32 %v3973, %v3977
    %v3982 = vmax.f32 %v3978, 0.0
    %v3983 = vmax.f32 %v3979, 0.0
    %v3984 = vmax.f32 %v3980, 0.0
    %v3985 = vmax.f32 %v3981, 0.0
    %s3986 = scalar_lea.vmem [#allocation2], 144
    %v3987 = vld [vmem:[%s3986] sm:$0xff]
    %v3988 = vld [vmem:[%s3986 + $0x8] sm:$0xff]
    %s3989 = scalar_lea.vmem %s3, 36
    %v3990 = vld [vmem:[%s3989] sm:$0xf]
    %v3992 = vsel %vm64, %v3982, 0
    %v3995 = vsel %vm64, %v3983, 0
    %v3998 = vsel %vm64, %v3984, 0
    %v4001 = vsel %vm64, %v3985, 0
    %4003 = vmatprep.subr.mxu0 0.0
    %4004 = vmatpush1.msra.mxu0 %v3987
    %4005 = vmatprep.subr.mxu0 0.0
    %4006 = vmatpush1.msra.mxu0 %v3988
    %4007 = vmatprep.subr.mxu0 0.0
    %4008 = vmatpush1.msra.mxu0 0.0
    %4009 = vmatprep.subr.mxu0 0.0
    %4010 = vmatpush1.msra.mxu0 0.0
    %4011 = vmatprep.subr.mxu0 0.0
    %4012 = vmatpush1.msra.mxu0 0.0
    %4013 = vmatprep.subr.mxu0 0.0
    %4014 = vmatpush1.msra.mxu0 0.0
    %4015 = vmatprep.subr.mxu0 0.0
    %4016 = vmatpush1.msra.mxu0 0.0
    %4017 = vmatprep.subr.mxu0 0.0
    %4018 = vmatpush1.msra.mxu0 0.0
    %4019 = vmatprep.subr.mxu0 0.0
    %4020 = vmatpush1.msra.mxu0 0.0
    %4021 = vmatprep.subr.mxu0 0.0
    %4022 = vmatpush1.msra.mxu0 0.0
    %4023 = vmatprep.subr.mxu0 0.0
    %4024 = vmatpush1.msra.mxu0 0.0
    %4025 = vmatprep.subr.mxu0 0.0
    %4026 = vmatpush1.msra.mxu0 0.0
    %4027 = vmatprep.subr.mxu0 0.0
    %4028 = vmatpush1.msra.mxu0 0.0
    %4029 = vmatprep.subr.mxu0 0.0
    %4030 = vmatpush1.msra.mxu0 0.0
    %4031 = vmatprep.subr.mxu0 0.0
    %4032 = vmatpush1.msra.mxu0 0.0
    %4033 = vmatprep.subr.mxu0 0.0
    %4034 = vmatpush1.msra.mxu0 0.0
    %4035 = vmatprep.subr.mxu0 0.0
    %4036 = vmatpush1.msra.mxu0 0.0
    %4037 = vmatprep.subr.mxu0 0.0
    %4038 = vmatpush1.msra.mxu0 0.0
    %4039 = vmatprep.subr.mxu0 0.0
    %4040 = vmatpush1.msra.mxu0 0.0
    %4041 = vmatprep.subr.mxu0 0.0
    %4042 = vmatpush1.msra.mxu0 0.0
    %4043 = vmatprep.subr.mxu0 0.0
    %4044 = vmatpush1.msra.mxu0 0.0
    %4045 = vmatprep.subr.mxu0 0.0
    %4046 = vmatpush1.msra.mxu0 0.0
    %4047 = vmatprep.subr.mxu0 0.0
    %4048 = vmatpush1.msra.mxu0 0.0
    %4049 = vmatprep.subr.mxu0 0.0
    %4050 = vmatpush1.msra.mxu0 0.0
    %4051 = vmatprep.subr.mxu0 0.0
    %4052 = vmatpush1.msra.mxu0 0.0
    %4053 = vmatprep.subr.mxu0 0.0
    %4054 = vmatpush1.msra.mxu0 0.0
    %4055 = vmatprep.subr.mxu0 0.0
    %4056 = vmatpush1.msra.mxu0 0.0
    %4057 = vmatprep.subr.mxu0 0.0
    %4058 = vmatpush1.msra.mxu0 0.0
    %4059 = vmatprep.subr.mxu0 0.0
    %4060 = vmatpush1.msra.mxu0 0.0
    %4061 = vmatprep.subr.mxu0 0.0
    %4062 = vmatpush1.msra.mxu0 0.0
    %4063 = vmatprep.subr.mxu0 0.0
    %4064 = vmatpush1.msra.mxu0 0.0
    %4065 = vmatprep.subr.mxu0 0.0
    %4066 = vmatpush1.msra.mxu0 0.0
    %4067 = vmatprep.mubr.f32.mxu0 0.0
    %4068 = vmatmul.mubr.f32.gmra.mrb[0].mxu0 %v3992
    %v4069 = vpop.f32.mrb[0].mxu0
    %v4070 = vadd.f32 0.0, %v4069
    %v4071 = vpop.f32.mrb[0].mxu0
    %4072 = vmatprep.mubr.f32.mxu0 0.0
    %4073 = vmatmul.mubr.f32.gmra.mrb[0].mxu0 %v3995
    %v4074 = vpop.f32.mrb[0].mxu0
    %v4075 = vadd.f32 0.0, %v4074
    %v4076 = vpop.f32.mrb[0].mxu0
    %4077 = vmatprep.mubr.f32.mxu0 0.0
    %4078 = vmatmul.mubr.f32.gmra.mrb[0].mxu0 %v3998
    %v4079 = vpop.f32.mrb[0].mxu0
    %v4080 = vadd.f32 0.0, %v4079
    %v4081 = vpop.f32.mrb[0].mxu0
    %4082 = vmatprep.mubr.f32.mxu0 0.0
    %4083 = vmatmul.mubr.f32.gmra.mrb[0].mxu0 %v4001
    %v4084 = vpop.f32.mrb[0].mxu0
    %v4085 = vadd.f32 0.0, %v4084
    %v4086 = vpop.f32.mrb[0].mxu0
    %4087 = vdwg.mxu0
    %v4088 = vlaneseq
    %v4089 = vshrl.u32 %v4088, 7
    %v4090 = vsub.s32 1, %v4089
    %v4091 = vrot.slane %v3990, %v4090
    %v4092 = vmul.f32 %v4070, %v4091
    %v4093 = vmul.f32 %v4075, %v4091
    %v4094 = vmul.f32 %v4080, %v4091
    %v4095 = vmul.f32 %v4085, %v4091
    %v4096 = vsel %vm64, %v4092, 0.0
    %4097 = vadd.xlane.f32.xlu0 %v4096
    %v4098 = vpop.xlane.xlu0 %4097
    %v4099 = vsel %vm64, %v4093, 0.0
    %4100 = vadd.xlane.f32.xlu0 %v4099
    %v4101 = vpop.xlane.xlu0 %4100
    %v4102 = vsel %vm64, %v4094, 0.0
    %4103 = vadd.xlane.f32.xlu0 %v4102
    %v4104 = vpop.xlane.xlu0 %4103
    %v4105 = vsel %vm64, %v4095, 0.0
    %4106 = vadd.xlane.f32.xlu0 %v4105
    %v4107 = vpop.xlane.xlu0 %4106
    %v4109 = vsel %vm64, %v3990, 0
    %v4112 = vsel %vm64, %v4070, 0
    %v4115 = vsel %vm64, %v4075, 0
    %v4118 = vsel %vm64, %v4080, 0
    %v4121 = vsel %vm64, %v4085, 0
    %4123 = vmatprep.subr.mxu0 0.0
    %4124 = vmatpush1.xpose.msra.mxu0 %v4112
    %4125 = vmatprep.subr.mxu0 0.0
    %4126 = vmatpush1.xpose.msra.mxu0 %v4115
    %4127 = vmatprep.subr.mxu0 0.0
    %4128 = vmatpush1.xpose.msra.mxu0 %v4118
    %4129 = vmatprep.subr.mxu0 0.0
    %4130 = vmatpush1.xpose.msra.mxu0 %v4121
    %4131 = vmatprep.subr.mxu0 0.0
    %4132 = vmatpush1.xpose.msra.mxu0 0.0
    %4133 = vmatprep.subr.mxu0 0.0
    %4134 = vmatpush1.xpose.msra.mxu0 0.0
    %4135 = vmatprep.subr.mxu0 0.0
    %4136 = vmatpush1.xpose.msra.mxu0 0.0
    %4137 = vmatprep.subr.mxu0 0.0
    %4138 = vmatpush1.xpose.msra.mxu0 0.0
    %4139 = vmatprep.subr.mxu0 0.0
    %4140 = vmatpush1.xpose.msra.mxu0 0.0
    %4141 = vmatprep.subr.mxu0 0.0
    %4142 = vmatpush1.xpose.msra.mxu0 0.0
    %4143 = vmatprep.subr.mxu0 0.0
    %4144 = vmatpush1.xpose.msra.mxu0 0.0
    %4145 = vmatprep.subr.mxu0 0.0
    %4146 = vmatpush1.xpose.msra.mxu0 0.0
    %4147 = vmatprep.subr.mxu0 0.0
    %4148 = vmatpush1.xpose.msra.mxu0 0.0
    %4149 = vmatprep.subr.mxu0 0.0
    %4150 = vmatpush1.xpose.msra.mxu0 0.0
    %4151 = vmatprep.subr.mxu0 0.0
    %4152 = vmatpush1.xpose.msra.mxu0 0.0
    %4153 = vmatprep.subr.mxu0 0.0
    %4154 = vmatpush1.xpose.msra.mxu0 0.0
    %4155 = vmatprep.subr.mxu0 0.0
    %4156 = vmatpush1.xpose.msra.mxu0 0.0
    %4157 = vmatprep.subr.mxu0 0.0
    %4158 = vmatpush1.xpose.msra.mxu0 0.0
    %4159 = vmatprep.subr.mxu0 0.0
    %4160 = vmatpush1.xpose.msra.mxu0 0.0
    %4161 = vmatprep.subr.mxu0 0.0
    %4162 = vmatpush1.xpose.msra.mxu0 0.0
    %4163 = vmatprep.subr.mxu0 0.0
    %4164 = vmatpush1.xpose.msra.mxu0 0.0
    %4165 = vmatprep.subr.mxu0 0.0
    %4166 = vmatpush1.xpose.msra.mxu0 0.0
    %4167 = vmatprep.subr.mxu0 0.0
    %4168 = vmatpush1.xpose.msra.mxu0 0.0
    %4169 = vmatprep.subr.mxu0 0.0
    %4170 = vmatpush1.xpose.msra.mxu0 0.0
    %4171 = vmatprep.subr.mxu0 0.0
    %4172 = vmatpush1.xpose.msra.mxu0 0.0
    %4173 = vmatprep.subr.mxu0 0.0
    %4174 = vmatpush1.xpose.msra.mxu0 0.0
    %4175 = vmatprep.subr.mxu0 0.0
    %4176 = vmatpush1.xpose.msra.mxu0 0.0
    %4177 = vmatprep.subr.mxu0 0.0
    %4178 = vmatpush1.xpose.msra.mxu0 0.0
    %4179 = vmatprep.subr.mxu0 0.0
    %4180 = vmatpush1.xpose.msra.mxu0 0.0
    %4181 = vmatprep.subr.mxu0 0.0
    %4182 = vmatpush1.xpose.msra.mxu0 0.0
    %4183 = vmatprep.subr.mxu0 0.0
    %4184 = vmatpush1.xpose.msra.mxu0 0.0
    %4185 = vmatprep.subr.mxu0 0.0
    %4186 = vmatpush1.xpose.msra.mxu0 0.0
    %4187 = vmatprep.mubr.f32.mxu0 0.0
    %4188 = vmatmul.mubr.f32.gmra.mrb[0].mxu0 %v4109
    %v4189 = vpop.f32.mrb[0].mxu0
    %v4190 = vadd.f32 0.0, %v4189
    %v4191 = vpop.f32.mrb[0].mxu0
    %4192 = vdwg.mxu0
    %v4193 = vlaneseq
    %v4194 = vshrl.u32 %v4193, 7
    %v4195 = vsub.s32 0, %v4194
    %v4196 = vrot.slane %v4190, %v4195
    %v4197 = vadd.f32 %v4098, %v4196
    %v4198 = vadd.f32 %v4101, %v4196
    %v4199 = vadd.f32 %v4104, %v4196
    %v4200 = vadd.f32 %v4107, %v4196
    %vm4201 = vcmp.gt.f32.partialorder %v4197, 0.0
    %vm4202 = vcmp.gt.f32.partialorder %v4198, 0.0
    %vm4203 = vcmp.gt.f32.partialorder %v4199, 0.0
    %vm4204 = vcmp.gt.f32.partialorder %v4200, 0.0
    %v4205 = vmul.f32 %v4197, 0.2
    %v4206 = vmul.f32 %v4198, 0.2
    %v4207 = vmul.f32 %v4199, 0.2
    %v4208 = vmul.f32 %v4200, 0.2
    %v4209 = vsel %vm4201, %v4197, %v4205
    %v4210 = vsel %vm4202, %v4198, %v4206
    %v4211 = vsel %vm4203, %v4199, %v4207
    %v4212 = vsel %vm4204, %v4200, %v4208
    %v4213 = vadd.f32 %v4209, %v53
    %v4214 = vadd.f32 %v4210, %v54
    %v4215 = vadd.f32 %v4211, %v55
    %v4216 = vadd.f32 %v4212, %v56
    %v4217 = vsel %vm291, %v4213, -inf
    %4218 = vmax.xlane.f32.xlu0 %v4217
    %v4219 = vpop.xlane.xlu0 %4218
    %v4220 = vsel %vm291, %v4214, -inf
    %4221 = vmax.xlane.f32.xlu0 %v4220
    %v4222 = vpop.xlane.xlu0 %4221
    %v4223 = vsel %vm291, %v4215, -inf
    %4224 = vmax.xlane.f32.xlu0 %v4223
    %v4225 = vpop.xlane.xlu0 %4224
    %v4226 = vsel %vm291, %v4216, -inf
    %4227 = vmax.xlane.f32.xlu0 %v4226
    %v4228 = vpop.xlane.xlu0 %4227
    %v4229 = vsub.f32 %v4213, %v4219
    %v4230 = vsub.f32 %v4214, %v4222
    %v4231 = vsub.f32 %v4215, %v4225
    %v4232 = vsub.f32 %v4216, %v4228
    %v4233 = vmul.f32 %v4229, 1.442695
    %v4234 = vpow.pop %v4233
    %v4235 = vmul.f32 %v4230, 1.442695
    %v4236 = vpow.pop %v4235
    %v4237 = vmul.f32 %v4231, 1.442695
    %v4238 = vpow.pop %v4237
    %v4239 = vmul.f32 %v4232, 1.442695
    %v4240 = vpow.pop %v4239
    %v4241 = vsel %vm291, %v4234, 0.0
    %4242 = vadd.xlane.f32.xlu0 %v4241
    %v4243 = vpop.xlane.xlu0 %4242
    %v4244 = vsel %vm291, %v4236, 0.0
    %4245 = vadd.xlane.f32.xlu0 %v4244
    %v4246 = vpop.xlane.xlu0 %4245
    %v4247 = vsel %vm291, %v4238, 0.0
    %4248 = vadd.xlane.f32.xlu0 %v4247
    %v4249 = vpop.xlane.xlu0 %4248
    %v4250 = vsel %vm291, %v4240, 0.0
    %4251 = vadd.xlane.f32.xlu0 %v4250
    %v4252 = vpop.xlane.xlu0 %4251
    %v4253 = vrcp.pop %v4243
    %v4254 = vrcp.pop %v4246
    %v4255 = vrcp.pop %v4249
    %v4256 = vrcp.pop %v4252
    %v4257 = vmul.f32 %v4234, %v4253
    %v4258 = vmul.f32 %v4236, %v4254
    %v4259 = vmul.f32 %v4238, %v4255
    %v4260 = vmul.f32 %v4240, %v4256
    %v4262 = vsel %vm291, %v4257, 0
    %v4265 = vsel %vm291, %v4258, 0
    %v4268 = vsel %vm291, %v4259, 0
    %v4271 = vsel %vm291, %v4260, 0
    %4273 = vmatprep.subr.mxu0 0.0
    %4274 = vmatpush1.msra.mxu0 %v4070
    %4275 = vmatprep.subr.mxu0 0.0
    %4276 = vmatpush1.msra.mxu0 %v4075
    %4277 = vmatprep.subr.mxu0 0.0
    %4278 = vmatpush1.msra.mxu0 %v4080
    %4279 = vmatprep.subr.mxu0 0.0
    %4280 = vmatpush1.msra.mxu0 %v4085
    %4281 = vmatprep.subr.mxu0 0.0
    %4282 = vmatpush1.msra.mxu0 0.0
    %4283 = vmatprep.subr.mxu0 0.0
    %4284 = vmatpush1.msra.mxu0 0.0
    %4285 = vmatprep.subr.mxu0 0.0
    %4286 = vmatpush1.msra.mxu0 0.0
    %4287 = vmatprep.subr.mxu0 0.0
    %4288 = vmatpush1.msra.mxu0 0.0
    %4289 = vmatprep.subr.mxu0 0.0
    %4290 = vmatpush1.msra.mxu0 0.0
    %4291 = vmatprep.subr.mxu0 0.0
    %4292 = vmatpush1.msra.mxu0 0.0
    %4293 = vmatprep.subr.mxu0 0.0
    %4294 = vmatpush1.msra.mxu0 0.0
    %4295 = vmatprep.subr.mxu0 0.0
    %4296 = vmatpush1.msra.mxu0 0.0
    %4297 = vmatprep.subr.mxu0 0.0
    %4298 = vmatpush1.msra.mxu0 0.0
    %4299 = vmatprep.subr.mxu0 0.0
    %4300 = vmatpush1.msra.mxu0 0.0
    %4301 = vmatprep.subr.mxu0 0.0
    %4302 = vmatpush1.msra.mxu0 0.0
    %4303 = vmatprep.subr.mxu0 0.0
    %4304 = vmatpush1.msra.mxu0 0.0
    %4305 = vmatprep.subr.mxu0 0.0
    %4306 = vmatpush1.msra.mxu0 0.0
    %4307 = vmatprep.subr.mxu0 0.0
    %4308 = vmatpush1.msra.mxu0 0.0
    %4309 = vmatprep.subr.mxu0 0.0
    %4310 = vmatpush1.msra.mxu0 0.0
    %4311 = vmatprep.subr.mxu0 0.0
    %4312 = vmatpush1.msra.mxu0 0.0
    %4313 = vmatprep.subr.mxu0 0.0
    %4314 = vmatpush1.msra.mxu0 0.0
    %4315 = vmatprep.subr.mxu0 0.0
    %4316 = vmatpush1.msra.mxu0 0.0
    %4317 = vmatprep.subr.mxu0 0.0
    %4318 = vmatpush1.msra.mxu0 0.0
    %4319 = vmatprep.subr.mxu0 0.0
    %4320 = vmatpush1.msra.mxu0 0.0
    %4321 = vmatprep.subr.mxu0 0.0
    %4322 = vmatpush1.msra.mxu0 0.0
    %4323 = vmatprep.subr.mxu0 0.0
    %4324 = vmatpush1.msra.mxu0 0.0
    %4325 = vmatprep.subr.mxu0 0.0
    %4326 = vmatpush1.msra.mxu0 0.0
    %4327 = vmatprep.subr.mxu0 0.0
    %4328 = vmatpush1.msra.mxu0 0.0
    %4329 = vmatprep.subr.mxu0 0.0
    %4330 = vmatpush1.msra.mxu0 0.0
    %4331 = vmatprep.subr.mxu0 0.0
    %4332 = vmatpush1.msra.mxu0 0.0
    %4333 = vmatprep.subr.mxu0 0.0
    %4334 = vmatpush1.msra.mxu0 0.0
    %4335 = vmatprep.subr.mxu0 0.0
    %4336 = vmatpush1.msra.mxu0 0.0
    %4337 = vmatprep.mubr.f32.mxu0 0.0
    %4338 = vmatmul.mubr.f32.gmra.mrb[0].mxu0 %v4262
    %v4339 = vpop.f32.mrb[0].mxu0
    %v4340 = vadd.f32 0.0, %v4339
    %v4341 = vpop.f32.mrb[0].mxu0
    %4342 = vmatprep.mubr.f32.mxu0 0.0
    %4343 = vmatmul.mubr.f32.gmra.mrb[0].mxu0 %v4265
    %v4344 = vpop.f32.mrb[0].mxu0
    %v4345 = vadd.f32 0.0, %v4344
    %v4346 = vpop.f32.mrb[0].mxu0
    %4347 = vmatprep.mubr.f32.mxu0 0.0
    %4348 = vmatmul.mubr.f32.gmra.mrb[0].mxu0 %v4268
    %v4349 = vpop.f32.mrb[0].mxu0
    %v4350 = vadd.f32 0.0, %v4349
    %v4351 = vpop.f32.mrb[0].mxu0
    %4352 = vmatprep.mubr.f32.mxu0 0.0
    %4353 = vmatmul.mubr.f32.gmra.mrb[0].mxu0 %v4271
    %v4354 = vpop.f32.mrb[0].mxu0
    %v4355 = vadd.f32 0.0, %v4354
    %v4356 = vpop.f32.mrb[0].mxu0
    %4357 = vdwg.mxu0
    %v4358 = vsel %vm64, %v4340, 0.0
    %v4359 = vsel %vm64, %v4345, 0.0
    %v4360 = vadd.f32 %v4358, %v4359
    %v4361 = vsel %vm64, %v4350, 0.0
    %v4362 = vadd.f32 %v4360, %v4361
    %v4363 = vsel %vm64, %v4355, 0.0
    %v4364 = vadd.f32 %v4362, %v4363
    %v4365 = vrot.slane %v4364, 4
    %v4366 = vadd.f32 %v4364, %v4365
    %v4367 = vrot.slane %v4366, 2
    %v4368 = vadd.f32 %v4366, %v4367
    %v4369 = vrot.slane %v4368, 1
    %v4370 = vadd.f32 %v4368, %v4369
    %v4371 = vmul.f32 %v4370, %v446
    %v4372 = vsub.f32 %v4340, %v4371
    %v4373 = vsub.f32 %v4345, %v4371
    %v4374 = vsub.f32 %v4350, %v4371
    %v4375 = vsub.f32 %v4355, %v4371
    %v4376 = vmul.f32 %v4372, %v4372
    %v4377 = vmul.f32 %v4373, %v4373
    %v4378 = vmul.f32 %v4374, %v4374
    %v4379 = vmul.f32 %v4375, %v4375
    %v4380 = vsel %vm64, %v4376, 0.0
    %v4381 = vsel %vm64, %v4377, 0.0
    %v4382 = vadd.f32 %v4380, %v4381
    %v4383 = vsel %vm64, %v4378, 0.0
    %v4384 = vadd.f32 %v4382, %v4383
    %v4385 = vsel %vm64, %v4379, 0.0
    %v4386 = vadd.f32 %v4384, %v4385
    %v4387 = vrot.slane %v4386, 4
    %v4388 = vadd.f32 %v4386, %v4387
    %v4389 = vrot.slane %v4388, 2
    %v4390 = vadd.f32 %v4388, %v4389
    %v4391 = vrot.slane %v4390, 1
    %v4392 = vadd.f32 %v4390, %v4391
    %v4393 = vmul.f32 %v4392, %v446
    %v4394 = vadd.f32 %v4393, 1e-05
    %v4395 = vrsqrt.pop %v4394
    %v4396 = vmul.f32 %v3990, %v4395
    %v4397 = vmul.f32 %v4371, %v4396
    %v4399 = vrot.slane %v4397, 7
    %v4401 = vsub.f32 %v3990, %v4399
    %v4402 = vlaneseq
    %v4403 = vshrl.u32 %v4402, 7
    %v4404 = vsub.s32 2, %v4403
    %v4405 = vrot.slane %v4396, %v4404
    %v4406 = vmul.f32 %v4340, %v4405
    %v4407 = vmul.f32 %v4345, %v4405
    %v4408 = vmul.f32 %v4350, %v4405
    %v4409 = vmul.f32 %v4355, %v4405
    %v4410 = vlaneseq
    %v4411 = vshrl.u32 %v4410, 7
    %v4412 = vsub.s32 3, %v4411
    %v4413 = vrot.slane %v4401, %v4412
    %v4414 = vadd.f32 %v4406, %v4413
    %v4415 = vadd.f32 %v4407, %v4413
    %v4416 = vadd.f32 %v4408, %v4413
    %v4417 = vadd.f32 %v4409, %v4413
    %v4418 = vmax.f32 %v4414, 0.0
    %v4419 = vmax.f32 %v4415, 0.0
    %v4420 = vmax.f32 %v4416, 0.0
    %v4421 = vmax.f32 %v4417, 0.0
    %s4422 = scalar_lea.vmem [#allocation2], 160
    %v4423 = vld [vmem:[%s4422] sm:$0xff]
    %v4424 = vld [vmem:[%s4422 + $0x8] sm:$0xff]
    %s4425 = scalar_lea.vmem %s3, 40
    %v4426 = vld [vmem:[%s4425] sm:$0xf]
    %v4428 = vsel %vm64, %v4418, 0
    %v4431 = vsel %vm64, %v4419, 0
    %v4434 = vsel %vm64, %v4420, 0
    %v4437 = vsel %vm64, %v4421, 0
    %4439 = vmatprep.subr.mxu0 0.0
    %4440 = vmatpush1.msra.mxu0 %v4423
    %4441 = vmatprep.subr.mxu0 0.0
    %4442 = vmatpush1.msra.mxu0 %v4424
    %4443 = vmatprep.subr.mxu0 0.0
    %4444 = vmatpush1.msra.mxu0 0.0
    %4445 = vmatprep.subr.mxu0 0.0
    %4446 = vmatpush1.msra.mxu0 0.0
    %4447 = vmatprep.subr.mxu0 0.0
    %4448 = vmatpush1.msra.mxu0 0.0
    %4449 = vmatprep.subr.mxu0 0.0
    %4450 = vmatpush1.msra.mxu0 0.0
    %4451 = vmatprep.subr.mxu0 0.0
    %4452 = vmatpush1.msra.mxu0 0.0
    %4453 = vmatprep.subr.mxu0 0.0
    %4454 = vmatpush1.msra.mxu0 0.0
    %4455 = vmatprep.subr.mxu0 0.0
    %4456 = vmatpush1.msra.mxu0 0.0
    %4457 = vmatprep.subr.mxu0 0.0
    %4458 = vmatpush1.msra.mxu0 0.0
    %4459 = vmatprep.subr.mxu0 0.0
    %4460 = vmatpush1.msra.mxu0 0.0
    %4461 = vmatprep.subr.mxu0 0.0
    %4462 = vmatpush1.msra.mxu0 0.0
    %4463 = vmatprep.subr.mxu0 0.0
    %4464 = vmatpush1.msra.mxu0 0.0
    %4465 = vmatprep.subr.mxu0 0.0
    %4466 = vmatpush1.msra.mxu0 0.0
    %4467 = vmatprep.subr.mxu0 0.0
    %4468 = vmatpush1.msra.mxu0 0.0
    %4469 = vmatprep.subr.mxu0 0.0
    %4470 = vmatpush1.msra.mxu0 0.0
    %4471 = vmatprep.subr.mxu0 0.0
    %4472 = vmatpush1.msra.mxu0 0.0
    %4473 = vmatprep.subr.mxu0 0.0
    %4474 = vmatpush1.msra.mxu0 0.0
    %4475 = vmatprep.subr.mxu0 0.0
    %4476 = vmatpush1.msra.mxu0 0.0
    %4477 = vmatprep.subr.mxu0 0.0
    %4478 = vmatpush1.msra.mxu0 0.0
    %4479 = vmatprep.subr.mxu0 0.0
    %4480 = vmatpush1.msra.mxu0 0.0
    %4481 = vmatprep.subr.mxu0 0.0
    %4482 = vmatpush1.msra.mxu0 0.0
    %4483 = vmatprep.subr.mxu0 0.0
    %4484 = vmatpush1.msra.mxu0 0.0
    %4485 = vmatprep.subr.mxu0 0.0
    %4486 = vmatpush1.msra.mxu0 0.0
    %4487 = vmatprep.subr.mxu0 0.0
    %4488 = vmatpush1.msra.mxu0 0.0
    %4489 = vmatprep.subr.mxu0 0.0
    %4490 = vmatpush1.msra.mxu0 0.0
    %4491 = vmatprep.subr.mxu0 0.0
    %4492 = vmatpush1.msra.mxu0 0.0
    %4493 = vmatprep.subr.mxu0 0.0
    %4494 = vmatpush1.msra.mxu0 0.0
    %4495 = vmatprep.subr.mxu0 0.0
    %4496 = vmatpush1.msra.mxu0 0.0
    %4497 = vmatprep.subr.mxu0 0.0
    %4498 = vmatpush1.msra.mxu0 0.0
    %4499 = vmatprep.subr.mxu0 0.0
    %4500 = vmatpush1.msra.mxu0 0.0
    %4501 = vmatprep.subr.mxu0 0.0
    %4502 = vmatpush1.msra.mxu0 0.0
    %4503 = vmatprep.mubr.f32.mxu0 0.0
    %4504 = vmatmul.mubr.f32.gmra.mrb[0].mxu0 %v4428
    %v4505 = vpop.f32.mrb[0].mxu0
    %v4506 = vadd.f32 0.0, %v4505
    %v4507 = vpop.f32.mrb[0].mxu0
    %4508 = vmatprep.mubr.f32.mxu0 0.0
    %4509 = vmatmul.mubr.f32.gmra.mrb[0].mxu0 %v4431
    %v4510 = vpop.f32.mrb[0].mxu0
    %v4511 = vadd.f32 0.0, %v4510
    %v4512 = vpop.f32.mrb[0].mxu0
    %4513 = vmatprep.mubr.f32.mxu0 0.0
    %4514 = vmatmul.mubr.f32.gmra.mrb[0].mxu0 %v4434
    %v4515 = vpop.f32.mrb[0].mxu0
    %v4516 = vadd.f32 0.0, %v4515
    %v4517 = vpop.f32.mrb[0].mxu0
    %4518 = vmatprep.mubr.f32.mxu0 0.0
    %4519 = vmatmul.mubr.f32.gmra.mrb[0].mxu0 %v4437
    %v4520 = vpop.f32.mrb[0].mxu0
    %v4521 = vadd.f32 0.0, %v4520
    %v4522 = vpop.f32.mrb[0].mxu0
    %4523 = vdwg.mxu0
    %v4524 = vlaneseq
    %v4525 = vshrl.u32 %v4524, 7
    %v4526 = vsub.s32 1, %v4525
    %v4527 = vrot.slane %v4426, %v4526
    %v4528 = vmul.f32 %v4506, %v4527
    %v4529 = vmul.f32 %v4511, %v4527
    %v4530 = vmul.f32 %v4516, %v4527
    %v4531 = vmul.f32 %v4521, %v4527
    %v4532 = vsel %vm64, %v4528, 0.0
    %4533 = vadd.xlane.f32.xlu0 %v4532
    %v4534 = vpop.xlane.xlu0 %4533
    %v4535 = vsel %vm64, %v4529, 0.0
    %4536 = vadd.xlane.f32.xlu0 %v4535
    %v4537 = vpop.xlane.xlu0 %4536
    %v4538 = vsel %vm64, %v4530, 0.0
    %4539 = vadd.xlane.f32.xlu0 %v4538
    %v4540 = vpop.xlane.xlu0 %4539
    %v4541 = vsel %vm64, %v4531, 0.0
    %4542 = vadd.xlane.f32.xlu0 %v4541
    %v4543 = vpop.xlane.xlu0 %4542
    %v4545 = vsel %vm64, %v4426, 0
    %v4548 = vsel %vm64, %v4506, 0
    %v4551 = vsel %vm64, %v4511, 0
    %v4554 = vsel %vm64, %v4516, 0
    %v4557 = vsel %vm64, %v4521, 0
    %4559 = vmatprep.subr.mxu0 0.0
    %4560 = vmatpush1.xpose.msra.mxu0 %v4548
    %4561 = vmatprep.subr.mxu0 0.0
    %4562 = vmatpush1.xpose.msra.mxu0 %v4551
    %4563 = vmatprep.subr.mxu0 0.0
    %4564 = vmatpush1.xpose.msra.mxu0 %v4554
    %4565 = vmatprep.subr.mxu0 0.0
    %4566 = vmatpush1.xpose.msra.mxu0 %v4557
    %4567 = vmatprep.subr.mxu0 0.0
    %4568 = vmatpush1.xpose.msra.mxu0 0.0
    %4569 = vmatprep.subr.mxu0 0.0
    %4570 = vmatpush1.xpose.msra.mxu0 0.0
    %4571 = vmatprep.subr.mxu0 0.0
    %4572 = vmatpush1.xpose.msra.mxu0 0.0
    %4573 = vmatprep.subr.mxu0 0.0
    %4574 = vmatpush1.xpose.msra.mxu0 0.0
    %4575 = vmatprep.subr.mxu0 0.0
    %4576 = vmatpush1.xpose.msra.mxu0 0.0
    %4577 = vmatprep.subr.mxu0 0.0
    %4578 = vmatpush1.xpose.msra.mxu0 0.0
    %4579 = vmatprep.subr.mxu0 0.0
    %4580 = vmatpush1.xpose.msra.mxu0 0.0
    %4581 = vmatprep.subr.mxu0 0.0
    %4582 = vmatpush1.xpose.msra.mxu0 0.0
    %4583 = vmatprep.subr.mxu0 0.0
    %4584 = vmatpush1.xpose.msra.mxu0 0.0
    %4585 = vmatprep.subr.mxu0 0.0
    %4586 = vmatpush1.xpose.msra.mxu0 0.0
    %4587 = vmatprep.subr.mxu0 0.0
    %4588 = vmatpush1.xpose.msra.mxu0 0.0
    %4589 = vmatprep.subr.mxu0 0.0
    %4590 = vmatpush1.xpose.msra.mxu0 0.0
    %4591 = vmatprep.subr.mxu0 0.0
    %4592 = vmatpush1.xpose.msra.mxu0 0.0
    %4593 = vmatprep.subr.mxu0 0.0
    %4594 = vmatpush1.xpose.msra.mxu0 0.0
    %4595 = vmatprep.subr.mxu0 0.0
    %4596 = vmatpush1.xpose.msra.mxu0 0.0
    %4597 = vmatprep.subr.mxu0 0.0
    %4598 = vmatpush1.xpose.msra.mxu0 0.0
    %4599 = vmatprep.subr.mxu0 0.0
    %4600 = vmatpush1.xpose.msra.mxu0 0.0
    %4601 = vmatprep.subr.mxu0 0.0
    %4602 = vmatpush1.xpose.msra.mxu0 0.0
    %4603 = vmatprep.subr.mxu0 0.0
    %4604 = vmatpush1.xpose.msra.mxu0 0.0
    %4605 = vmatprep.subr.mxu0 0.0
    %4606 = vmatpush1.xpose.msra.mxu0 0.0
    %4607 = vmatprep.subr.mxu0 0.0
    %4608 = vmatpush1.xpose.msra.mxu0 0.0
    %4609 = vmatprep.subr.mxu0 0.0
    %4610 = vmatpush1.xpose.msra.mxu0 0.0
    %4611 = vmatprep.subr.mxu0 0.0
    %4612 = vmatpush1.xpose.msra.mxu0 0.0
    %4613 = vmatprep.subr.mxu0 0.0
    %4614 = vmatpush1.xpose.msra.mxu0 0.0
    %4615 = vmatprep.subr.mxu0 0.0
    %4616 = vmatpush1.xpose.msra.mxu0 0.0
    %4617 = vmatprep.subr.mxu0 0.0
    %4618 = vmatpush1.xpose.msra.mxu0 0.0
    %4619 = vmatprep.subr.mxu0 0.0
    %4620 = vmatpush1.xpose.msra.mxu0 0.0
    %4621 = vmatprep.subr.mxu0 0.0
    %4622 = vmatpush1.xpose.msra.mxu0 0.0
    %4623 = vmatprep.mubr.f32.mxu0 0.0
    %4624 = vmatmul.mubr.f32.gmra.mrb[0].mxu0 %v4545
    %v4625 = vpop.f32.mrb[0].mxu0
    %v4626 = vadd.f32 0.0, %v4625
    %v4627 = vpop.f32.mrb[0].mxu0
    %4628 = vdwg.mxu0
    %v4629 = vlaneseq
    %v4630 = vshrl.u32 %v4629, 7
    %v4631 = vsub.s32 0, %v4630
    %v4632 = vrot.slane %v4626, %v4631
    %v4633 = vadd.f32 %v4534, %v4632
    %v4634 = vadd.f32 %v4537, %v4632
    %v4635 = vadd.f32 %v4540, %v4632
    %v4636 = vadd.f32 %v4543, %v4632
    %vm4637 = vcmp.gt.f32.partialorder %v4633, 0.0
    %vm4638 = vcmp.gt.f32.partialorder %v4634, 0.0
    %vm4639 = vcmp.gt.f32.partialorder %v4635, 0.0
    %vm4640 = vcmp.gt.f32.partialorder %v4636, 0.0
    %v4641 = vmul.f32 %v4633, 0.2
    %v4642 = vmul.f32 %v4634, 0.2
    %v4643 = vmul.f32 %v4635, 0.2
    %v4644 = vmul.f32 %v4636, 0.2
    %v4645 = vsel %vm4637, %v4633, %v4641
    %v4646 = vsel %vm4638, %v4634, %v4642
    %v4647 = vsel %vm4639, %v4635, %v4643
    %v4648 = vsel %vm4640, %v4636, %v4644
    %v4649 = vadd.f32 %v4645, %v53
    %v4650 = vadd.f32 %v4646, %v54
    %v4651 = vadd.f32 %v4647, %v55
    %v4652 = vadd.f32 %v4648, %v56
    %v4653 = vsel %vm291, %v4649, -inf
    %4654 = vmax.xlane.f32.xlu0 %v4653
    %v4655 = vpop.xlane.xlu0 %4654
    %v4656 = vsel %vm291, %v4650, -inf
    %4657 = vmax.xlane.f32.xlu0 %v4656
    %v4658 = vpop.xlane.xlu0 %4657
    %v4659 = vsel %vm291, %v4651, -inf
    %4660 = vmax.xlane.f32.xlu0 %v4659
    %v4661 = vpop.xlane.xlu0 %4660
    %v4662 = vsel %vm291, %v4652, -inf
    %4663 = vmax.xlane.f32.xlu0 %v4662
    %v4664 = vpop.xlane.xlu0 %4663
    %v4665 = vsub.f32 %v4649, %v4655
    %v4666 = vsub.f32 %v4650, %v4658
    %v4667 = vsub.f32 %v4651, %v4661
    %v4668 = vsub.f32 %v4652, %v4664
    %v4669 = vmul.f32 %v4665, 1.442695
    %v4670 = vpow.pop %v4669
    %v4671 = vmul.f32 %v4666, 1.442695
    %v4672 = vpow.pop %v4671
    %v4673 = vmul.f32 %v4667, 1.442695
    %v4674 = vpow.pop %v4673
    %v4675 = vmul.f32 %v4668, 1.442695
    %v4676 = vpow.pop %v4675
    %v4677 = vsel %vm291, %v4670, 0.0
    %4678 = vadd.xlane.f32.xlu0 %v4677
    %v4679 = vpop.xlane.xlu0 %4678
    %v4680 = vsel %vm291, %v4672, 0.0
    %4681 = vadd.xlane.f32.xlu0 %v4680
    %v4682 = vpop.xlane.xlu0 %4681
    %v4683 = vsel %vm291, %v4674, 0.0
    %4684 = vadd.xlane.f32.xlu0 %v4683
    %v4685 = vpop.xlane.xlu0 %4684
    %v4686 = vsel %vm291, %v4676, 0.0
    %4687 = vadd.xlane.f32.xlu0 %v4686
    %v4688 = vpop.xlane.xlu0 %4687
    %v4689 = vrcp.pop %v4679
    %v4690 = vrcp.pop %v4682
    %v4691 = vrcp.pop %v4685
    %v4692 = vrcp.pop %v4688
    %v4693 = vmul.f32 %v4670, %v4689
    %v4694 = vmul.f32 %v4672, %v4690
    %v4695 = vmul.f32 %v4674, %v4691
    %v4696 = vmul.f32 %v4676, %v4692
    %v4698 = vsel %vm291, %v4693, 0
    %v4701 = vsel %vm291, %v4694, 0
    %v4704 = vsel %vm291, %v4695, 0
    %v4707 = vsel %vm291, %v4696, 0
    %4709 = vmatprep.subr.mxu0 0.0
    %4710 = vmatpush1.msra.mxu0 %v4506
    %4711 = vmatprep.subr.mxu0 0.0
    %4712 = vmatpush1.msra.mxu0 %v4511
    %4713 = vmatprep.subr.mxu0 0.0
    %4714 = vmatpush1.msra.mxu0 %v4516
    %4715 = vmatprep.subr.mxu0 0.0
    %4716 = vmatpush1.msra.mxu0 %v4521
    %4717 = vmatprep.subr.mxu0 0.0
    %4718 = vmatpush1.msra.mxu0 0.0
    %4719 = vmatprep.subr.mxu0 0.0
    %4720 = vmatpush1.msra.mxu0 0.0
    %4721 = vmatprep.subr.mxu0 0.0
    %4722 = vmatpush1.msra.mxu0 0.0
    %4723 = vmatprep.subr.mxu0 0.0
    %4724 = vmatpush1.msra.mxu0 0.0
    %4725 = vmatprep.subr.mxu0 0.0
    %4726 = vmatpush1.msra.mxu0 0.0
    %4727 = vmatprep.subr.mxu0 0.0
    %4728 = vmatpush1.msra.mxu0 0.0
    %4729 = vmatprep.subr.mxu0 0.0
    %4730 = vmatpush1.msra.mxu0 0.0
    %4731 = vmatprep.subr.mxu0 0.0
    %4732 = vmatpush1.msra.mxu0 0.0
    %4733 = vmatprep.subr.mxu0 0.0
    %4734 = vmatpush1.msra.mxu0 0.0
    %4735 = vmatprep.subr.mxu0 0.0
    %4736 = vmatpush1.msra.mxu0 0.0
    %4737 = vmatprep.subr.mxu0 0.0
    %4738 = vmatpush1.msra.mxu0 0.0
    %4739 = vmatprep.subr.mxu0 0.0
    %4740 = vmatpush1.msra.mxu0 0.0
    %4741 = vmatprep.subr.mxu0 0.0
    %4742 = vmatpush1.msra.mxu0 0.0
    %4743 = vmatprep.subr.mxu0 0.0
    %4744 = vmatpush1.msra.mxu0 0.0
    %4745 = vmatprep.subr.mxu0 0.0
    %4746 = vmatpush1.msra.mxu0 0.0
    %4747 = vmatprep.subr.mxu0 0.0
    %4748 = vmatpush1.msra.mxu0 0.0
    %4749 = vmatprep.subr.mxu0 0.0
    %4750 = vmatpush1.msra.mxu0 0.0
    %4751 = vmatprep.subr.mxu0 0.0
    %4752 = vmatpush1.msra.mxu0 0.0
    %4753 = vmatprep.subr.mxu0 0.0
    %4754 = vmatpush1.msra.mxu0 0.0
    %4755 = vmatprep.subr.mxu0 0.0
    %4756 = vmatpush1.msra.mxu0 0.0
    %4757 = vmatprep.subr.mxu0 0.0
    %4758 = vmatpush1.msra.mxu0 0.0
    %4759 = vmatprep.subr.mxu0 0.0
    %4760 = vmatpush1.msra.mxu0 0.0
    %4761 = vmatprep.subr.mxu0 0.0
    %4762 = vmatpush1.msra.mxu0 0.0
    %4763 = vmatprep.subr.mxu0 0.0
    %4764 = vmatpush1.msra.mxu0 0.0
    %4765 = vmatprep.subr.mxu0 0.0
    %4766 = vmatpush1.msra.mxu0 0.0
    %4767 = vmatprep.subr.mxu0 0.0
    %4768 = vmatpush1.msra.mxu0 0.0
    %4769 = vmatprep.subr.mxu0 0.0
    %4770 = vmatpush1.msra.mxu0 0.0
    %4771 = vmatprep.subr.mxu0 0.0
    %4772 = vmatpush1.msra.mxu0 0.0
    %4773 = vmatprep.mubr.f32.mxu0 0.0
    %4774 = vmatmul.mubr.f32.gmra.mrb[0].mxu0 %v4698
    %v4775 = vpop.f32.mrb[0].mxu0
    %v4776 = vadd.f32 0.0, %v4775
    %v4777 = vpop.f32.mrb[0].mxu0
    %4778 = vmatprep.mubr.f32.mxu0 0.0
    %4779 = vmatmul.mubr.f32.gmra.mrb[0].mxu0 %v4701
    %v4780 = vpop.f32.mrb[0].mxu0
    %v4781 = vadd.f32 0.0, %v4780
    %v4782 = vpop.f32.mrb[0].mxu0
    %4783 = vmatprep.mubr.f32.mxu0 0.0
    %4784 = vmatmul.mubr.f32.gmra.mrb[0].mxu0 %v4704
    %v4785 = vpop.f32.mrb[0].mxu0
    %v4786 = vadd.f32 0.0, %v4785
    %v4787 = vpop.f32.mrb[0].mxu0
    %4788 = vmatprep.mubr.f32.mxu0 0.0
    %4789 = vmatmul.mubr.f32.gmra.mrb[0].mxu0 %v4707
    %v4790 = vpop.f32.mrb[0].mxu0
    %v4791 = vadd.f32 0.0, %v4790
    %v4792 = vpop.f32.mrb[0].mxu0
    %4793 = vdwg.mxu0
    %v4794 = vsel %vm64, %v4776, 0.0
    %v4795 = vsel %vm64, %v4781, 0.0
    %v4796 = vadd.f32 %v4794, %v4795
    %v4797 = vsel %vm64, %v4786, 0.0
    %v4798 = vadd.f32 %v4796, %v4797
    %v4799 = vsel %vm64, %v4791, 0.0
    %v4800 = vadd.f32 %v4798, %v4799
    %v4801 = vrot.slane %v4800, 4
    %v4802 = vadd.f32 %v4800, %v4801
    %v4803 = vrot.slane %v4802, 2
    %v4804 = vadd.f32 %v4802, %v4803
    %v4805 = vrot.slane %v4804, 1
    %v4806 = vadd.f32 %v4804, %v4805
    %v4807 = vmul.f32 %v4806, %v446
    %v4808 = vsub.f32 %v4776, %v4807
    %v4809 = vsub.f32 %v4781, %v4807
    %v4810 = vsub.f32 %v4786, %v4807
    %v4811 = vsub.f32 %v4791, %v4807
    %v4812 = vmul.f32 %v4808, %v4808
    %v4813 = vmul.f32 %v4809, %v4809
    %v4814 = vmul.f32 %v4810, %v4810
    %v4815 = vmul.f32 %v4811, %v4811
    %v4816 = vsel %vm64, %v4812, 0.0
    %v4817 = vsel %vm64, %v4813, 0.0
    %v4818 = vadd.f32 %v4816, %v4817
    %v4819 = vsel %vm64, %v4814, 0.0
    %v4820 = vadd.f32 %v4818, %v4819
    %v4821 = vsel %vm64, %v4815, 0.0
    %v4822 = vadd.f32 %v4820, %v4821
    %v4823 = vrot.slane %v4822, 4
    %v4824 = vadd.f32 %v4822, %v4823
    %v4825 = vrot.slane %v4824, 2
    %v4826 = vadd.f32 %v4824, %v4825
    %v4827 = vrot.slane %v4826, 1
    %v4828 = vadd.f32 %v4826, %v4827
    %v4829 = vmul.f32 %v4828, %v446
    %v4830 = vadd.f32 %v4829, 1e-05
    %v4831 = vrsqrt.pop %v4830
    %v4832 = vmul.f32 %v4426, %v4831
    %v4833 = vmul.f32 %v4807, %v4832
    %v4835 = vrot.slane %v4833, 7
    %v4837 = vsub.f32 %v4426, %v4835
    %v4838 = vlaneseq
    %v4839 = vshrl.u32 %v4838, 7
    %v4840 = vsub.s32 2, %v4839
    %v4841 = vrot.slane %v4832, %v4840
    %v4842 = vmul.f32 %v4776, %v4841
    %v4843 = vmul.f32 %v4781, %v4841
    %v4844 = vmul.f32 %v4786, %v4841
    %v4845 = vmul.f32 %v4791, %v4841
    %v4846 = vlaneseq
    %v4847 = vshrl.u32 %v4846, 7
    %v4848 = vsub.s32 3, %v4847
    %v4849 = vrot.slane %v4837, %v4848
    %v4850 = vadd.f32 %v4842, %v4849
    %v4851 = vadd.f32 %v4843, %v4849
    %v4852 = vadd.f32 %v4844, %v4849
    %v4853 = vadd.f32 %v4845, %v4849
    %v4854 = vmax.f32 %v4850, 0.0
    %v4855 = vmax.f32 %v4851, 0.0
    %v4856 = vmax.f32 %v4852, 0.0
    %v4857 = vmax.f32 %v4853, 0.0
    %s4858 = scalar_lea.vmem [#allocation2], 176
    %v4859 = vld [vmem:[%s4858] sm:$0xff]
    %v4860 = vld [vmem:[%s4858 + $0x8] sm:$0xff]
    %s4861 = scalar_lea.vmem %s3, 44
    %v4862 = vld [vmem:[%s4861] sm:$0xf]
    %v4864 = vsel %vm64, %v4854, 0
    %v4867 = vsel %vm64, %v4855, 0
    %v4870 = vsel %vm64, %v4856, 0
    %v4873 = vsel %vm64, %v4857, 0
    %4875 = vmatprep.subr.mxu0 0.0
    %4876 = vmatpush1.msra.mxu0 %v4859
    %4877 = vmatprep.subr.mxu0 0.0
    %4878 = vmatpush1.msra.mxu0 %v4860
    %4879 = vmatprep.subr.mxu0 0.0
    %4880 = vmatpush1.msra.mxu0 0.0
    %4881 = vmatprep.subr.mxu0 0.0
    %4882 = vmatpush1.msra.mxu0 0.0
    %4883 = vmatprep.subr.mxu0 0.0
    %4884 = vmatpush1.msra.mxu0 0.0
    %4885 = vmatprep.subr.mxu0 0.0
    %4886 = vmatpush1.msra.mxu0 0.0
    %4887 = vmatprep.subr.mxu0 0.0
    %4888 = vmatpush1.msra.mxu0 0.0
    %4889 = vmatprep.subr.mxu0 0.0
    %4890 = vmatpush1.msra.mxu0 0.0
    %4891 = vmatprep.subr.mxu0 0.0
    %4892 = vmatpush1.msra.mxu0 0.0
    %4893 = vmatprep.subr.mxu0 0.0
    %4894 = vmatpush1.msra.mxu0 0.0
    %4895 = vmatprep.subr.mxu0 0.0
    %4896 = vmatpush1.msra.mxu0 0.0
    %4897 = vmatprep.subr.mxu0 0.0
    %4898 = vmatpush1.msra.mxu0 0.0
    %4899 = vmatprep.subr.mxu0 0.0
    %4900 = vmatpush1.msra.mxu0 0.0
    %4901 = vmatprep.subr.mxu0 0.0
    %4902 = vmatpush1.msra.mxu0 0.0
    %4903 = vmatprep.subr.mxu0 0.0
    %4904 = vmatpush1.msra.mxu0 0.0
    %4905 = vmatprep.subr.mxu0 0.0
    %4906 = vmatpush1.msra.mxu0 0.0
    %4907 = vmatprep.subr.mxu0 0.0
    %4908 = vmatpush1.msra.mxu0 0.0
    %4909 = vmatprep.subr.mxu0 0.0
    %4910 = vmatpush1.msra.mxu0 0.0
    %4911 = vmatprep.subr.mxu0 0.0
    %4912 = vmatpush1.msra.mxu0 0.0
    %4913 = vmatprep.subr.mxu0 0.0
    %4914 = vmatpush1.msra.mxu0 0.0
    %4915 = vmatprep.subr.mxu0 0.0
    %4916 = vmatpush1.msra.mxu0 0.0
    %4917 = vmatprep.subr.mxu0 0.0
    %4918 = vmatpush1.msra.mxu0 0.0
    %4919 = vmatprep.subr.mxu0 0.0
    %4920 = vmatpush1.msra.mxu0 0.0
    %4921 = vmatprep.subr.mxu0 0.0
    %4922 = vmatpush1.msra.mxu0 0.0
    %4923 = vmatprep.subr.mxu0 0.0
    %4924 = vmatpush1.msra.mxu0 0.0
    %4925 = vmatprep.subr.mxu0 0.0
    %4926 = vmatpush1.msra.mxu0 0.0
    %4927 = vmatprep.subr.mxu0 0.0
    %4928 = vmatpush1.msra.mxu0 0.0
    %4929 = vmatprep.subr.mxu0 0.0
    %4930 = vmatpush1.msra.mxu0 0.0
    %4931 = vmatprep.subr.mxu0 0.0
    %4932 = vmatpush1.msra.mxu0 0.0
    %4933 = vmatprep.subr.mxu0 0.0
    %4934 = vmatpush1.msra.mxu0 0.0
    %4935 = vmatprep.subr.mxu0 0.0
    %4936 = vmatpush1.msra.mxu0 0.0
    %4937 = vmatprep.subr.mxu0 0.0
    %4938 = vmatpush1.msra.mxu0 0.0
    %4939 = vmatprep.mubr.f32.mxu0 0.0
    %4940 = vmatmul.mubr.f32.gmra.mrb[0].mxu0 %v4864
    %v4941 = vpop.f32.mrb[0].mxu0
    %v4942 = vadd.f32 0.0, %v4941
    %v4943 = vpop.f32.mrb[0].mxu0
    %4944 = vmatprep.mubr.f32.mxu0 0.0
    %4945 = vmatmul.mubr.f32.gmra.mrb[0].mxu0 %v4867
    %v4946 = vpop.f32.mrb[0].mxu0
    %v4947 = vadd.f32 0.0, %v4946
    %v4948 = vpop.f32.mrb[0].mxu0
    %4949 = vmatprep.mubr.f32.mxu0 0.0
    %4950 = vmatmul.mubr.f32.gmra.mrb[0].mxu0 %v4870
    %v4951 = vpop.f32.mrb[0].mxu0
    %v4952 = vadd.f32 0.0, %v4951
    %v4953 = vpop.f32.mrb[0].mxu0
    %4954 = vmatprep.mubr.f32.mxu0 0.0
    %4955 = vmatmul.mubr.f32.gmra.mrb[0].mxu0 %v4873
    %v4956 = vpop.f32.mrb[0].mxu0
    %v4957 = vadd.f32 0.0, %v4956
    %v4958 = vpop.f32.mrb[0].mxu0
    %4959 = vdwg.mxu0
    %v4960 = vlaneseq
    %v4961 = vshrl.u32 %v4960, 7
    %v4962 = vsub.s32 1, %v4961
    %v4963 = vrot.slane %v4862, %v4962
    %v4964 = vmul.f32 %v4942, %v4963
    %v4965 = vmul.f32 %v4947, %v4963
    %v4966 = vmul.f32 %v4952, %v4963
    %v4967 = vmul.f32 %v4957, %v4963
    %v4968 = vsel %vm64, %v4964, 0.0
    %4969 = vadd.xlane.f32.xlu0 %v4968
    %v4970 = vpop.xlane.xlu0 %4969
    %v4971 = vsel %vm64, %v4965, 0.0
    %4972 = vadd.xlane.f32.xlu0 %v4971
    %v4973 = vpop.xlane.xlu0 %4972
    %v4974 = vsel %vm64, %v4966, 0.0
    %4975 = vadd.xlane.f32.xlu0 %v4974
    %v4976 = vpop.xlane.xlu0 %4975
    %v4977 = vsel %vm64, %v4967, 0.0
    %4978 = vadd.xlane.f32.xlu0 %v4977
    %v4979 = vpop.xlane.xlu0 %4978
    %v4981 = vsel %vm64, %v4862, 0
    %v4984 = vsel %vm64, %v4942, 0
    %v4987 = vsel %vm64, %v4947, 0
    %v4990 = vsel %vm64, %v4952, 0
    %v4993 = vsel %vm64, %v4957, 0
    %4995 = vmatprep.subr.mxu0 0.0
    %4996 = vmatpush1.xpose.msra.mxu0 %v4984
    %4997 = vmatprep.subr.mxu0 0.0
    %4998 = vmatpush1.xpose.msra.mxu0 %v4987
    %4999 = vmatprep.subr.mxu0 0.0
    %5000 = vmatpush1.xpose.msra.mxu0 %v4990
    %5001 = vmatprep.subr.mxu0 0.0
    %5002 = vmatpush1.xpose.msra.mxu0 %v4993
    %5003 = vmatprep.subr.mxu0 0.0
    %5004 = vmatpush1.xpose.msra.mxu0 0.0
    %5005 = vmatprep.subr.mxu0 0.0
    %5006 = vmatpush1.xpose.msra.mxu0 0.0
    %5007 = vmatprep.subr.mxu0 0.0
    %5008 = vmatpush1.xpose.msra.mxu0 0.0
    %5009 = vmatprep.subr.mxu0 0.0
    %5010 = vmatpush1.xpose.msra.mxu0 0.0
    %5011 = vmatprep.subr.mxu0 0.0
    %5012 = vmatpush1.xpose.msra.mxu0 0.0
    %5013 = vmatprep.subr.mxu0 0.0
    %5014 = vmatpush1.xpose.msra.mxu0 0.0
    %5015 = vmatprep.subr.mxu0 0.0
    %5016 = vmatpush1.xpose.msra.mxu0 0.0
    %5017 = vmatprep.subr.mxu0 0.0
    %5018 = vmatpush1.xpose.msra.mxu0 0.0
    %5019 = vmatprep.subr.mxu0 0.0
    %5020 = vmatpush1.xpose.msra.mxu0 0.0
    %5021 = vmatprep.subr.mxu0 0.0
    %5022 = vmatpush1.xpose.msra.mxu0 0.0
    %5023 = vmatprep.subr.mxu0 0.0
    %5024 = vmatpush1.xpose.msra.mxu0 0.0
    %5025 = vmatprep.subr.mxu0 0.0
    %5026 = vmatpush1.xpose.msra.mxu0 0.0
    %5027 = vmatprep.subr.mxu0 0.0
    %5028 = vmatpush1.xpose.msra.mxu0 0.0
    %5029 = vmatprep.subr.mxu0 0.0
    %5030 = vmatpush1.xpose.msra.mxu0 0.0
    %5031 = vmatprep.subr.mxu0 0.0
    %5032 = vmatpush1.xpose.msra.mxu0 0.0
    %5033 = vmatprep.subr.mxu0 0.0
    %5034 = vmatpush1.xpose.msra.mxu0 0.0
    %5035 = vmatprep.subr.mxu0 0.0
    %5036 = vmatpush1.xpose.msra.mxu0 0.0
    %5037 = vmatprep.subr.mxu0 0.0
    %5038 = vmatpush1.xpose.msra.mxu0 0.0
    %5039 = vmatprep.subr.mxu0 0.0
    %5040 = vmatpush1.xpose.msra.mxu0 0.0
    %5041 = vmatprep.subr.mxu0 0.0
    %5042 = vmatpush1.xpose.msra.mxu0 0.0
    %5043 = vmatprep.subr.mxu0 0.0
    %5044 = vmatpush1.xpose.msra.mxu0 0.0
    %5045 = vmatprep.subr.mxu0 0.0
    %5046 = vmatpush1.xpose.msra.mxu0 0.0
    %5047 = vmatprep.subr.mxu0 0.0
    %5048 = vmatpush1.xpose.msra.mxu0 0.0
    %5049 = vmatprep.subr.mxu0 0.0
    %5050 = vmatpush1.xpose.msra.mxu0 0.0
    %5051 = vmatprep.subr.mxu0 0.0
    %5052 = vmatpush1.xpose.msra.mxu0 0.0
    %5053 = vmatprep.subr.mxu0 0.0
    %5054 = vmatpush1.xpose.msra.mxu0 0.0
    %5055 = vmatprep.subr.mxu0 0.0
    %5056 = vmatpush1.xpose.msra.mxu0 0.0
    %5057 = vmatprep.subr.mxu0 0.0
    %5058 = vmatpush1.xpose.msra.mxu0 0.0
    %5059 = vmatprep.mubr.f32.mxu0 0.0
    %5060 = vmatmul.mubr.f32.gmra.mrb[0].mxu0 %v4981
    %v5061 = vpop.f32.mrb[0].mxu0
    %v5062 = vadd.f32 0.0, %v5061
    %v5063 = vpop.f32.mrb[0].mxu0
    %5064 = vdwg.mxu0
    %v5065 = vlaneseq
    %v5066 = vshrl.u32 %v5065, 7
    %v5067 = vsub.s32 0, %v5066
    %v5068 = vrot.slane %v5062, %v5067
    %v5069 = vadd.f32 %v4970, %v5068
    %v5070 = vadd.f32 %v4973, %v5068
    %v5071 = vadd.f32 %v4976, %v5068
    %v5072 = vadd.f32 %v4979, %v5068
    %vm5073 = vcmp.gt.f32.partialorder %v5069, 0.0
    %vm5074 = vcmp.gt.f32.partialorder %v5070, 0.0
    %vm5075 = vcmp.gt.f32.partialorder %v5071, 0.0
    %vm5076 = vcmp.gt.f32.partialorder %v5072, 0.0
    %v5077 = vmul.f32 %v5069, 0.2
    %v5078 = vmul.f32 %v5070, 0.2
    %v5079 = vmul.f32 %v5071, 0.2
    %v5080 = vmul.f32 %v5072, 0.2
    %v5081 = vsel %vm5073, %v5069, %v5077
    %v5082 = vsel %vm5074, %v5070, %v5078
    %v5083 = vsel %vm5075, %v5071, %v5079
    %v5084 = vsel %vm5076, %v5072, %v5080
    %v5085 = vadd.f32 %v5081, %v53
    %v5086 = vadd.f32 %v5082, %v54
    %v5087 = vadd.f32 %v5083, %v55
    %v5088 = vadd.f32 %v5084, %v56
    %v5089 = vsel %vm291, %v5085, -inf
    %5090 = vmax.xlane.f32.xlu0 %v5089
    %v5091 = vpop.xlane.xlu0 %5090
    %v5092 = vsel %vm291, %v5086, -inf
    %5093 = vmax.xlane.f32.xlu0 %v5092
    %v5094 = vpop.xlane.xlu0 %5093
    %v5095 = vsel %vm291, %v5087, -inf
    %5096 = vmax.xlane.f32.xlu0 %v5095
    %v5097 = vpop.xlane.xlu0 %5096
    %v5098 = vsel %vm291, %v5088, -inf
    %5099 = vmax.xlane.f32.xlu0 %v5098
    %v5100 = vpop.xlane.xlu0 %5099
    %v5101 = vsub.f32 %v5085, %v5091
    %v5102 = vsub.f32 %v5086, %v5094
    %v5103 = vsub.f32 %v5087, %v5097
    %v5104 = vsub.f32 %v5088, %v5100
    %v5105 = vmul.f32 %v5101, 1.442695
    %v5106 = vpow.pop %v5105
    %v5107 = vmul.f32 %v5102, 1.442695
    %v5108 = vpow.pop %v5107
    %v5109 = vmul.f32 %v5103, 1.442695
    %v5110 = vpow.pop %v5109
    %v5111 = vmul.f32 %v5104, 1.442695
    %v5112 = vpow.pop %v5111
    %v5113 = vsel %vm291, %v5106, 0.0
    %5114 = vadd.xlane.f32.xlu0 %v5113
    %v5115 = vpop.xlane.xlu0 %5114
    %v5116 = vsel %vm291, %v5108, 0.0
    %5117 = vadd.xlane.f32.xlu0 %v5116
    %v5118 = vpop.xlane.xlu0 %5117
    %v5119 = vsel %vm291, %v5110, 0.0
    %5120 = vadd.xlane.f32.xlu0 %v5119
    %v5121 = vpop.xlane.xlu0 %5120
    %v5122 = vsel %vm291, %v5112, 0.0
    %5123 = vadd.xlane.f32.xlu0 %v5122
    %v5124 = vpop.xlane.xlu0 %5123
    %v5125 = vrcp.pop %v5115
    %v5126 = vrcp.pop %v5118
    %v5127 = vrcp.pop %v5121
    %v5128 = vrcp.pop %v5124
    %v5129 = vmul.f32 %v5106, %v5125
    %v5130 = vmul.f32 %v5108, %v5126
    %v5131 = vmul.f32 %v5110, %v5127
    %v5132 = vmul.f32 %v5112, %v5128
    %v5134 = vsel %vm291, %v5129, 0
    %v5137 = vsel %vm291, %v5130, 0
    %v5140 = vsel %vm291, %v5131, 0
    %v5143 = vsel %vm291, %v5132, 0
    %5145 = vmatprep.subr.mxu0 0.0
    %5146 = vmatpush1.msra.mxu0 %v4942
    %5147 = vmatprep.subr.mxu0 0.0
    %5148 = vmatpush1.msra.mxu0 %v4947
    %5149 = vmatprep.subr.mxu0 0.0
    %5150 = vmatpush1.msra.mxu0 %v4952
    %5151 = vmatprep.subr.mxu0 0.0
    %5152 = vmatpush1.msra.mxu0 %v4957
    %5153 = vmatprep.subr.mxu0 0.0
    %5154 = vmatpush1.msra.mxu0 0.0
    %5155 = vmatprep.subr.mxu0 0.0
    %5156 = vmatpush1.msra.mxu0 0.0
    %5157 = vmatprep.subr.mxu0 0.0
    %5158 = vmatpush1.msra.mxu0 0.0
    %5159 = vmatprep.subr.mxu0 0.0
    %5160 = vmatpush1.msra.mxu0 0.0
    %5161 = vmatprep.subr.mxu0 0.0
    %5162 = vmatpush1.msra.mxu0 0.0
    %5163 = vmatprep.subr.mxu0 0.0
    %5164 = vmatpush1.msra.mxu0 0.0
    %5165 = vmatprep.subr.mxu0 0.0
    %5166 = vmatpush1.msra.mxu0 0.0
    %5167 = vmatprep.subr.mxu0 0.0
    %5168 = vmatpush1.msra.mxu0 0.0
    %5169 = vmatprep.subr.mxu0 0.0
    %5170 = vmatpush1.msra.mxu0 0.0
    %5171 = vmatprep.subr.mxu0 0.0
    %5172 = vmatpush1.msra.mxu0 0.0
    %5173 = vmatprep.subr.mxu0 0.0
    %5174 = vmatpush1.msra.mxu0 0.0
    %5175 = vmatprep.subr.mxu0 0.0
    %5176 = vmatpush1.msra.mxu0 0.0
    %5177 = vmatprep.subr.mxu0 0.0
    %5178 = vmatpush1.msra.mxu0 0.0
    %5179 = vmatprep.subr.mxu0 0.0
    %5180 = vmatpush1.msra.mxu0 0.0
    %5181 = vmatprep.subr.mxu0 0.0
    %5182 = vmatpush1.msra.mxu0 0.0
    %5183 = vmatprep.subr.mxu0 0.0
    %5184 = vmatpush1.msra.mxu0 0.0
    %5185 = vmatprep.subr.mxu0 0.0
    %5186 = vmatpush1.msra.mxu0 0.0
    %5187 = vmatprep.subr.mxu0 0.0
    %5188 = vmatpush1.msra.mxu0 0.0
    %5189 = vmatprep.subr.mxu0 0.0
    %5190 = vmatpush1.msra.mxu0 0.0
    %5191 = vmatprep.subr.mxu0 0.0
    %5192 = vmatpush1.msra.mxu0 0.0
    %5193 = vmatprep.subr.mxu0 0.0
    %5194 = vmatpush1.msra.mxu0 0.0
    %5195 = vmatprep.subr.mxu0 0.0
    %5196 = vmatpush1.msra.mxu0 0.0
    %5197 = vmatprep.subr.mxu0 0.0
    %5198 = vmatpush1.msra.mxu0 0.0
    %5199 = vmatprep.subr.mxu0 0.0
    %5200 = vmatpush1.msra.mxu0 0.0
    %5201 = vmatprep.subr.mxu0 0.0
    %5202 = vmatpush1.msra.mxu0 0.0
    %5203 = vmatprep.subr.mxu0 0.0
    %5204 = vmatpush1.msra.mxu0 0.0
    %5205 = vmatprep.subr.mxu0 0.0
    %5206 = vmatpush1.msra.mxu0 0.0
    %5207 = vmatprep.subr.mxu0 0.0
    %5208 = vmatpush1.msra.mxu0 0.0
    %5209 = vmatprep.mubr.f32.mxu0 0.0
    %5210 = vmatmul.mubr.f32.gmra.mrb[0].mxu0 %v5134
    %v5211 = vpop.f32.mrb[0].mxu0
    %v5212 = vadd.f32 0.0, %v5211
    %v5213 = vpop.f32.mrb[0].mxu0
    %5214 = vmatprep.mubr.f32.mxu0 0.0
    %5215 = vmatmul.mubr.f32.gmra.mrb[0].mxu0 %v5137
    %v5216 = vpop.f32.mrb[0].mxu0
    %v5217 = vadd.f32 0.0, %v5216
    %v5218 = vpop.f32.mrb[0].mxu0
    %5219 = vmatprep.mubr.f32.mxu0 0.0
    %5220 = vmatmul.mubr.f32.gmra.mrb[0].mxu0 %v5140
    %v5221 = vpop.f32.mrb[0].mxu0
    %v5222 = vadd.f32 0.0, %v5221
    %v5223 = vpop.f32.mrb[0].mxu0
    %5224 = vmatprep.mubr.f32.mxu0 0.0
    %5225 = vmatmul.mubr.f32.gmra.mrb[0].mxu0 %v5143
    %v5226 = vpop.f32.mrb[0].mxu0
    %v5227 = vadd.f32 0.0, %v5226
    %v5228 = vpop.f32.mrb[0].mxu0
    %5229 = vdwg.mxu0
    %v5230 = vsel %vm64, %v5212, 0.0
    %v5231 = vsel %vm64, %v5217, 0.0
    %v5232 = vadd.f32 %v5230, %v5231
    %v5233 = vsel %vm64, %v5222, 0.0
    %v5234 = vadd.f32 %v5232, %v5233
    %v5235 = vsel %vm64, %v5227, 0.0
    %v5236 = vadd.f32 %v5234, %v5235
    %v5237 = vrot.slane %v5236, 4
    %v5238 = vadd.f32 %v5236, %v5237
    %v5239 = vrot.slane %v5238, 2
    %v5240 = vadd.f32 %v5238, %v5239
    %v5241 = vrot.slane %v5240, 1
    %v5242 = vadd.f32 %v5240, %v5241
    %v5243 = vmul.f32 %v5242, %v446
    %v5244 = vsub.f32 %v5212, %v5243
    %v5245 = vsub.f32 %v5217, %v5243
    %v5246 = vsub.f32 %v5222, %v5243
    %v5247 = vsub.f32 %v5227, %v5243
    %v5248 = vmul.f32 %v5244, %v5244
    %v5249 = vmul.f32 %v5245, %v5245
    %v5250 = vmul.f32 %v5246, %v5246
    %v5251 = vmul.f32 %v5247, %v5247
    %v5252 = vsel %vm64, %v5248, 0.0
    %v5253 = vsel %vm64, %v5249, 0.0
    %v5254 = vadd.f32 %v5252, %v5253
    %v5255 = vsel %vm64, %v5250, 0.0
    %v5256 = vadd.f32 %v5254, %v5255
    %v5257 = vsel %vm64, %v5251, 0.0
    %v5258 = vadd.f32 %v5256, %v5257
    %v5259 = vrot.slane %v5258, 4
    %v5260 = vadd.f32 %v5258, %v5259
    %v5261 = vrot.slane %v5260, 2
    %v5262 = vadd.f32 %v5260, %v5261
    %v5263 = vrot.slane %v5262, 1
    %v5264 = vadd.f32 %v5262, %v5263
    %v5265 = vmul.f32 %v5264, %v446
    %v5266 = vadd.f32 %v5265, 1e-05
    %v5267 = vrsqrt.pop %v5266
    %v5268 = vmul.f32 %v4862, %v5267
    %v5269 = vmul.f32 %v5243, %v5268
    %v5271 = vrot.slane %v5269, 7
    %v5273 = vsub.f32 %v4862, %v5271
    %v5274 = vlaneseq
    %v5275 = vshrl.u32 %v5274, 7
    %v5276 = vsub.s32 2, %v5275
    %v5277 = vrot.slane %v5268, %v5276
    %v5278 = vmul.f32 %v5212, %v5277
    %v5279 = vmul.f32 %v5217, %v5277
    %v5280 = vmul.f32 %v5222, %v5277
    %v5281 = vmul.f32 %v5227, %v5277
    %v5282 = vlaneseq
    %v5283 = vshrl.u32 %v5282, 7
    %v5284 = vsub.s32 3, %v5283
    %v5285 = vrot.slane %v5273, %v5284
    %v5286 = vadd.f32 %v5278, %v5285
    %v5287 = vadd.f32 %v5279, %v5285
    %v5288 = vadd.f32 %v5280, %v5285
    %v5289 = vadd.f32 %v5281, %v5285
    %v5290 = vmax.f32 %v5286, 0.0
    %v5291 = vmax.f32 %v5287, 0.0
    %v5292 = vmax.f32 %v5288, 0.0
    %v5293 = vmax.f32 %v5289, 0.0
    %s5294 = scalar_lea.vmem [#allocation2], 192
    %v5295 = vld [vmem:[%s5294] sm:$0xff]
    %v5296 = vld [vmem:[%s5294 + $0x8] sm:$0xff]
    %s5297 = scalar_lea.vmem %s3, 48
    %v5298 = vld [vmem:[%s5297] sm:$0xf]
    %v5300 = vsel %vm64, %v5290, 0
    %v5303 = vsel %vm64, %v5291, 0
    %v5306 = vsel %vm64, %v5292, 0
    %v5309 = vsel %vm64, %v5293, 0
    %5311 = vmatprep.subr.mxu0 0.0
    %5312 = vmatpush1.msra.mxu0 %v5295
    %5313 = vmatprep.subr.mxu0 0.0
    %5314 = vmatpush1.msra.mxu0 %v5296
    %5315 = vmatprep.subr.mxu0 0.0
    %5316 = vmatpush1.msra.mxu0 0.0
    %5317 = vmatprep.subr.mxu0 0.0
    %5318 = vmatpush1.msra.mxu0 0.0
    %5319 = vmatprep.subr.mxu0 0.0
    %5320 = vmatpush1.msra.mxu0 0.0
    %5321 = vmatprep.subr.mxu0 0.0
    %5322 = vmatpush1.msra.mxu0 0.0
    %5323 = vmatprep.subr.mxu0 0.0
    %5324 = vmatpush1.msra.mxu0 0.0
    %5325 = vmatprep.subr.mxu0 0.0
    %5326 = vmatpush1.msra.mxu0 0.0
    %5327 = vmatprep.subr.mxu0 0.0
    %5328 = vmatpush1.msra.mxu0 0.0
    %5329 = vmatprep.subr.mxu0 0.0
    %5330 = vmatpush1.msra.mxu0 0.0
    %5331 = vmatprep.subr.mxu0 0.0
    %5332 = vmatpush1.msra.mxu0 0.0
    %5333 = vmatprep.subr.mxu0 0.0
    %5334 = vmatpush1.msra.mxu0 0.0
    %5335 = vmatprep.subr.mxu0 0.0
    %5336 = vmatpush1.msra.mxu0 0.0
    %5337 = vmatprep.subr.mxu0 0.0
    %5338 = vmatpush1.msra.mxu0 0.0
    %5339 = vmatprep.subr.mxu0 0.0
    %5340 = vmatpush1.msra.mxu0 0.0
    %5341 = vmatprep.subr.mxu0 0.0
    %5342 = vmatpush1.msra.mxu0 0.0
    %5343 = vmatprep.subr.mxu0 0.0
    %5344 = vmatpush1.msra.mxu0 0.0
    %5345 = vmatprep.subr.mxu0 0.0
    %5346 = vmatpush1.msra.mxu0 0.0
    %5347 = vmatprep.subr.mxu0 0.0
    %5348 = vmatpush1.msra.mxu0 0.0
    %5349 = vmatprep.subr.mxu0 0.0
    %5350 = vmatpush1.msra.mxu0 0.0
    %5351 = vmatprep.subr.mxu0 0.0
    %5352 = vmatpush1.msra.mxu0 0.0
    %5353 = vmatprep.subr.mxu0 0.0
    %5354 = vmatpush1.msra.mxu0 0.0
    %5355 = vmatprep.subr.mxu0 0.0
    %5356 = vmatpush1.msra.mxu0 0.0
    %5357 = vmatprep.subr.mxu0 0.0
    %5358 = vmatpush1.msra.mxu0 0.0
    %5359 = vmatprep.subr.mxu0 0.0
    %5360 = vmatpush1.msra.mxu0 0.0
    %5361 = vmatprep.subr.mxu0 0.0
    %5362 = vmatpush1.msra.mxu0 0.0
    %5363 = vmatprep.subr.mxu0 0.0
    %5364 = vmatpush1.msra.mxu0 0.0
    %5365 = vmatprep.subr.mxu0 0.0
    %5366 = vmatpush1.msra.mxu0 0.0
    %5367 = vmatprep.subr.mxu0 0.0
    %5368 = vmatpush1.msra.mxu0 0.0
    %5369 = vmatprep.subr.mxu0 0.0
    %5370 = vmatpush1.msra.mxu0 0.0
    %5371 = vmatprep.subr.mxu0 0.0
    %5372 = vmatpush1.msra.mxu0 0.0
    %5373 = vmatprep.subr.mxu0 0.0
    %5374 = vmatpush1.msra.mxu0 0.0
    %5375 = vmatprep.mubr.f32.mxu0 0.0
    %5376 = vmatmul.mubr.f32.gmra.mrb[0].mxu0 %v5300
    %v5377 = vpop.f32.mrb[0].mxu0
    %v5378 = vadd.f32 0.0, %v5377
    %v5379 = vpop.f32.mrb[0].mxu0
    %5380 = vmatprep.mubr.f32.mxu0 0.0
    %5381 = vmatmul.mubr.f32.gmra.mrb[0].mxu0 %v5303
    %v5382 = vpop.f32.mrb[0].mxu0
    %v5383 = vadd.f32 0.0, %v5382
    %v5384 = vpop.f32.mrb[0].mxu0
    %5385 = vmatprep.mubr.f32.mxu0 0.0
    %5386 = vmatmul.mubr.f32.gmra.mrb[0].mxu0 %v5306
    %v5387 = vpop.f32.mrb[0].mxu0
    %v5388 = vadd.f32 0.0, %v5387
    %v5389 = vpop.f32.mrb[0].mxu0
    %5390 = vmatprep.mubr.f32.mxu0 0.0
    %5391 = vmatmul.mubr.f32.gmra.mrb[0].mxu0 %v5309
    %v5392 = vpop.f32.mrb[0].mxu0
    %v5393 = vadd.f32 0.0, %v5392
    %v5394 = vpop.f32.mrb[0].mxu0
    %5395 = vdwg.mxu0
    %v5396 = vlaneseq
    %v5397 = vshrl.u32 %v5396, 7
    %v5398 = vsub.s32 1, %v5397
    %v5399 = vrot.slane %v5298, %v5398
    %v5400 = vmul.f32 %v5378, %v5399
    %v5401 = vmul.f32 %v5383, %v5399
    %v5402 = vmul.f32 %v5388, %v5399
    %v5403 = vmul.f32 %v5393, %v5399
    %v5404 = vsel %vm64, %v5400, 0.0
    %5405 = vadd.xlane.f32.xlu0 %v5404
    %v5406 = vpop.xlane.xlu0 %5405
    %v5407 = vsel %vm64, %v5401, 0.0
    %5408 = vadd.xlane.f32.xlu0 %v5407
    %v5409 = vpop.xlane.xlu0 %5408
    %v5410 = vsel %vm64, %v5402, 0.0
    %5411 = vadd.xlane.f32.xlu0 %v5410
    %v5412 = vpop.xlane.xlu0 %5411
    %v5413 = vsel %vm64, %v5403, 0.0
    %5414 = vadd.xlane.f32.xlu0 %v5413
    %v5415 = vpop.xlane.xlu0 %5414
    %v5417 = vsel %vm64, %v5298, 0
    %v5420 = vsel %vm64, %v5378, 0
    %v5423 = vsel %vm64, %v5383, 0
    %v5426 = vsel %vm64, %v5388, 0
    %v5429 = vsel %vm64, %v5393, 0
    %5431 = vmatprep.subr.mxu0 0.0
    %5432 = vmatpush1.xpose.msra.mxu0 %v5420
    %5433 = vmatprep.subr.mxu0 0.0
    %5434 = vmatpush1.xpose.msra.mxu0 %v5423
    %5435 = vmatprep.subr.mxu0 0.0
    %5436 = vmatpush1.xpose.msra.mxu0 %v5426
    %5437 = vmatprep.subr.mxu0 0.0
    %5438 = vmatpush1.xpose.msra.mxu0 %v5429
    %5439 = vmatprep.subr.mxu0 0.0
    %5440 = vmatpush1.xpose.msra.mxu0 0.0
    %5441 = vmatprep.subr.mxu0 0.0
    %5442 = vmatpush1.xpose.msra.mxu0 0.0
    %5443 = vmatprep.subr.mxu0 0.0
    %5444 = vmatpush1.xpose.msra.mxu0 0.0
    %5445 = vmatprep.subr.mxu0 0.0
    %5446 = vmatpush1.xpose.msra.mxu0 0.0
    %5447 = vmatprep.subr.mxu0 0.0
    %5448 = vmatpush1.xpose.msra.mxu0 0.0
    %5449 = vmatprep.subr.mxu0 0.0
    %5450 = vmatpush1.xpose.msra.mxu0 0.0
    %5451 = vmatprep.subr.mxu0 0.0
    %5452 = vmatpush1.xpose.msra.mxu0 0.0
    %5453 = vmatprep.subr.mxu0 0.0
    %5454 = vmatpush1.xpose.msra.mxu0 0.0
    %5455 = vmatprep.subr.mxu0 0.0
    %5456 = vmatpush1.xpose.msra.mxu0 0.0
    %5457 = vmatprep.subr.mxu0 0.0
    %5458 = vmatpush1.xpose.msra.mxu0 0.0
    %5459 = vmatprep.subr.mxu0 0.0
    %5460 = vmatpush1.xpose.msra.mxu0 0.0
    %5461 = vmatprep.subr.mxu0 0.0
    %5462 = vmatpush1.xpose.msra.mxu0 0.0
    %5463 = vmatprep.subr.mxu0 0.0
    %5464 = vmatpush1.xpose.msra.mxu0 0.0
    %5465 = vmatprep.subr.mxu0 0.0
    %5466 = vmatpush1.xpose.msra.mxu0 0.0
    %5467 = vmatprep.subr.mxu0 0.0
    %5468 = vmatpush1.xpose.msra.mxu0 0.0
    %5469 = vmatprep.subr.mxu0 0.0
    %5470 = vmatpush1.xpose.msra.mxu0 0.0
    %5471 = vmatprep.subr.mxu0 0.0
    %5472 = vmatpush1.xpose.msra.mxu0 0.0
    %5473 = vmatprep.subr.mxu0 0.0
    %5474 = vmatpush1.xpose.msra.mxu0 0.0
    %5475 = vmatprep.subr.mxu0 0.0
    %5476 = vmatpush1.xpose.msra.mxu0 0.0
    %5477 = vmatprep.subr.mxu0 0.0
    %5478 = vmatpush1.xpose.msra.mxu0 0.0
    %5479 = vmatprep.subr.mxu0 0.0
    %5480 = vmatpush1.xpose.msra.mxu0 0.0
    %5481 = vmatprep.subr.mxu0 0.0
    %5482 = vmatpush1.xpose.msra.mxu0 0.0
    %5483 = vmatprep.subr.mxu0 0.0
    %5484 = vmatpush1.xpose.msra.mxu0 0.0
    %5485 = vmatprep.subr.mxu0 0.0
    %5486 = vmatpush1.xpose.msra.mxu0 0.0
    %5487 = vmatprep.subr.mxu0 0.0
    %5488 = vmatpush1.xpose.msra.mxu0 0.0
    %5489 = vmatprep.subr.mxu0 0.0
    %5490 = vmatpush1.xpose.msra.mxu0 0.0
    %5491 = vmatprep.subr.mxu0 0.0
    %5492 = vmatpush1.xpose.msra.mxu0 0.0
    %5493 = vmatprep.subr.mxu0 0.0
    %5494 = vmatpush1.xpose.msra.mxu0 0.0
    %5495 = vmatprep.mubr.f32.mxu0 0.0
    %5496 = vmatmul.mubr.f32.gmra.mrb[0].mxu0 %v5417
    %v5497 = vpop.f32.mrb[0].mxu0
    %v5498 = vadd.f32 0.0, %v5497
    %v5499 = vpop.f32.mrb[0].mxu0
    %5500 = vdwg.mxu0
    %v5501 = vlaneseq
    %v5502 = vshrl.u32 %v5501, 7
    %v5503 = vsub.s32 0, %v5502
    %v5504 = vrot.slane %v5498, %v5503
    %v5505 = vadd.f32 %v5406, %v5504
    %v5506 = vadd.f32 %v5409, %v5504
    %v5507 = vadd.f32 %v5412, %v5504
    %v5508 = vadd.f32 %v5415, %v5504
    %vm5509 = vcmp.gt.f32.partialorder %v5505, 0.0
    %vm5510 = vcmp.gt.f32.partialorder %v5506, 0.0
    %vm5511 = vcmp.gt.f32.partialorder %v5507, 0.0
    %vm5512 = vcmp.gt.f32.partialorder %v5508, 0.0
    %v5513 = vmul.f32 %v5505, 0.2
    %v5514 = vmul.f32 %v5506, 0.2
    %v5515 = vmul.f32 %v5507, 0.2
    %v5516 = vmul.f32 %v5508, 0.2
    %v5517 = vsel %vm5509, %v5505, %v5513
    %v5518 = vsel %vm5510, %v5506, %v5514
    %v5519 = vsel %vm5511, %v5507, %v5515
    %v5520 = vsel %vm5512, %v5508, %v5516
    %v5521 = vadd.f32 %v5517, %v53
    %v5522 = vadd.f32 %v5518, %v54
    %v5523 = vadd.f32 %v5519, %v55
    %v5524 = vadd.f32 %v5520, %v56
    %v5525 = vsel %vm291, %v5521, -inf
    %5526 = vmax.xlane.f32.xlu0 %v5525
    %v5527 = vpop.xlane.xlu0 %5526
    %v5528 = vsel %vm291, %v5522, -inf
    %5529 = vmax.xlane.f32.xlu0 %v5528
    %v5530 = vpop.xlane.xlu0 %5529
    %v5531 = vsel %vm291, %v5523, -inf
    %5532 = vmax.xlane.f32.xlu0 %v5531
    %v5533 = vpop.xlane.xlu0 %5532
    %v5534 = vsel %vm291, %v5524, -inf
    %5535 = vmax.xlane.f32.xlu0 %v5534
    %v5536 = vpop.xlane.xlu0 %5535
    %v5537 = vsub.f32 %v5521, %v5527
    %v5538 = vsub.f32 %v5522, %v5530
    %v5539 = vsub.f32 %v5523, %v5533
    %v5540 = vsub.f32 %v5524, %v5536
    %v5541 = vmul.f32 %v5537, 1.442695
    %v5542 = vpow.pop %v5541
    %v5543 = vmul.f32 %v5538, 1.442695
    %v5544 = vpow.pop %v5543
    %v5545 = vmul.f32 %v5539, 1.442695
    %v5546 = vpow.pop %v5545
    %v5547 = vmul.f32 %v5540, 1.442695
    %v5548 = vpow.pop %v5547
    %v5549 = vsel %vm291, %v5542, 0.0
    %5550 = vadd.xlane.f32.xlu0 %v5549
    %v5551 = vpop.xlane.xlu0 %5550
    %v5552 = vsel %vm291, %v5544, 0.0
    %5553 = vadd.xlane.f32.xlu0 %v5552
    %v5554 = vpop.xlane.xlu0 %5553
    %v5555 = vsel %vm291, %v5546, 0.0
    %5556 = vadd.xlane.f32.xlu0 %v5555
    %v5557 = vpop.xlane.xlu0 %5556
    %v5558 = vsel %vm291, %v5548, 0.0
    %5559 = vadd.xlane.f32.xlu0 %v5558
    %v5560 = vpop.xlane.xlu0 %5559
    %v5561 = vrcp.pop %v5551
    %v5562 = vrcp.pop %v5554
    %v5563 = vrcp.pop %v5557
    %v5564 = vrcp.pop %v5560
    %v5565 = vmul.f32 %v5542, %v5561
    %v5566 = vmul.f32 %v5544, %v5562
    %v5567 = vmul.f32 %v5546, %v5563
    %v5568 = vmul.f32 %v5548, %v5564
    %v5570 = vsel %vm291, %v5565, 0
    %v5573 = vsel %vm291, %v5566, 0
    %v5576 = vsel %vm291, %v5567, 0
    %v5579 = vsel %vm291, %v5568, 0
    %5581 = vmatprep.subr.mxu0 0.0
    %5582 = vmatpush1.msra.mxu0 %v5378
    %5583 = vmatprep.subr.mxu0 0.0
    %5584 = vmatpush1.msra.mxu0 %v5383
    %5585 = vmatprep.subr.mxu0 0.0
    %5586 = vmatpush1.msra.mxu0 %v5388
    %5587 = vmatprep.subr.mxu0 0.0
    %5588 = vmatpush1.msra.mxu0 %v5393
    %5589 = vmatprep.subr.mxu0 0.0
    %5590 = vmatpush1.msra.mxu0 0.0
    %5591 = vmatprep.subr.mxu0 0.0
    %5592 = vmatpush1.msra.mxu0 0.0
    %5593 = vmatprep.subr.mxu0 0.0
    %5594 = vmatpush1.msra.mxu0 0.0
    %5595 = vmatprep.subr.mxu0 0.0
    %5596 = vmatpush1.msra.mxu0 0.0
    %5597 = vmatprep.subr.mxu0 0.0
    %5598 = vmatpush1.msra.mxu0 0.0
    %5599 = vmatprep.subr.mxu0 0.0
    %5600 = vmatpush1.msra.mxu0 0.0
    %5601 = vmatprep.subr.mxu0 0.0
    %5602 = vmatpush1.msra.mxu0 0.0
    %5603 = vmatprep.subr.mxu0 0.0
    %5604 = vmatpush1.msra.mxu0 0.0
    %5605 = vmatprep.subr.mxu0 0.0
    %5606 = vmatpush1.msra.mxu0 0.0
    %5607 = vmatprep.subr.mxu0 0.0
    %5608 = vmatpush1.msra.mxu0 0.0
    %5609 = vmatprep.subr.mxu0 0.0
    %5610 = vmatpush1.msra.mxu0 0.0
    %5611 = vmatprep.subr.mxu0 0.0
    %5612 = vmatpush1.msra.mxu0 0.0
    %5613 = vmatprep.subr.mxu0 0.0
    %5614 = vmatpush1.msra.mxu0 0.0
    %5615 = vmatprep.subr.mxu0 0.0
    %5616 = vmatpush1.msra.mxu0 0.0
    %5617 = vmatprep.subr.mxu0 0.0
    %5618 = vmatpush1.msra.mxu0 0.0
    %5619 = vmatprep.subr.mxu0 0.0
    %5620 = vmatpush1.msra.mxu0 0.0
    %5621 = vmatprep.subr.mxu0 0.0
    %5622 = vmatpush1.msra.mxu0 0.0
    %5623 = vmatprep.subr.mxu0 0.0
    %5624 = vmatpush1.msra.mxu0 0.0
    %5625 = vmatprep.subr.mxu0 0.0
    %5626 = vmatpush1.msra.mxu0 0.0
    %5627 = vmatprep.subr.mxu0 0.0
    %5628 = vmatpush1.msra.mxu0 0.0
    %5629 = vmatprep.subr.mxu0 0.0
    %5630 = vmatpush1.msra.mxu0 0.0
    %5631 = vmatprep.subr.mxu0 0.0
    %5632 = vmatpush1.msra.mxu0 0.0
    %5633 = vmatprep.subr.mxu0 0.0
    %5634 = vmatpush1.msra.mxu0 0.0
    %5635 = vmatprep.subr.mxu0 0.0
    %5636 = vmatpush1.msra.mxu0 0.0
    %5637 = vmatprep.subr.mxu0 0.0
    %5638 = vmatpush1.msra.mxu0 0.0
    %5639 = vmatprep.subr.mxu0 0.0
    %5640 = vmatpush1.msra.mxu0 0.0
    %5641 = vmatprep.subr.mxu0 0.0
    %5642 = vmatpush1.msra.mxu0 0.0
    %5643 = vmatprep.subr.mxu0 0.0
    %5644 = vmatpush1.msra.mxu0 0.0
    %5645 = vmatprep.mubr.f32.mxu0 0.0
    %5646 = vmatmul.mubr.f32.gmra.mrb[0].mxu0 %v5570
    %v5647 = vpop.f32.mrb[0].mxu0
    %v5648 = vadd.f32 0.0, %v5647
    %v5649 = vpop.f32.mrb[0].mxu0
    %5650 = vmatprep.mubr.f32.mxu0 0.0
    %5651 = vmatmul.mubr.f32.gmra.mrb[0].mxu0 %v5573
    %v5652 = vpop.f32.mrb[0].mxu0
    %v5653 = vadd.f32 0.0, %v5652
    %v5654 = vpop.f32.mrb[0].mxu0
    %5655 = vmatprep.mubr.f32.mxu0 0.0
    %5656 = vmatmul.mubr.f32.gmra.mrb[0].mxu0 %v5576
    %v5657 = vpop.f32.mrb[0].mxu0
    %v5658 = vadd.f32 0.0, %v5657
    %v5659 = vpop.f32.mrb[0].mxu0
    %5660 = vmatprep.mubr.f32.mxu0 0.0
    %5661 = vmatmul.mubr.f32.gmra.mrb[0].mxu0 %v5579
    %v5662 = vpop.f32.mrb[0].mxu0
    %v5663 = vadd.f32 0.0, %v5662
    %v5664 = vpop.f32.mrb[0].mxu0
    %5665 = vdwg.mxu0
    %v5666 = vsel %vm64, %v5648, 0.0
    %v5667 = vsel %vm64, %v5653, 0.0
    %v5668 = vadd.f32 %v5666, %v5667
    %v5669 = vsel %vm64, %v5658, 0.0
    %v5670 = vadd.f32 %v5668, %v5669
    %v5671 = vsel %vm64, %v5663, 0.0
    %v5672 = vadd.f32 %v5670, %v5671
    %v5673 = vrot.slane %v5672, 4
    %v5674 = vadd.f32 %v5672, %v5673
    %v5675 = vrot.slane %v5674, 2
    %v5676 = vadd.f32 %v5674, %v5675
    %v5677 = vrot.slane %v5676, 1
    %v5678 = vadd.f32 %v5676, %v5677
    %v5679 = vmul.f32 %v5678, %v446
    %v5680 = vsub.f32 %v5648, %v5679
    %v5681 = vsub.f32 %v5653, %v5679
    %v5682 = vsub.f32 %v5658, %v5679
    %v5683 = vsub.f32 %v5663, %v5679
    %v5684 = vmul.f32 %v5680, %v5680
    %v5685 = vmul.f32 %v5681, %v5681
    %v5686 = vmul.f32 %v5682, %v5682
    %v5687 = vmul.f32 %v5683, %v5683
    %v5688 = vsel %vm64, %v5684, 0.0
    %v5689 = vsel %vm64, %v5685, 0.0
    %v5690 = vadd.f32 %v5688, %v5689
    %v5691 = vsel %vm64, %v5686, 0.0
    %v5692 = vadd.f32 %v5690, %v5691
    %v5693 = vsel %vm64, %v5687, 0.0
    %v5694 = vadd.f32 %v5692, %v5693
    %v5695 = vrot.slane %v5694, 4
    %v5696 = vadd.f32 %v5694, %v5695
    %v5697 = vrot.slane %v5696, 2
    %v5698 = vadd.f32 %v5696, %v5697
    %v5699 = vrot.slane %v5698, 1
    %v5700 = vadd.f32 %v5698, %v5699
    %v5701 = vmul.f32 %v5700, %v446
    %v5702 = vadd.f32 %v5701, 1e-05
    %v5703 = vrsqrt.pop %v5702
    %v5704 = vmul.f32 %v5298, %v5703
    %v5705 = vmul.f32 %v5679, %v5704
    %v5707 = vrot.slane %v5705, 7
    %v5709 = vsub.f32 %v5298, %v5707
    %v5710 = vlaneseq
    %v5711 = vshrl.u32 %v5710, 7
    %v5712 = vsub.s32 2, %v5711
    %v5713 = vrot.slane %v5704, %v5712
    %v5714 = vmul.f32 %v5648, %v5713
    %v5715 = vmul.f32 %v5653, %v5713
    %v5716 = vmul.f32 %v5658, %v5713
    %v5717 = vmul.f32 %v5663, %v5713
    %v5718 = vlaneseq
    %v5719 = vshrl.u32 %v5718, 7
    %v5720 = vsub.s32 3, %v5719
    %v5721 = vrot.slane %v5709, %v5720
    %v5722 = vadd.f32 %v5714, %v5721
    %v5723 = vadd.f32 %v5715, %v5721
    %v5724 = vadd.f32 %v5716, %v5721
    %v5725 = vadd.f32 %v5717, %v5721
    %v5726 = vmax.f32 %v5722, 0.0
    %v5727 = vmax.f32 %v5723, 0.0
    %v5728 = vmax.f32 %v5724, 0.0
    %v5729 = vmax.f32 %v5725, 0.0
    %s5730 = scalar_lea.vmem [#allocation2], 208
    %v5731 = vld [vmem:[%s5730] sm:$0xff]
    %v5732 = vld [vmem:[%s5730 + $0x8] sm:$0xff]
    %s5733 = scalar_lea.vmem %s3, 52
    %v5734 = vld [vmem:[%s5733] sm:$0xf]
    %v5736 = vsel %vm64, %v5726, 0
    %v5739 = vsel %vm64, %v5727, 0
    %v5742 = vsel %vm64, %v5728, 0
    %v5745 = vsel %vm64, %v5729, 0
    %5747 = vmatprep.subr.mxu0 0.0
    %5748 = vmatpush1.msra.mxu0 %v5731
    %5749 = vmatprep.subr.mxu0 0.0
    %5750 = vmatpush1.msra.mxu0 %v5732
    %5751 = vmatprep.subr.mxu0 0.0
    %5752 = vmatpush1.msra.mxu0 0.0
    %5753 = vmatprep.subr.mxu0 0.0
    %5754 = vmatpush1.msra.mxu0 0.0
    %5755 = vmatprep.subr.mxu0 0.0
    %5756 = vmatpush1.msra.mxu0 0.0
    %5757 = vmatprep.subr.mxu0 0.0
    %5758 = vmatpush1.msra.mxu0 0.0
    %5759 = vmatprep.subr.mxu0 0.0
    %5760 = vmatpush1.msra.mxu0 0.0
    %5761 = vmatprep.subr.mxu0 0.0
    %5762 = vmatpush1.msra.mxu0 0.0
    %5763 = vmatprep.subr.mxu0 0.0
    %5764 = vmatpush1.msra.mxu0 0.0
    %5765 = vmatprep.subr.mxu0 0.0
    %5766 = vmatpush1.msra.mxu0 0.0
    %5767 = vmatprep.subr.mxu0 0.0
    %5768 = vmatpush1.msra.mxu0 0.0
    %5769 = vmatprep.subr.mxu0 0.0
    %5770 = vmatpush1.msra.mxu0 0.0
    %5771 = vmatprep.subr.mxu0 0.0
    %5772 = vmatpush1.msra.mxu0 0.0
    %5773 = vmatprep.subr.mxu0 0.0
    %5774 = vmatpush1.msra.mxu0 0.0
    %5775 = vmatprep.subr.mxu0 0.0
    %5776 = vmatpush1.msra.mxu0 0.0
    %5777 = vmatprep.subr.mxu0 0.0
    %5778 = vmatpush1.msra.mxu0 0.0
    %5779 = vmatprep.subr.mxu0 0.0
    %5780 = vmatpush1.msra.mxu0 0.0
    %5781 = vmatprep.subr.mxu0 0.0
    %5782 = vmatpush1.msra.mxu0 0.0
    %5783 = vmatprep.subr.mxu0 0.0
    %5784 = vmatpush1.msra.mxu0 0.0
    %5785 = vmatprep.subr.mxu0 0.0
    %5786 = vmatpush1.msra.mxu0 0.0
    %5787 = vmatprep.subr.mxu0 0.0
    %5788 = vmatpush1.msra.mxu0 0.0
    %5789 = vmatprep.subr.mxu0 0.0
    %5790 = vmatpush1.msra.mxu0 0.0
    %5791 = vmatprep.subr.mxu0 0.0
    %5792 = vmatpush1.msra.mxu0 0.0
    %5793 = vmatprep.subr.mxu0 0.0
    %5794 = vmatpush1.msra.mxu0 0.0
    %5795 = vmatprep.subr.mxu0 0.0
    %5796 = vmatpush1.msra.mxu0 0.0
    %5797 = vmatprep.subr.mxu0 0.0
    %5798 = vmatpush1.msra.mxu0 0.0
    %5799 = vmatprep.subr.mxu0 0.0
    %5800 = vmatpush1.msra.mxu0 0.0
    %5801 = vmatprep.subr.mxu0 0.0
    %5802 = vmatpush1.msra.mxu0 0.0
    %5803 = vmatprep.subr.mxu0 0.0
    %5804 = vmatpush1.msra.mxu0 0.0
    %5805 = vmatprep.subr.mxu0 0.0
    %5806 = vmatpush1.msra.mxu0 0.0
    %5807 = vmatprep.subr.mxu0 0.0
    %5808 = vmatpush1.msra.mxu0 0.0
    %5809 = vmatprep.subr.mxu0 0.0
    %5810 = vmatpush1.msra.mxu0 0.0
    %5811 = vmatprep.mubr.f32.mxu0 0.0
    %5812 = vmatmul.mubr.f32.gmra.mrb[0].mxu0 %v5736
    %v5813 = vpop.f32.mrb[0].mxu0
    %v5814 = vadd.f32 0.0, %v5813
    %v5815 = vpop.f32.mrb[0].mxu0
    %5816 = vmatprep.mubr.f32.mxu0 0.0
    %5817 = vmatmul.mubr.f32.gmra.mrb[0].mxu0 %v5739
    %v5818 = vpop.f32.mrb[0].mxu0
    %v5819 = vadd.f32 0.0, %v5818
    %v5820 = vpop.f32.mrb[0].mxu0
    %5821 = vmatprep.mubr.f32.mxu0 0.0
    %5822 = vmatmul.mubr.f32.gmra.mrb[0].mxu0 %v5742
    %v5823 = vpop.f32.mrb[0].mxu0
    %v5824 = vadd.f32 0.0, %v5823
    %v5825 = vpop.f32.mrb[0].mxu0
    %5826 = vmatprep.mubr.f32.mxu0 0.0
    %5827 = vmatmul.mubr.f32.gmra.mrb[0].mxu0 %v5745
    %v5828 = vpop.f32.mrb[0].mxu0
    %v5829 = vadd.f32 0.0, %v5828
    %v5830 = vpop.f32.mrb[0].mxu0
    %5831 = vdwg.mxu0
    %v5832 = vlaneseq
    %v5833 = vshrl.u32 %v5832, 7
    %v5834 = vsub.s32 1, %v5833
    %v5835 = vrot.slane %v5734, %v5834
    %v5836 = vmul.f32 %v5814, %v5835
    %v5837 = vmul.f32 %v5819, %v5835
    %v5838 = vmul.f32 %v5824, %v5835
    %v5839 = vmul.f32 %v5829, %v5835
    %v5840 = vsel %vm64, %v5836, 0.0
    %5841 = vadd.xlane.f32.xlu0 %v5840
    %v5842 = vpop.xlane.xlu0 %5841
    %v5843 = vsel %vm64, %v5837, 0.0
    %5844 = vadd.xlane.f32.xlu0 %v5843
    %v5845 = vpop.xlane.xlu0 %5844
    %v5846 = vsel %vm64, %v5838, 0.0
    %5847 = vadd.xlane.f32.xlu0 %v5846
    %v5848 = vpop.xlane.xlu0 %5847
    %v5849 = vsel %vm64, %v5839, 0.0
    %5850 = vadd.xlane.f32.xlu0 %v5849
    %v5851 = vpop.xlane.xlu0 %5850
    %v5853 = vsel %vm64, %v5734, 0
    %v5856 = vsel %vm64, %v5814, 0
    %v5859 = vsel %vm64, %v5819, 0
    %v5862 = vsel %vm64, %v5824, 0
    %v5865 = vsel %vm64, %v5829, 0
    %5867 = vmatprep.subr.mxu0 0.0
    %5868 = vmatpush1.xpose.msra.mxu0 %v5856
    %5869 = vmatprep.subr.mxu0 0.0
    %5870 = vmatpush1.xpose.msra.mxu0 %v5859
    %5871 = vmatprep.subr.mxu0 0.0
    %5872 = vmatpush1.xpose.msra.mxu0 %v5862
    %5873 = vmatprep.subr.mxu0 0.0
    %5874 = vmatpush1.xpose.msra.mxu0 %v5865
    %5875 = vmatprep.subr.mxu0 0.0
    %5876 = vmatpush1.xpose.msra.mxu0 0.0
    %5877 = vmatprep.subr.mxu0 0.0
    %5878 = vmatpush1.xpose.msra.mxu0 0.0
    %5879 = vmatprep.subr.mxu0 0.0
    %5880 = vmatpush1.xpose.msra.mxu0 0.0
    %5881 = vmatprep.subr.mxu0 0.0
    %5882 = vmatpush1.xpose.msra.mxu0 0.0
    %5883 = vmatprep.subr.mxu0 0.0
    %5884 = vmatpush1.xpose.msra.mxu0 0.0
    %5885 = vmatprep.subr.mxu0 0.0
    %5886 = vmatpush1.xpose.msra.mxu0 0.0
    %5887 = vmatprep.subr.mxu0 0.0
    %5888 = vmatpush1.xpose.msra.mxu0 0.0
    %5889 = vmatprep.subr.mxu0 0.0
    %5890 = vmatpush1.xpose.msra.mxu0 0.0
    %5891 = vmatprep.subr.mxu0 0.0
    %5892 = vmatpush1.xpose.msra.mxu0 0.0
    %5893 = vmatprep.subr.mxu0 0.0
    %5894 = vmatpush1.xpose.msra.mxu0 0.0
    %5895 = vmatprep.subr.mxu0 0.0
    %5896 = vmatpush1.xpose.msra.mxu0 0.0
    %5897 = vmatprep.subr.mxu0 0.0
    %5898 = vmatpush1.xpose.msra.mxu0 0.0
    %5899 = vmatprep.subr.mxu0 0.0
    %5900 = vmatpush1.xpose.msra.mxu0 0.0
    %5901 = vmatprep.subr.mxu0 0.0
    %5902 = vmatpush1.xpose.msra.mxu0 0.0
    %5903 = vmatprep.subr.mxu0 0.0
    %5904 = vmatpush1.xpose.msra.mxu0 0.0
    %5905 = vmatprep.subr.mxu0 0.0
    %5906 = vmatpush1.xpose.msra.mxu0 0.0
    %5907 = vmatprep.subr.mxu0 0.0
    %5908 = vmatpush1.xpose.msra.mxu0 0.0
    %5909 = vmatprep.subr.mxu0 0.0
    %5910 = vmatpush1.xpose.msra.mxu0 0.0
    %5911 = vmatprep.subr.mxu0 0.0
    %5912 = vmatpush1.xpose.msra.mxu0 0.0
    %5913 = vmatprep.subr.mxu0 0.0
    %5914 = vmatpush1.xpose.msra.mxu0 0.0
    %5915 = vmatprep.subr.mxu0 0.0
    %5916 = vmatpush1.xpose.msra.mxu0 0.0
    %5917 = vmatprep.subr.mxu0 0.0
    %5918 = vmatpush1.xpose.msra.mxu0 0.0
    %5919 = vmatprep.subr.mxu0 0.0
    %5920 = vmatpush1.xpose.msra.mxu0 0.0
    %5921 = vmatprep.subr.mxu0 0.0
    %5922 = vmatpush1.xpose.msra.mxu0 0.0
    %5923 = vmatprep.subr.mxu0 0.0
    %5924 = vmatpush1.xpose.msra.mxu0 0.0
    %5925 = vmatprep.subr.mxu0 0.0
    %5926 = vmatpush1.xpose.msra.mxu0 0.0
    %5927 = vmatprep.subr.mxu0 0.0
    %5928 = vmatpush1.xpose.msra.mxu0 0.0
    %5929 = vmatprep.subr.mxu0 0.0
    %5930 = vmatpush1.xpose.msra.mxu0 0.0
    %5931 = vmatprep.mubr.f32.mxu0 0.0
    %5932 = vmatmul.mubr.f32.gmra.mrb[0].mxu0 %v5853
    %v5933 = vpop.f32.mrb[0].mxu0
    %v5934 = vadd.f32 0.0, %v5933
    %v5935 = vpop.f32.mrb[0].mxu0
    %5936 = vdwg.mxu0
    %v5937 = vlaneseq
    %v5938 = vshrl.u32 %v5937, 7
    %v5939 = vsub.s32 0, %v5938
    %v5940 = vrot.slane %v5934, %v5939
    %v5941 = vadd.f32 %v5842, %v5940
    %v5942 = vadd.f32 %v5845, %v5940
    %v5943 = vadd.f32 %v5848, %v5940
    %v5944 = vadd.f32 %v5851, %v5940
    %vm5945 = vcmp.gt.f32.partialorder %v5941, 0.0
    %vm5946 = vcmp.gt.f32.partialorder %v5942, 0.0
    %vm5947 = vcmp.gt.f32.partialorder %v5943, 0.0
    %vm5948 = vcmp.gt.f32.partialorder %v5944, 0.0
    %v5949 = vmul.f32 %v5941, 0.2
    %v5950 = vmul.f32 %v5942, 0.2
    %v5951 = vmul.f32 %v5943, 0.2
    %v5952 = vmul.f32 %v5944, 0.2
    %v5953 = vsel %vm5945, %v5941, %v5949
    %v5954 = vsel %vm5946, %v5942, %v5950
    %v5955 = vsel %vm5947, %v5943, %v5951
    %v5956 = vsel %vm5948, %v5944, %v5952
    %v5957 = vadd.f32 %v5953, %v53
    %v5958 = vadd.f32 %v5954, %v54
    %v5959 = vadd.f32 %v5955, %v55
    %v5960 = vadd.f32 %v5956, %v56
    %v5961 = vsel %vm291, %v5957, -inf
    %5962 = vmax.xlane.f32.xlu0 %v5961
    %v5963 = vpop.xlane.xlu0 %5962
    %v5964 = vsel %vm291, %v5958, -inf
    %5965 = vmax.xlane.f32.xlu0 %v5964
    %v5966 = vpop.xlane.xlu0 %5965
    %v5967 = vsel %vm291, %v5959, -inf
    %5968 = vmax.xlane.f32.xlu0 %v5967
    %v5969 = vpop.xlane.xlu0 %5968
    %v5970 = vsel %vm291, %v5960, -inf
    %5971 = vmax.xlane.f32.xlu0 %v5970
    %v5972 = vpop.xlane.xlu0 %5971
    %v5973 = vsub.f32 %v5957, %v5963
    %v5974 = vsub.f32 %v5958, %v5966
    %v5975 = vsub.f32 %v5959, %v5969
    %v5976 = vsub.f32 %v5960, %v5972
    %v5977 = vmul.f32 %v5973, 1.442695
    %v5978 = vpow.pop %v5977
    %v5979 = vmul.f32 %v5974, 1.442695
    %v5980 = vpow.pop %v5979
    %v5981 = vmul.f32 %v5975, 1.442695
    %v5982 = vpow.pop %v5981
    %v5983 = vmul.f32 %v5976, 1.442695
    %v5984 = vpow.pop %v5983
    %v5985 = vsel %vm291, %v5978, 0.0
    %5986 = vadd.xlane.f32.xlu0 %v5985
    %v5987 = vpop.xlane.xlu0 %5986
    %v5988 = vsel %vm291, %v5980, 0.0
    %5989 = vadd.xlane.f32.xlu0 %v5988
    %v5990 = vpop.xlane.xlu0 %5989
    %v5991 = vsel %vm291, %v5982, 0.0
    %5992 = vadd.xlane.f32.xlu0 %v5991
    %v5993 = vpop.xlane.xlu0 %5992
    %v5994 = vsel %vm291, %v5984, 0.0
    %5995 = vadd.xlane.f32.xlu0 %v5994
    %v5996 = vpop.xlane.xlu0 %5995
    %v5997 = vrcp.pop %v5987
    %v5998 = vrcp.pop %v5990
    %v5999 = vrcp.pop %v5993
    %v6000 = vrcp.pop %v5996
    %v6001 = vmul.f32 %v5978, %v5997
    %v6002 = vmul.f32 %v5980, %v5998
    %v6003 = vmul.f32 %v5982, %v5999
    %v6004 = vmul.f32 %v5984, %v6000
    %v6006 = vsel %vm291, %v6001, 0
    %v6009 = vsel %vm291, %v6002, 0
    %v6012 = vsel %vm291, %v6003, 0
    %v6015 = vsel %vm291, %v6004, 0
    %6017 = vmatprep.subr.mxu0 0.0
    %6018 = vmatpush1.msra.mxu0 %v5814
    %6019 = vmatprep.subr.mxu0 0.0
    %6020 = vmatpush1.msra.mxu0 %v5819
    %6021 = vmatprep.subr.mxu0 0.0
    %6022 = vmatpush1.msra.mxu0 %v5824
    %6023 = vmatprep.subr.mxu0 0.0
    %6024 = vmatpush1.msra.mxu0 %v5829
    %6025 = vmatprep.subr.mxu0 0.0
    %6026 = vmatpush1.msra.mxu0 0.0
    %6027 = vmatprep.subr.mxu0 0.0
    %6028 = vmatpush1.msra.mxu0 0.0
    %6029 = vmatprep.subr.mxu0 0.0
    %6030 = vmatpush1.msra.mxu0 0.0
    %6031 = vmatprep.subr.mxu0 0.0
    %6032 = vmatpush1.msra.mxu0 0.0
    %6033 = vmatprep.subr.mxu0 0.0
    %6034 = vmatpush1.msra.mxu0 0.0
    %6035 = vmatprep.subr.mxu0 0.0
    %6036 = vmatpush1.msra.mxu0 0.0
    %6037 = vmatprep.subr.mxu0 0.0
    %6038 = vmatpush1.msra.mxu0 0.0
    %6039 = vmatprep.subr.mxu0 0.0
    %6040 = vmatpush1.msra.mxu0 0.0
    %6041 = vmatprep.subr.mxu0 0.0
    %6042 = vmatpush1.msra.mxu0 0.0
    %6043 = vmatprep.subr.mxu0 0.0
    %6044 = vmatpush1.msra.mxu0 0.0
    %6045 = vmatprep.subr.mxu0 0.0
    %6046 = vmatpush1.msra.mxu0 0.0
    %6047 = vmatprep.subr.mxu0 0.0
    %6048 = vmatpush1.msra.mxu0 0.0
    %6049 = vmatprep.subr.mxu0 0.0
    %6050 = vmatpush1.msra.mxu0 0.0
    %6051 = vmatprep.subr.mxu0 0.0
    %6052 = vmatpush1.msra.mxu0 0.0
    %6053 = vmatprep.subr.mxu0 0.0
    %6054 = vmatpush1.msra.mxu0 0.0
    %6055 = vmatprep.subr.mxu0 0.0
    %6056 = vmatpush1.msra.mxu0 0.0
    %6057 = vmatprep.subr.mxu0 0.0
    %6058 = vmatpush1.msra.mxu0 0.0
    %6059 = vmatprep.subr.mxu0 0.0
    %6060 = vmatpush1.msra.mxu0 0.0
    %6061 = vmatprep.subr.mxu0 0.0
    %6062 = vmatpush1.msra.mxu0 0.0
    %6063 = vmatprep.subr.mxu0 0.0
    %6064 = vmatpush1.msra.mxu0 0.0
    %6065 = vmatprep.subr.mxu0 0.0
    %6066 = vmatpush1.msra.mxu0 0.0
    %6067 = vmatprep.subr.mxu0 0.0
    %6068 = vmatpush1.msra.mxu0 0.0
    %6069 = vmatprep.subr.mxu0 0.0
    %6070 = vmatpush1.msra.mxu0 0.0
    %6071 = vmatprep.subr.mxu0 0.0
    %6072 = vmatpush1.msra.mxu0 0.0
    %6073 = vmatprep.subr.mxu0 0.0
    %6074 = vmatpush1.msra.mxu0 0.0
    %6075 = vmatprep.subr.mxu0 0.0
    %6076 = vmatpush1.msra.mxu0 0.0
    %6077 = vmatprep.subr.mxu0 0.0
    %6078 = vmatpush1.msra.mxu0 0.0
    %6079 = vmatprep.subr.mxu0 0.0
    %6080 = vmatpush1.msra.mxu0 0.0
    %6081 = vmatprep.mubr.f32.mxu0 0.0
    %6082 = vmatmul.mubr.f32.gmra.mrb[0].mxu0 %v6006
    %v6083 = vpop.f32.mrb[0].mxu0
    %v6084 = vadd.f32 0.0, %v6083
    %v6085 = vpop.f32.mrb[0].mxu0
    %6086 = vmatprep.mubr.f32.mxu0 0.0
    %6087 = vmatmul.mubr.f32.gmra.mrb[0].mxu0 %v6009
    %v6088 = vpop.f32.mrb[0].mxu0
    %v6089 = vadd.f32 0.0, %v6088
    %v6090 = vpop.f32.mrb[0].mxu0
    %6091 = vmatprep.mubr.f32.mxu0 0.0
    %6092 = vmatmul.mubr.f32.gmra.mrb[0].mxu0 %v6012
    %v6093 = vpop.f32.mrb[0].mxu0
    %v6094 = vadd.f32 0.0, %v6093
    %v6095 = vpop.f32.mrb[0].mxu0
    %6096 = vmatprep.mubr.f32.mxu0 0.0
    %6097 = vmatmul.mubr.f32.gmra.mrb[0].mxu0 %v6015
    %v6098 = vpop.f32.mrb[0].mxu0
    %v6099 = vadd.f32 0.0, %v6098
    %v6100 = vpop.f32.mrb[0].mxu0
    %6101 = vdwg.mxu0
    %v6102 = vsel %vm64, %v6084, 0.0
    %v6103 = vsel %vm64, %v6089, 0.0
    %v6104 = vadd.f32 %v6102, %v6103
    %v6105 = vsel %vm64, %v6094, 0.0
    %v6106 = vadd.f32 %v6104, %v6105
    %v6107 = vsel %vm64, %v6099, 0.0
    %v6108 = vadd.f32 %v6106, %v6107
    %v6109 = vrot.slane %v6108, 4
    %v6110 = vadd.f32 %v6108, %v6109
    %v6111 = vrot.slane %v6110, 2
    %v6112 = vadd.f32 %v6110, %v6111
    %v6113 = vrot.slane %v6112, 1
    %v6114 = vadd.f32 %v6112, %v6113
    %v6115 = vmul.f32 %v6114, %v446
    %v6116 = vsub.f32 %v6084, %v6115
    %v6117 = vsub.f32 %v6089, %v6115
    %v6118 = vsub.f32 %v6094, %v6115
    %v6119 = vsub.f32 %v6099, %v6115
    %v6120 = vmul.f32 %v6116, %v6116
    %v6121 = vmul.f32 %v6117, %v6117
    %v6122 = vmul.f32 %v6118, %v6118
    %v6123 = vmul.f32 %v6119, %v6119
    %v6124 = vsel %vm64, %v6120, 0.0
    %v6125 = vsel %vm64, %v6121, 0.0
    %v6126 = vadd.f32 %v6124, %v6125
    %v6127 = vsel %vm64, %v6122, 0.0
    %v6128 = vadd.f32 %v6126, %v6127
    %v6129 = vsel %vm64, %v6123, 0.0
    %v6130 = vadd.f32 %v6128, %v6129
    %v6131 = vrot.slane %v6130, 4
    %v6132 = vadd.f32 %v6130, %v6131
    %v6133 = vrot.slane %v6132, 2
    %v6134 = vadd.f32 %v6132, %v6133
    %v6135 = vrot.slane %v6134, 1
    %v6136 = vadd.f32 %v6134, %v6135
    %v6137 = vmul.f32 %v6136, %v446
    %v6138 = vadd.f32 %v6137, 1e-05
    %v6139 = vrsqrt.pop %v6138
    %v6140 = vmul.f32 %v5734, %v6139
    %v6141 = vmul.f32 %v6115, %v6140
    %v6143 = vrot.slane %v6141, 7
    %v6145 = vsub.f32 %v5734, %v6143
    %v6146 = vlaneseq
    %v6147 = vshrl.u32 %v6146, 7
    %v6148 = vsub.s32 2, %v6147
    %v6149 = vrot.slane %v6140, %v6148
    %v6150 = vmul.f32 %v6084, %v6149
    %v6151 = vmul.f32 %v6089, %v6149
    %v6152 = vmul.f32 %v6094, %v6149
    %v6153 = vmul.f32 %v6099, %v6149
    %v6154 = vlaneseq
    %v6155 = vshrl.u32 %v6154, 7
    %v6156 = vsub.s32 3, %v6155
    %v6157 = vrot.slane %v6145, %v6156
    %v6158 = vadd.f32 %v6150, %v6157
    %v6159 = vadd.f32 %v6151, %v6157
    %v6160 = vadd.f32 %v6152, %v6157
    %v6161 = vadd.f32 %v6153, %v6157
    %v6162 = vmax.f32 %v6158, 0.0
    %v6163 = vmax.f32 %v6159, 0.0
    %v6164 = vmax.f32 %v6160, 0.0
    %v6165 = vmax.f32 %v6161, 0.0
    %s6166 = scalar_lea.vmem [#allocation2], 224
    %v6167 = vld [vmem:[%s6166] sm:$0xff]
    %v6168 = vld [vmem:[%s6166 + $0x8] sm:$0xff]
    %s6169 = scalar_lea.vmem %s3, 56
    %v6170 = vld [vmem:[%s6169] sm:$0xf]
    %v6172 = vsel %vm64, %v6162, 0
    %v6175 = vsel %vm64, %v6163, 0
    %v6178 = vsel %vm64, %v6164, 0
    %v6181 = vsel %vm64, %v6165, 0
    %6183 = vmatprep.subr.mxu0 0.0
    %6184 = vmatpush1.msra.mxu0 %v6167
    %6185 = vmatprep.subr.mxu0 0.0
    %6186 = vmatpush1.msra.mxu0 %v6168
    %6187 = vmatprep.subr.mxu0 0.0
    %6188 = vmatpush1.msra.mxu0 0.0
    %6189 = vmatprep.subr.mxu0 0.0
    %6190 = vmatpush1.msra.mxu0 0.0
    %6191 = vmatprep.subr.mxu0 0.0
    %6192 = vmatpush1.msra.mxu0 0.0
    %6193 = vmatprep.subr.mxu0 0.0
    %6194 = vmatpush1.msra.mxu0 0.0
    %6195 = vmatprep.subr.mxu0 0.0
    %6196 = vmatpush1.msra.mxu0 0.0
    %6197 = vmatprep.subr.mxu0 0.0
    %6198 = vmatpush1.msra.mxu0 0.0
    %6199 = vmatprep.subr.mxu0 0.0
    %6200 = vmatpush1.msra.mxu0 0.0
    %6201 = vmatprep.subr.mxu0 0.0
    %6202 = vmatpush1.msra.mxu0 0.0
    %6203 = vmatprep.subr.mxu0 0.0
    %6204 = vmatpush1.msra.mxu0 0.0
    %6205 = vmatprep.subr.mxu0 0.0
    %6206 = vmatpush1.msra.mxu0 0.0
    %6207 = vmatprep.subr.mxu0 0.0
    %6208 = vmatpush1.msra.mxu0 0.0
    %6209 = vmatprep.subr.mxu0 0.0
    %6210 = vmatpush1.msra.mxu0 0.0
    %6211 = vmatprep.subr.mxu0 0.0
    %6212 = vmatpush1.msra.mxu0 0.0
    %6213 = vmatprep.subr.mxu0 0.0
    %6214 = vmatpush1.msra.mxu0 0.0
    %6215 = vmatprep.subr.mxu0 0.0
    %6216 = vmatpush1.msra.mxu0 0.0
    %6217 = vmatprep.subr.mxu0 0.0
    %6218 = vmatpush1.msra.mxu0 0.0
    %6219 = vmatprep.subr.mxu0 0.0
    %6220 = vmatpush1.msra.mxu0 0.0
    %6221 = vmatprep.subr.mxu0 0.0
    %6222 = vmatpush1.msra.mxu0 0.0
    %6223 = vmatprep.subr.mxu0 0.0
    %6224 = vmatpush1.msra.mxu0 0.0
    %6225 = vmatprep.subr.mxu0 0.0
    %6226 = vmatpush1.msra.mxu0 0.0
    %6227 = vmatprep.subr.mxu0 0.0
    %6228 = vmatpush1.msra.mxu0 0.0
    %6229 = vmatprep.subr.mxu0 0.0
    %6230 = vmatpush1.msra.mxu0 0.0
    %6231 = vmatprep.subr.mxu0 0.0
    %6232 = vmatpush1.msra.mxu0 0.0
    %6233 = vmatprep.subr.mxu0 0.0
    %6234 = vmatpush1.msra.mxu0 0.0
    %6235 = vmatprep.subr.mxu0 0.0
    %6236 = vmatpush1.msra.mxu0 0.0
    %6237 = vmatprep.subr.mxu0 0.0
    %6238 = vmatpush1.msra.mxu0 0.0
    %6239 = vmatprep.subr.mxu0 0.0
    %6240 = vmatpush1.msra.mxu0 0.0
    %6241 = vmatprep.subr.mxu0 0.0
    %6242 = vmatpush1.msra.mxu0 0.0
    %6243 = vmatprep.subr.mxu0 0.0
    %6244 = vmatpush1.msra.mxu0 0.0
    %6245 = vmatprep.subr.mxu0 0.0
    %6246 = vmatpush1.msra.mxu0 0.0
    %6247 = vmatprep.mubr.f32.mxu0 0.0
    %6248 = vmatmul.mubr.f32.gmra.mrb[0].mxu0 %v6172
    %v6249 = vpop.f32.mrb[0].mxu0
    %v6250 = vadd.f32 0.0, %v6249
    %v6251 = vpop.f32.mrb[0].mxu0
    %6252 = vmatprep.mubr.f32.mxu0 0.0
    %6253 = vmatmul.mubr.f32.gmra.mrb[0].mxu0 %v6175
    %v6254 = vpop.f32.mrb[0].mxu0
    %v6255 = vadd.f32 0.0, %v6254
    %v6256 = vpop.f32.mrb[0].mxu0
    %6257 = vmatprep.mubr.f32.mxu0 0.0
    %6258 = vmatmul.mubr.f32.gmra.mrb[0].mxu0 %v6178
    %v6259 = vpop.f32.mrb[0].mxu0
    %v6260 = vadd.f32 0.0, %v6259
    %v6261 = vpop.f32.mrb[0].mxu0
    %6262 = vmatprep.mubr.f32.mxu0 0.0
    %6263 = vmatmul.mubr.f32.gmra.mrb[0].mxu0 %v6181
    %v6264 = vpop.f32.mrb[0].mxu0
    %v6265 = vadd.f32 0.0, %v6264
    %v6266 = vpop.f32.mrb[0].mxu0
    %6267 = vdwg.mxu0
    %v6268 = vlaneseq
    %v6269 = vshrl.u32 %v6268, 7
    %v6270 = vsub.s32 1, %v6269
    %v6271 = vrot.slane %v6170, %v6270
    %v6272 = vmul.f32 %v6250, %v6271
    %v6273 = vmul.f32 %v6255, %v6271
    %v6274 = vmul.f32 %v6260, %v6271
    %v6275 = vmul.f32 %v6265, %v6271
    %v6276 = vsel %vm64, %v6272, 0.0
    %6277 = vadd.xlane.f32.xlu0 %v6276
    %v6278 = vpop.xlane.xlu0 %6277
    %v6279 = vsel %vm64, %v6273, 0.0
    %6280 = vadd.xlane.f32.xlu0 %v6279
    %v6281 = vpop.xlane.xlu0 %6280
    %v6282 = vsel %vm64, %v6274, 0.0
    %6283 = vadd.xlane.f32.xlu0 %v6282
    %v6284 = vpop.xlane.xlu0 %6283
    %v6285 = vsel %vm64, %v6275, 0.0
    %6286 = vadd.xlane.f32.xlu0 %v6285
    %v6287 = vpop.xlane.xlu0 %6286
    %v6289 = vsel %vm64, %v6170, 0
    %v6292 = vsel %vm64, %v6250, 0
    %v6295 = vsel %vm64, %v6255, 0
    %v6298 = vsel %vm64, %v6260, 0
    %v6301 = vsel %vm64, %v6265, 0
    %6303 = vmatprep.subr.mxu0 0.0
    %6304 = vmatpush1.xpose.msra.mxu0 %v6292
    %6305 = vmatprep.subr.mxu0 0.0
    %6306 = vmatpush1.xpose.msra.mxu0 %v6295
    %6307 = vmatprep.subr.mxu0 0.0
    %6308 = vmatpush1.xpose.msra.mxu0 %v6298
    %6309 = vmatprep.subr.mxu0 0.0
    %6310 = vmatpush1.xpose.msra.mxu0 %v6301
    %6311 = vmatprep.subr.mxu0 0.0
    %6312 = vmatpush1.xpose.msra.mxu0 0.0
    %6313 = vmatprep.subr.mxu0 0.0
    %6314 = vmatpush1.xpose.msra.mxu0 0.0
    %6315 = vmatprep.subr.mxu0 0.0
    %6316 = vmatpush1.xpose.msra.mxu0 0.0
    %6317 = vmatprep.subr.mxu0 0.0
    %6318 = vmatpush1.xpose.msra.mxu0 0.0
    %6319 = vmatprep.subr.mxu0 0.0
    %6320 = vmatpush1.xpose.msra.mxu0 0.0
    %6321 = vmatprep.subr.mxu0 0.0
    %6322 = vmatpush1.xpose.msra.mxu0 0.0
    %6323 = vmatprep.subr.mxu0 0.0
    %6324 = vmatpush1.xpose.msra.mxu0 0.0
    %6325 = vmatprep.subr.mxu0 0.0
    %6326 = vmatpush1.xpose.msra.mxu0 0.0
    %6327 = vmatprep.subr.mxu0 0.0
    %6328 = vmatpush1.xpose.msra.mxu0 0.0
    %6329 = vmatprep.subr.mxu0 0.0
    %6330 = vmatpush1.xpose.msra.mxu0 0.0
    %6331 = vmatprep.subr.mxu0 0.0
    %6332 = vmatpush1.xpose.msra.mxu0 0.0
    %6333 = vmatprep.subr.mxu0 0.0
    %6334 = vmatpush1.xpose.msra.mxu0 0.0
    %6335 = vmatprep.subr.mxu0 0.0
    %6336 = vmatpush1.xpose.msra.mxu0 0.0
    %6337 = vmatprep.subr.mxu0 0.0
    %6338 = vmatpush1.xpose.msra.mxu0 0.0
    %6339 = vmatprep.subr.mxu0 0.0
    %6340 = vmatpush1.xpose.msra.mxu0 0.0
    %6341 = vmatprep.subr.mxu0 0.0
    %6342 = vmatpush1.xpose.msra.mxu0 0.0
    %6343 = vmatprep.subr.mxu0 0.0
    %6344 = vmatpush1.xpose.msra.mxu0 0.0
    %6345 = vmatprep.subr.mxu0 0.0
    %6346 = vmatpush1.xpose.msra.mxu0 0.0
    %6347 = vmatprep.subr.mxu0 0.0
    %6348 = vmatpush1.xpose.msra.mxu0 0.0
    %6349 = vmatprep.subr.mxu0 0.0
    %6350 = vmatpush1.xpose.msra.mxu0 0.0
    %6351 = vmatprep.subr.mxu0 0.0
    %6352 = vmatpush1.xpose.msra.mxu0 0.0
    %6353 = vmatprep.subr.mxu0 0.0
    %6354 = vmatpush1.xpose.msra.mxu0 0.0
    %6355 = vmatprep.subr.mxu0 0.0
    %6356 = vmatpush1.xpose.msra.mxu0 0.0
    %6357 = vmatprep.subr.mxu0 0.0
    %6358 = vmatpush1.xpose.msra.mxu0 0.0
    %6359 = vmatprep.subr.mxu0 0.0
    %6360 = vmatpush1.xpose.msra.mxu0 0.0
    %6361 = vmatprep.subr.mxu0 0.0
    %6362 = vmatpush1.xpose.msra.mxu0 0.0
    %6363 = vmatprep.subr.mxu0 0.0
    %6364 = vmatpush1.xpose.msra.mxu0 0.0
    %6365 = vmatprep.subr.mxu0 0.0
    %6366 = vmatpush1.xpose.msra.mxu0 0.0
    %6367 = vmatprep.mubr.f32.mxu0 0.0
    %6368 = vmatmul.mubr.f32.gmra.mrb[0].mxu0 %v6289
    %v6369 = vpop.f32.mrb[0].mxu0
    %v6370 = vadd.f32 0.0, %v6369
    %v6371 = vpop.f32.mrb[0].mxu0
    %6372 = vdwg.mxu0
    %v6373 = vlaneseq
    %v6374 = vshrl.u32 %v6373, 7
    %v6375 = vsub.s32 0, %v6374
    %v6376 = vrot.slane %v6370, %v6375
    %v6377 = vadd.f32 %v6278, %v6376
    %v6378 = vadd.f32 %v6281, %v6376
    %v6379 = vadd.f32 %v6284, %v6376
    %v6380 = vadd.f32 %v6287, %v6376
    %vm6381 = vcmp.gt.f32.partialorder %v6377, 0.0
    %vm6382 = vcmp.gt.f32.partialorder %v6378, 0.0
    %vm6383 = vcmp.gt.f32.partialorder %v6379, 0.0
    %vm6384 = vcmp.gt.f32.partialorder %v6380, 0.0
    %v6385 = vmul.f32 %v6377, 0.2
    %v6386 = vmul.f32 %v6378, 0.2
    %v6387 = vmul.f32 %v6379, 0.2
    %v6388 = vmul.f32 %v6380, 0.2
    %v6389 = vsel %vm6381, %v6377, %v6385
    %v6390 = vsel %vm6382, %v6378, %v6386
    %v6391 = vsel %vm6383, %v6379, %v6387
    %v6392 = vsel %vm6384, %v6380, %v6388
    %v6393 = vadd.f32 %v6389, %v53
    %v6394 = vadd.f32 %v6390, %v54
    %v6395 = vadd.f32 %v6391, %v55
    %v6396 = vadd.f32 %v6392, %v56
    %v6397 = vsel %vm291, %v6393, -inf
    %6398 = vmax.xlane.f32.xlu0 %v6397
    %v6399 = vpop.xlane.xlu0 %6398
    %v6400 = vsel %vm291, %v6394, -inf
    %6401 = vmax.xlane.f32.xlu0 %v6400
    %v6402 = vpop.xlane.xlu0 %6401
    %v6403 = vsel %vm291, %v6395, -inf
    %6404 = vmax.xlane.f32.xlu0 %v6403
    %v6405 = vpop.xlane.xlu0 %6404
    %v6406 = vsel %vm291, %v6396, -inf
    %6407 = vmax.xlane.f32.xlu0 %v6406
    %v6408 = vpop.xlane.xlu0 %6407
    %v6409 = vsub.f32 %v6393, %v6399
    %v6410 = vsub.f32 %v6394, %v6402
    %v6411 = vsub.f32 %v6395, %v6405
    %v6412 = vsub.f32 %v6396, %v6408
    %v6413 = vmul.f32 %v6409, 1.442695
    %v6414 = vpow.pop %v6413
    %v6415 = vmul.f32 %v6410, 1.442695
    %v6416 = vpow.pop %v6415
    %v6417 = vmul.f32 %v6411, 1.442695
    %v6418 = vpow.pop %v6417
    %v6419 = vmul.f32 %v6412, 1.442695
    %v6420 = vpow.pop %v6419
    %v6421 = vsel %vm291, %v6414, 0.0
    %6422 = vadd.xlane.f32.xlu0 %v6421
    %v6423 = vpop.xlane.xlu0 %6422
    %v6424 = vsel %vm291, %v6416, 0.0
    %6425 = vadd.xlane.f32.xlu0 %v6424
    %v6426 = vpop.xlane.xlu0 %6425
    %v6427 = vsel %vm291, %v6418, 0.0
    %6428 = vadd.xlane.f32.xlu0 %v6427
    %v6429 = vpop.xlane.xlu0 %6428
    %v6430 = vsel %vm291, %v6420, 0.0
    %6431 = vadd.xlane.f32.xlu0 %v6430
    %v6432 = vpop.xlane.xlu0 %6431
    %v6433 = vrcp.pop %v6423
    %v6434 = vrcp.pop %v6426
    %v6435 = vrcp.pop %v6429
    %v6436 = vrcp.pop %v6432
    %v6437 = vmul.f32 %v6414, %v6433
    %v6438 = vmul.f32 %v6416, %v6434
    %v6439 = vmul.f32 %v6418, %v6435
    %v6440 = vmul.f32 %v6420, %v6436
    %v6442 = vsel %vm291, %v6437, 0
    %v6445 = vsel %vm291, %v6438, 0
    %v6448 = vsel %vm291, %v6439, 0
    %v6451 = vsel %vm291, %v6440, 0
    %6453 = vmatprep.subr.mxu0 0.0
    %6454 = vmatpush1.msra.mxu0 %v6250
    %6455 = vmatprep.subr.mxu0 0.0
    %6456 = vmatpush1.msra.mxu0 %v6255
    %6457 = vmatprep.subr.mxu0 0.0
    %6458 = vmatpush1.msra.mxu0 %v6260
    %6459 = vmatprep.subr.mxu0 0.0
    %6460 = vmatpush1.msra.mxu0 %v6265
    %6461 = vmatprep.subr.mxu0 0.0
    %6462 = vmatpush1.msra.mxu0 0.0
    %6463 = vmatprep.subr.mxu0 0.0
    %6464 = vmatpush1.msra.mxu0 0.0
    %6465 = vmatprep.subr.mxu0 0.0
    %6466 = vmatpush1.msra.mxu0 0.0
    %6467 = vmatprep.subr.mxu0 0.0
    %6468 = vmatpush1.msra.mxu0 0.0
    %6469 = vmatprep.subr.mxu0 0.0
    %6470 = vmatpush1.msra.mxu0 0.0
    %6471 = vmatprep.subr.mxu0 0.0
    %6472 = vmatpush1.msra.mxu0 0.0
    %6473 = vmatprep.subr.mxu0 0.0
    %6474 = vmatpush1.msra.mxu0 0.0
    %6475 = vmatprep.subr.mxu0 0.0
    %6476 = vmatpush1.msra.mxu0 0.0
    %6477 = vmatprep.subr.mxu0 0.0
    %6478 = vmatpush1.msra.mxu0 0.0
    %6479 = vmatprep.subr.mxu0 0.0
    %6480 = vmatpush1.msra.mxu0 0.0
    %6481 = vmatprep.subr.mxu0 0.0
    %6482 = vmatpush1.msra.mxu0 0.0
    %6483 = vmatprep.subr.mxu0 0.0
    %6484 = vmatpush1.msra.mxu0 0.0
    %6485 = vmatprep.subr.mxu0 0.0
    %6486 = vmatpush1.msra.mxu0 0.0
    %6487 = vmatprep.subr.mxu0 0.0
    %6488 = vmatpush1.msra.mxu0 0.0
    %6489 = vmatprep.subr.mxu0 0.0
    %6490 = vmatpush1.msra.mxu0 0.0
    %6491 = vmatprep.subr.mxu0 0.0
    %6492 = vmatpush1.msra.mxu0 0.0
    %6493 = vmatprep.subr.mxu0 0.0
    %6494 = vmatpush1.msra.mxu0 0.0
    %6495 = vmatprep.subr.mxu0 0.0
    %6496 = vmatpush1.msra.mxu0 0.0
    %6497 = vmatprep.subr.mxu0 0.0
    %6498 = vmatpush1.msra.mxu0 0.0
    %6499 = vmatprep.subr.mxu0 0.0
    %6500 = vmatpush1.msra.mxu0 0.0
    %6501 = vmatprep.subr.mxu0 0.0
    %6502 = vmatpush1.msra.mxu0 0.0
    %6503 = vmatprep.subr.mxu0 0.0
    %6504 = vmatpush1.msra.mxu0 0.0
    %6505 = vmatprep.subr.mxu0 0.0
    %6506 = vmatpush1.msra.mxu0 0.0
    %6507 = vmatprep.subr.mxu0 0.0
    %6508 = vmatpush1.msra.mxu0 0.0
    %6509 = vmatprep.subr.mxu0 0.0
    %6510 = vmatpush1.msra.mxu0 0.0
    %6511 = vmatprep.subr.mxu0 0.0
    %6512 = vmatpush1.msra.mxu0 0.0
    %6513 = vmatprep.subr.mxu0 0.0
    %6514 = vmatpush1.msra.mxu0 0.0
    %6515 = vmatprep.subr.mxu0 0.0
    %6516 = vmatpush1.msra.mxu0 0.0
    %6517 = vmatprep.mubr.f32.mxu0 0.0
    %6518 = vmatmul.mubr.f32.gmra.mrb[0].mxu0 %v6442
    %v6519 = vpop.f32.mrb[0].mxu0
    %v6520 = vadd.f32 0.0, %v6519
    %v6521 = vpop.f32.mrb[0].mxu0
    %6522 = vmatprep.mubr.f32.mxu0 0.0
    %6523 = vmatmul.mubr.f32.gmra.mrb[0].mxu0 %v6445
    %v6524 = vpop.f32.mrb[0].mxu0
    %v6525 = vadd.f32 0.0, %v6524
    %v6526 = vpop.f32.mrb[0].mxu0
    %6527 = vmatprep.mubr.f32.mxu0 0.0
    %6528 = vmatmul.mubr.f32.gmra.mrb[0].mxu0 %v6448
    %v6529 = vpop.f32.mrb[0].mxu0
    %v6530 = vadd.f32 0.0, %v6529
    %v6531 = vpop.f32.mrb[0].mxu0
    %6532 = vmatprep.mubr.f32.mxu0 0.0
    %6533 = vmatmul.mubr.f32.gmra.mrb[0].mxu0 %v6451
    %v6534 = vpop.f32.mrb[0].mxu0
    %v6535 = vadd.f32 0.0, %v6534
    %v6536 = vpop.f32.mrb[0].mxu0
    %6537 = vdwg.mxu0
    %v6538 = vsel %vm64, %v6520, 0.0
    %v6539 = vsel %vm64, %v6525, 0.0
    %v6540 = vadd.f32 %v6538, %v6539
    %v6541 = vsel %vm64, %v6530, 0.0
    %v6542 = vadd.f32 %v6540, %v6541
    %v6543 = vsel %vm64, %v6535, 0.0
    %v6544 = vadd.f32 %v6542, %v6543
    %v6545 = vrot.slane %v6544, 4
    %v6546 = vadd.f32 %v6544, %v6545
    %v6547 = vrot.slane %v6546, 2
    %v6548 = vadd.f32 %v6546, %v6547
    %v6549 = vrot.slane %v6548, 1
    %v6550 = vadd.f32 %v6548, %v6549
    %v6551 = vmul.f32 %v6550, %v446
    %v6552 = vsub.f32 %v6520, %v6551
    %v6553 = vsub.f32 %v6525, %v6551
    %v6554 = vsub.f32 %v6530, %v6551
    %v6555 = vsub.f32 %v6535, %v6551
    %v6556 = vmul.f32 %v6552, %v6552
    %v6557 = vmul.f32 %v6553, %v6553
    %v6558 = vmul.f32 %v6554, %v6554
    %v6559 = vmul.f32 %v6555, %v6555
    %v6560 = vsel %vm64, %v6556, 0.0
    %v6561 = vsel %vm64, %v6557, 0.0
    %v6562 = vadd.f32 %v6560, %v6561
    %v6563 = vsel %vm64, %v6558, 0.0
    %v6564 = vadd.f32 %v6562, %v6563
    %v6565 = vsel %vm64, %v6559, 0.0
    %v6566 = vadd.f32 %v6564, %v6565
    %v6567 = vrot.slane %v6566, 4
    %v6568 = vadd.f32 %v6566, %v6567
    %v6569 = vrot.slane %v6568, 2
    %v6570 = vadd.f32 %v6568, %v6569
    %v6571 = vrot.slane %v6570, 1
    %v6572 = vadd.f32 %v6570, %v6571
    %v6573 = vmul.f32 %v6572, %v446
    %v6574 = vadd.f32 %v6573, 1e-05
    %v6575 = vrsqrt.pop %v6574
    %v6576 = vmul.f32 %v6170, %v6575
    %v6577 = vmul.f32 %v6551, %v6576
    %v6579 = vrot.slane %v6577, 7
    %v6581 = vsub.f32 %v6170, %v6579
    %v6582 = vlaneseq
    %v6583 = vshrl.u32 %v6582, 7
    %v6584 = vsub.s32 2, %v6583
    %v6585 = vrot.slane %v6576, %v6584
    %v6586 = vmul.f32 %v6520, %v6585
    %v6587 = vmul.f32 %v6525, %v6585
    %v6588 = vmul.f32 %v6530, %v6585
    %v6589 = vmul.f32 %v6535, %v6585
    %v6590 = vlaneseq
    %v6591 = vshrl.u32 %v6590, 7
    %v6592 = vsub.s32 3, %v6591
    %v6593 = vrot.slane %v6581, %v6592
    %v6594 = vadd.f32 %v6586, %v6593
    %v6595 = vadd.f32 %v6587, %v6593
    %v6596 = vadd.f32 %v6588, %v6593
    %v6597 = vadd.f32 %v6589, %v6593
    %v6598 = vmax.f32 %v6594, 0.0
    %v6599 = vmax.f32 %v6595, 0.0
    %v6600 = vmax.f32 %v6596, 0.0
    %v6601 = vmax.f32 %v6597, 0.0
    %s6602 = scalar_lea.vmem [#allocation2], 240
    %v6603 = vld [vmem:[%s6602] sm:$0xff]
    %v6604 = vld [vmem:[%s6602 + $0x8] sm:$0xff]
    %s6605 = scalar_lea.vmem %s3, 60
    %v6606 = vld [vmem:[%s6605] sm:$0xf]
    %v6608 = vsel %vm64, %v6598, 0
    %v6611 = vsel %vm64, %v6599, 0
    %v6614 = vsel %vm64, %v6600, 0
    %v6617 = vsel %vm64, %v6601, 0
    %6619 = vmatprep.subr.mxu0 0.0
    %6620 = vmatpush1.msra.mxu0 %v6603
    %6621 = vmatprep.subr.mxu0 0.0
    %6622 = vmatpush1.msra.mxu0 %v6604
    %6623 = vmatprep.subr.mxu0 0.0
    %6624 = vmatpush1.msra.mxu0 0.0
    %6625 = vmatprep.subr.mxu0 0.0
    %6626 = vmatpush1.msra.mxu0 0.0
    %6627 = vmatprep.subr.mxu0 0.0
    %6628 = vmatpush1.msra.mxu0 0.0
    %6629 = vmatprep.subr.mxu0 0.0
    %6630 = vmatpush1.msra.mxu0 0.0
    %6631 = vmatprep.subr.mxu0 0.0
    %6632 = vmatpush1.msra.mxu0 0.0
    %6633 = vmatprep.subr.mxu0 0.0
    %6634 = vmatpush1.msra.mxu0 0.0
    %6635 = vmatprep.subr.mxu0 0.0
    %6636 = vmatpush1.msra.mxu0 0.0
    %6637 = vmatprep.subr.mxu0 0.0
    %6638 = vmatpush1.msra.mxu0 0.0
    %6639 = vmatprep.subr.mxu0 0.0
    %6640 = vmatpush1.msra.mxu0 0.0
    %6641 = vmatprep.subr.mxu0 0.0
    %6642 = vmatpush1.msra.mxu0 0.0
    %6643 = vmatprep.subr.mxu0 0.0
    %6644 = vmatpush1.msra.mxu0 0.0
    %6645 = vmatprep.subr.mxu0 0.0
    %6646 = vmatpush1.msra.mxu0 0.0
    %6647 = vmatprep.subr.mxu0 0.0
    %6648 = vmatpush1.msra.mxu0 0.0
    %6649 = vmatprep.subr.mxu0 0.0
    %6650 = vmatpush1.msra.mxu0 0.0
    %6651 = vmatprep.subr.mxu0 0.0
    %6652 = vmatpush1.msra.mxu0 0.0
    %6653 = vmatprep.subr.mxu0 0.0
    %6654 = vmatpush1.msra.mxu0 0.0
    %6655 = vmatprep.subr.mxu0 0.0
    %6656 = vmatpush1.msra.mxu0 0.0
    %6657 = vmatprep.subr.mxu0 0.0
    %6658 = vmatpush1.msra.mxu0 0.0
    %6659 = vmatprep.subr.mxu0 0.0
    %6660 = vmatpush1.msra.mxu0 0.0
    %6661 = vmatprep.subr.mxu0 0.0
    %6662 = vmatpush1.msra.mxu0 0.0
    %6663 = vmatprep.subr.mxu0 0.0
    %6664 = vmatpush1.msra.mxu0 0.0
    %6665 = vmatprep.subr.mxu0 0.0
    %6666 = vmatpush1.msra.mxu0 0.0
    %6667 = vmatprep.subr.mxu0 0.0
    %6668 = vmatpush1.msra.mxu0 0.0
    %6669 = vmatprep.subr.mxu0 0.0
    %6670 = vmatpush1.msra.mxu0 0.0
    %6671 = vmatprep.subr.mxu0 0.0
    %6672 = vmatpush1.msra.mxu0 0.0
    %6673 = vmatprep.subr.mxu0 0.0
    %6674 = vmatpush1.msra.mxu0 0.0
    %6675 = vmatprep.subr.mxu0 0.0
    %6676 = vmatpush1.msra.mxu0 0.0
    %6677 = vmatprep.subr.mxu0 0.0
    %6678 = vmatpush1.msra.mxu0 0.0
    %6679 = vmatprep.subr.mxu0 0.0
    %6680 = vmatpush1.msra.mxu0 0.0
    %6681 = vmatprep.subr.mxu0 0.0
    %6682 = vmatpush1.msra.mxu0 0.0
    %6683 = vmatprep.mubr.f32.mxu0 0.0
    %6684 = vmatmul.mubr.f32.gmra.mrb[0].mxu0 %v6608
    %v6685 = vpop.f32.mrb[0].mxu0
    %v6686 = vadd.f32 0.0, %v6685
    %v6687 = vpop.f32.mrb[0].mxu0
    %6688 = vmatprep.mubr.f32.mxu0 0.0
    %6689 = vmatmul.mubr.f32.gmra.mrb[0].mxu0 %v6611
    %v6690 = vpop.f32.mrb[0].mxu0
    %v6691 = vadd.f32 0.0, %v6690
    %v6692 = vpop.f32.mrb[0].mxu0
    %6693 = vmatprep.mubr.f32.mxu0 0.0
    %6694 = vmatmul.mubr.f32.gmra.mrb[0].mxu0 %v6614
    %v6695 = vpop.f32.mrb[0].mxu0
    %v6696 = vadd.f32 0.0, %v6695
    %v6697 = vpop.f32.mrb[0].mxu0
    %6698 = vmatprep.mubr.f32.mxu0 0.0
    %6699 = vmatmul.mubr.f32.gmra.mrb[0].mxu0 %v6617
    %v6700 = vpop.f32.mrb[0].mxu0
    %v6701 = vadd.f32 0.0, %v6700
    %v6702 = vpop.f32.mrb[0].mxu0
    %6703 = vdwg.mxu0
    %v6704 = vlaneseq
    %v6705 = vshrl.u32 %v6704, 7
    %v6706 = vsub.s32 1, %v6705
    %v6707 = vrot.slane %v6606, %v6706
    %v6708 = vmul.f32 %v6686, %v6707
    %v6709 = vmul.f32 %v6691, %v6707
    %v6710 = vmul.f32 %v6696, %v6707
    %v6711 = vmul.f32 %v6701, %v6707
    %v6712 = vsel %vm64, %v6708, 0.0
    %6713 = vadd.xlane.f32.xlu0 %v6712
    %v6714 = vpop.xlane.xlu0 %6713
    %v6715 = vsel %vm64, %v6709, 0.0
    %6716 = vadd.xlane.f32.xlu0 %v6715
    %v6717 = vpop.xlane.xlu0 %6716
    %v6718 = vsel %vm64, %v6710, 0.0
    %6719 = vadd.xlane.f32.xlu0 %v6718
    %v6720 = vpop.xlane.xlu0 %6719
    %v6721 = vsel %vm64, %v6711, 0.0
    %6722 = vadd.xlane.f32.xlu0 %v6721
    %v6723 = vpop.xlane.xlu0 %6722
    %v6725 = vsel %vm64, %v6606, 0
    %v6728 = vsel %vm64, %v6686, 0
    %v6731 = vsel %vm64, %v6691, 0
    %v6734 = vsel %vm64, %v6696, 0
    %v6737 = vsel %vm64, %v6701, 0
    %6739 = vmatprep.subr.mxu0 0.0
    %6740 = vmatpush1.xpose.msra.mxu0 %v6728
    %6741 = vmatprep.subr.mxu0 0.0
    %6742 = vmatpush1.xpose.msra.mxu0 %v6731
    %6743 = vmatprep.subr.mxu0 0.0
    %6744 = vmatpush1.xpose.msra.mxu0 %v6734
    %6745 = vmatprep.subr.mxu0 0.0
    %6746 = vmatpush1.xpose.msra.mxu0 %v6737
    %6747 = vmatprep.subr.mxu0 0.0
    %6748 = vmatpush1.xpose.msra.mxu0 0.0
    %6749 = vmatprep.subr.mxu0 0.0
    %6750 = vmatpush1.xpose.msra.mxu0 0.0
    %6751 = vmatprep.subr.mxu0 0.0
    %6752 = vmatpush1.xpose.msra.mxu0 0.0
    %6753 = vmatprep.subr.mxu0 0.0
    %6754 = vmatpush1.xpose.msra.mxu0 0.0
    %6755 = vmatprep.subr.mxu0 0.0
    %6756 = vmatpush1.xpose.msra.mxu0 0.0
    %6757 = vmatprep.subr.mxu0 0.0
    %6758 = vmatpush1.xpose.msra.mxu0 0.0
    %6759 = vmatprep.subr.mxu0 0.0
    %6760 = vmatpush1.xpose.msra.mxu0 0.0
    %6761 = vmatprep.subr.mxu0 0.0
    %6762 = vmatpush1.xpose.msra.mxu0 0.0
    %6763 = vmatprep.subr.mxu0 0.0
    %6764 = vmatpush1.xpose.msra.mxu0 0.0
    %6765 = vmatprep.subr.mxu0 0.0
    %6766 = vmatpush1.xpose.msra.mxu0 0.0
    %6767 = vmatprep.subr.mxu0 0.0
    %6768 = vmatpush1.xpose.msra.mxu0 0.0
    %6769 = vmatprep.subr.mxu0 0.0
    %6770 = vmatpush1.xpose.msra.mxu0 0.0
    %6771 = vmatprep.subr.mxu0 0.0
    %6772 = vmatpush1.xpose.msra.mxu0 0.0
    %6773 = vmatprep.subr.mxu0 0.0
    %6774 = vmatpush1.xpose.msra.mxu0 0.0
    %6775 = vmatprep.subr.mxu0 0.0
    %6776 = vmatpush1.xpose.msra.mxu0 0.0
    %6777 = vmatprep.subr.mxu0 0.0
    %6778 = vmatpush1.xpose.msra.mxu0 0.0
    %6779 = vmatprep.subr.mxu0 0.0
    %6780 = vmatpush1.xpose.msra.mxu0 0.0
    %6781 = vmatprep.subr.mxu0 0.0
    %6782 = vmatpush1.xpose.msra.mxu0 0.0
    %6783 = vmatprep.subr.mxu0 0.0
    %6784 = vmatpush1.xpose.msra.mxu0 0.0
    %6785 = vmatprep.subr.mxu0 0.0
    %6786 = vmatpush1.xpose.msra.mxu0 0.0
    %6787 = vmatprep.subr.mxu0 0.0
    %6788 = vmatpush1.xpose.msra.mxu0 0.0
    %6789 = vmatprep.subr.mxu0 0.0
    %6790 = vmatpush1.xpose.msra.mxu0 0.0
    %6791 = vmatprep.subr.mxu0 0.0
    %6792 = vmatpush1.xpose.msra.mxu0 0.0
    %6793 = vmatprep.subr.mxu0 0.0
    %6794 = vmatpush1.xpose.msra.mxu0 0.0
    %6795 = vmatprep.subr.mxu0 0.0
    %6796 = vmatpush1.xpose.msra.mxu0 0.0
    %6797 = vmatprep.subr.mxu0 0.0
    %6798 = vmatpush1.xpose.msra.mxu0 0.0
    %6799 = vmatprep.subr.mxu0 0.0
    %6800 = vmatpush1.xpose.msra.mxu0 0.0
    %6801 = vmatprep.subr.mxu0 0.0
    %6802 = vmatpush1.xpose.msra.mxu0 0.0
    %6803 = vmatprep.mubr.f32.mxu0 0.0
    %6804 = vmatmul.mubr.f32.gmra.mrb[0].mxu0 %v6725
    %v6805 = vpop.f32.mrb[0].mxu0
    %v6806 = vadd.f32 0.0, %v6805
    %v6807 = vpop.f32.mrb[0].mxu0
    %6808 = vdwg.mxu0
    %v6809 = vlaneseq
    %v6810 = vshrl.u32 %v6809, 7
    %v6811 = vsub.s32 0, %v6810
    %v6812 = vrot.slane %v6806, %v6811
    %v6813 = vadd.f32 %v6714, %v6812
    %v6814 = vadd.f32 %v6717, %v6812
    %v6815 = vadd.f32 %v6720, %v6812
    %v6816 = vadd.f32 %v6723, %v6812
    %vm6817 = vcmp.gt.f32.partialorder %v6813, 0.0
    %vm6818 = vcmp.gt.f32.partialorder %v6814, 0.0
    %vm6819 = vcmp.gt.f32.partialorder %v6815, 0.0
    %vm6820 = vcmp.gt.f32.partialorder %v6816, 0.0
    %v6821 = vmul.f32 %v6813, 0.2
    %v6822 = vmul.f32 %v6814, 0.2
    %v6823 = vmul.f32 %v6815, 0.2
    %v6824 = vmul.f32 %v6816, 0.2
    %v6825 = vsel %vm6817, %v6813, %v6821
    %v6826 = vsel %vm6818, %v6814, %v6822
    %v6827 = vsel %vm6819, %v6815, %v6823
    %v6828 = vsel %vm6820, %v6816, %v6824
    %v6829 = vadd.f32 %v6825, %v53
    %v6830 = vadd.f32 %v6826, %v54
    %v6831 = vadd.f32 %v6827, %v55
    %v6832 = vadd.f32 %v6828, %v56
    %v6833 = vsel %vm291, %v6829, -inf
    %6834 = vmax.xlane.f32.xlu0 %v6833
    %v6835 = vpop.xlane.xlu0 %6834
    %v6836 = vsel %vm291, %v6830, -inf
    %6837 = vmax.xlane.f32.xlu0 %v6836
    %v6838 = vpop.xlane.xlu0 %6837
    %v6839 = vsel %vm291, %v6831, -inf
    %6840 = vmax.xlane.f32.xlu0 %v6839
    %v6841 = vpop.xlane.xlu0 %6840
    %v6842 = vsel %vm291, %v6832, -inf
    %6843 = vmax.xlane.f32.xlu0 %v6842
    %v6844 = vpop.xlane.xlu0 %6843
    %v6845 = vsub.f32 %v6829, %v6835
    %v6846 = vsub.f32 %v6830, %v6838
    %v6847 = vsub.f32 %v6831, %v6841
    %v6848 = vsub.f32 %v6832, %v6844
    %v6849 = vmul.f32 %v6845, 1.442695
    %v6850 = vpow.pop %v6849
    %v6851 = vmul.f32 %v6846, 1.442695
    %v6852 = vpow.pop %v6851
    %v6853 = vmul.f32 %v6847, 1.442695
    %v6854 = vpow.pop %v6853
    %v6855 = vmul.f32 %v6848, 1.442695
    %v6856 = vpow.pop %v6855
    %v6857 = vsel %vm291, %v6850, 0.0
    %6858 = vadd.xlane.f32.xlu0 %v6857
    %v6859 = vpop.xlane.xlu0 %6858
    %v6860 = vsel %vm291, %v6852, 0.0
    %6861 = vadd.xlane.f32.xlu0 %v6860
    %v6862 = vpop.xlane.xlu0 %6861
    %v6863 = vsel %vm291, %v6854, 0.0
    %6864 = vadd.xlane.f32.xlu0 %v6863
    %v6865 = vpop.xlane.xlu0 %6864
    %v6866 = vsel %vm291, %v6856, 0.0
    %6867 = vadd.xlane.f32.xlu0 %v6866
    %v6868 = vpop.xlane.xlu0 %6867
    %v6869 = vrcp.pop %v6859
    %v6870 = vrcp.pop %v6862
    %v6871 = vrcp.pop %v6865
    %v6872 = vrcp.pop %v6868
    %v6873 = vmul.f32 %v6850, %v6869
    %v6874 = vmul.f32 %v6852, %v6870
    %v6875 = vmul.f32 %v6854, %v6871
    %v6876 = vmul.f32 %v6856, %v6872
    %v6878 = vsel %vm291, %v6873, 0
    %v6881 = vsel %vm291, %v6874, 0
    %v6884 = vsel %vm291, %v6875, 0
    %v6887 = vsel %vm291, %v6876, 0
    %6889 = vmatprep.subr.mxu0 0.0
    %6890 = vmatpush1.msra.mxu0 %v6686
    %6891 = vmatprep.subr.mxu0 0.0
    %6892 = vmatpush1.msra.mxu0 %v6691
    %6893 = vmatprep.subr.mxu0 0.0
    %6894 = vmatpush1.msra.mxu0 %v6696
    %6895 = vmatprep.subr.mxu0 0.0
    %6896 = vmatpush1.msra.mxu0 %v6701
    %6897 = vmatprep.subr.mxu0 0.0
    %6898 = vmatpush1.msra.mxu0 0.0
    %6899 = vmatprep.subr.mxu0 0.0
    %6900 = vmatpush1.msra.mxu0 0.0
    %6901 = vmatprep.subr.mxu0 0.0
    %6902 = vmatpush1.msra.mxu0 0.0
    %6903 = vmatprep.subr.mxu0 0.0
    %6904 = vmatpush1.msra.mxu0 0.0
    %6905 = vmatprep.subr.mxu0 0.0
    %6906 = vmatpush1.msra.mxu0 0.0
    %6907 = vmatprep.subr.mxu0 0.0
    %6908 = vmatpush1.msra.mxu0 0.0
    %6909 = vmatprep.subr.mxu0 0.0
    %6910 = vmatpush1.msra.mxu0 0.0
    %6911 = vmatprep.subr.mxu0 0.0
    %6912 = vmatpush1.msra.mxu0 0.0
    %6913 = vmatprep.subr.mxu0 0.0
    %6914 = vmatpush1.msra.mxu0 0.0
    %6915 = vmatprep.subr.mxu0 0.0
    %6916 = vmatpush1.msra.mxu0 0.0
    %6917 = vmatprep.subr.mxu0 0.0
    %6918 = vmatpush1.msra.mxu0 0.0
    %6919 = vmatprep.subr.mxu0 0.0
    %6920 = vmatpush1.msra.mxu0 0.0
    %6921 = vmatprep.subr.mxu0 0.0
    %6922 = vmatpush1.msra.mxu0 0.0
    %6923 = vmatprep.subr.mxu0 0.0
    %6924 = vmatpush1.msra.mxu0 0.0
    %6925 = vmatprep.subr.mxu0 0.0
    %6926 = vmatpush1.msra.mxu0 0.0
    %6927 = vmatprep.subr.mxu0 0.0
    %6928 = vmatpush1.msra.mxu0 0.0
    %6929 = vmatprep.subr.mxu0 0.0
    %6930 = vmatpush1.msra.mxu0 0.0
    %6931 = vmatprep.subr.mxu0 0.0
    %6932 = vmatpush1.msra.mxu0 0.0
    %6933 = vmatprep.subr.mxu0 0.0
    %6934 = vmatpush1.msra.mxu0 0.0
    %6935 = vmatprep.subr.mxu0 0.0
    %6936 = vmatpush1.msra.mxu0 0.0
    %6937 = vmatprep.subr.mxu0 0.0
    %6938 = vmatpush1.msra.mxu0 0.0
    %6939 = vmatprep.subr.mxu0 0.0
    %6940 = vmatpush1.msra.mxu0 0.0
    %6941 = vmatprep.subr.mxu0 0.0
    %6942 = vmatpush1.msra.mxu0 0.0
    %6943 = vmatprep.subr.mxu0 0.0
    %6944 = vmatpush1.msra.mxu0 0.0
    %6945 = vmatprep.subr.mxu0 0.0
    %6946 = vmatpush1.msra.mxu0 0.0
    %6947 = vmatprep.subr.mxu0 0.0
    %6948 = vmatpush1.msra.mxu0 0.0
    %6949 = vmatprep.subr.mxu0 0.0
    %6950 = vmatpush1.msra.mxu0 0.0
    %6951 = vmatprep.subr.mxu0 0.0
    %6952 = vmatpush1.msra.mxu0 0.0
    %6953 = vmatprep.mubr.f32.mxu0 0.0
    %6954 = vmatmul.mubr.f32.gmra.mrb[0].mxu0 %v6878
    %v6955 = vpop.f32.mrb[0].mxu0
    %v6956 = vadd.f32 0.0, %v6955
    %v6957 = vpop.f32.mrb[0].mxu0
    %6958 = vmatprep.mubr.f32.mxu0 0.0
    %6959 = vmatmul.mubr.f32.gmra.mrb[0].mxu0 %v6881
    %v6960 = vpop.f32.mrb[0].mxu0
    %v6961 = vadd.f32 0.0, %v6960
    %v6962 = vpop.f32.mrb[0].mxu0
    %6963 = vmatprep.mubr.f32.mxu0 0.0
    %6964 = vmatmul.mubr.f32.gmra.mrb[0].mxu0 %v6884
    %v6965 = vpop.f32.mrb[0].mxu0
    %v6966 = vadd.f32 0.0, %v6965
    %v6967 = vpop.f32.mrb[0].mxu0
    %6968 = vmatprep.mubr.f32.mxu0 0.0
    %6969 = vmatmul.mubr.f32.gmra.mrb[0].mxu0 %v6887
    %v6970 = vpop.f32.mrb[0].mxu0
    %v6971 = vadd.f32 0.0, %v6970
    %v6972 = vpop.f32.mrb[0].mxu0
    %6973 = vdwg.mxu0
    %v6974 = vsel %vm64, %v6956, 0.0
    %v6975 = vsel %vm64, %v6961, 0.0
    %v6976 = vadd.f32 %v6974, %v6975
    %v6977 = vsel %vm64, %v6966, 0.0
    %v6978 = vadd.f32 %v6976, %v6977
    %v6979 = vsel %vm64, %v6971, 0.0
    %v6980 = vadd.f32 %v6978, %v6979
    %v6981 = vrot.slane %v6980, 4
    %v6982 = vadd.f32 %v6980, %v6981
    %v6983 = vrot.slane %v6982, 2
    %v6984 = vadd.f32 %v6982, %v6983
    %v6985 = vrot.slane %v6984, 1
    %v6986 = vadd.f32 %v6984, %v6985
    %v6987 = vmul.f32 %v6986, %v446
    %v6988 = vsub.f32 %v6956, %v6987
    %v6989 = vsub.f32 %v6961, %v6987
    %v6990 = vsub.f32 %v6966, %v6987
    %v6991 = vsub.f32 %v6971, %v6987
    %v6992 = vmul.f32 %v6988, %v6988
    %v6993 = vmul.f32 %v6989, %v6989
    %v6994 = vmul.f32 %v6990, %v6990
    %v6995 = vmul.f32 %v6991, %v6991
    %v6996 = vsel %vm64, %v6992, 0.0
    %v6997 = vsel %vm64, %v6993, 0.0
    %v6998 = vadd.f32 %v6996, %v6997
    %v6999 = vsel %vm64, %v6994, 0.0
    %v7000 = vadd.f32 %v6998, %v6999
    %v7001 = vsel %vm64, %v6995, 0.0
    %v7002 = vadd.f32 %v7000, %v7001
    %v7003 = vrot.slane %v7002, 4
    %v7004 = vadd.f32 %v7002, %v7003
    %v7005 = vrot.slane %v7004, 2
    %v7006 = vadd.f32 %v7004, %v7005
    %v7007 = vrot.slane %v7006, 1
    %v7008 = vadd.f32 %v7006, %v7007
    %v7009 = vmul.f32 %v7008, %v446
    %v7010 = vadd.f32 %v7009, 1e-05
    %v7011 = vrsqrt.pop %v7010
    %v7012 = vmul.f32 %v6606, %v7011
    %v7013 = vmul.f32 %v6987, %v7012
    %v7015 = vrot.slane %v7013, 7
    %v7017 = vsub.f32 %v6606, %v7015
    %v7018 = vlaneseq
    %v7019 = vshrl.u32 %v7018, 7
    %v7020 = vsub.s32 2, %v7019
    %v7021 = vrot.slane %v7012, %v7020
    %v7022 = vmul.f32 %v6956, %v7021
    %v7023 = vmul.f32 %v6961, %v7021
    %v7024 = vmul.f32 %v6966, %v7021
    %v7025 = vmul.f32 %v6971, %v7021
    %v7026 = vlaneseq
    %v7027 = vshrl.u32 %v7026, 7
    %v7028 = vsub.s32 3, %v7027
    %v7029 = vrot.slane %v7017, %v7028
    %v7030 = vadd.f32 %v7022, %v7029
    %v7031 = vadd.f32 %v7023, %v7029
    %v7032 = vadd.f32 %v7024, %v7029
    %v7033 = vadd.f32 %v7025, %v7029
    %v7034 = vmax.f32 %v7030, 0.0
    %v7035 = vmax.f32 %v7031, 0.0
    %v7036 = vmax.f32 %v7032, 0.0
    %v7037 = vmax.f32 %v7033, 0.0
    %v7038 = vld [vmem:[%s4] sm:$0x3]
    %v7040 = vsel %vm291, %v7038, 0
    %7042 = vmatprep.subr.mxu0 0.0
    %7043 = vmatpush1.msra.mxu0 %v7034
    %7044 = vmatprep.subr.mxu0 0.0
    %7045 = vmatpush1.msra.mxu0 %v7035
    %7046 = vmatprep.subr.mxu0 0.0
    %7047 = vmatpush1.msra.mxu0 %v7036
    %7048 = vmatprep.subr.mxu0 0.0
    %7049 = vmatpush1.msra.mxu0 %v7037
    %7050 = vmatprep.subr.mxu0 0.0
    %7051 = vmatpush1.msra.mxu0 0.0
    %7052 = vmatprep.subr.mxu0 0.0
    %7053 = vmatpush1.msra.mxu0 0.0
    %7054 = vmatprep.subr.mxu0 0.0
    %7055 = vmatpush1.msra.mxu0 0.0
    %7056 = vmatprep.subr.mxu0 0.0
    %7057 = vmatpush1.msra.mxu0 0.0
    %7058 = vmatprep.subr.mxu0 0.0
    %7059 = vmatpush1.msra.mxu0 0.0
    %7060 = vmatprep.subr.mxu0 0.0
    %7061 = vmatpush1.msra.mxu0 0.0
    %7062 = vmatprep.subr.mxu0 0.0
    %7063 = vmatpush1.msra.mxu0 0.0
    %7064 = vmatprep.subr.mxu0 0.0
    %7065 = vmatpush1.msra.mxu0 0.0
    %7066 = vmatprep.subr.mxu0 0.0
    %7067 = vmatpush1.msra.mxu0 0.0
    %7068 = vmatprep.subr.mxu0 0.0
    %7069 = vmatpush1.msra.mxu0 0.0
    %7070 = vmatprep.subr.mxu0 0.0
    %7071 = vmatpush1.msra.mxu0 0.0
    %7072 = vmatprep.subr.mxu0 0.0
    %7073 = vmatpush1.msra.mxu0 0.0
    %7074 = vmatprep.subr.mxu0 0.0
    %7075 = vmatpush1.msra.mxu0 0.0
    %7076 = vmatprep.subr.mxu0 0.0
    %7077 = vmatpush1.msra.mxu0 0.0
    %7078 = vmatprep.subr.mxu0 0.0
    %7079 = vmatpush1.msra.mxu0 0.0
    %7080 = vmatprep.subr.mxu0 0.0
    %7081 = vmatpush1.msra.mxu0 0.0
    %7082 = vmatprep.subr.mxu0 0.0
    %7083 = vmatpush1.msra.mxu0 0.0
    %7084 = vmatprep.subr.mxu0 0.0
    %7085 = vmatpush1.msra.mxu0 0.0
    %7086 = vmatprep.subr.mxu0 0.0
    %7087 = vmatpush1.msra.mxu0 0.0
    %7088 = vmatprep.subr.mxu0 0.0
    %7089 = vmatpush1.msra.mxu0 0.0
    %7090 = vmatprep.subr.mxu0 0.0
    %7091 = vmatpush1.msra.mxu0 0.0
    %7092 = vmatprep.subr.mxu0 0.0
    %7093 = vmatpush1.msra.mxu0 0.0
    %7094 = vmatprep.subr.mxu0 0.0
    %7095 = vmatpush1.msra.mxu0 0.0
    %7096 = vmatprep.subr.mxu0 0.0
    %7097 = vmatpush1.msra.mxu0 0.0
    %7098 = vmatprep.subr.mxu0 0.0
    %7099 = vmatpush1.msra.mxu0 0.0
    %7100 = vmatprep.subr.mxu0 0.0
    %7101 = vmatpush1.msra.mxu0 0.0
    %7102 = vmatprep.subr.mxu0 0.0
    %7103 = vmatpush1.msra.mxu0 0.0
    %7104 = vmatprep.subr.mxu0 0.0
    %7105 = vmatpush1.msra.mxu0 0.0
    %7106 = vmatprep.mubr.f32.mxu0 0.0
    %7107 = vmatmul.mubr.f32.gmra.mrb[0].mxu0 %v7040
    %v7108 = vpop.f32.mrb[0].mxu0
    %v7109 = vadd.f32 0.0, %v7108
    %v7110 = vpop.f32.mrb[0].mxu0
    %7111 = vdwg.mxu0
    %v7112 = vld [vmem:[%s5] sm:$0xff]
    %v7113 = vld [vmem:[%s5 + $0x8] sm:$0xff]
    %v7114 = vld [vmem:[%s6] sm:$0x1]
    %v7116 = vlaneseq
    %v7117 = vshrl.u32 %v7116, 7
    %v7118 = vsub.s32 0, %v7117
    %v7119 = vrot.slane %v7114, %v7118
    %v7122 = vsel %vm64, %v7109, 0
    %7124 = vmatprep.subr.mxu0 0.0
    %7125 = vmatpush1.msra.mxu0 %v7112
    %7126 = vmatprep.subr.mxu0 0.0
    %7127 = vmatpush1.msra.mxu0 %v7113
    %7128 = vmatprep.subr.mxu0 0.0
    %7129 = vmatpush1.msra.mxu0 0.0
    %7130 = vmatprep.subr.mxu0 0.0
    %7131 = vmatpush1.msra.mxu0 0.0
    %7132 = vmatprep.subr.mxu0 0.0
    %7133 = vmatpush1.msra.mxu0 0.0
    %7134 = vmatprep.subr.mxu0 0.0
    %7135 = vmatpush1.msra.mxu0 0.0
    %7136 = vmatprep.subr.mxu0 0.0
    %7137 = vmatpush1.msra.mxu0 0.0
    %7138 = vmatprep.subr.mxu0 0.0
    %7139 = vmatpush1.msra.mxu0 0.0
    %7140 = vmatprep.subr.mxu0 0.0
    %7141 = vmatpush1.msra.mxu0 0.0
    %7142 = vmatprep.subr.mxu0 0.0
    %7143 = vmatpush1.msra.mxu0 0.0
    %7144 = vmatprep.subr.mxu0 0.0
    %7145 = vmatpush1.msra.mxu0 0.0
    %7146 = vmatprep.subr.mxu0 0.0
    %7147 = vmatpush1.msra.mxu0 0.0
    %7148 = vmatprep.subr.mxu0 0.0
    %7149 = vmatpush1.msra.mxu0 0.0
    %7150 = vmatprep.subr.mxu0 0.0
    %7151 = vmatpush1.msra.mxu0 0.0
    %7152 = vmatprep.subr.mxu0 0.0
    %7153 = vmatpush1.msra.mxu0 0.0
    %7154 = vmatprep.subr.mxu0 0.0
    %7155 = vmatpush1.msra.mxu0 0.0
    %7156 = vmatprep.subr.mxu0 0.0
    %7157 = vmatpush1.msra.mxu0 0.0
    %7158 = vmatprep.subr.mxu0 0.0
    %7159 = vmatpush1.msra.mxu0 0.0
    %7160 = vmatprep.subr.mxu0 0.0
    %7161 = vmatpush1.msra.mxu0 0.0
    %7162 = vmatprep.subr.mxu0 0.0
    %7163 = vmatpush1.msra.mxu0 0.0
    %7164 = vmatprep.subr.mxu0 0.0
    %7165 = vmatpush1.msra.mxu0 0.0
    %7166 = vmatprep.subr.mxu0 0.0
    %7167 = vmatpush1.msra.mxu0 0.0
    %7168 = vmatprep.subr.mxu0 0.0
    %7169 = vmatpush1.msra.mxu0 0.0
    %7170 = vmatprep.subr.mxu0 0.0
    %7171 = vmatpush1.msra.mxu0 0.0
    %7172 = vmatprep.subr.mxu0 0.0
    %7173 = vmatpush1.msra.mxu0 0.0
    %7174 = vmatprep.subr.mxu0 0.0
    %7175 = vmatpush1.msra.mxu0 0.0
    %7176 = vmatprep.subr.mxu0 0.0
    %7177 = vmatpush1.msra.mxu0 0.0
    %7178 = vmatprep.subr.mxu0 0.0
    %7179 = vmatpush1.msra.mxu0 0.0
    %7180 = vmatprep.subr.mxu0 0.0
    %7181 = vmatpush1.msra.mxu0 0.0
    %7182 = vmatprep.subr.mxu0 0.0
    %7183 = vmatpush1.msra.mxu0 0.0
    %7184 = vmatprep.subr.mxu0 0.0
    %7185 = vmatpush1.msra.mxu0 0.0
    %7186 = vmatprep.subr.mxu0 0.0
    %7187 = vmatpush1.msra.mxu0 0.0
    %7188 = vmatprep.mubr.f32.mxu0 0.0
    %7189 = vmatmul.mubr.f32.gmra.mrb[0].mxu0 %v7122
    %v7190 = vpop.f32.mrb[0].mxu0
    %v7191 = vadd.f32 %v7119, %v7190
    %v7192 = vpop.f32.mrb[0].mxu0
    %7193 = vdwg.mxu0
    %v7194 = vmax.f32 %v7191, 0.0
    %v7195 = vld [vmem:[%s7] sm:$0xff]
    %v7196 = vld [vmem:[%s7 + $0x8] sm:$0xff]
    %v7197 = vld [vmem:[%s7 + $0x10] sm:$0xff]
    %v7198 = vld [vmem:[%s7 + $0x18] sm:$0xff]
    %v7199 = vld [vmem:[%s7 + $0x20] sm:$0xff]
    %v7200 = vld [vmem:[%s7 + $0x28] sm:$0xff]
    %v7201 = vld [vmem:[%s7 + $0x30] sm:$0x3]
    %v7202 = vld [vmem:[%s8] sm:$0x1]
    %v7204 = vlaneseq
    %v7205 = vshrl.u32 %v7204, 7
    %v7206 = vsub.s32 0, %v7205
    %v7207 = vrot.slane %v7202, %v7206
    %vm7209 = vcmask 408576
    %v7211 = vsel %vm7209, %v7194, 0
    %vm7213 = vcmask 1041408
    %v7215 = vsel %vm7213, %v7201, 0
    %7217 = vmatprep.subr.mxu0 0.0
    %7218 = vmatpush1.msra.mxu0 %v7195
    %7219 = vmatprep.subr.mxu0 0.0
    %7220 = vmatpush1.msra.mxu0 %v7196
    %7221 = vmatprep.subr.mxu0 0.0
    %7222 = vmatpush1.msra.mxu0 %v7197
    %7223 = vmatprep.subr.mxu0 0.0
    %7224 = vmatpush1.msra.mxu0 %v7198
    %7225 = vmatprep.subr.mxu0 0.0
    %7226 = vmatpush1.msra.mxu0 %v7199
    %7227 = vmatprep.subr.mxu0 0.0
    %7228 = vmatpush1.msra.mxu0 %v7200
    %7229 = vmatprep.subr.mxu0 0.0
    %7230 = vmatpush1.msra.mxu0 %v7215
    %7231 = vmatprep.subr.mxu0 0.0
    %7232 = vmatpush1.msra.mxu0 0.0
    %7233 = vmatprep.subr.mxu0 0.0
    %7234 = vmatpush1.msra.mxu0 0.0
    %7235 = vmatprep.subr.mxu0 0.0
    %7236 = vmatpush1.msra.mxu0 0.0
    %7237 = vmatprep.subr.mxu0 0.0
    %7238 = vmatpush1.msra.mxu0 0.0
    %7239 = vmatprep.subr.mxu0 0.0
    %7240 = vmatpush1.msra.mxu0 0.0
    %7241 = vmatprep.subr.mxu0 0.0
    %7242 = vmatpush1.msra.mxu0 0.0
    %7243 = vmatprep.subr.mxu0 0.0
    %7244 = vmatpush1.msra.mxu0 0.0
    %7245 = vmatprep.subr.mxu0 0.0
    %7246 = vmatpush1.msra.mxu0 0.0
    %7247 = vmatprep.subr.mxu0 0.0
    %7248 = vmatpush1.msra.mxu0 0.0
    %7249 = vmatprep.subr.mxu0 0.0
    %7250 = vmatpush1.msra.mxu0 0.0
    %7251 = vmatprep.subr.mxu0 0.0
    %7252 = vmatpush1.msra.mxu0 0.0
    %7253 = vmatprep.subr.mxu0 0.0
    %7254 = vmatpush1.msra.mxu0 0.0
    %7255 = vmatprep.subr.mxu0 0.0
    %7256 = vmatpush1.msra.mxu0 0.0
    %7257 = vmatprep.subr.mxu0 0.0
    %7258 = vmatpush1.msra.mxu0 0.0
    %7259 = vmatprep.subr.mxu0 0.0
    %7260 = vmatpush1.msra.mxu0 0.0
    %7261 = vmatprep.subr.mxu0 0.0
    %7262 = vmatpush1.msra.mxu0 0.0
    %7263 = vmatprep.subr.mxu0 0.0
    %7264 = vmatpush1.msra.mxu0 0.0
    %7265 = vmatprep.subr.mxu0 0.0
    %7266 = vmatpush1.msra.mxu0 0.0
    %7267 = vmatprep.subr.mxu0 0.0
    %7268 = vmatpush1.msra.mxu0 0.0
    %7269 = vmatprep.subr.mxu0 0.0
    %7270 = vmatpush1.msra.mxu0 0.0
    %7271 = vmatprep.subr.mxu0 0.0
    %7272 = vmatpush1.msra.mxu0 0.0
    %7273 = vmatprep.subr.mxu0 0.0
    %7274 = vmatpush1.msra.mxu0 0.0
    %7275 = vmatprep.subr.mxu0 0.0
    %7276 = vmatpush1.msra.mxu0 0.0
    %7277 = vmatprep.subr.mxu0 0.0
    %7278 = vmatpush1.msra.mxu0 0.0
    %7279 = vmatprep.subr.mxu0 0.0
    %7280 = vmatpush1.msra.mxu0 0.0
    %7281 = vmatprep.mubr.f32.mxu0 0.0
    %7282 = vmatmul.mubr.f32.gmra.mrb[0].mxu0 %v7211
    %v7283 = vpop.f32.mrb[0].mxu0
    %v7284 = vadd.f32 %v7207, %v7283
    %v7285 = vpop.f32.mrb[0].mxu0
    %7286 = vdwg.mxu0
    %v7287 = vmax.f32 %v7284, 0.0
    %v7288 = vld [vmem:[%s9] sm:$0xff]
    %v7289 = vld [vmem:[%s9 + $0x8] sm:$0xff]
    %v7290 = vld [vmem:[%s9 + $0x10] sm:$0xff]
    %v7291 = vld [vmem:[%s9 + $0x18] sm:$0x1]
    %v7292 = vld [vmem:[%s10] sm:$0x1]
    %v7294 = vlaneseq
    %v7295 = vshrl.u32 %v7294, 7
    %v7296 = vsub.s32 0, %v7295
    %v7297 = vrot.slane %v7292, %v7296
    %vm7299 = vcmask 203776
    %v7301 = vsel %vm7299, %v7287, 0
    %vm7303 = vcmask 1040384
    %v7305 = vsel %vm7303, %v7291, 0
    %7307 = vmatprep.subr.mxu0 0.0
    %7308 = vmatpush1.msra.mxu0 %v7288
    %7309 = vmatprep.subr.mxu0 0.0
    %7310 = vmatpush1.msra.mxu0 %v7289
    %7311 = vmatprep.subr.mxu0 0.0
    %7312 = vmatpush1.msra.mxu0 %v7290
    %7313 = vmatprep.subr.mxu0 0.0
    %7314 = vmatpush1.msra.mxu0 %v7305
    %7315 = vmatprep.subr.mxu0 0.0
    %7316 = vmatpush1.msra.mxu0 0.0
    %7317 = vmatprep.subr.mxu0 0.0
    %7318 = vmatpush1.msra.mxu0 0.0
    %7319 = vmatprep.subr.mxu0 0.0
    %7320 = vmatpush1.msra.mxu0 0.0
    %7321 = vmatprep.subr.mxu0 0.0
    %7322 = vmatpush1.msra.mxu0 0.0
    %7323 = vmatprep.subr.mxu0 0.0
    %7324 = vmatpush1.msra.mxu0 0.0
    %7325 = vmatprep.subr.mxu0 0.0
    %7326 = vmatpush1.msra.mxu0 0.0
    %7327 = vmatprep.subr.mxu0 0.0
    %7328 = vmatpush1.msra.mxu0 0.0
    %7329 = vmatprep.subr.mxu0 0.0
    %7330 = vmatpush1.msra.mxu0 0.0
    %7331 = vmatprep.subr.mxu0 0.0
    %7332 = vmatpush1.msra.mxu0 0.0
    %7333 = vmatprep.subr.mxu0 0.0
    %7334 = vmatpush1.msra.mxu0 0.0
    %7335 = vmatprep.subr.mxu0 0.0
    %7336 = vmatpush1.msra.mxu0 0.0
    %7337 = vmatprep.subr.mxu0 0.0
    %7338 = vmatpush1.msra.mxu0 0.0
    %7339 = vmatprep.subr.mxu0 0.0
    %7340 = vmatpush1.msra.mxu0 0.0
    %7341 = vmatprep.subr.mxu0 0.0
    %7342 = vmatpush1.msra.mxu0 0.0
    %7343 = vmatprep.subr.mxu0 0.0
    %7344 = vmatpush1.msra.mxu0 0.0
    %7345 = vmatprep.subr.mxu0 0.0
    %7346 = vmatpush1.msra.mxu0 0.0
    %7347 = vmatprep.subr.mxu0 0.0
    %7348 = vmatpush1.msra.mxu0 0.0
    %7349 = vmatprep.subr.mxu0 0.0
    %7350 = vmatpush1.msra.mxu0 0.0
    %7351 = vmatprep.subr.mxu0 0.0
    %7352 = vmatpush1.msra.mxu0 0.0
    %7353 = vmatprep.subr.mxu0 0.0
    %7354 = vmatpush1.msra.mxu0 0.0
    %7355 = vmatprep.subr.mxu0 0.0
    %7356 = vmatpush1.msra.mxu0 0.0
    %7357 = vmatprep.subr.mxu0 0.0
    %7358 = vmatpush1.msra.mxu0 0.0
    %7359 = vmatprep.subr.mxu0 0.0
    %7360 = vmatpush1.msra.mxu0 0.0
    %7361 = vmatprep.subr.mxu0 0.0
    %7362 = vmatpush1.msra.mxu0 0.0
    %7363 = vmatprep.subr.mxu0 0.0
    %7364 = vmatpush1.msra.mxu0 0.0
    %7365 = vmatprep.subr.mxu0 0.0
    %7366 = vmatpush1.msra.mxu0 0.0
    %7367 = vmatprep.subr.mxu0 0.0
    %7368 = vmatpush1.msra.mxu0 0.0
    %7369 = vmatprep.subr.mxu0 0.0
    %7370 = vmatpush1.msra.mxu0 0.0
    %7371 = vmatprep.mubr.f32.mxu0 0.0
    %7372 = vmatmul.mubr.f32.gmra.mrb[0].mxu0 %v7301
    %v7373 = vpop.f32.mrb[0].mxu0
    %v7374 = vadd.f32 %v7297, %v7373
    %v7375 = vpop.f32.mrb[0].mxu0
    %7376 = vdwg.mxu0
    %vm7377 = vcmask 25600
    %7378 = vst.msk [vmem:[#allocation5] sm:$0x3] %vm7377, %v7374
    // Predicated region
    $region50: #{tpu_custom_call.1} parent=1 // pred_check
      _
    $region51: #{tpu_custom_call.1} parent=1 // pred_check_branch
      %7380 = sbr.rel (0) target = $region53
    $region52: #{tpu_custom_call.1} parent=1 // pred_region
      %s7382 = ssub.s32 32, 32
      %7383 = vsyncadd [#allocation4], %s7382
      %s7385 = sshll.u32 [#allocation5], 4
      %s7386 = int_to_ptr.vmem [resolvable:$true] %s7385
      %7388 = dma.vmem_to_hbm [thread:$0]  %s7386, 32, %s11, [#allocation4]
    $region53: #{tpu_custom_call.1} parent=1 // pred_fallthru
      _
    // Predicated region
    $region54: #{tpu_custom_call.1} parent=1 // pred_check
      _
    $region55: #{tpu_custom_call.1} parent=1 // pred_check_branch
      %7390 = sbr.rel (0) target = $region57
    $region56: #{tpu_custom_call.1} parent=1 // pred_region
      %7391 = dma.done [#allocation4], 32
    $region57: #{tpu_custom_call.1} parent=1 // pred_fallthru
      _
    %7392 = vsyncpa [#allocation3], 1
    %7393 = vsyncpa [#allocation4], 1

</llo_original>
